<compile_context>
chip_gen: v7x
topology: tpu7x:2x2x1
jax: 0.10.0
libtpu: 0.0.40
codegen_flags: <defaults>
</compile_context>

<pallas_src>
import jax
import jax.numpy as jnp
from jax.experimental import pallas as pl
from jax.experimental.pallas import tpu as pltpu


LATENT_SIZE = 64
LAYER_SIZES = [LATENT_SIZE, 128, 256, 512, 1024, 3072]


def _leaky_relu(x, negative_slope=0.2):
    return jnp.where(x > 0, x, negative_slope * x)


def generator_kernel(z_ref,
                     w1_ref, b1_ref,
                     w2_ref, b2_ref,
                     w3_ref, b3_ref,
                     w4_ref, b4_ref,
                     w5_ref, b5_ref,
                     out_ref):
    """grid = (batch_tile i,).  All weights are VMEM-resident.

    Full 5-layer MLP for one (TM, 64) batch tile.  Matmuls take bf16 operands
    and accumulate in f32 on the MXU; activations are computed in f32 and cast
    back to bf16 between layers.
    """
    h = z_ref[...]
    h = jnp.dot(h, w1_ref[...], preferred_element_type=jnp.float32) + b1_ref[...]
    h = _leaky_relu(h).astype(jnp.bfloat16)
    h = jnp.dot(h, w2_ref[...], preferred_element_type=jnp.float32) + b2_ref[...]
    h = _leaky_relu(h).astype(jnp.bfloat16)
    h = jnp.dot(h, w3_ref[...], preferred_element_type=jnp.float32) + b3_ref[...]
    h = _leaky_relu(h).astype(jnp.bfloat16)
    h = jnp.dot(h, w4_ref[...], preferred_element_type=jnp.float32) + b4_ref[...]
    h = _leaky_relu(h).astype(jnp.bfloat16)
    h = jnp.dot(h, w5_ref[...], preferred_element_type=jnp.float32) + b5_ref[...]
    out_ref[...] = jnp.tanh(h).astype(out_ref.dtype)


def init_params(key, dtype=jnp.float32):
    """Deterministic parameter init (shapes from the PyTorch __init__).

    Weights are stored (in_features, out_features) so the kernel computes
    x @ W + b, equivalent to PyTorch's x @ W.T convention.
    """
    params = []
    for i in range(5):
        fan_in, fan_out = LAYER_SIZES[i], LAYER_SIZES[i + 1]
        key, kw, kb = jax.random.split(key, 3)
        bound = 1.0 / (fan_in ** 0.5)  # torch.nn.Linear default init
        w = jax.random.uniform(kw, (fan_in, fan_out), dtype, -bound, bound)
        b = jax.random.uniform(kb, (1, fan_out), dtype, -bound, bound)
        params.append((w, b))
    return params


def _pick_tiling(B):
    """Batch padding + tile size.

    * Pad to a multiple of 16 (bf16 sublane packing).
    * Emit >= 2 batch tiles whenever the batch allows it, so the "parallel"
      batch axis can use v7x's second TensorCore.
    * Cap TM at 512 for large batches (full-height MXU LHS; fits VMEM on all
      generations).
    """
    B_pad = ((B + 15) // 16) * 16
    if B_pad <= 16:
        TM = B_pad                       # too small to split across cores
    elif B_pad <= 1024:
        B_pad = ((B_pad + 31) // 32) * 32
        TM = B_pad // 2                  # exactly 2 batch tiles
    else:
        TM = 512
        B_pad = ((B_pad + TM - 1) // TM) * TM
    return B_pad, TM


@jax.jit
def generator_forward(z, params):
    B = z.shape[0]
    B_pad, TM = _pick_tiling(B)

    zp = z if B_pad == B else jnp.pad(z, ((0, B_pad - B), (0, 0)))
    zp = zp.astype(jnp.bfloat16)

    # bf16 weights (halves HBM weight traffic), f32 biases.
    flat_params = []
    for w, b in params:
        flat_params.extend([w.astype(jnp.bfloat16), b.astype(jnp.float32)])

    grid = (B_pad // TM,)

    def resident_spec(shape):
        # Full-array block, constant index_map -> DMA'd once, resident in VMEM
        # across all batch tiles.
        return pl.BlockSpec(shape, lambda i: (0,) * len(shape))

    in_specs = [pl.BlockSpec((TM, LATENT_SIZE), lambda i: (i, 0))]            # z
    for k in range(5):
        in_specs.append(resident_spec((LAYER_SIZES[k], LAYER_SIZES[k + 1])))  # wk
        in_specs.append(resident_spec((1, LAYER_SIZES[k + 1])))               # bk
    out_spec = pl.BlockSpec((TM, LAYER_SIZES[-1]), lambda i: (i, 0))

    # Advisory cost hint: weights read once, bf16 activations in/out.
    flops = 2 * B_pad * sum(LAYER_SIZES[k] * LAYER_SIZES[k + 1] for k in range(5))
    weight_bytes = sum(LAYER_SIZES[k] * LAYER_SIZES[k + 1] * 2   # bf16 weights
                       + LAYER_SIZES[k + 1] * 4                  # f32 biases
                       for k in range(5))
    bytes_accessed = (weight_bytes
                      + B_pad * LATENT_SIZE * 2        # bf16 z
                      + B_pad * LAYER_SIZES[-1] * 2)   # bf16 output
    cost = pl.CostEstimate(flops=flops,
                           transcendentals=B_pad * LAYER_SIZES[-1],
                           bytes_accessed=bytes_accessed)

    out_flat = pl.pallas_call(
        generator_kernel,
        out_shape=jax.ShapeDtypeStruct((B_pad, LAYER_SIZES[-1]), jnp.bfloat16),
        grid_spec=pltpu.PrefetchScalarGridSpec(
            num_scalar_prefetch=0,
            grid=grid,
            in_specs=in_specs,
            out_specs=out_spec,
        ),
        compiler_params=pltpu.CompilerParams(
            dimension_semantics=("parallel",),
            vmem_limit_bytes=48 << 20,
        ),
        cost_estimate=cost,
    )(zp, *flat_params)

    # TODO(synk): if this runs in a sampling loop, pin weights in VMEM across
    # calls (cross-call prefetch) instead of re-reading ~7.3 MiB per call.

    # Glue: widen to f32 (caller contract) + PyTorch's x.view(B, 3, 32, 32).
    return out_flat[:B].astype(jnp.float32).reshape(B, 3, 32, 32)


def generator_reference(z, params):
    """Pure-JAX f32 reference of the PyTorch forward."""
    h = z.astype(jnp.float32)
    for idx, (w, b) in enumerate(params):
        h = h @ w + b
        if idx < 4:
            h = jnp.where(h > 0, h, 0.2 * h)
        else:
            h = jnp.tanh(h)
    return h.reshape(z.shape[0], 3, 32, 32)


if __name__ == "__main__":
    key = jax.random.PRNGKey(0)
    key, zkey = jax.random.split(key)

    batch = 8
    z = jax.random.normal(zkey, (batch, LATENT_SIZE), dtype=jnp.float32)
    params = init_params(key)

    out = generator_forward(z, params)
    out = jax.block_until_ready(out)

    assert out.shape == (batch, 3, 32, 32), out.shape
    assert out.dtype == jnp.float32
    # sanity: tanh output range (bf16 rounding stays within [-1, 1])
    assert bool(jnp.all(jnp.abs(out) <= 1.0))

    # tolerance check vs. f32 reference (bf16 weights/activations/output
    # introduce ~1e-2-level deltas, well inside tolerance)
    ref = generator_reference(z, params)
    max_err = float(jnp.max(jnp.abs(out - ref)))
    assert max_err < 0.1, f"max abs error vs f32 reference too large: {max_err}"

    print("KERNEL_OK")
</pallas_src>

<mosaic_0001>
module attributes {stable_mosaic.version = 11 : i64} {
  func.func @generator_kernel(%arg0: i32, %arg1: memref<16x64xbf16, #tpu.memory_space<vmem>>, %arg2: memref<64x128xbf16, #tpu.memory_space<vmem>>, %arg3: memref<1x128xf32, #tpu.memory_space<vmem>>, %arg4: memref<128x256xbf16, #tpu.memory_space<vmem>>, %arg5: memref<1x256xf32, #tpu.memory_space<vmem>>, %arg6: memref<256x512xbf16, #tpu.memory_space<vmem>>, %arg7: memref<1x512xf32, #tpu.memory_space<vmem>>, %arg8: memref<512x1024xbf16, #tpu.memory_space<vmem>>, %arg9: memref<1x1024xf32, #tpu.memory_space<vmem>>, %arg10: memref<1024x3072xbf16, #tpu.memory_space<vmem>>, %arg11: memref<1x3072xf32, #tpu.memory_space<vmem>>, %arg12: memref<16x3072xbf16, #tpu.memory_space<vmem>>) attributes {dimension_semantics = [#tpu.dimension_semantics<parallel>], iteration_bounds = array<i64: 1>, scalar_prefetch = 0 : i64, scratch_operands = 0 : i64, tpu.core_type = #tpu.core_type<tc>, window_params = [{transform_indices = @transform_0, window_bounds = array<i64: 16, 64>}, {pipeline_mode = #tpu.pipeline_mode<synchronous>, transform_indices = @transform_1, window_bounds = array<i64: 64, 128>}, {pipeline_mode = #tpu.pipeline_mode<synchronous>, transform_indices = @transform_2, window_bounds = array<i64: 1, 128>}, {pipeline_mode = #tpu.pipeline_mode<synchronous>, transform_indices = @transform_3, window_bounds = array<i64: 128, 256>}, {pipeline_mode = #tpu.pipeline_mode<synchronous>, transform_indices = @transform_4, window_bounds = array<i64: 1, 256>}, {pipeline_mode = #tpu.pipeline_mode<synchronous>, transform_indices = @transform_5, window_bounds = array<i64: 256, 512>}, {pipeline_mode = #tpu.pipeline_mode<synchronous>, transform_indices = @transform_6, window_bounds = array<i64: 1, 512>}, {pipeline_mode = #tpu.pipeline_mode<synchronous>, transform_indices = @transform_7, window_bounds = array<i64: 512, 1024>}, {pipeline_mode = #tpu.pipeline_mode<synchronous>, transform_indices = @transform_8, window_bounds = array<i64: 1, 1024>}, {pipeline_mode = #tpu.pipeline_mode<synchronous>, transform_indices = @transform_9, window_bounds = array<i64: 1024, 3072>}, {pipeline_mode = #tpu.pipeline_mode<synchronous>, transform_indices = @transform_10, window_bounds = array<i64: 1, 3072>}, {transform_indices = @transform_11, window_bounds = array<i64: 16, 3072>}]} {
    %c0 = arith.constant 0 : index
    %c0_0 = arith.constant 0 : index
    %0 = vector.load %arg1[%c0, %c0_0] : memref<16x64xbf16, #tpu.memory_space<vmem>>, vector<16x64xbf16>
    %c0_1 = arith.constant 0 : index
    %c0_2 = arith.constant 0 : index
    %1 = vector.load %arg2[%c0_1, %c0_2] : memref<64x128xbf16, #tpu.memory_space<vmem>>, vector<64x128xbf16>
    %cst = arith.constant dense<0.000000e+00> : vector<16x128xf32>
    %2 = tpu.matmul %0, %1, %cst {dimension_numbers = #tpu.dot_dimension_numbers<[1], [0], [0], [1], [0, 0, 1, 1], [], []>} : vector<16x64xbf16>, vector<64x128xbf16>, vector<16x128xf32> -> vector<16x128xf32>
    %c0_3 = arith.constant 0 : index
    %c0_4 = arith.constant 0 : index
    %3 = vector.load %arg3[%c0_3, %c0_4] : memref<1x128xf32, #tpu.memory_space<vmem>>, vector<1x128xf32>
    %4 = vector.broadcast %3 : vector<1x128xf32> to vector<16x128xf32>
    %5 = arith.addf %2, %4 : vector<16x128xf32>
    %cst_5 = arith.constant 0.000000e+00 : f32
    %6 = vector.broadcast %cst_5 : f32 to vector<16x128xf32>
    %7 = arith.cmpf ogt, %5, %6 : vector<16x128xf32>
    %cst_6 = arith.constant 2.000000e-01 : f32
    %8 = vector.broadcast %cst_6 : f32 to vector<16x128xf32>
    %9 = arith.mulf %8, %5 : vector<16x128xf32>
    %10 = arith.select %7, %5, %9 : vector<16x128xi1>, vector<16x128xf32>
    %11 = arith.truncf %10 : vector<16x128xf32> to vector<16x128xbf16>
    %c0_7 = arith.constant 0 : index
    %c0_8 = arith.constant 0 : index
    %12 = vector.load %arg4[%c0_7, %c0_8] : memref<128x256xbf16, #tpu.memory_space<vmem>>, vector<128x256xbf16>
    %cst_9 = arith.constant dense<0.000000e+00> : vector<16x256xf32>
    %13 = tpu.matmul %11, %12, %cst_9 {dimension_numbers = #tpu.dot_dimension_numbers<[1], [0], [0], [1], [0, 0, 1, 1], [], []>} : vector<16x128xbf16>, vector<128x256xbf16>, vector<16x256xf32> -> vector<16x256xf32>
    %c0_10 = arith.constant 0 : index
    %c0_11 = arith.constant 0 : index
    %14 = vector.load %arg5[%c0_10, %c0_11] : memref<1x256xf32, #tpu.memory_space<vmem>>, vector<1x256xf32>
    %15 = vector.broadcast %14 : vector<1x256xf32> to vector<16x256xf32>
    %16 = arith.addf %13, %15 : vector<16x256xf32>
    %cst_12 = arith.constant 0.000000e+00 : f32
    %17 = vector.broadcast %cst_12 : f32 to vector<16x256xf32>
    %18 = arith.cmpf ogt, %16, %17 : vector<16x256xf32>
    %cst_13 = arith.constant 2.000000e-01 : f32
    %19 = vector.broadcast %cst_13 : f32 to vector<16x256xf32>
    %20 = arith.mulf %19, %16 : vector<16x256xf32>
    %21 = arith.select %18, %16, %20 : vector<16x256xi1>, vector<16x256xf32>
    %22 = arith.truncf %21 : vector<16x256xf32> to vector<16x256xbf16>
    %c0_14 = arith.constant 0 : index
    %c0_15 = arith.constant 0 : index
    %23 = vector.load %arg6[%c0_14, %c0_15] : memref<256x512xbf16, #tpu.memory_space<vmem>>, vector<256x512xbf16>
    %cst_16 = arith.constant dense<0.000000e+00> : vector<16x512xf32>
    %24 = tpu.matmul %22, %23, %cst_16 {dimension_numbers = #tpu.dot_dimension_numbers<[1], [0], [0], [1], [0, 0, 1, 1], [], []>} : vector<16x256xbf16>, vector<256x512xbf16>, vector<16x512xf32> -> vector<16x512xf32>
    %c0_17 = arith.constant 0 : index
    %c0_18 = arith.constant 0 : index
    %25 = vector.load %arg7[%c0_17, %c0_18] : memref<1x512xf32, #tpu.memory_space<vmem>>, vector<1x512xf32>
    %26 = vector.broadcast %25 : vector<1x512xf32> to vector<16x512xf32>
    %27 = arith.addf %24, %26 : vector<16x512xf32>
    %cst_19 = arith.constant 0.000000e+00 : f32
    %28 = vector.broadcast %cst_19 : f32 to vector<16x512xf32>
    %29 = arith.cmpf ogt, %27, %28 : vector<16x512xf32>
    %cst_20 = arith.constant 2.000000e-01 : f32
    %30 = vector.broadcast %cst_20 : f32 to vector<16x512xf32>
    %31 = arith.mulf %30, %27 : vector<16x512xf32>
    %32 = arith.select %29, %27, %31 : vector<16x512xi1>, vector<16x512xf32>
    %33 = arith.truncf %32 : vector<16x512xf32> to vector<16x512xbf16>
    %c0_21 = arith.constant 0 : index
    %c0_22 = arith.constant 0 : index
    %34 = vector.load %arg8[%c0_21, %c0_22] : memref<512x1024xbf16, #tpu.memory_space<vmem>>, vector<512x1024xbf16>
    %cst_23 = arith.constant dense<0.000000e+00> : vector<16x1024xf32>
    %35 = tpu.matmul %33, %34, %cst_23 {dimension_numbers = #tpu.dot_dimension_numbers<[1], [0], [0], [1], [0, 0, 1, 1], [], []>} : vector<16x512xbf16>, vector<512x1024xbf16>, vector<16x1024xf32> -> vector<16x1024xf32>
    %c0_24 = arith.constant 0 : index
    %c0_25 = arith.constant 0 : index
    %36 = vector.load %arg9[%c0_24, %c0_25] : memref<1x1024xf32, #tpu.memory_space<vmem>>, vector<1x1024xf32>
    %37 = vector.broadcast %36 : vector<1x1024xf32> to vector<16x1024xf32>
    %38 = arith.addf %35, %37 : vector<16x1024xf32>
    %cst_26 = arith.constant 0.000000e+00 : f32
    %39 = vector.broadcast %cst_26 : f32 to vector<16x1024xf32>
    %40 = arith.cmpf ogt, %38, %39 : vector<16x1024xf32>
    %cst_27 = arith.constant 2.000000e-01 : f32
    %41 = vector.broadcast %cst_27 : f32 to vector<16x1024xf32>
    %42 = arith.mulf %41, %38 : vector<16x1024xf32>
    %43 = arith.select %40, %38, %42 : vector<16x1024xi1>, vector<16x1024xf32>
    %44 = arith.truncf %43 : vector<16x1024xf32> to vector<16x1024xbf16>
    %c0_28 = arith.constant 0 : index
    %c0_29 = arith.constant 0 : index
    %45 = vector.load %arg10[%c0_28, %c0_29] : memref<1024x3072xbf16, #tpu.memory_space<vmem>>, vector<1024x3072xbf16>
    %cst_30 = arith.constant dense<0.000000e+00> : vector<16x3072xf32>
    %46 = tpu.matmul %44, %45, %cst_30 {dimension_numbers = #tpu.dot_dimension_numbers<[1], [0], [0], [1], [0, 0, 1, 1], [], []>} : vector<16x1024xbf16>, vector<1024x3072xbf16>, vector<16x3072xf32> -> vector<16x3072xf32>
    %c0_31 = arith.constant 0 : index
    %c0_32 = arith.constant 0 : index
    %47 = vector.load %arg11[%c0_31, %c0_32] : memref<1x3072xf32, #tpu.memory_space<vmem>>, vector<1x3072xf32>
    %48 = vector.broadcast %47 : vector<1x3072xf32> to vector<16x3072xf32>
    %49 = arith.addf %46, %48 : vector<16x3072xf32>
    %50 = math.tanh %49 : vector<16x3072xf32>
    %51 = arith.truncf %50 : vector<16x3072xf32> to vector<16x3072xbf16>
    %c0_33 = arith.constant 0 : index
    %c0_34 = arith.constant 0 : index
    %52 = vector.load %arg12[%c0_33, %c0_34] : memref<16x3072xbf16, #tpu.memory_space<vmem>>, vector<16x3072xbf16>
    tpu.vector_store %arg12[%c0_33, %c0_34], %51 {strides = array<i32>} : memref<16x3072xbf16, #tpu.memory_space<vmem>>, vector<16x3072xbf16>,
    return
  }
  func.func @transform_0(%arg0: i32) -> (i32, i32) {
    %c0_i32 = arith.constant 0 : i32
    %c0_i32_0 = arith.constant 0 : i32
    return %arg0, %c0_i32 : i32, i32
  }
  func.func @transform_1(%arg0: i32) -> (i32, i32) {
    %c0_i32 = arith.constant 0 : i32
    %c0_i32_0 = arith.constant 0 : i32
    %c0_i32_1 = arith.constant 0 : i32
    return %c0_i32, %c0_i32_0 : i32, i32
  }
  func.func @transform_2(%arg0: i32) -> (i32, i32) {
    %c0_i32 = arith.constant 0 : i32
    %c0_i32_0 = arith.constant 0 : i32
    %c0_i32_1 = arith.constant 0 : i32
    return %c0_i32, %c0_i32_0 : i32, i32
  }
  func.func @transform_3(%arg0: i32) -> (i32, i32) {
    %c0_i32 = arith.constant 0 : i32
    %c0_i32_0 = arith.constant 0 : i32
    %c0_i32_1 = arith.constant 0 : i32
    return %c0_i32, %c0_i32_0 : i32, i32
  }
  func.func @transform_4(%arg0: i32) -> (i32, i32) {
    %c0_i32 = arith.constant 0 : i32
    %c0_i32_0 = arith.constant 0 : i32
    %c0_i32_1 = arith.constant 0 : i32
    return %c0_i32, %c0_i32_0 : i32, i32
  }
  func.func @transform_5(%arg0: i32) -> (i32, i32) {
    %c0_i32 = arith.constant 0 : i32
    %c0_i32_0 = arith.constant 0 : i32
    %c0_i32_1 = arith.constant 0 : i32
    return %c0_i32, %c0_i32_0 : i32, i32
  }
  func.func @transform_6(%arg0: i32) -> (i32, i32) {
    %c0_i32 = arith.constant 0 : i32
    %c0_i32_0 = arith.constant 0 : i32
    %c0_i32_1 = arith.constant 0 : i32
    return %c0_i32, %c0_i32_0 : i32, i32
  }
  func.func @transform_7(%arg0: i32) -> (i32, i32) {
    %c0_i32 = arith.constant 0 : i32
    %c0_i32_0 = arith.constant 0 : i32
    %c0_i32_1 = arith.constant 0 : i32
    return %c0_i32, %c0_i32_0 : i32, i32
  }
  func.func @transform_8(%arg0: i32) -> (i32, i32) {
    %c0_i32 = arith.constant 0 : i32
    %c0_i32_0 = arith.constant 0 : i32
    %c0_i32_1 = arith.constant 0 : i32
    return %c0_i32, %c0_i32_0 : i32, i32
  }
  func.func @transform_9(%arg0: i32) -> (i32, i32) {
    %c0_i32 = arith.constant 0 : i32
    %c0_i32_0 = arith.constant 0 : i32
    %c0_i32_1 = arith.constant 0 : i32
    return %c0_i32, %c0_i32_0 : i32, i32
  }
  func.func @transform_10(%arg0: i32) -> (i32, i32) {
    %c0_i32 = arith.constant 0 : i32
    %c0_i32_0 = arith.constant 0 : i32
    %c0_i32_1 = arith.constant 0 : i32
    return %c0_i32, %c0_i32_0 : i32, i32
  }
  func.func @transform_11(%arg0: i32) -> (i32, i32) {
    %c0_i32 = arith.constant 0 : i32
    %c0_i32_0 = arith.constant 0 : i32
    return %arg0, %c0_i32 : i32, i32
  }
}

</mosaic_0001>

<llo_original>
// kernel: generator_forward.1
$region0: #{generator_forward.1}
  #allocation0 [shape = 'u32[]', space=smem, size = 0x4, offset = 0x4, fixed_abs, tag = 'smem constant byte address 0x4 - core index']
  #allocation1 [shape = 'u32[144,128]{1,0:T(1,128)}', space=vmem, size = 0x12000, scoped, tag = 'internal scratch']
  %s0 = inlined_call_operand.vmem [shape: bf16[16,64], index: 0, kind: input, shape index: {}]
  %s1 = inlined_call_operand.vmem [shape: bf16[64,128], index: 1, kind: input, shape index: {}]
  %s2 = inlined_call_operand.vmem [shape: f32[1,128], index: 2, kind: input, shape index: {}]
  %s3 = inlined_call_operand.vmem [shape: bf16[128,256], index: 3, kind: input, shape index: {}]
  %s4 = inlined_call_operand.vmem [shape: f32[1,256], index: 4, kind: input, shape index: {}]
  %s5 = inlined_call_operand.vmem [shape: bf16[256,512], index: 5, kind: input, shape index: {}]
  %s6 = inlined_call_operand.vmem [shape: f32[1,512], index: 6, kind: input, shape index: {}]
  %s7 = inlined_call_operand.vmem [shape: bf16[512,1024], index: 7, kind: input, shape index: {}]
  %s8 = inlined_call_operand.vmem [shape: f32[1,1024], index: 8, kind: input, shape index: {}]
  %s9 = inlined_call_operand.vmem [shape: bf16[1024,3072], index: 9, kind: input, shape index: {}]
  %s10 = inlined_call_operand.vmem [shape: f32[1,3072], index: 10, kind: input, shape index: {}]
  %s11 = inlined_call_operand.vmem [shape: bf16[16,3072], index: 11, kind: output, shape index: {}]
  %s12 = sld [smem:[#allocation0]]
  $region54: #{generator_forward.1} parent=0
    _
  %s14 = ssub.s32 1, %s12
  %s15 = scalar_select 0, %s14, %s12
  // Predicated region
  $region2: #{generator_forward.1} parent=0 // pred_check
    _
  $region3: #{generator_forward.1} parent=0 // pred_check_branch
    %17 = sbr.rel (0) target = $region5
  $region4: #{generator_forward.1} parent=0 // pred_region
    _
  $region5: #{generator_forward.1} parent=0 // pred_fallthru
    _
  // Predicated region
  $region6: #{generator_forward.1} parent=0 // pred_check
    _
  $region7: #{generator_forward.1} parent=0 // pred_check_branch
    %19 = sbr.rel (0) target = $region9
  $region8: #{generator_forward.1} parent=0 // pred_region
    _
  $region9: #{generator_forward.1} parent=0 // pred_fallthru
    _
  // Predicated region
  $region10: #{generator_forward.1} parent=0 // pred_check
    _
  $region11: #{generator_forward.1} parent=0 // pred_check_branch
    %21 = sbr.rel (0) target = $region13
  $region12: #{generator_forward.1} parent=0 // pred_region
    _
  $region13: #{generator_forward.1} parent=0 // pred_fallthru
    _
  // Predicated region
  $region14: #{generator_forward.1} parent=0 // pred_check
    _
  $region15: #{generator_forward.1} parent=0 // pred_check_branch
    %23 = sbr.rel (0) target = $region17
  $region16: #{generator_forward.1} parent=0 // pred_region
    _
  $region17: #{generator_forward.1} parent=0 // pred_fallthru
    _
  // Predicated region
  $region18: #{generator_forward.1} parent=0 // pred_check
    _
  $region19: #{generator_forward.1} parent=0 // pred_check_branch
    %25 = sbr.rel (0) target = $region21
  $region20: #{generator_forward.1} parent=0 // pred_region
    _
  $region21: #{generator_forward.1} parent=0 // pred_fallthru
    _
  // Predicated region
  $region22: #{generator_forward.1} parent=0 // pred_check
    _
  $region23: #{generator_forward.1} parent=0 // pred_check_branch
    %27 = sbr.rel (0) target = $region25
  $region24: #{generator_forward.1} parent=0 // pred_region
    _
  $region25: #{generator_forward.1} parent=0 // pred_fallthru
    _
  // Predicated region
  $region26: #{generator_forward.1} parent=0 // pred_check
    _
  $region27: #{generator_forward.1} parent=0 // pred_check_branch
    %29 = sbr.rel (0) target = $region29
  $region28: #{generator_forward.1} parent=0 // pred_region
    _
  $region29: #{generator_forward.1} parent=0 // pred_fallthru
    _
  // Predicated region
  $region30: #{generator_forward.1} parent=0 // pred_check
    _
  $region31: #{generator_forward.1} parent=0 // pred_check_branch
    %31 = sbr.rel (0) target = $region33
  $region32: #{generator_forward.1} parent=0 // pred_region
    _
  $region33: #{generator_forward.1} parent=0 // pred_fallthru
    _
  // Predicated region
  $region34: #{generator_forward.1} parent=0 // pred_check
    _
  $region35: #{generator_forward.1} parent=0 // pred_check_branch
    %33 = sbr.rel (0) target = $region37
  $region36: #{generator_forward.1} parent=0 // pred_region
    _
  $region37: #{generator_forward.1} parent=0 // pred_fallthru
    _
  // Predicated region
  $region38: #{generator_forward.1} parent=0 // pred_check
    _
  $region39: #{generator_forward.1} parent=0 // pred_check_branch
    %35 = sbr.rel (0) target = $region41
  $region40: #{generator_forward.1} parent=0 // pred_region
    _
  $region41: #{generator_forward.1} parent=0 // pred_fallthru
    _
  // Predicated region
  $region42: #{generator_forward.1} parent=0 // pred_check
    _
  $region43: #{generator_forward.1} parent=0 // pred_check_branch
    %37 = sbr.rel (0) target = $region45
  $region44: #{generator_forward.1} parent=0 // pred_region
    _
  $region45: #{generator_forward.1} parent=0 // pred_fallthru
    _
  %v39 = vld [vmem:[%s0] sm:$0xf]
  %v40 = vld [vmem:[%s0 + $0x4] sm:$0xf]
  %v41 = vld [vmem:[%s1] sm:$0xf]
  %v42 = vld [vmem:[%s1 + $0x4] sm:$0xf]
  %v43 = vld [vmem:[%s1 + $0x8] sm:$0xf]
  %v44 = vld [vmem:[%s1 + $0xc] sm:$0xf]
  %v45 = vld [vmem:[%s1 + $0x10] sm:$0xf]
  %v46 = vld [vmem:[%s1 + $0x14] sm:$0xf]
  %v47 = vld [vmem:[%s1 + $0x18] sm:$0xf]
  %v48 = vld [vmem:[%s1 + $0x1c] sm:$0xf]
  %v49 = vld [vmem:[%s2] sm:$0x1]
  %v51 = vlaneseq
  %v52 = vshrl.u32 %v51, 7
  %v53 = vsub.s32 0, %v52
  %v54 = vrot.slane %v49, %v53
  %v58 = vunpack.c.l.b16 %v39
  %v59 = vunpack.c.l.b16 %v40
  %v60 = vpack.c.b16 %v59, %v58
  %v69 = vunpack.c.l.b16 %v41
  %v70 = vunpack.c.l.b16 %v42
  %v71 = vunpack.c.l.b16 %v43
  %v72 = vunpack.c.l.b16 %v44
  %v73 = vunpack.c.l.b16 %v45
  %v74 = vunpack.c.l.b16 %v46
  %v75 = vunpack.c.l.b16 %v47
  %v76 = vunpack.c.l.b16 %v48
  %v77 = vpack.c.b16 %v70, %v69
  %v78 = vpack.c.b16 %v72, %v71
  %v79 = vpack.c.b16 %v74, %v73
  %v80 = vpack.c.b16 %v76, %v75
  %vm85 = vcmask 523264
  %v87 = vsel %vm85, %v60, 0
  %89 = vmatprep.subr.bf16.mxu0 0
  %90 = vmatpush1.bf16.msra.mxu0 %v77
  %91 = vmatprep.subr.bf16.mxu0 0
  %92 = vmatpush1.bf16.msra.mxu0 %v78
  %93 = vmatprep.subr.bf16.mxu0 0
  %94 = vmatpush1.bf16.msra.mxu0 %v79
  %95 = vmatprep.subr.bf16.mxu0 0
  %96 = vmatpush1.bf16.msra.mxu0 %v80
  %97 = vmatprep.subr.bf16.mxu0 0
  %98 = vmatpush1.bf16.msra.mxu0 0
  %99 = vmatprep.subr.bf16.mxu0 0
  %100 = vmatpush1.bf16.msra.mxu0 0
  %101 = vmatprep.subr.bf16.mxu0 0
  %102 = vmatpush1.bf16.msra.mxu0 0
  %103 = vmatprep.subr.bf16.mxu0 0
  %104 = vmatpush1.bf16.msra.mxu0 0
  %105 = vmatprep.subr.bf16.mxu0 0
  %106 = vmatpush1.bf16.msra.mxu0 0
  %107 = vmatprep.subr.bf16.mxu0 0
  %108 = vmatpush1.bf16.msra.mxu0 0
  %109 = vmatprep.subr.bf16.mxu0 0
  %110 = vmatpush1.bf16.msra.mxu0 0
  %111 = vmatprep.subr.bf16.mxu0 0
  %112 = vmatpush1.bf16.msra.mxu0 0
  %113 = vmatprep.subr.bf16.mxu0 0
  %114 = vmatpush1.bf16.msra.mxu0 0
  %115 = vmatprep.subr.bf16.mxu0 0
  %116 = vmatpush1.bf16.msra.mxu0 0
  %117 = vmatprep.subr.bf16.mxu0 0
  %118 = vmatpush1.bf16.msra.mxu0 0
  %119 = vmatprep.subr.bf16.mxu0 0
  %120 = vmatpush1.bf16.msra.mxu0 0
  %121 = vmatprep.mubr.bf16.mxu0 0
  %122 = vmatmul.mubr.bf16.gmra.mrb[0].mxu0 %v87
  %v123 = vpop.f32.mrb[0].mxu0
  %v124 = vadd.f32 %v54, %v123
  %v125 = vpop.f32.mrb[0].mxu0
  %v126 = vpop.f32.mrb[0].mxu0
  %v127 = vadd.f32 %v54, %v126
  %v128 = vpop.f32.mrb[0].mxu0
  %129 = vdwg.mxu0
  %vm130 = vcmp.gt.f32.partialorder %v124, 0.0
  %vm131 = vcmp.gt.f32.partialorder %v127, 0.0
  %v132 = vmul.f32 %v124, 0.2
  %v133 = vmul.f32 %v127, 0.2
  %v134 = vsel %vm130, %v124, %v132
  %v135 = vsel %vm131, %v127, %v133
  %v136 = vpack.c.bf16 %v135, %v134
  %v137 = vld [vmem:[%s3] sm:$0xff]
  %v138 = vld [vmem:[%s3 + $0x8] sm:$0xff]
  %v139 = vld [vmem:[%s3 + $0x10] sm:$0xff]
  %v140 = vld [vmem:[%s3 + $0x18] sm:$0xff]
  %v141 = vld [vmem:[%s3 + $0x20] sm:$0xff]
  %v142 = vld [vmem:[%s3 + $0x28] sm:$0xff]
  %v143 = vld [vmem:[%s3 + $0x30] sm:$0xff]
  %v144 = vld [vmem:[%s3 + $0x38] sm:$0xff]
  %v145 = vld [vmem:[%s3 + $0x40] sm:$0xff]
  %v146 = vld [vmem:[%s3 + $0x48] sm:$0xff]
  %v147 = vld [vmem:[%s3 + $0x50] sm:$0xff]
  %v148 = vld [vmem:[%s3 + $0x58] sm:$0xff]
  %v149 = vld [vmem:[%s3 + $0x60] sm:$0xff]
  %v150 = vld [vmem:[%s3 + $0x68] sm:$0xff]
  %v151 = vld [vmem:[%s3 + $0x70] sm:$0xff]
  %v152 = vld [vmem:[%s3 + $0x78] sm:$0xff]
  %v153 = vld [vmem:[%s4] sm:$0x3]
  %v155 = vlaneseq
  %v156 = vshrl.u32 %v155, 7
  %v157 = vsub.s32 0, %v156
  %v158 = vrot.slane %v153, %v157
  %v159 = vlaneseq
  %v160 = vshrl.u32 %v159, 7
  %v161 = vsub.s32 1, %v160
  %v162 = vrot.slane %v153, %v161
  %v181 = vunpack.c.l.b16 %v137
  %v182 = vunpack.c.h.b16 %v137
  %v183 = vunpack.c.l.b16 %v138
  %v184 = vunpack.c.h.b16 %v138
  %v185 = vunpack.c.l.b16 %v139
  %v186 = vunpack.c.h.b16 %v139
  %v187 = vunpack.c.l.b16 %v140
  %v188 = vunpack.c.h.b16 %v140
  %v189 = vunpack.c.l.b16 %v141
  %v190 = vunpack.c.h.b16 %v141
  %v191 = vunpack.c.l.b16 %v142
  %v192 = vunpack.c.h.b16 %v142
  %v193 = vunpack.c.l.b16 %v143
  %v194 = vunpack.c.h.b16 %v143
  %v195 = vunpack.c.l.b16 %v144
  %v196 = vunpack.c.h.b16 %v144
  %v197 = vunpack.c.l.b16 %v145
  %v198 = vunpack.c.h.b16 %v145
  %v199 = vunpack.c.l.b16 %v146
  %v200 = vunpack.c.h.b16 %v146
  %v201 = vunpack.c.l.b16 %v147
  %v202 = vunpack.c.h.b16 %v147
  %v203 = vunpack.c.l.b16 %v148
  %v204 = vunpack.c.h.b16 %v148
  %v205 = vunpack.c.l.b16 %v149
  %v206 = vunpack.c.h.b16 %v149
  %v207 = vunpack.c.l.b16 %v150
  %v208 = vunpack.c.h.b16 %v150
  %v209 = vunpack.c.l.b16 %v151
  %v210 = vunpack.c.h.b16 %v151
  %v211 = vunpack.c.l.b16 %v152
  %v212 = vunpack.c.h.b16 %v152
  %v213 = vpack.c.b16 %v183, %v181
  %v214 = vpack.c.b16 %v184, %v182
  %v215 = vpack.c.b16 %v187, %v185
  %v216 = vpack.c.b16 %v188, %v186
  %v217 = vpack.c.b16 %v191, %v189
  %v218 = vpack.c.b16 %v192, %v190
  %v219 = vpack.c.b16 %v195, %v193
  %v220 = vpack.c.b16 %v196, %v194
  %v221 = vpack.c.b16 %v199, %v197
  %v222 = vpack.c.b16 %v200, %v198
  %v223 = vpack.c.b16 %v203, %v201
  %v224 = vpack.c.b16 %v204, %v202
  %v225 = vpack.c.b16 %v207, %v205
  %v226 = vpack.c.b16 %v208, %v206
  %v227 = vpack.c.b16 %v211, %v209
  %v228 = vpack.c.b16 %v212, %v210
  %245 = vmatprep.subr.bf16.mxu0 %v214
  %246 = vmatpush1.bf16.msra.mxu0 %v213
  %247 = vmatprep.subr.bf16.mxu0 %v216
  %248 = vmatpush1.bf16.msra.mxu0 %v215
  %249 = vmatprep.subr.bf16.mxu0 %v218
  %250 = vmatpush1.bf16.msra.mxu0 %v217
  %251 = vmatprep.subr.bf16.mxu0 %v220
  %252 = vmatpush1.bf16.msra.mxu0 %v219
  %253 = vmatprep.subr.bf16.mxu0 %v222
  %254 = vmatpush1.bf16.msra.mxu0 %v221
  %255 = vmatprep.subr.bf16.mxu0 %v224
  %256 = vmatpush1.bf16.msra.mxu0 %v223
  %257 = vmatprep.subr.bf16.mxu0 %v226
  %258 = vmatpush1.bf16.msra.mxu0 %v225
  %259 = vmatprep.subr.bf16.mxu0 %v228
  %260 = vmatpush1.bf16.msra.mxu0 %v227
  %261 = vmatprep.subr.bf16.mxu0 0
  %262 = vmatpush1.bf16.msra.mxu0 0
  %263 = vmatprep.subr.bf16.mxu0 0
  %264 = vmatpush1.bf16.msra.mxu0 0
  %265 = vmatprep.subr.bf16.mxu0 0
  %266 = vmatpush1.bf16.msra.mxu0 0
  %267 = vmatprep.subr.bf16.mxu0 0
  %268 = vmatpush1.bf16.msra.mxu0 0
  %269 = vmatprep.subr.bf16.mxu0 0
  %270 = vmatpush1.bf16.msra.mxu0 0
  %271 = vmatprep.subr.bf16.mxu0 0
  %272 = vmatpush1.bf16.msra.mxu0 0
  %273 = vmatprep.subr.bf16.mxu0 0
  %274 = vmatpush1.bf16.msra.mxu0 0
  %275 = vmatprep.subr.bf16.mxu0 0
  %276 = vmatpush1.bf16.msra.mxu0 0
  %277 = vmatprep.mubr.bf16.mxu0 0
  %278 = vmatmul.mubr.bf16.gmra.mrb[0].mxu0 %v136
  %v279 = vpop.f32.mrb[0].mxu0
  %v280 = vadd.f32 %v158, %v279
  %v281 = vpop.f32.mrb[0].mxu0
  %v282 = vadd.f32 %v162, %v281
  %v283 = vpop.f32.mrb[0].mxu0
  %v284 = vadd.f32 %v158, %v283
  %v285 = vpop.f32.mrb[0].mxu0
  %v286 = vadd.f32 %v162, %v285
  %287 = vdwg.mxu0
  %vm288 = vcmp.gt.f32.partialorder %v280, 0.0
  %vm289 = vcmp.gt.f32.partialorder %v282, 0.0
  %vm290 = vcmp.gt.f32.partialorder %v284, 0.0
  %vm291 = vcmp.gt.f32.partialorder %v286, 0.0
  %v292 = vmul.f32 %v280, 0.2
  %v293 = vmul.f32 %v282, 0.2
  %v294 = vmul.f32 %v284, 0.2
  %v295 = vmul.f32 %v286, 0.2
  %v296 = vsel %vm288, %v280, %v292
  %v297 = vsel %vm289, %v282, %v293
  %v298 = vsel %vm290, %v284, %v294
  %v299 = vsel %vm291, %v286, %v295
  %v300 = vpack.c.bf16 %v298, %v296
  %v301 = vpack.c.bf16 %v299, %v297
  %v302 = vld [vmem:[%s5] sm:$0xff]
  %v303 = vld [vmem:[%s5 + $0x8] sm:$0xff]
  %v304 = vld [vmem:[%s5 + $0x10] sm:$0xff]
  %v305 = vld [vmem:[%s5 + $0x18] sm:$0xff]
  %v306 = vld [vmem:[%s5 + $0x20] sm:$0xff]
  %v307 = vld [vmem:[%s5 + $0x28] sm:$0xff]
  %v308 = vld [vmem:[%s5 + $0x30] sm:$0xff]
  %v309 = vld [vmem:[%s5 + $0x38] sm:$0xff]
  %v310 = vld [vmem:[%s5 + $0x40] sm:$0xff]
  %v311 = vld [vmem:[%s5 + $0x48] sm:$0xff]
  %v312 = vld [vmem:[%s5 + $0x50] sm:$0xff]
  %v313 = vld [vmem:[%s5 + $0x58] sm:$0xff]
  %v314 = vld [vmem:[%s5 + $0x60] sm:$0xff]
  %v315 = vld [vmem:[%s5 + $0x68] sm:$0xff]
  %v316 = vld [vmem:[%s5 + $0x70] sm:$0xff]
  %v317 = vld [vmem:[%s5 + $0x78] sm:$0xff]
  %v318 = vld [vmem:[%s5 + $0x80] sm:$0xff]
  %v319 = vld [vmem:[%s5 + $0x88] sm:$0xff]
  %v320 = vld [vmem:[%s5 + $0x90] sm:$0xff]
  %v321 = vld [vmem:[%s5 + $0x98] sm:$0xff]
  %v322 = vld [vmem:[%s5 + $0xa0] sm:$0xff]
  %v323 = vld [vmem:[%s5 + $0xa8] sm:$0xff]
  %v324 = vld [vmem:[%s5 + $0xb0] sm:$0xff]
  %v325 = vld [vmem:[%s5 + $0xb8] sm:$0xff]
  %v326 = vld [vmem:[%s5 + $0xc0] sm:$0xff]
  %v327 = vld [vmem:[%s5 + $0xc8] sm:$0xff]
  %v328 = vld [vmem:[%s5 + $0xd0] sm:$0xff]
  %v329 = vld [vmem:[%s5 + $0xd8] sm:$0xff]
  %v330 = vld [vmem:[%s5 + $0xe0] sm:$0xff]
  %v331 = vld [vmem:[%s5 + $0xe8] sm:$0xff]
  %v332 = vld [vmem:[%s5 + $0xf0] sm:$0xff]
  %v333 = vld [vmem:[%s5 + $0xf8] sm:$0xff]
  %v334 = vld [vmem:[%s5 + $0x100] sm:$0xff]
  %v335 = vld [vmem:[%s5 + $0x108] sm:$0xff]
  %v336 = vld [vmem:[%s5 + $0x110] sm:$0xff]
  %v337 = vld [vmem:[%s5 + $0x118] sm:$0xff]
  %v338 = vld [vmem:[%s5 + $0x120] sm:$0xff]
  %v339 = vld [vmem:[%s5 + $0x128] sm:$0xff]
  %v340 = vld [vmem:[%s5 + $0x130] sm:$0xff]
  %v341 = vld [vmem:[%s5 + $0x138] sm:$0xff]
  %v342 = vld [vmem:[%s5 + $0x140] sm:$0xff]
  %v343 = vld [vmem:[%s5 + $0x148] sm:$0xff]
  %v344 = vld [vmem:[%s5 + $0x150] sm:$0xff]
  %v345 = vld [vmem:[%s5 + $0x158] sm:$0xff]
  %v346 = vld [vmem:[%s5 + $0x160] sm:$0xff]
  %v347 = vld [vmem:[%s5 + $0x168] sm:$0xff]
  %v348 = vld [vmem:[%s5 + $0x170] sm:$0xff]
  %v349 = vld [vmem:[%s5 + $0x178] sm:$0xff]
  %v350 = vld [vmem:[%s5 + $0x180] sm:$0xff]
  %v351 = vld [vmem:[%s5 + $0x188] sm:$0xff]
  %v352 = vld [vmem:[%s5 + $0x190] sm:$0xff]
  %v353 = vld [vmem:[%s5 + $0x198] sm:$0xff]
  %v354 = vld [vmem:[%s5 + $0x1a0] sm:$0xff]
  %v355 = vld [vmem:[%s5 + $0x1a8] sm:$0xff]
  %v356 = vld [vmem:[%s5 + $0x1b0] sm:$0xff]
  %v357 = vld [vmem:[%s5 + $0x1b8] sm:$0xff]
  %v358 = vld [vmem:[%s5 + $0x1c0] sm:$0xff]
  %v359 = vld [vmem:[%s5 + $0x1c8] sm:$0xff]
  %v360 = vld [vmem:[%s5 + $0x1d0] sm:$0xff]
  %v361 = vld [vmem:[%s5 + $0x1d8] sm:$0xff]
  %v362 = vld [vmem:[%s5 + $0x1e0] sm:$0xff]
  %v363 = vld [vmem:[%s5 + $0x1e8] sm:$0xff]
  %v364 = vld [vmem:[%s5 + $0x1f0] sm:$0xff]
  %v365 = vld [vmem:[%s5 + $0x1f8] sm:$0xff]
  %v366 = vld [vmem:[%s6] sm:$0xf]
  %v368 = vlaneseq
  %v369 = vshrl.u32 %v368, 7
  %v370 = vsub.s32 0, %v369
  %v371 = vrot.slane %v366, %v370
  %v372 = vlaneseq
  %v373 = vshrl.u32 %v372, 7
  %v374 = vsub.s32 1, %v373
  %v375 = vrot.slane %v366, %v374
  %v376 = vlaneseq
  %v377 = vshrl.u32 %v376, 7
  %v378 = vsub.s32 2, %v377
  %v379 = vrot.slane %v366, %v378
  %v380 = vlaneseq
  %v381 = vshrl.u32 %v380, 7
  %v382 = vsub.s32 3, %v381
  %v383 = vrot.slane %v366, %v382
  %v452 = vunpack.c.l.b16 %v302
  %v453 = vunpack.c.h.b16 %v302
  %v454 = vunpack.c.l.b16 %v303
  %v455 = vunpack.c.h.b16 %v303
  %v456 = vunpack.c.l.b16 %v304
  %v457 = vunpack.c.h.b16 %v304
  %v458 = vunpack.c.l.b16 %v305
  %v459 = vunpack.c.h.b16 %v305
  %v460 = vunpack.c.l.b16 %v306
  %v461 = vunpack.c.h.b16 %v306
  %v462 = vunpack.c.l.b16 %v307
  %v463 = vunpack.c.h.b16 %v307
  %v464 = vunpack.c.l.b16 %v308
  %v465 = vunpack.c.h.b16 %v308
  %v466 = vunpack.c.l.b16 %v309
  %v467 = vunpack.c.h.b16 %v309
  %v468 = vunpack.c.l.b16 %v310
  %v469 = vunpack.c.h.b16 %v310
  %v470 = vunpack.c.l.b16 %v311
  %v471 = vunpack.c.h.b16 %v311
  %v472 = vunpack.c.l.b16 %v312
  %v473 = vunpack.c.h.b16 %v312
  %v474 = vunpack.c.l.b16 %v313
  %v475 = vunpack.c.h.b16 %v313
  %v476 = vunpack.c.l.b16 %v314
  %v477 = vunpack.c.h.b16 %v314
  %v478 = vunpack.c.l.b16 %v315
  %v479 = vunpack.c.h.b16 %v315
  %v480 = vunpack.c.l.b16 %v316
  %v481 = vunpack.c.h.b16 %v316
  %v482 = vunpack.c.l.b16 %v317
  %v483 = vunpack.c.h.b16 %v317
  %v484 = vunpack.c.l.b16 %v318
  %v485 = vunpack.c.h.b16 %v318
  %v486 = vunpack.c.l.b16 %v319
  %v487 = vunpack.c.h.b16 %v319
  %v488 = vunpack.c.l.b16 %v320
  %v489 = vunpack.c.h.b16 %v320
  %v490 = vunpack.c.l.b16 %v321
  %v491 = vunpack.c.h.b16 %v321
  %v492 = vunpack.c.l.b16 %v322
  %v493 = vunpack.c.h.b16 %v322
  %v494 = vunpack.c.l.b16 %v323
  %v495 = vunpack.c.h.b16 %v323
  %v496 = vunpack.c.l.b16 %v324
  %v497 = vunpack.c.h.b16 %v324
  %v498 = vunpack.c.l.b16 %v325
  %v499 = vunpack.c.h.b16 %v325
  %v500 = vunpack.c.l.b16 %v326
  %v501 = vunpack.c.h.b16 %v326
  %v502 = vunpack.c.l.b16 %v327
  %v503 = vunpack.c.h.b16 %v327
  %v504 = vunpack.c.l.b16 %v328
  %v505 = vunpack.c.h.b16 %v328
  %v506 = vunpack.c.l.b16 %v329
  %v507 = vunpack.c.h.b16 %v329
  %v508 = vunpack.c.l.b16 %v330
  %v509 = vunpack.c.h.b16 %v330
  %v510 = vunpack.c.l.b16 %v331
  %v511 = vunpack.c.h.b16 %v331
  %v512 = vunpack.c.l.b16 %v332
  %v513 = vunpack.c.h.b16 %v332
  %v514 = vunpack.c.l.b16 %v333
  %v515 = vunpack.c.h.b16 %v333
  %v516 = vunpack.c.l.b16 %v334
  %v517 = vunpack.c.h.b16 %v334
  %v518 = vunpack.c.l.b16 %v335
  %v519 = vunpack.c.h.b16 %v335
  %v520 = vunpack.c.l.b16 %v336
  %v521 = vunpack.c.h.b16 %v336
  %v522 = vunpack.c.l.b16 %v337
  %v523 = vunpack.c.h.b16 %v337
  %v524 = vunpack.c.l.b16 %v338
  %v525 = vunpack.c.h.b16 %v338
  %v526 = vunpack.c.l.b16 %v339
  %v527 = vunpack.c.h.b16 %v339
  %v528 = vunpack.c.l.b16 %v340
  %v529 = vunpack.c.h.b16 %v340
  %v530 = vunpack.c.l.b16 %v341
  %v531 = vunpack.c.h.b16 %v341
  %v532 = vunpack.c.l.b16 %v342
  %v533 = vunpack.c.h.b16 %v342
  %v534 = vunpack.c.l.b16 %v343
  %v535 = vunpack.c.h.b16 %v343
  %v536 = vunpack.c.l.b16 %v344
  %v537 = vunpack.c.h.b16 %v344
  %v538 = vunpack.c.l.b16 %v345
  %v539 = vunpack.c.h.b16 %v345
  %v540 = vunpack.c.l.b16 %v346
  %v541 = vunpack.c.h.b16 %v346
  %v542 = vunpack.c.l.b16 %v347
  %v543 = vunpack.c.h.b16 %v347
  %v544 = vunpack.c.l.b16 %v348
  %v545 = vunpack.c.h.b16 %v348
  %v546 = vunpack.c.l.b16 %v349
  %v547 = vunpack.c.h.b16 %v349
  %v548 = vunpack.c.l.b16 %v350
  %v549 = vunpack.c.h.b16 %v350
  %v550 = vunpack.c.l.b16 %v351
  %v551 = vunpack.c.h.b16 %v351
  %v552 = vunpack.c.l.b16 %v352
  %v553 = vunpack.c.h.b16 %v352
  %v554 = vunpack.c.l.b16 %v353
  %v555 = vunpack.c.h.b16 %v353
  %v556 = vunpack.c.l.b16 %v354
  %v557 = vunpack.c.h.b16 %v354
  %v558 = vunpack.c.l.b16 %v355
  %v559 = vunpack.c.h.b16 %v355
  %v560 = vunpack.c.l.b16 %v356
  %v561 = vunpack.c.h.b16 %v356
  %v562 = vunpack.c.l.b16 %v357
  %v563 = vunpack.c.h.b16 %v357
  %v564 = vunpack.c.l.b16 %v358
  %v565 = vunpack.c.h.b16 %v358
  %v566 = vunpack.c.l.b16 %v359
  %v567 = vunpack.c.h.b16 %v359
  %v568 = vunpack.c.l.b16 %v360
  %v569 = vunpack.c.h.b16 %v360
  %v570 = vunpack.c.l.b16 %v361
  %v571 = vunpack.c.h.b16 %v361
  %v572 = vunpack.c.l.b16 %v362
  %v573 = vunpack.c.h.b16 %v362
  %v574 = vunpack.c.l.b16 %v363
  %v575 = vunpack.c.h.b16 %v363
  %v576 = vunpack.c.l.b16 %v364
  %v577 = vunpack.c.h.b16 %v364
  %v578 = vunpack.c.l.b16 %v365
  %v579 = vunpack.c.h.b16 %v365
  %v580 = vpack.c.b16 %v456, %v452
  %v581 = vpack.c.b16 %v457, %v453
  %v582 = vpack.c.b16 %v458, %v454
  %v583 = vpack.c.b16 %v459, %v455
  %v584 = vpack.c.b16 %v464, %v460
  %v585 = vpack.c.b16 %v465, %v461
  %v586 = vpack.c.b16 %v466, %v462
  %v587 = vpack.c.b16 %v467, %v463
  %v588 = vpack.c.b16 %v472, %v468
  %v589 = vpack.c.b16 %v473, %v469
  %v590 = vpack.c.b16 %v474, %v470
  %v591 = vpack.c.b16 %v475, %v471
  %v592 = vpack.c.b16 %v480, %v476
  %v593 = vpack.c.b16 %v481, %v477
  %v594 = vpack.c.b16 %v482, %v478
  %v595 = vpack.c.b16 %v483, %v479
  %v596 = vpack.c.b16 %v488, %v484
  %v597 = vpack.c.b16 %v489, %v485
  %v598 = vpack.c.b16 %v490, %v486
  %v599 = vpack.c.b16 %v491, %v487
  %v600 = vpack.c.b16 %v496, %v492
  %v601 = vpack.c.b16 %v497, %v493
  %v602 = vpack.c.b16 %v498, %v494
  %v603 = vpack.c.b16 %v499, %v495
  %v604 = vpack.c.b16 %v504, %v500
  %v605 = vpack.c.b16 %v505, %v501
  %v606 = vpack.c.b16 %v506, %v502
  %v607 = vpack.c.b16 %v507, %v503
  %v608 = vpack.c.b16 %v512, %v508
  %v609 = vpack.c.b16 %v513, %v509
  %v610 = vpack.c.b16 %v514, %v510
  %v611 = vpack.c.b16 %v515, %v511
  %v612 = vpack.c.b16 %v520, %v516
  %v613 = vpack.c.b16 %v521, %v517
  %v614 = vpack.c.b16 %v522, %v518
  %v615 = vpack.c.b16 %v523, %v519
  %v616 = vpack.c.b16 %v528, %v524
  %v617 = vpack.c.b16 %v529, %v525
  %v618 = vpack.c.b16 %v530, %v526
  %v619 = vpack.c.b16 %v531, %v527
  %v620 = vpack.c.b16 %v536, %v532
  %v621 = vpack.c.b16 %v537, %v533
  %v622 = vpack.c.b16 %v538, %v534
  %v623 = vpack.c.b16 %v539, %v535
  %v624 = vpack.c.b16 %v544, %v540
  %v625 = vpack.c.b16 %v545, %v541
  %v626 = vpack.c.b16 %v546, %v542
  %v627 = vpack.c.b16 %v547, %v543
  %v628 = vpack.c.b16 %v552, %v548
  %v629 = vpack.c.b16 %v553, %v549
  %v630 = vpack.c.b16 %v554, %v550
  %v631 = vpack.c.b16 %v555, %v551
  %v632 = vpack.c.b16 %v560, %v556
  %v633 = vpack.c.b16 %v561, %v557
  %v634 = vpack.c.b16 %v562, %v558
  %v635 = vpack.c.b16 %v563, %v559
  %v636 = vpack.c.b16 %v568, %v564
  %v637 = vpack.c.b16 %v569, %v565
  %v638 = vpack.c.b16 %v570, %v566
  %v639 = vpack.c.b16 %v571, %v567
  %v640 = vpack.c.b16 %v576, %v572
  %v641 = vpack.c.b16 %v577, %v573
  %v642 = vpack.c.b16 %v578, %v574
  %v643 = vpack.c.b16 %v579, %v575
  %708 = vmatprep.subr.bf16.mxu0 %v581
  %709 = vmatpush1.bf16.msra.mxu0 %v580
  %710 = vmatprep.subr.bf16.mxu0 %v585
  %711 = vmatpush1.bf16.msra.mxu0 %v584
  %712 = vmatprep.subr.bf16.mxu0 %v589
  %713 = vmatpush1.bf16.msra.mxu0 %v588
  %714 = vmatprep.subr.bf16.mxu0 %v593
  %715 = vmatpush1.bf16.msra.mxu0 %v592
  %716 = vmatprep.subr.bf16.mxu0 %v597
  %717 = vmatpush1.bf16.msra.mxu0 %v596
  %718 = vmatprep.subr.bf16.mxu0 %v601
  %719 = vmatpush1.bf16.msra.mxu0 %v600
  %720 = vmatprep.subr.bf16.mxu0 %v605
  %721 = vmatpush1.bf16.msra.mxu0 %v604
  %722 = vmatprep.subr.bf16.mxu0 %v609
  %723 = vmatpush1.bf16.msra.mxu0 %v608
  %724 = vmatprep.subr.bf16.mxu0 %v613
  %725 = vmatpush1.bf16.msra.mxu0 %v612
  %726 = vmatprep.subr.bf16.mxu0 %v617
  %727 = vmatpush1.bf16.msra.mxu0 %v616
  %728 = vmatprep.subr.bf16.mxu0 %v621
  %729 = vmatpush1.bf16.msra.mxu0 %v620
  %730 = vmatprep.subr.bf16.mxu0 %v625
  %731 = vmatpush1.bf16.msra.mxu0 %v624
  %732 = vmatprep.subr.bf16.mxu0 %v629
  %733 = vmatpush1.bf16.msra.mxu0 %v628
  %734 = vmatprep.subr.bf16.mxu0 %v633
  %735 = vmatpush1.bf16.msra.mxu0 %v632
  %736 = vmatprep.subr.bf16.mxu0 %v637
  %737 = vmatpush1.bf16.msra.mxu0 %v636
  %738 = vmatprep.subr.bf16.mxu0 %v641
  %739 = vmatpush1.bf16.msra.mxu0 %v640
  %740 = vmatprep.mubr.bf16.mxu0 %v301
  %741 = vmatmul.mubr.bf16.gmra.mrb[0].mxu0 %v300
  %v742 = vpop.f32.mrb[0].mxu0
  %v743 = vadd.f32 %v371, %v742
  %v744 = vpop.f32.mrb[0].mxu0
  %v745 = vadd.f32 %v375, %v744
  %v746 = vpop.f32.mrb[0].mxu0
  %v747 = vadd.f32 %v371, %v746
  %v748 = vpop.f32.mrb[0].mxu0
  %v749 = vadd.f32 %v375, %v748
  %750 = vdwg.mxu0
  %751 = vmatprep.subr.bf16.mxu0 %v583
  %752 = vmatpush1.bf16.msra.mxu0 %v582
  %753 = vmatprep.subr.bf16.mxu0 %v587
  %754 = vmatpush1.bf16.msra.mxu0 %v586
  %755 = vmatprep.subr.bf16.mxu0 %v591
  %756 = vmatpush1.bf16.msra.mxu0 %v590
  %757 = vmatprep.subr.bf16.mxu0 %v595
  %758 = vmatpush1.bf16.msra.mxu0 %v594
  %759 = vmatprep.subr.bf16.mxu0 %v599
  %760 = vmatpush1.bf16.msra.mxu0 %v598
  %761 = vmatprep.subr.bf16.mxu0 %v603
  %762 = vmatpush1.bf16.msra.mxu0 %v602
  %763 = vmatprep.subr.bf16.mxu0 %v607
  %764 = vmatpush1.bf16.msra.mxu0 %v606
  %765 = vmatprep.subr.bf16.mxu0 %v611
  %766 = vmatpush1.bf16.msra.mxu0 %v610
  %767 = vmatprep.subr.bf16.mxu0 %v615
  %768 = vmatpush1.bf16.msra.mxu0 %v614
  %769 = vmatprep.subr.bf16.mxu0 %v619
  %770 = vmatpush1.bf16.msra.mxu0 %v618
  %771 = vmatprep.subr.bf16.mxu0 %v623
  %772 = vmatpush1.bf16.msra.mxu0 %v622
  %773 = vmatprep.subr.bf16.mxu0 %v627
  %774 = vmatpush1.bf16.msra.mxu0 %v626
  %775 = vmatprep.subr.bf16.mxu0 %v631
  %776 = vmatpush1.bf16.msra.mxu0 %v630
  %777 = vmatprep.subr.bf16.mxu0 %v635
  %778 = vmatpush1.bf16.msra.mxu0 %v634
  %779 = vmatprep.subr.bf16.mxu0 %v639
  %780 = vmatpush1.bf16.msra.mxu0 %v638
  %781 = vmatprep.subr.bf16.mxu0 %v643
  %782 = vmatpush1.bf16.msra.mxu0 %v642
  %783 = vmatprep.mubr.bf16.mxu0 %v301
  %784 = vmatmul.mubr.bf16.gmra.mrb[0].mxu0 %v300
  %v785 = vpop.f32.mrb[0].mxu0
  %v786 = vadd.f32 %v379, %v785
  %v787 = vpop.f32.mrb[0].mxu0
  %v788 = vadd.f32 %v383, %v787
  %v789 = vpop.f32.mrb[0].mxu0
  %v790 = vadd.f32 %v379, %v789
  %v791 = vpop.f32.mrb[0].mxu0
  %v792 = vadd.f32 %v383, %v791
  %793 = vdwg.mxu0
  %vm794 = vcmp.gt.f32.partialorder %v743, 0.0
  %vm795 = vcmp.gt.f32.partialorder %v745, 0.0
  %vm796 = vcmp.gt.f32.partialorder %v786, 0.0
  %vm797 = vcmp.gt.f32.partialorder %v788, 0.0
  %vm798 = vcmp.gt.f32.partialorder %v747, 0.0
  %vm799 = vcmp.gt.f32.partialorder %v749, 0.0
  %vm800 = vcmp.gt.f32.partialorder %v790, 0.0
  %vm801 = vcmp.gt.f32.partialorder %v792, 0.0
  %v802 = vmul.f32 %v743, 0.2
  %v803 = vmul.f32 %v745, 0.2
  %v804 = vmul.f32 %v786, 0.2
  %v805 = vmul.f32 %v788, 0.2
  %v806 = vmul.f32 %v747, 0.2
  %v807 = vmul.f32 %v749, 0.2
  %v808 = vmul.f32 %v790, 0.2
  %v809 = vmul.f32 %v792, 0.2
  %v810 = vsel %vm794, %v743, %v802
  %v811 = vsel %vm795, %v745, %v803
  %v812 = vsel %vm796, %v786, %v804
  %v813 = vsel %vm797, %v788, %v805
  %v814 = vsel %vm798, %v747, %v806
  %v815 = vsel %vm799, %v749, %v807
  %v816 = vsel %vm800, %v790, %v808
  %v817 = vsel %vm801, %v792, %v809
  %v818 = vpack.c.bf16 %v814, %v810
  %v819 = vpack.c.bf16 %v815, %v811
  %v820 = vpack.c.bf16 %v816, %v812
  %v821 = vpack.c.bf16 %v817, %v813
  %v822 = vld [vmem:[%s7] sm:$0xff]
  %v823 = vld [vmem:[%s7 + $0x8] sm:$0xff]
  %v824 = vld [vmem:[%s7 + $0x10] sm:$0xff]
  %v825 = vld [vmem:[%s7 + $0x18] sm:$0xff]
  %v826 = vld [vmem:[%s7 + $0x20] sm:$0xff]
  %v827 = vld [vmem:[%s7 + $0x28] sm:$0xff]
  %v828 = vld [vmem:[%s7 + $0x30] sm:$0xff]
  %v829 = vld [vmem:[%s7 + $0x38] sm:$0xff]
  %v830 = vld [vmem:[%s7 + $0x40] sm:$0xff]
  %v831 = vld [vmem:[%s7 + $0x48] sm:$0xff]
  %v832 = vld [vmem:[%s7 + $0x50] sm:$0xff]
  %v833 = vld [vmem:[%s7 + $0x58] sm:$0xff]
  %v834 = vld [vmem:[%s7 + $0x60] sm:$0xff]
  %v835 = vld [vmem:[%s7 + $0x68] sm:$0xff]
  %v836 = vld [vmem:[%s7 + $0x70] sm:$0xff]
  %v837 = vld [vmem:[%s7 + $0x78] sm:$0xff]
  %v838 = vld [vmem:[%s7 + $0x80] sm:$0xff]
  %v839 = vld [vmem:[%s7 + $0x88] sm:$0xff]
  %v840 = vld [vmem:[%s7 + $0x90] sm:$0xff]
  %v841 = vld [vmem:[%s7 + $0x98] sm:$0xff]
  %v842 = vld [vmem:[%s7 + $0xa0] sm:$0xff]
  %v843 = vld [vmem:[%s7 + $0xa8] sm:$0xff]
  %v844 = vld [vmem:[%s7 + $0xb0] sm:$0xff]
  %v845 = vld [vmem:[%s7 + $0xb8] sm:$0xff]
  %v846 = vld [vmem:[%s7 + $0xc0] sm:$0xff]
  %v847 = vld [vmem:[%s7 + $0xc8] sm:$0xff]
  %v848 = vld [vmem:[%s7 + $0xd0] sm:$0xff]
  %v849 = vld [vmem:[%s7 + $0xd8] sm:$0xff]
  %v850 = vld [vmem:[%s7 + $0xe0] sm:$0xff]
  %v851 = vld [vmem:[%s7 + $0xe8] sm:$0xff]
  %v852 = vld [vmem:[%s7 + $0xf0] sm:$0xff]
  %v853 = vld [vmem:[%s7 + $0xf8] sm:$0xff]
  %v854 = vld [vmem:[%s7 + $0x100] sm:$0xff]
  %v855 = vld [vmem:[%s7 + $0x108] sm:$0xff]
  %v856 = vld [vmem:[%s7 + $0x110] sm:$0xff]
  %v857 = vld [vmem:[%s7 + $0x118] sm:$0xff]
  %v858 = vld [vmem:[%s7 + $0x120] sm:$0xff]
  %v859 = vld [vmem:[%s7 + $0x128] sm:$0xff]
  %v860 = vld [vmem:[%s7 + $0x130] sm:$0xff]
  %v861 = vld [vmem:[%s7 + $0x138] sm:$0xff]
  %v862 = vld [vmem:[%s7 + $0x140] sm:$0xff]
  %v863 = vld [vmem:[%s7 + $0x148] sm:$0xff]
  %v864 = vld [vmem:[%s7 + $0x150] sm:$0xff]
  %v865 = vld [vmem:[%s7 + $0x158] sm:$0xff]
  %v866 = vld [vmem:[%s7 + $0x160] sm:$0xff]
  %v867 = vld [vmem:[%s7 + $0x168] sm:$0xff]
  %v868 = vld [vmem:[%s7 + $0x170] sm:$0xff]
  %v869 = vld [vmem:[%s7 + $0x178] sm:$0xff]
  %v870 = vld [vmem:[%s7 + $0x180] sm:$0xff]
  %v871 = vld [vmem:[%s7 + $0x188] sm:$0xff]
  %v872 = vld [vmem:[%s7 + $0x190] sm:$0xff]
  %v873 = vld [vmem:[%s7 + $0x198] sm:$0xff]
  %v874 = vld [vmem:[%s7 + $0x1a0] sm:$0xff]
  %v875 = vld [vmem:[%s7 + $0x1a8] sm:$0xff]
  %v876 = vld [vmem:[%s7 + $0x1b0] sm:$0xff]
  %v877 = vld [vmem:[%s7 + $0x1b8] sm:$0xff]
  %v878 = vld [vmem:[%s7 + $0x1c0] sm:$0xff]
  %v879 = vld [vmem:[%s7 + $0x1c8] sm:$0xff]
  %v880 = vld [vmem:[%s7 + $0x1d0] sm:$0xff]
  %v881 = vld [vmem:[%s7 + $0x1d8] sm:$0xff]
  %v882 = vld [vmem:[%s7 + $0x1e0] sm:$0xff]
  %v883 = vld [vmem:[%s7 + $0x1e8] sm:$0xff]
  %v884 = vld [vmem:[%s7 + $0x1f0] sm:$0xff]
  %v885 = vld [vmem:[%s7 + $0x1f8] sm:$0xff]
  %v886 = vld [vmem:[%s7 + $0x200] sm:$0xff]
  %v887 = vld [vmem:[%s7 + $0x208] sm:$0xff]
  %v888 = vld [vmem:[%s7 + $0x210] sm:$0xff]
  %v889 = vld [vmem:[%s7 + $0x218] sm:$0xff]
  %v890 = vld [vmem:[%s7 + $0x220] sm:$0xff]
  %v891 = vld [vmem:[%s7 + $0x228] sm:$0xff]
  %v892 = vld [vmem:[%s7 + $0x230] sm:$0xff]
  %v893 = vld [vmem:[%s7 + $0x238] sm:$0xff]
  %v894 = vld [vmem:[%s7 + $0x240] sm:$0xff]
  %v895 = vld [vmem:[%s7 + $0x248] sm:$0xff]
  %v896 = vld [vmem:[%s7 + $0x250] sm:$0xff]
  %v897 = vld [vmem:[%s7 + $0x258] sm:$0xff]
  %v898 = vld [vmem:[%s7 + $0x260] sm:$0xff]
  %v899 = vld [vmem:[%s7 + $0x268] sm:$0xff]
  %v900 = vld [vmem:[%s7 + $0x270] sm:$0xff]
  %v901 = vld [vmem:[%s7 + $0x278] sm:$0xff]
  %v902 = vld [vmem:[%s7 + $0x280] sm:$0xff]
  %v903 = vld [vmem:[%s7 + $0x288] sm:$0xff]
  %v904 = vld [vmem:[%s7 + $0x290] sm:$0xff]
  %v905 = vld [vmem:[%s7 + $0x298] sm:$0xff]
  %v906 = vld [vmem:[%s7 + $0x2a0] sm:$0xff]
  %v907 = vld [vmem:[%s7 + $0x2a8] sm:$0xff]
  %v908 = vld [vmem:[%s7 + $0x2b0] sm:$0xff]
  %v909 = vld [vmem:[%s7 + $0x2b8] sm:$0xff]
  %v910 = vld [vmem:[%s7 + $0x2c0] sm:$0xff]
  %v911 = vld [vmem:[%s7 + $0x2c8] sm:$0xff]
  %v912 = vld [vmem:[%s7 + $0x2d0] sm:$0xff]
  %v913 = vld [vmem:[%s7 + $0x2d8] sm:$0xff]
  %v914 = vld [vmem:[%s7 + $0x2e0] sm:$0xff]
  %v915 = vld [vmem:[%s7 + $0x2e8] sm:$0xff]
  %v916 = vld [vmem:[%s7 + $0x2f0] sm:$0xff]
  %v917 = vld [vmem:[%s7 + $0x2f8] sm:$0xff]
  %v918 = vld [vmem:[%s7 + $0x300] sm:$0xff]
  %v919 = vld [vmem:[%s7 + $0x308] sm:$0xff]
  %v920 = vld [vmem:[%s7 + $0x310] sm:$0xff]
  %v921 = vld [vmem:[%s7 + $0x318] sm:$0xff]
  %v922 = vld [vmem:[%s7 + $0x320] sm:$0xff]
  %v923 = vld [vmem:[%s7 + $0x328] sm:$0xff]
  %v924 = vld [vmem:[%s7 + $0x330] sm:$0xff]
  %v925 = vld [vmem:[%s7 + $0x338] sm:$0xff]
  %v926 = vld [vmem:[%s7 + $0x340] sm:$0xff]
  %v927 = vld [vmem:[%s7 + $0x348] sm:$0xff]
  %v928 = vld [vmem:[%s7 + $0x350] sm:$0xff]
  %v929 = vld [vmem:[%s7 + $0x358] sm:$0xff]
  %v930 = vld [vmem:[%s7 + $0x360] sm:$0xff]
  %v931 = vld [vmem:[%s7 + $0x368] sm:$0xff]
  %v932 = vld [vmem:[%s7 + $0x370] sm:$0xff]
  %v933 = vld [vmem:[%s7 + $0x378] sm:$0xff]
  %v934 = vld [vmem:[%s7 + $0x380] sm:$0xff]
  %v935 = vld [vmem:[%s7 + $0x388] sm:$0xff]
  %v936 = vld [vmem:[%s7 + $0x390] sm:$0xff]
  %v937 = vld [vmem:[%s7 + $0x398] sm:$0xff]
  %v938 = vld [vmem:[%s7 + $0x3a0] sm:$0xff]
  %v939 = vld [vmem:[%s7 + $0x3a8] sm:$0xff]
  %v940 = vld [vmem:[%s7 + $0x3b0] sm:$0xff]
  %v941 = vld [vmem:[%s7 + $0x3b8] sm:$0xff]
  %v942 = vld [vmem:[%s7 + $0x3c0] sm:$0xff]
  %v943 = vld [vmem:[%s7 + $0x3c8] sm:$0xff]
  %v944 = vld [vmem:[%s7 + $0x3d0] sm:$0xff]
  %v945 = vld [vmem:[%s7 + $0x3d8] sm:$0xff]
  %v946 = vld [vmem:[%s7 + $0x3e0] sm:$0xff]
  %v947 = vld [vmem:[%s7 + $0x3e8] sm:$0xff]
  %v948 = vld [vmem:[%s7 + $0x3f0] sm:$0xff]
  %v949 = vld [vmem:[%s7 + $0x3f8] sm:$0xff]
  %v950 = vld [vmem:[%s7 + $0x400] sm:$0xff]
  %v951 = vld [vmem:[%s7 + $0x408] sm:$0xff]
  %v952 = vld [vmem:[%s7 + $0x410] sm:$0xff]
  %v953 = vld [vmem:[%s7 + $0x418] sm:$0xff]
  %v954 = vld [vmem:[%s7 + $0x420] sm:$0xff]
  %v955 = vld [vmem:[%s7 + $0x428] sm:$0xff]
  %v956 = vld [vmem:[%s7 + $0x430] sm:$0xff]
  %v957 = vld [vmem:[%s7 + $0x438] sm:$0xff]
  %v958 = vld [vmem:[%s7 + $0x440] sm:$0xff]
  %v959 = vld [vmem:[%s7 + $0x448] sm:$0xff]
  %v960 = vld [vmem:[%s7 + $0x450] sm:$0xff]
  %v961 = vld [vmem:[%s7 + $0x458] sm:$0xff]
  %v962 = vld [vmem:[%s7 + $0x460] sm:$0xff]
  %v963 = vld [vmem:[%s7 + $0x468] sm:$0xff]
  %v964 = vld [vmem:[%s7 + $0x470] sm:$0xff]
  %v965 = vld [vmem:[%s7 + $0x478] sm:$0xff]
  %v966 = vld [vmem:[%s7 + $0x480] sm:$0xff]
  %v967 = vld [vmem:[%s7 + $0x488] sm:$0xff]
  %v968 = vld [vmem:[%s7 + $0x490] sm:$0xff]
  %v969 = vld [vmem:[%s7 + $0x498] sm:$0xff]
  %v970 = vld [vmem:[%s7 + $0x4a0] sm:$0xff]
  %v971 = vld [vmem:[%s7 + $0x4a8] sm:$0xff]
  %v972 = vld [vmem:[%s7 + $0x4b0] sm:$0xff]
  %v973 = vld [vmem:[%s7 + $0x4b8] sm:$0xff]
  %v974 = vld [vmem:[%s7 + $0x4c0] sm:$0xff]
  %v975 = vld [vmem:[%s7 + $0x4c8] sm:$0xff]
  %v976 = vld [vmem:[%s7 + $0x4d0] sm:$0xff]
  %v977 = vld [vmem:[%s7 + $0x4d8] sm:$0xff]
  %v978 = vld [vmem:[%s7 + $0x4e0] sm:$0xff]
  %v979 = vld [vmem:[%s7 + $0x4e8] sm:$0xff]
  %v980 = vld [vmem:[%s7 + $0x4f0] sm:$0xff]
  %v981 = vld [vmem:[%s7 + $0x4f8] sm:$0xff]
  %v982 = vld [vmem:[%s7 + $0x500] sm:$0xff]
  %v983 = vld [vmem:[%s7 + $0x508] sm:$0xff]
  %v984 = vld [vmem:[%s7 + $0x510] sm:$0xff]
  %v985 = vld [vmem:[%s7 + $0x518] sm:$0xff]
  %v986 = vld [vmem:[%s7 + $0x520] sm:$0xff]
  %v987 = vld [vmem:[%s7 + $0x528] sm:$0xff]
  %v988 = vld [vmem:[%s7 + $0x530] sm:$0xff]
  %v989 = vld [vmem:[%s7 + $0x538] sm:$0xff]
  %v990 = vld [vmem:[%s7 + $0x540] sm:$0xff]
  %v991 = vld [vmem:[%s7 + $0x548] sm:$0xff]
  %v992 = vld [vmem:[%s7 + $0x550] sm:$0xff]
  %v993 = vld [vmem:[%s7 + $0x558] sm:$0xff]
  %v994 = vld [vmem:[%s7 + $0x560] sm:$0xff]
  %v995 = vld [vmem:[%s7 + $0x568] sm:$0xff]
  %v996 = vld [vmem:[%s7 + $0x570] sm:$0xff]
  %v997 = vld [vmem:[%s7 + $0x578] sm:$0xff]
  %v998 = vld [vmem:[%s7 + $0x580] sm:$0xff]
  %v999 = vld [vmem:[%s7 + $0x588] sm:$0xff]
  %v1000 = vld [vmem:[%s7 + $0x590] sm:$0xff]
  %v1001 = vld [vmem:[%s7 + $0x598] sm:$0xff]
  %v1002 = vld [vmem:[%s7 + $0x5a0] sm:$0xff]
  %v1003 = vld [vmem:[%s7 + $0x5a8] sm:$0xff]
  %v1004 = vld [vmem:[%s7 + $0x5b0] sm:$0xff]
  %v1005 = vld [vmem:[%s7 + $0x5b8] sm:$0xff]
  %v1006 = vld [vmem:[%s7 + $0x5c0] sm:$0xff]
  %v1007 = vld [vmem:[%s7 + $0x5c8] sm:$0xff]
  %v1008 = vld [vmem:[%s7 + $0x5d0] sm:$0xff]
  %v1009 = vld [vmem:[%s7 + $0x5d8] sm:$0xff]
  %v1010 = vld [vmem:[%s7 + $0x5e0] sm:$0xff]
  %v1011 = vld [vmem:[%s7 + $0x5e8] sm:$0xff]
  %v1012 = vld [vmem:[%s7 + $0x5f0] sm:$0xff]
  %v1013 = vld [vmem:[%s7 + $0x5f8] sm:$0xff]
  %v1014 = vld [vmem:[%s7 + $0x600] sm:$0xff]
  %v1015 = vld [vmem:[%s7 + $0x608] sm:$0xff]
  %v1016 = vld [vmem:[%s7 + $0x610] sm:$0xff]
  %v1017 = vld [vmem:[%s7 + $0x618] sm:$0xff]
  %v1018 = vld [vmem:[%s7 + $0x620] sm:$0xff]
  %v1019 = vld [vmem:[%s7 + $0x628] sm:$0xff]
  %v1020 = vld [vmem:[%s7 + $0x630] sm:$0xff]
  %v1021 = vld [vmem:[%s7 + $0x638] sm:$0xff]
  %v1022 = vld [vmem:[%s7 + $0x640] sm:$0xff]
  %v1023 = vld [vmem:[%s7 + $0x648] sm:$0xff]
  %v1024 = vld [vmem:[%s7 + $0x650] sm:$0xff]
  %v1025 = vld [vmem:[%s7 + $0x658] sm:$0xff]
  %v1026 = vld [vmem:[%s7 + $0x660] sm:$0xff]
  %v1027 = vld [vmem:[%s7 + $0x668] sm:$0xff]
  %v1028 = vld [vmem:[%s7 + $0x670] sm:$0xff]
  %v1029 = vld [vmem:[%s7 + $0x678] sm:$0xff]
  %v1030 = vld [vmem:[%s7 + $0x680] sm:$0xff]
  %v1031 = vld [vmem:[%s7 + $0x688] sm:$0xff]
  %v1032 = vld [vmem:[%s7 + $0x690] sm:$0xff]
  %v1033 = vld [vmem:[%s7 + $0x698] sm:$0xff]
  %v1034 = vld [vmem:[%s7 + $0x6a0] sm:$0xff]
  %v1035 = vld [vmem:[%s7 + $0x6a8] sm:$0xff]
  %v1036 = vld [vmem:[%s7 + $0x6b0] sm:$0xff]
  %v1037 = vld [vmem:[%s7 + $0x6b8] sm:$0xff]
  %v1038 = vld [vmem:[%s7 + $0x6c0] sm:$0xff]
  %v1039 = vld [vmem:[%s7 + $0x6c8] sm:$0xff]
  %v1040 = vld [vmem:[%s7 + $0x6d0] sm:$0xff]
  %v1041 = vld [vmem:[%s7 + $0x6d8] sm:$0xff]
  %v1042 = vld [vmem:[%s7 + $0x6e0] sm:$0xff]
  %v1043 = vld [vmem:[%s7 + $0x6e8] sm:$0xff]
  %v1044 = vld [vmem:[%s7 + $0x6f0] sm:$0xff]
  %v1045 = vld [vmem:[%s7 + $0x6f8] sm:$0xff]
  %v1046 = vld [vmem:[%s7 + $0x700] sm:$0xff]
  %v1047 = vld [vmem:[%s7 + $0x708] sm:$0xff]
  %v1048 = vld [vmem:[%s7 + $0x710] sm:$0xff]
  %v1049 = vld [vmem:[%s7 + $0x718] sm:$0xff]
  %v1050 = vld [vmem:[%s7 + $0x720] sm:$0xff]
  %v1051 = vld [vmem:[%s7 + $0x728] sm:$0xff]
  %v1052 = vld [vmem:[%s7 + $0x730] sm:$0xff]
  %v1053 = vld [vmem:[%s7 + $0x738] sm:$0xff]
  %v1054 = vld [vmem:[%s7 + $0x740] sm:$0xff]
  %v1055 = vld [vmem:[%s7 + $0x748] sm:$0xff]
  %v1056 = vld [vmem:[%s7 + $0x750] sm:$0xff]
  %v1057 = vld [vmem:[%s7 + $0x758] sm:$0xff]
  %v1058 = vld [vmem:[%s7 + $0x760] sm:$0xff]
  %v1059 = vld [vmem:[%s7 + $0x768] sm:$0xff]
  %v1060 = vld [vmem:[%s7 + $0x770] sm:$0xff]
  %v1061 = vld [vmem:[%s7 + $0x778] sm:$0xff]
  %v1062 = vld [vmem:[%s7 + $0x780] sm:$0xff]
  %v1063 = vld [vmem:[%s7 + $0x788] sm:$0xff]
  %v1064 = vld [vmem:[%s7 + $0x790] sm:$0xff]
  %v1065 = vld [vmem:[%s7 + $0x798] sm:$0xff]
  %v1066 = vld [vmem:[%s7 + $0x7a0] sm:$0xff]
  %v1067 = vld [vmem:[%s7 + $0x7a8] sm:$0xff]
  %v1068 = vld [vmem:[%s7 + $0x7b0] sm:$0xff]
  %v1069 = vld [vmem:[%s7 + $0x7b8] sm:$0xff]
  %v1070 = vld [vmem:[%s7 + $0x7c0] sm:$0xff]
  %v1071 = vld [vmem:[%s7 + $0x7c8] sm:$0xff]
  %v1072 = vld [vmem:[%s7 + $0x7d0] sm:$0xff]
  %v1073 = vld [vmem:[%s7 + $0x7d8] sm:$0xff]
  %v1074 = vld [vmem:[%s7 + $0x7e0] sm:$0xff]
  %v1075 = vld [vmem:[%s7 + $0x7e8] sm:$0xff]
  %v1076 = vld [vmem:[%s7 + $0x7f0] sm:$0xff]
  %v1077 = vld [vmem:[%s7 + $0x7f8] sm:$0xff]
  %v1078 = vld [vmem:[%s8] sm:$0xff]
  %v1080 = vlaneseq
  %v1081 = vshrl.u32 %v1080, 7
  %v1082 = vsub.s32 0, %v1081
  %v1083 = vrot.slane %v1078, %v1082
  %v1084 = vlaneseq
  %v1085 = vshrl.u32 %v1084, 7
  %v1086 = vsub.s32 1, %v1085
  %v1087 = vrot.slane %v1078, %v1086
  %v1088 = vlaneseq
  %v1089 = vshrl.u32 %v1088, 7
  %v1090 = vsub.s32 2, %v1089
  %v1091 = vrot.slane %v1078, %v1090
  %v1092 = vlaneseq
  %v1093 = vshrl.u32 %v1092, 7
  %v1094 = vsub.s32 3, %v1093
  %v1095 = vrot.slane %v1078, %v1094
  %v1096 = vlaneseq
  %v1097 = vshrl.u32 %v1096, 7
  %v1098 = vsub.s32 4, %v1097
  %v1099 = vrot.slane %v1078, %v1098
  %v1100 = vlaneseq
  %v1101 = vshrl.u32 %v1100, 7
  %v1102 = vsub.s32 5, %v1101
  %v1103 = vrot.slane %v1078, %v1102
  %v1104 = vlaneseq
  %v1105 = vshrl.u32 %v1104, 7
  %v1106 = vsub.s32 6, %v1105
  %v1107 = vrot.slane %v1078, %v1106
  %v1108 = vlaneseq
  %v1109 = vshrl.u32 %v1108, 7
  %v1110 = vsub.s32 7, %v1109
  %v1111 = vrot.slane %v1078, %v1110
  %v1376 = vunpack.c.l.b16 %v822
  %v1377 = vunpack.c.h.b16 %v822
  %v1378 = vunpack.c.l.b16 %v823
  %v1379 = vunpack.c.h.b16 %v823
  %v1380 = vunpack.c.l.b16 %v824
  %v1381 = vunpack.c.h.b16 %v824
  %v1382 = vunpack.c.l.b16 %v825
  %v1383 = vunpack.c.h.b16 %v825
  %v1384 = vunpack.c.l.b16 %v826
  %v1385 = vunpack.c.h.b16 %v826
  %v1386 = vunpack.c.l.b16 %v827
  %v1387 = vunpack.c.h.b16 %v827
  %v1388 = vunpack.c.l.b16 %v828
  %v1389 = vunpack.c.h.b16 %v828
  %v1390 = vunpack.c.l.b16 %v829
  %v1391 = vunpack.c.h.b16 %v829
  %v1392 = vunpack.c.l.b16 %v830
  %v1393 = vunpack.c.h.b16 %v830
  %v1394 = vunpack.c.l.b16 %v831
  %v1395 = vunpack.c.h.b16 %v831
  %v1396 = vunpack.c.l.b16 %v832
  %v1397 = vunpack.c.h.b16 %v832
  %v1398 = vunpack.c.l.b16 %v833
  %v1399 = vunpack.c.h.b16 %v833
  %v1400 = vunpack.c.l.b16 %v834
  %v1401 = vunpack.c.h.b16 %v834
  %v1402 = vunpack.c.l.b16 %v835
  %v1403 = vunpack.c.h.b16 %v835
  %v1404 = vunpack.c.l.b16 %v836
  %v1405 = vunpack.c.h.b16 %v836
  %v1406 = vunpack.c.l.b16 %v837
  %v1407 = vunpack.c.h.b16 %v837
  %v1408 = vunpack.c.l.b16 %v838
  %v1409 = vunpack.c.h.b16 %v838
  %v1410 = vunpack.c.l.b16 %v839
  %v1411 = vunpack.c.h.b16 %v839
  %v1412 = vunpack.c.l.b16 %v840
  %v1413 = vunpack.c.h.b16 %v840
  %v1414 = vunpack.c.l.b16 %v841
  %v1415 = vunpack.c.h.b16 %v841
  %v1416 = vunpack.c.l.b16 %v842
  %v1417 = vunpack.c.h.b16 %v842
  %v1418 = vunpack.c.l.b16 %v843
  %v1419 = vunpack.c.h.b16 %v843
  %v1420 = vunpack.c.l.b16 %v844
  %v1421 = vunpack.c.h.b16 %v844
  %v1422 = vunpack.c.l.b16 %v845
  %v1423 = vunpack.c.h.b16 %v845
  %v1424 = vunpack.c.l.b16 %v846
  %v1425 = vunpack.c.h.b16 %v846
  %v1426 = vunpack.c.l.b16 %v847
  %v1427 = vunpack.c.h.b16 %v847
  %v1428 = vunpack.c.l.b16 %v848
  %v1429 = vunpack.c.h.b16 %v848
  %v1430 = vunpack.c.l.b16 %v849
  %v1431 = vunpack.c.h.b16 %v849
  %v1432 = vunpack.c.l.b16 %v850
  %v1433 = vunpack.c.h.b16 %v850
  %v1434 = vunpack.c.l.b16 %v851
  %v1435 = vunpack.c.h.b16 %v851
  %v1436 = vunpack.c.l.b16 %v852
  %v1437 = vunpack.c.h.b16 %v852
  %v1438 = vunpack.c.l.b16 %v853
  %v1439 = vunpack.c.h.b16 %v853
  %v1440 = vunpack.c.l.b16 %v854
  %v1441 = vunpack.c.h.b16 %v854
  %v1442 = vunpack.c.l.b16 %v855
  %v1443 = vunpack.c.h.b16 %v855
  %v1444 = vunpack.c.l.b16 %v856
  %v1445 = vunpack.c.h.b16 %v856
  %v1446 = vunpack.c.l.b16 %v857
  %v1447 = vunpack.c.h.b16 %v857
  %v1448 = vunpack.c.l.b16 %v858
  %v1449 = vunpack.c.h.b16 %v858
  %v1450 = vunpack.c.l.b16 %v859
  %v1451 = vunpack.c.h.b16 %v859
  %v1452 = vunpack.c.l.b16 %v860
  %v1453 = vunpack.c.h.b16 %v860
  %v1454 = vunpack.c.l.b16 %v861
  %v1455 = vunpack.c.h.b16 %v861
  %v1456 = vunpack.c.l.b16 %v862
  %v1457 = vunpack.c.h.b16 %v862
  %v1458 = vunpack.c.l.b16 %v863
  %v1459 = vunpack.c.h.b16 %v863
  %v1460 = vunpack.c.l.b16 %v864
  %v1461 = vunpack.c.h.b16 %v864
  %v1462 = vunpack.c.l.b16 %v865
  %v1463 = vunpack.c.h.b16 %v865
  %v1464 = vunpack.c.l.b16 %v866
  %v1465 = vunpack.c.h.b16 %v866
  %v1466 = vunpack.c.l.b16 %v867
  %v1467 = vunpack.c.h.b16 %v867
  %v1468 = vunpack.c.l.b16 %v868
  %v1469 = vunpack.c.h.b16 %v868
  %v1470 = vunpack.c.l.b16 %v869
  %v1471 = vunpack.c.h.b16 %v869
  %v1472 = vunpack.c.l.b16 %v870
  %v1473 = vunpack.c.h.b16 %v870
  %v1474 = vunpack.c.l.b16 %v871
  %v1475 = vunpack.c.h.b16 %v871
  %v1476 = vunpack.c.l.b16 %v872
  %v1477 = vunpack.c.h.b16 %v872
  %v1478 = vunpack.c.l.b16 %v873
  %v1479 = vunpack.c.h.b16 %v873
  %v1480 = vunpack.c.l.b16 %v874
  %v1481 = vunpack.c.h.b16 %v874
  %v1482 = vunpack.c.l.b16 %v875
  %v1483 = vunpack.c.h.b16 %v875
  %v1484 = vunpack.c.l.b16 %v876
  %v1485 = vunpack.c.h.b16 %v876
  %v1486 = vunpack.c.l.b16 %v877
  %v1487 = vunpack.c.h.b16 %v877
  %v1488 = vunpack.c.l.b16 %v878
  %v1489 = vunpack.c.h.b16 %v878
  %v1490 = vunpack.c.l.b16 %v879
  %v1491 = vunpack.c.h.b16 %v879
  %v1492 = vunpack.c.l.b16 %v880
  %v1493 = vunpack.c.h.b16 %v880
  %v1494 = vunpack.c.l.b16 %v881
  %v1495 = vunpack.c.h.b16 %v881
  %v1496 = vunpack.c.l.b16 %v882
  %v1497 = vunpack.c.h.b16 %v882
  %v1498 = vunpack.c.l.b16 %v883
  %v1499 = vunpack.c.h.b16 %v883
  %v1500 = vunpack.c.l.b16 %v884
  %v1501 = vunpack.c.h.b16 %v884
  %v1502 = vunpack.c.l.b16 %v885
  %v1503 = vunpack.c.h.b16 %v885
  %v1504 = vunpack.c.l.b16 %v886
  %v1505 = vunpack.c.h.b16 %v886
  %v1506 = vunpack.c.l.b16 %v887
  %v1507 = vunpack.c.h.b16 %v887
  %v1508 = vunpack.c.l.b16 %v888
  %v1509 = vunpack.c.h.b16 %v888
  %v1510 = vunpack.c.l.b16 %v889
  %v1511 = vunpack.c.h.b16 %v889
  %v1512 = vunpack.c.l.b16 %v890
  %v1513 = vunpack.c.h.b16 %v890
  %v1514 = vunpack.c.l.b16 %v891
  %v1515 = vunpack.c.h.b16 %v891
  %v1516 = vunpack.c.l.b16 %v892
  %v1517 = vunpack.c.h.b16 %v892
  %v1518 = vunpack.c.l.b16 %v893
  %v1519 = vunpack.c.h.b16 %v893
  %v1520 = vunpack.c.l.b16 %v894
  %v1521 = vunpack.c.h.b16 %v894
  %v1522 = vunpack.c.l.b16 %v895
  %v1523 = vunpack.c.h.b16 %v895
  %v1524 = vunpack.c.l.b16 %v896
  %v1525 = vunpack.c.h.b16 %v896
  %v1526 = vunpack.c.l.b16 %v897
  %v1527 = vunpack.c.h.b16 %v897
  %v1528 = vunpack.c.l.b16 %v898
  %v1529 = vunpack.c.h.b16 %v898
  %v1530 = vunpack.c.l.b16 %v899
  %v1531 = vunpack.c.h.b16 %v899
  %v1532 = vunpack.c.l.b16 %v900
  %v1533 = vunpack.c.h.b16 %v900
  %v1534 = vunpack.c.l.b16 %v901
  %v1535 = vunpack.c.h.b16 %v901
  %v1536 = vunpack.c.l.b16 %v902
  %v1537 = vunpack.c.h.b16 %v902
  %v1538 = vunpack.c.l.b16 %v903
  %v1539 = vunpack.c.h.b16 %v903
  %v1540 = vunpack.c.l.b16 %v904
  %v1541 = vunpack.c.h.b16 %v904
  %v1542 = vunpack.c.l.b16 %v905
  %v1543 = vunpack.c.h.b16 %v905
  %v1544 = vunpack.c.l.b16 %v906
  %v1545 = vunpack.c.h.b16 %v906
  %v1546 = vunpack.c.l.b16 %v907
  %v1547 = vunpack.c.h.b16 %v907
  %v1548 = vunpack.c.l.b16 %v908
  %v1549 = vunpack.c.h.b16 %v908
  %v1550 = vunpack.c.l.b16 %v909
  %v1551 = vunpack.c.h.b16 %v909
  %v1552 = vunpack.c.l.b16 %v910
  %v1553 = vunpack.c.h.b16 %v910
  %v1554 = vunpack.c.l.b16 %v911
  %v1555 = vunpack.c.h.b16 %v911
  %v1556 = vunpack.c.l.b16 %v912
  %v1557 = vunpack.c.h.b16 %v912
  %v1558 = vunpack.c.l.b16 %v913
  %v1559 = vunpack.c.h.b16 %v913
  %v1560 = vunpack.c.l.b16 %v914
  %v1561 = vunpack.c.h.b16 %v914
  %v1562 = vunpack.c.l.b16 %v915
  %v1563 = vunpack.c.h.b16 %v915
  %v1564 = vunpack.c.l.b16 %v916
  %v1565 = vunpack.c.h.b16 %v916
  %v1566 = vunpack.c.l.b16 %v917
  %v1567 = vunpack.c.h.b16 %v917
  %v1568 = vunpack.c.l.b16 %v918
  %v1569 = vunpack.c.h.b16 %v918
  %v1570 = vunpack.c.l.b16 %v919
  %v1571 = vunpack.c.h.b16 %v919
  %v1572 = vunpack.c.l.b16 %v920
  %v1573 = vunpack.c.h.b16 %v920
  %v1574 = vunpack.c.l.b16 %v921
  %v1575 = vunpack.c.h.b16 %v921
  %v1576 = vunpack.c.l.b16 %v922
  %v1577 = vunpack.c.h.b16 %v922
  %v1578 = vunpack.c.l.b16 %v923
  %v1579 = vunpack.c.h.b16 %v923
  %v1580 = vunpack.c.l.b16 %v924
  %v1581 = vunpack.c.h.b16 %v924
  %v1582 = vunpack.c.l.b16 %v925
  %v1583 = vunpack.c.h.b16 %v925
  %v1584 = vunpack.c.l.b16 %v926
  %v1585 = vunpack.c.h.b16 %v926
  %v1586 = vunpack.c.l.b16 %v927
  %v1587 = vunpack.c.h.b16 %v927
  %v1588 = vunpack.c.l.b16 %v928
  %v1589 = vunpack.c.h.b16 %v928
  %v1590 = vunpack.c.l.b16 %v929
  %v1591 = vunpack.c.h.b16 %v929
  %v1592 = vunpack.c.l.b16 %v930
  %v1593 = vunpack.c.h.b16 %v930
  %v1594 = vunpack.c.l.b16 %v931
  %v1595 = vunpack.c.h.b16 %v931
  %v1596 = vunpack.c.l.b16 %v932
  %v1597 = vunpack.c.h.b16 %v932
  %v1598 = vunpack.c.l.b16 %v933
  %v1599 = vunpack.c.h.b16 %v933
  %v1600 = vunpack.c.l.b16 %v934
  %v1601 = vunpack.c.h.b16 %v934
  %v1602 = vunpack.c.l.b16 %v935
  %v1603 = vunpack.c.h.b16 %v935
  %v1604 = vunpack.c.l.b16 %v936
  %v1605 = vunpack.c.h.b16 %v936
  %v1606 = vunpack.c.l.b16 %v937
  %v1607 = vunpack.c.h.b16 %v937
  %v1608 = vunpack.c.l.b16 %v938
  %v1609 = vunpack.c.h.b16 %v938
  %v1610 = vunpack.c.l.b16 %v939
  %v1611 = vunpack.c.h.b16 %v939
  %v1612 = vunpack.c.l.b16 %v940
  %v1613 = vunpack.c.h.b16 %v940
  %v1614 = vunpack.c.l.b16 %v941
  %v1615 = vunpack.c.h.b16 %v941
  %v1616 = vunpack.c.l.b16 %v942
  %v1617 = vunpack.c.h.b16 %v942
  %v1618 = vunpack.c.l.b16 %v943
  %v1619 = vunpack.c.h.b16 %v943
  %v1620 = vunpack.c.l.b16 %v944
  %v1621 = vunpack.c.h.b16 %v944
  %v1622 = vunpack.c.l.b16 %v945
  %v1623 = vunpack.c.h.b16 %v945
  %v1624 = vunpack.c.l.b16 %v946
  %v1625 = vunpack.c.h.b16 %v946
  %v1626 = vunpack.c.l.b16 %v947
  %v1627 = vunpack.c.h.b16 %v947
  %v1628 = vunpack.c.l.b16 %v948
  %v1629 = vunpack.c.h.b16 %v948
  %v1630 = vunpack.c.l.b16 %v949
  %v1631 = vunpack.c.h.b16 %v949
  %v1632 = vunpack.c.l.b16 %v950
  %v1633 = vunpack.c.h.b16 %v950
  %v1634 = vunpack.c.l.b16 %v951
  %v1635 = vunpack.c.h.b16 %v951
  %v1636 = vunpack.c.l.b16 %v952
  %v1637 = vunpack.c.h.b16 %v952
  %v1638 = vunpack.c.l.b16 %v953
  %v1639 = vunpack.c.h.b16 %v953
  %v1640 = vunpack.c.l.b16 %v954
  %v1641 = vunpack.c.h.b16 %v954
  %v1642 = vunpack.c.l.b16 %v955
  %v1643 = vunpack.c.h.b16 %v955
  %v1644 = vunpack.c.l.b16 %v956
  %v1645 = vunpack.c.h.b16 %v956
  %v1646 = vunpack.c.l.b16 %v957
  %v1647 = vunpack.c.h.b16 %v957
  %v1648 = vunpack.c.l.b16 %v958
  %v1649 = vunpack.c.h.b16 %v958
  %v1650 = vunpack.c.l.b16 %v959
  %v1651 = vunpack.c.h.b16 %v959
  %v1652 = vunpack.c.l.b16 %v960
  %v1653 = vunpack.c.h.b16 %v960
  %v1654 = vunpack.c.l.b16 %v961
  %v1655 = vunpack.c.h.b16 %v961
  %v1656 = vunpack.c.l.b16 %v962
  %v1657 = vunpack.c.h.b16 %v962
  %v1658 = vunpack.c.l.b16 %v963
  %v1659 = vunpack.c.h.b16 %v963
  %v1660 = vunpack.c.l.b16 %v964
  %v1661 = vunpack.c.h.b16 %v964
  %v1662 = vunpack.c.l.b16 %v965
  %v1663 = vunpack.c.h.b16 %v965
  %v1664 = vunpack.c.l.b16 %v966
  %v1665 = vunpack.c.h.b16 %v966
  %v1666 = vunpack.c.l.b16 %v967
  %v1667 = vunpack.c.h.b16 %v967
  %v1668 = vunpack.c.l.b16 %v968
  %v1669 = vunpack.c.h.b16 %v968
  %v1670 = vunpack.c.l.b16 %v969
  %v1671 = vunpack.c.h.b16 %v969
  %v1672 = vunpack.c.l.b16 %v970
  %v1673 = vunpack.c.h.b16 %v970
  %v1674 = vunpack.c.l.b16 %v971
  %v1675 = vunpack.c.h.b16 %v971
  %v1676 = vunpack.c.l.b16 %v972
  %v1677 = vunpack.c.h.b16 %v972
  %v1678 = vunpack.c.l.b16 %v973
  %v1679 = vunpack.c.h.b16 %v973
  %v1680 = vunpack.c.l.b16 %v974
  %v1681 = vunpack.c.h.b16 %v974
  %v1682 = vunpack.c.l.b16 %v975
  %v1683 = vunpack.c.h.b16 %v975
  %v1684 = vunpack.c.l.b16 %v976
  %v1685 = vunpack.c.h.b16 %v976
  %v1686 = vunpack.c.l.b16 %v977
  %v1687 = vunpack.c.h.b16 %v977
  %v1688 = vunpack.c.l.b16 %v978
  %v1689 = vunpack.c.h.b16 %v978
  %v1690 = vunpack.c.l.b16 %v979
  %v1691 = vunpack.c.h.b16 %v979
  %v1692 = vunpack.c.l.b16 %v980
  %v1693 = vunpack.c.h.b16 %v980
  %v1694 = vunpack.c.l.b16 %v981
  %v1695 = vunpack.c.h.b16 %v981
  %v1696 = vunpack.c.l.b16 %v982
  %v1697 = vunpack.c.h.b16 %v982
  %v1698 = vunpack.c.l.b16 %v983
  %v1699 = vunpack.c.h.b16 %v983
  %v1700 = vunpack.c.l.b16 %v984
  %v1701 = vunpack.c.h.b16 %v984
  %v1702 = vunpack.c.l.b16 %v985
  %v1703 = vunpack.c.h.b16 %v985
  %v1704 = vunpack.c.l.b16 %v986
  %v1705 = vunpack.c.h.b16 %v986
  %v1706 = vunpack.c.l.b16 %v987
  %v1707 = vunpack.c.h.b16 %v987
  %v1708 = vunpack.c.l.b16 %v988
  %v1709 = vunpack.c.h.b16 %v988
  %v1710 = vunpack.c.l.b16 %v989
  %v1711 = vunpack.c.h.b16 %v989
  %v1712 = vunpack.c.l.b16 %v990
  %v1713 = vunpack.c.h.b16 %v990
  %v1714 = vunpack.c.l.b16 %v991
  %v1715 = vunpack.c.h.b16 %v991
  %v1716 = vunpack.c.l.b16 %v992
  %v1717 = vunpack.c.h.b16 %v992
  %v1718 = vunpack.c.l.b16 %v993
  %v1719 = vunpack.c.h.b16 %v993
  %v1720 = vunpack.c.l.b16 %v994
  %v1721 = vunpack.c.h.b16 %v994
  %v1722 = vunpack.c.l.b16 %v995
  %v1723 = vunpack.c.h.b16 %v995
  %v1724 = vunpack.c.l.b16 %v996
  %v1725 = vunpack.c.h.b16 %v996
  %v1726 = vunpack.c.l.b16 %v997
  %v1727 = vunpack.c.h.b16 %v997
  %v1728 = vunpack.c.l.b16 %v998
  %v1729 = vunpack.c.h.b16 %v998
  %v1730 = vunpack.c.l.b16 %v999
  %v1731 = vunpack.c.h.b16 %v999
  %v1732 = vunpack.c.l.b16 %v1000
  %v1733 = vunpack.c.h.b16 %v1000
  %v1734 = vunpack.c.l.b16 %v1001
  %v1735 = vunpack.c.h.b16 %v1001
  %v1736 = vunpack.c.l.b16 %v1002
  %v1737 = vunpack.c.h.b16 %v1002
  %v1738 = vunpack.c.l.b16 %v1003
  %v1739 = vunpack.c.h.b16 %v1003
  %v1740 = vunpack.c.l.b16 %v1004
  %v1741 = vunpack.c.h.b16 %v1004
  %v1742 = vunpack.c.l.b16 %v1005
  %v1743 = vunpack.c.h.b16 %v1005
  %v1744 = vunpack.c.l.b16 %v1006
  %v1745 = vunpack.c.h.b16 %v1006
  %v1746 = vunpack.c.l.b16 %v1007
  %v1747 = vunpack.c.h.b16 %v1007
  %v1748 = vunpack.c.l.b16 %v1008
  %v1749 = vunpack.c.h.b16 %v1008
  %v1750 = vunpack.c.l.b16 %v1009
  %v1751 = vunpack.c.h.b16 %v1009
  %v1752 = vunpack.c.l.b16 %v1010
  %v1753 = vunpack.c.h.b16 %v1010
  %v1754 = vunpack.c.l.b16 %v1011
  %v1755 = vunpack.c.h.b16 %v1011
  %v1756 = vunpack.c.l.b16 %v1012
  %v1757 = vunpack.c.h.b16 %v1012
  %v1758 = vunpack.c.l.b16 %v1013
  %v1759 = vunpack.c.h.b16 %v1013
  %v1760 = vunpack.c.l.b16 %v1014
  %v1761 = vunpack.c.h.b16 %v1014
  %v1762 = vunpack.c.l.b16 %v1015
  %v1763 = vunpack.c.h.b16 %v1015
  %v1764 = vunpack.c.l.b16 %v1016
  %v1765 = vunpack.c.h.b16 %v1016
  %v1766 = vunpack.c.l.b16 %v1017
  %v1767 = vunpack.c.h.b16 %v1017
  %v1768 = vunpack.c.l.b16 %v1018
  %v1769 = vunpack.c.h.b16 %v1018
  %v1770 = vunpack.c.l.b16 %v1019
  %v1771 = vunpack.c.h.b16 %v1019
  %v1772 = vunpack.c.l.b16 %v1020
  %v1773 = vunpack.c.h.b16 %v1020
  %v1774 = vunpack.c.l.b16 %v1021
  %v1775 = vunpack.c.h.b16 %v1021
  %v1776 = vunpack.c.l.b16 %v1022
  %v1777 = vunpack.c.h.b16 %v1022
  %v1778 = vunpack.c.l.b16 %v1023
  %v1779 = vunpack.c.h.b16 %v1023
  %v1780 = vunpack.c.l.b16 %v1024
  %v1781 = vunpack.c.h.b16 %v1024
  %v1782 = vunpack.c.l.b16 %v1025
  %v1783 = vunpack.c.h.b16 %v1025
  %v1784 = vunpack.c.l.b16 %v1026
  %v1785 = vunpack.c.h.b16 %v1026
  %v1786 = vunpack.c.l.b16 %v1027
  %v1787 = vunpack.c.h.b16 %v1027
  %v1788 = vunpack.c.l.b16 %v1028
  %v1789 = vunpack.c.h.b16 %v1028
  %v1790 = vunpack.c.l.b16 %v1029
  %v1791 = vunpack.c.h.b16 %v1029
  %v1792 = vunpack.c.l.b16 %v1030
  %v1793 = vunpack.c.h.b16 %v1030
  %v1794 = vunpack.c.l.b16 %v1031
  %v1795 = vunpack.c.h.b16 %v1031
  %v1796 = vunpack.c.l.b16 %v1032
  %v1797 = vunpack.c.h.b16 %v1032
  %v1798 = vunpack.c.l.b16 %v1033
  %v1799 = vunpack.c.h.b16 %v1033
  %v1800 = vunpack.c.l.b16 %v1034
  %v1801 = vunpack.c.h.b16 %v1034
  %v1802 = vunpack.c.l.b16 %v1035
  %v1803 = vunpack.c.h.b16 %v1035
  %v1804 = vunpack.c.l.b16 %v1036
  %v1805 = vunpack.c.h.b16 %v1036
  %v1806 = vunpack.c.l.b16 %v1037
  %v1807 = vunpack.c.h.b16 %v1037
  %v1808 = vunpack.c.l.b16 %v1038
  %v1809 = vunpack.c.h.b16 %v1038
  %v1810 = vunpack.c.l.b16 %v1039
  %v1811 = vunpack.c.h.b16 %v1039
  %v1812 = vunpack.c.l.b16 %v1040
  %v1813 = vunpack.c.h.b16 %v1040
  %v1814 = vunpack.c.l.b16 %v1041
  %v1815 = vunpack.c.h.b16 %v1041
  %v1816 = vunpack.c.l.b16 %v1042
  %v1817 = vunpack.c.h.b16 %v1042
  %v1818 = vunpack.c.l.b16 %v1043
  %v1819 = vunpack.c.h.b16 %v1043
  %v1820 = vunpack.c.l.b16 %v1044
  %v1821 = vunpack.c.h.b16 %v1044
  %v1822 = vunpack.c.l.b16 %v1045
  %v1823 = vunpack.c.h.b16 %v1045
  %v1824 = vunpack.c.l.b16 %v1046
  %v1825 = vunpack.c.h.b16 %v1046
  %v1826 = vunpack.c.l.b16 %v1047
  %v1827 = vunpack.c.h.b16 %v1047
  %v1828 = vunpack.c.l.b16 %v1048
  %v1829 = vunpack.c.h.b16 %v1048
  %v1830 = vunpack.c.l.b16 %v1049
  %v1831 = vunpack.c.h.b16 %v1049
  %v1832 = vunpack.c.l.b16 %v1050
  %v1833 = vunpack.c.h.b16 %v1050
  %v1834 = vunpack.c.l.b16 %v1051
  %v1835 = vunpack.c.h.b16 %v1051
  %v1836 = vunpack.c.l.b16 %v1052
  %v1837 = vunpack.c.h.b16 %v1052
  %v1838 = vunpack.c.l.b16 %v1053
  %v1839 = vunpack.c.h.b16 %v1053
  %v1840 = vunpack.c.l.b16 %v1054
  %v1841 = vunpack.c.h.b16 %v1054
  %v1842 = vunpack.c.l.b16 %v1055
  %v1843 = vunpack.c.h.b16 %v1055
  %v1844 = vunpack.c.l.b16 %v1056
  %v1845 = vunpack.c.h.b16 %v1056
  %v1846 = vunpack.c.l.b16 %v1057
  %v1847 = vunpack.c.h.b16 %v1057
  %v1848 = vunpack.c.l.b16 %v1058
  %v1849 = vunpack.c.h.b16 %v1058
  %v1850 = vunpack.c.l.b16 %v1059
  %v1851 = vunpack.c.h.b16 %v1059
  %v1852 = vunpack.c.l.b16 %v1060
  %v1853 = vunpack.c.h.b16 %v1060
  %v1854 = vunpack.c.l.b16 %v1061
  %v1855 = vunpack.c.h.b16 %v1061
  %v1856 = vunpack.c.l.b16 %v1062
  %v1857 = vunpack.c.h.b16 %v1062
  %v1858 = vunpack.c.l.b16 %v1063
  %v1859 = vunpack.c.h.b16 %v1063
  %v1860 = vunpack.c.l.b16 %v1064
  %v1861 = vunpack.c.h.b16 %v1064
  %v1862 = vunpack.c.l.b16 %v1065
  %v1863 = vunpack.c.h.b16 %v1065
  %v1864 = vunpack.c.l.b16 %v1066
  %v1865 = vunpack.c.h.b16 %v1066
  %v1866 = vunpack.c.l.b16 %v1067
  %v1867 = vunpack.c.h.b16 %v1067
  %v1868 = vunpack.c.l.b16 %v1068
  %v1869 = vunpack.c.h.b16 %v1068
  %v1870 = vunpack.c.l.b16 %v1069
  %v1871 = vunpack.c.h.b16 %v1069
  %v1872 = vunpack.c.l.b16 %v1070
  %v1873 = vunpack.c.h.b16 %v1070
  %v1874 = vunpack.c.l.b16 %v1071
  %v1875 = vunpack.c.h.b16 %v1071
  %v1876 = vunpack.c.l.b16 %v1072
  %v1877 = vunpack.c.h.b16 %v1072
  %v1878 = vunpack.c.l.b16 %v1073
  %v1879 = vunpack.c.h.b16 %v1073
  %v1880 = vunpack.c.l.b16 %v1074
  %v1881 = vunpack.c.h.b16 %v1074
  %v1882 = vunpack.c.l.b16 %v1075
  %v1883 = vunpack.c.h.b16 %v1075
  %v1884 = vunpack.c.l.b16 %v1076
  %v1885 = vunpack.c.h.b16 %v1076
  %v1886 = vunpack.c.l.b16 %v1077
  %v1887 = vunpack.c.h.b16 %v1077
  %v1888 = vpack.c.b16 %v1384, %v1376
  %v1889 = vpack.c.b16 %v1385, %v1377
  %v1890 = vpack.c.b16 %v1386, %v1378
  %v1891 = vpack.c.b16 %v1387, %v1379
  %v1892 = vpack.c.b16 %v1388, %v1380
  %v1893 = vpack.c.b16 %v1389, %v1381
  %v1894 = vpack.c.b16 %v1390, %v1382
  %v1895 = vpack.c.b16 %v1391, %v1383
  %v1896 = vpack.c.b16 %v1400, %v1392
  %v1897 = vpack.c.b16 %v1401, %v1393
  %v1898 = vpack.c.b16 %v1402, %v1394
  %v1899 = vpack.c.b16 %v1403, %v1395
  %v1900 = vpack.c.b16 %v1404, %v1396
  %v1901 = vpack.c.b16 %v1405, %v1397
  %v1902 = vpack.c.b16 %v1406, %v1398
  %v1903 = vpack.c.b16 %v1407, %v1399
  %v1904 = vpack.c.b16 %v1416, %v1408
  %v1905 = vpack.c.b16 %v1417, %v1409
  %v1906 = vpack.c.b16 %v1418, %v1410
  %v1907 = vpack.c.b16 %v1419, %v1411
  %v1908 = vpack.c.b16 %v1420, %v1412
  %v1909 = vpack.c.b16 %v1421, %v1413
  %v1910 = vpack.c.b16 %v1422, %v1414
  %v1911 = vpack.c.b16 %v1423, %v1415
  %v1912 = vpack.c.b16 %v1432, %v1424
  %v1913 = vpack.c.b16 %v1433, %v1425
  %v1914 = vpack.c.b16 %v1434, %v1426
  %v1915 = vpack.c.b16 %v1435, %v1427
  %v1916 = vpack.c.b16 %v1436, %v1428
  %v1917 = vpack.c.b16 %v1437, %v1429
  %v1918 = vpack.c.b16 %v1438, %v1430
  %v1919 = vpack.c.b16 %v1439, %v1431
  %v1920 = vpack.c.b16 %v1448, %v1440
  %v1921 = vpack.c.b16 %v1449, %v1441
  %v1922 = vpack.c.b16 %v1450, %v1442
  %v1923 = vpack.c.b16 %v1451, %v1443
  %v1924 = vpack.c.b16 %v1452, %v1444
  %v1925 = vpack.c.b16 %v1453, %v1445
  %v1926 = vpack.c.b16 %v1454, %v1446
  %v1927 = vpack.c.b16 %v1455, %v1447
  %v1928 = vpack.c.b16 %v1464, %v1456
  %v1929 = vpack.c.b16 %v1465, %v1457
  %v1930 = vpack.c.b16 %v1466, %v1458
  %v1931 = vpack.c.b16 %v1467, %v1459
  %v1932 = vpack.c.b16 %v1468, %v1460
  %v1933 = vpack.c.b16 %v1469, %v1461
  %v1934 = vpack.c.b16 %v1470, %v1462
  %v1935 = vpack.c.b16 %v1471, %v1463
  %v1936 = vpack.c.b16 %v1480, %v1472
  %v1937 = vpack.c.b16 %v1481, %v1473
  %v1938 = vpack.c.b16 %v1482, %v1474
  %v1939 = vpack.c.b16 %v1483, %v1475
  %v1940 = vpack.c.b16 %v1484, %v1476
  %v1941 = vpack.c.b16 %v1485, %v1477
  %v1942 = vpack.c.b16 %v1486, %v1478
  %v1943 = vpack.c.b16 %v1487, %v1479
  %v1944 = vpack.c.b16 %v1496, %v1488
  %v1945 = vpack.c.b16 %v1497, %v1489
  %v1946 = vpack.c.b16 %v1498, %v1490
  %v1947 = vpack.c.b16 %v1499, %v1491
  %v1948 = vpack.c.b16 %v1500, %v1492
  %v1949 = vpack.c.b16 %v1501, %v1493
  %v1950 = vpack.c.b16 %v1502, %v1494
  %v1951 = vpack.c.b16 %v1503, %v1495
  %v1952 = vpack.c.b16 %v1512, %v1504
  %v1953 = vpack.c.b16 %v1513, %v1505
  %v1954 = vpack.c.b16 %v1514, %v1506
  %v1955 = vpack.c.b16 %v1515, %v1507
  %v1956 = vpack.c.b16 %v1516, %v1508
  %v1957 = vpack.c.b16 %v1517, %v1509
  %v1958 = vpack.c.b16 %v1518, %v1510
  %v1959 = vpack.c.b16 %v1519, %v1511
  %v1960 = vpack.c.b16 %v1528, %v1520
  %v1961 = vpack.c.b16 %v1529, %v1521
  %v1962 = vpack.c.b16 %v1530, %v1522
  %v1963 = vpack.c.b16 %v1531, %v1523
  %v1964 = vpack.c.b16 %v1532, %v1524
  %v1965 = vpack.c.b16 %v1533, %v1525
  %v1966 = vpack.c.b16 %v1534, %v1526
  %v1967 = vpack.c.b16 %v1535, %v1527
  %v1968 = vpack.c.b16 %v1544, %v1536
  %v1969 = vpack.c.b16 %v1545, %v1537
  %v1970 = vpack.c.b16 %v1546, %v1538
  %v1971 = vpack.c.b16 %v1547, %v1539
  %v1972 = vpack.c.b16 %v1548, %v1540
  %v1973 = vpack.c.b16 %v1549, %v1541
  %v1974 = vpack.c.b16 %v1550, %v1542
  %v1975 = vpack.c.b16 %v1551, %v1543
  %v1976 = vpack.c.b16 %v1560, %v1552
  %v1977 = vpack.c.b16 %v1561, %v1553
  %v1978 = vpack.c.b16 %v1562, %v1554
  %v1979 = vpack.c.b16 %v1563, %v1555
  %v1980 = vpack.c.b16 %v1564, %v1556
  %v1981 = vpack.c.b16 %v1565, %v1557
  %v1982 = vpack.c.b16 %v1566, %v1558
  %v1983 = vpack.c.b16 %v1567, %v1559
  %v1984 = vpack.c.b16 %v1576, %v1568
  %v1985 = vpack.c.b16 %v1577, %v1569
  %v1986 = vpack.c.b16 %v1578, %v1570
  %v1987 = vpack.c.b16 %v1579, %v1571
  %v1988 = vpack.c.b16 %v1580, %v1572
  %v1989 = vpack.c.b16 %v1581, %v1573
  %v1990 = vpack.c.b16 %v1582, %v1574
  %v1991 = vpack.c.b16 %v1583, %v1575
  %v1992 = vpack.c.b16 %v1592, %v1584
  %v1993 = vpack.c.b16 %v1593, %v1585
  %v1994 = vpack.c.b16 %v1594, %v1586
  %v1995 = vpack.c.b16 %v1595, %v1587
  %v1996 = vpack.c.b16 %v1596, %v1588
  %v1997 = vpack.c.b16 %v1597, %v1589
  %v1998 = vpack.c.b16 %v1598, %v1590
  %v1999 = vpack.c.b16 %v1599, %v1591
  %v2000 = vpack.c.b16 %v1608, %v1600
  %v2001 = vpack.c.b16 %v1609, %v1601
  %v2002 = vpack.c.b16 %v1610, %v1602
  %v2003 = vpack.c.b16 %v1611, %v1603
  %v2004 = vpack.c.b16 %v1612, %v1604
  %v2005 = vpack.c.b16 %v1613, %v1605
  %v2006 = vpack.c.b16 %v1614, %v1606
  %v2007 = vpack.c.b16 %v1615, %v1607
  %v2008 = vpack.c.b16 %v1624, %v1616
  %v2009 = vpack.c.b16 %v1625, %v1617
  %v2010 = vpack.c.b16 %v1626, %v1618
  %v2011 = vpack.c.b16 %v1627, %v1619
  %v2012 = vpack.c.b16 %v1628, %v1620
  %v2013 = vpack.c.b16 %v1629, %v1621
  %v2014 = vpack.c.b16 %v1630, %v1622
  %v2015 = vpack.c.b16 %v1631, %v1623
  %v2016 = vpack.c.b16 %v1640, %v1632
  %v2017 = vpack.c.b16 %v1641, %v1633
  %v2018 = vpack.c.b16 %v1642, %v1634
  %v2019 = vpack.c.b16 %v1643, %v1635
  %v2020 = vpack.c.b16 %v1644, %v1636
  %v2021 = vpack.c.b16 %v1645, %v1637
  %v2022 = vpack.c.b16 %v1646, %v1638
  %v2023 = vpack.c.b16 %v1647, %v1639
  %v2024 = vpack.c.b16 %v1656, %v1648
  %v2025 = vpack.c.b16 %v1657, %v1649
  %v2026 = vpack.c.b16 %v1658, %v1650
  %v2027 = vpack.c.b16 %v1659, %v1651
  %v2028 = vpack.c.b16 %v1660, %v1652
  %v2029 = vpack.c.b16 %v1661, %v1653
  %v2030 = vpack.c.b16 %v1662, %v1654
  %v2031 = vpack.c.b16 %v1663, %v1655
  %v2032 = vpack.c.b16 %v1672, %v1664
  %v2033 = vpack.c.b16 %v1673, %v1665
  %v2034 = vpack.c.b16 %v1674, %v1666
  %v2035 = vpack.c.b16 %v1675, %v1667
  %v2036 = vpack.c.b16 %v1676, %v1668
  %v2037 = vpack.c.b16 %v1677, %v1669
  %v2038 = vpack.c.b16 %v1678, %v1670
  %v2039 = vpack.c.b16 %v1679, %v1671
  %v2040 = vpack.c.b16 %v1688, %v1680
  %v2041 = vpack.c.b16 %v1689, %v1681
  %v2042 = vpack.c.b16 %v1690, %v1682
  %v2043 = vpack.c.b16 %v1691, %v1683
  %v2044 = vpack.c.b16 %v1692, %v1684
  %v2045 = vpack.c.b16 %v1693, %v1685
  %v2046 = vpack.c.b16 %v1694, %v1686
  %v2047 = vpack.c.b16 %v1695, %v1687
  %v2048 = vpack.c.b16 %v1704, %v1696
  %v2049 = vpack.c.b16 %v1705, %v1697
  %v2050 = vpack.c.b16 %v1706, %v1698
  %v2051 = vpack.c.b16 %v1707, %v1699
  %v2052 = vpack.c.b16 %v1708, %v1700
  %v2053 = vpack.c.b16 %v1709, %v1701
  %v2054 = vpack.c.b16 %v1710, %v1702
  %v2055 = vpack.c.b16 %v1711, %v1703
  %v2056 = vpack.c.b16 %v1720, %v1712
  %v2057 = vpack.c.b16 %v1721, %v1713
  %v2058 = vpack.c.b16 %v1722, %v1714
  %v2059 = vpack.c.b16 %v1723, %v1715
  %v2060 = vpack.c.b16 %v1724, %v1716
  %v2061 = vpack.c.b16 %v1725, %v1717
  %v2062 = vpack.c.b16 %v1726, %v1718
  %v2063 = vpack.c.b16 %v1727, %v1719
  %v2064 = vpack.c.b16 %v1736, %v1728
  %v2065 = vpack.c.b16 %v1737, %v1729
  %v2066 = vpack.c.b16 %v1738, %v1730
  %v2067 = vpack.c.b16 %v1739, %v1731
  %v2068 = vpack.c.b16 %v1740, %v1732
  %v2069 = vpack.c.b16 %v1741, %v1733
  %v2070 = vpack.c.b16 %v1742, %v1734
  %v2071 = vpack.c.b16 %v1743, %v1735
  %v2072 = vpack.c.b16 %v1752, %v1744
  %v2073 = vpack.c.b16 %v1753, %v1745
  %v2074 = vpack.c.b16 %v1754, %v1746
  %v2075 = vpack.c.b16 %v1755, %v1747
  %v2076 = vpack.c.b16 %v1756, %v1748
  %v2077 = vpack.c.b16 %v1757, %v1749
  %v2078 = vpack.c.b16 %v1758, %v1750
  %v2079 = vpack.c.b16 %v1759, %v1751
  %v2080 = vpack.c.b16 %v1768, %v1760
  %v2081 = vpack.c.b16 %v1769, %v1761
  %v2082 = vpack.c.b16 %v1770, %v1762
  %v2083 = vpack.c.b16 %v1771, %v1763
  %v2084 = vpack.c.b16 %v1772, %v1764
  %v2085 = vpack.c.b16 %v1773, %v1765
  %v2086 = vpack.c.b16 %v1774, %v1766
  %v2087 = vpack.c.b16 %v1775, %v1767
  %v2088 = vpack.c.b16 %v1784, %v1776
  %v2089 = vpack.c.b16 %v1785, %v1777
  %v2090 = vpack.c.b16 %v1786, %v1778
  %v2091 = vpack.c.b16 %v1787, %v1779
  %v2092 = vpack.c.b16 %v1788, %v1780
  %v2093 = vpack.c.b16 %v1789, %v1781
  %v2094 = vpack.c.b16 %v1790, %v1782
  %v2095 = vpack.c.b16 %v1791, %v1783
  %v2096 = vpack.c.b16 %v1800, %v1792
  %v2097 = vpack.c.b16 %v1801, %v1793
  %v2098 = vpack.c.b16 %v1802, %v1794
  %v2099 = vpack.c.b16 %v1803, %v1795
  %v2100 = vpack.c.b16 %v1804, %v1796
  %v2101 = vpack.c.b16 %v1805, %v1797
  %v2102 = vpack.c.b16 %v1806, %v1798
  %v2103 = vpack.c.b16 %v1807, %v1799
  %v2104 = vpack.c.b16 %v1816, %v1808
  %v2105 = vpack.c.b16 %v1817, %v1809
  %v2106 = vpack.c.b16 %v1818, %v1810
  %v2107 = vpack.c.b16 %v1819, %v1811
  %v2108 = vpack.c.b16 %v1820, %v1812
  %v2109 = vpack.c.b16 %v1821, %v1813
  %v2110 = vpack.c.b16 %v1822, %v1814
  %v2111 = vpack.c.b16 %v1823, %v1815
  %v2112 = vpack.c.b16 %v1832, %v1824
  %v2113 = vpack.c.b16 %v1833, %v1825
  %v2114 = vpack.c.b16 %v1834, %v1826
  %v2115 = vpack.c.b16 %v1835, %v1827
  %v2116 = vpack.c.b16 %v1836, %v1828
  %v2117 = vpack.c.b16 %v1837, %v1829
  %v2118 = vpack.c.b16 %v1838, %v1830
  %v2119 = vpack.c.b16 %v1839, %v1831
  %v2120 = vpack.c.b16 %v1848, %v1840
  %v2121 = vpack.c.b16 %v1849, %v1841
  %v2122 = vpack.c.b16 %v1850, %v1842
  %v2123 = vpack.c.b16 %v1851, %v1843
  %v2124 = vpack.c.b16 %v1852, %v1844
  %v2125 = vpack.c.b16 %v1853, %v1845
  %v2126 = vpack.c.b16 %v1854, %v1846
  %v2127 = vpack.c.b16 %v1855, %v1847
  %v2128 = vpack.c.b16 %v1864, %v1856
  %v2129 = vpack.c.b16 %v1865, %v1857
  %v2130 = vpack.c.b16 %v1866, %v1858
  %v2131 = vpack.c.b16 %v1867, %v1859
  %v2132 = vpack.c.b16 %v1868, %v1860
  %v2133 = vpack.c.b16 %v1869, %v1861
  %v2134 = vpack.c.b16 %v1870, %v1862
  %v2135 = vpack.c.b16 %v1871, %v1863
  %v2136 = vpack.c.b16 %v1880, %v1872
  %v2137 = vpack.c.b16 %v1881, %v1873
  %v2138 = vpack.c.b16 %v1882, %v1874
  %v2139 = vpack.c.b16 %v1883, %v1875
  %v2140 = vpack.c.b16 %v1884, %v1876
  %v2141 = vpack.c.b16 %v1885, %v1877
  %v2142 = vpack.c.b16 %v1886, %v1878
  %v2143 = vpack.c.b16 %v1887, %v1879
  %2400 = vmatprep.subr.bf16.mxu0 %v1889
  %2401 = vmatpush1.bf16.msra.mxu0 %v1888
  %2402 = vmatprep.subr.bf16.mxu0 %v1897
  %2403 = vmatpush1.bf16.msra.mxu0 %v1896
  %2404 = vmatprep.subr.bf16.mxu0 %v1905
  %2405 = vmatpush1.bf16.msra.mxu0 %v1904
  %2406 = vmatprep.subr.bf16.mxu0 %v1913
  %2407 = vmatpush1.bf16.msra.mxu0 %v1912
  %2408 = vmatprep.subr.bf16.mxu0 %v1921
  %2409 = vmatpush1.bf16.msra.mxu0 %v1920
  %2410 = vmatprep.subr.bf16.mxu0 %v1929
  %2411 = vmatpush1.bf16.msra.mxu0 %v1928
  %2412 = vmatprep.subr.bf16.mxu0 %v1937
  %2413 = vmatpush1.bf16.msra.mxu0 %v1936
  %2414 = vmatprep.subr.bf16.mxu0 %v1945
  %2415 = vmatpush1.bf16.msra.mxu0 %v1944
  %2416 = vmatprep.subr.bf16.mxu0 %v1953
  %2417 = vmatpush1.bf16.msra.mxu0 %v1952
  %2418 = vmatprep.subr.bf16.mxu0 %v1961
  %2419 = vmatpush1.bf16.msra.mxu0 %v1960
  %2420 = vmatprep.subr.bf16.mxu0 %v1969
  %2421 = vmatpush1.bf16.msra.mxu0 %v1968
  %2422 = vmatprep.subr.bf16.mxu0 %v1977
  %2423 = vmatpush1.bf16.msra.mxu0 %v1976
  %2424 = vmatprep.subr.bf16.mxu0 %v1985
  %2425 = vmatpush1.bf16.msra.mxu0 %v1984
  %2426 = vmatprep.subr.bf16.mxu0 %v1993
  %2427 = vmatpush1.bf16.msra.mxu0 %v1992
  %2428 = vmatprep.subr.bf16.mxu0 %v2001
  %2429 = vmatpush1.bf16.msra.mxu0 %v2000
  %2430 = vmatprep.subr.bf16.mxu0 %v2009
  %2431 = vmatpush1.bf16.msra.mxu0 %v2008
  %2432 = vmatprep.mubr.bf16.mxu0 %v819
  %2433 = vmatmul.mubr.bf16.gmra.mrb[0].mxu0 %v818
  %v2434 = vpop.f32.mrb[0].mxu0
  %v2435 = vadd.f32 %v1083, %v2434
  %v2436 = vpop.f32.mrb[0].mxu0
  %v2437 = vadd.f32 %v1087, %v2436
  %v2438 = vpop.f32.mrb[0].mxu0
  %v2439 = vadd.f32 %v1083, %v2438
  %v2440 = vpop.f32.mrb[0].mxu0
  %v2441 = vadd.f32 %v1087, %v2440
  %2442 = vdwg.mxu0
  %2443 = vmatprep.subr.bf16.mxu0 %v2017
  %2444 = vmatpush1.bf16.msra.mxu0 %v2016
  %2445 = vmatprep.subr.bf16.mxu0 %v2025
  %2446 = vmatpush1.bf16.msra.mxu0 %v2024
  %2447 = vmatprep.subr.bf16.mxu0 %v2033
  %2448 = vmatpush1.bf16.msra.mxu0 %v2032
  %2449 = vmatprep.subr.bf16.mxu0 %v2041
  %2450 = vmatpush1.bf16.msra.mxu0 %v2040
  %2451 = vmatprep.subr.bf16.mxu0 %v2049
  %2452 = vmatpush1.bf16.msra.mxu0 %v2048
  %2453 = vmatprep.subr.bf16.mxu0 %v2057
  %2454 = vmatpush1.bf16.msra.mxu0 %v2056
  %2455 = vmatprep.subr.bf16.mxu0 %v2065
  %2456 = vmatpush1.bf16.msra.mxu0 %v2064
  %2457 = vmatprep.subr.bf16.mxu0 %v2073
  %2458 = vmatpush1.bf16.msra.mxu0 %v2072
  %2459 = vmatprep.subr.bf16.mxu0 %v2081
  %2460 = vmatpush1.bf16.msra.mxu0 %v2080
  %2461 = vmatprep.subr.bf16.mxu0 %v2089
  %2462 = vmatpush1.bf16.msra.mxu0 %v2088
  %2463 = vmatprep.subr.bf16.mxu0 %v2097
  %2464 = vmatpush1.bf16.msra.mxu0 %v2096
  %2465 = vmatprep.subr.bf16.mxu0 %v2105
  %2466 = vmatpush1.bf16.msra.mxu0 %v2104
  %2467 = vmatprep.subr.bf16.mxu0 %v2113
  %2468 = vmatpush1.bf16.msra.mxu0 %v2112
  %2469 = vmatprep.subr.bf16.mxu0 %v2121
  %2470 = vmatpush1.bf16.msra.mxu0 %v2120
  %2471 = vmatprep.subr.bf16.mxu0 %v2129
  %2472 = vmatpush1.bf16.msra.mxu0 %v2128
  %2473 = vmatprep.subr.bf16.mxu0 %v2137
  %2474 = vmatpush1.bf16.msra.mxu0 %v2136
  %2475 = vmatprep.mubr.bf16.mxu0 %v821
  %2476 = vmatmul.mubr.bf16.gmra.mrb[0].mxu0 %v820
  %v2477 = vpop.f32.mrb[0].mxu0
  %v2478 = vadd.f32 %v2435, %v2477
  %v2479 = vpop.f32.mrb[0].mxu0
  %v2480 = vadd.f32 %v2437, %v2479
  %v2481 = vpop.f32.mrb[0].mxu0
  %v2482 = vadd.f32 %v2439, %v2481
  %v2483 = vpop.f32.mrb[0].mxu0
  %v2484 = vadd.f32 %v2441, %v2483
  %2485 = vdwg.mxu0
  %2486 = vmatprep.subr.bf16.mxu0 %v1891
  %2487 = vmatpush1.bf16.msra.mxu0 %v1890
  %2488 = vmatprep.subr.bf16.mxu0 %v1899
  %2489 = vmatpush1.bf16.msra.mxu0 %v1898
  %2490 = vmatprep.subr.bf16.mxu0 %v1907
  %2491 = vmatpush1.bf16.msra.mxu0 %v1906
  %2492 = vmatprep.subr.bf16.mxu0 %v1915
  %2493 = vmatpush1.bf16.msra.mxu0 %v1914
  %2494 = vmatprep.subr.bf16.mxu0 %v1923
  %2495 = vmatpush1.bf16.msra.mxu0 %v1922
  %2496 = vmatprep.subr.bf16.mxu0 %v1931
  %2497 = vmatpush1.bf16.msra.mxu0 %v1930
  %2498 = vmatprep.subr.bf16.mxu0 %v1939
  %2499 = vmatpush1.bf16.msra.mxu0 %v1938
  %2500 = vmatprep.subr.bf16.mxu0 %v1947
  %2501 = vmatpush1.bf16.msra.mxu0 %v1946
  %2502 = vmatprep.subr.bf16.mxu0 %v1955
  %2503 = vmatpush1.bf16.msra.mxu0 %v1954
  %2504 = vmatprep.subr.bf16.mxu0 %v1963
  %2505 = vmatpush1.bf16.msra.mxu0 %v1962
  %2506 = vmatprep.subr.bf16.mxu0 %v1971
  %2507 = vmatpush1.bf16.msra.mxu0 %v1970
  %2508 = vmatprep.subr.bf16.mxu0 %v1979
  %2509 = vmatpush1.bf16.msra.mxu0 %v1978
  %2510 = vmatprep.subr.bf16.mxu0 %v1987
  %2511 = vmatpush1.bf16.msra.mxu0 %v1986
  %2512 = vmatprep.subr.bf16.mxu0 %v1995
  %2513 = vmatpush1.bf16.msra.mxu0 %v1994
  %2514 = vmatprep.subr.bf16.mxu0 %v2003
  %2515 = vmatpush1.bf16.msra.mxu0 %v2002
  %2516 = vmatprep.subr.bf16.mxu0 %v2011
  %2517 = vmatpush1.bf16.msra.mxu0 %v2010
  %2518 = vmatprep.mubr.bf16.mxu0 %v819
  %2519 = vmatmul.mubr.bf16.gmra.mrb[0].mxu0 %v818
  %v2520 = vpop.f32.mrb[0].mxu0
  %v2521 = vadd.f32 %v1091, %v2520
  %v2522 = vpop.f32.mrb[0].mxu0
  %v2523 = vadd.f32 %v1095, %v2522
  %v2524 = vpop.f32.mrb[0].mxu0
  %v2525 = vadd.f32 %v1091, %v2524
  %v2526 = vpop.f32.mrb[0].mxu0
  %v2527 = vadd.f32 %v1095, %v2526
  %2528 = vdwg.mxu0
  %2529 = vmatprep.subr.bf16.mxu0 %v2019
  %2530 = vmatpush1.bf16.msra.mxu0 %v2018
  %2531 = vmatprep.subr.bf16.mxu0 %v2027
  %2532 = vmatpush1.bf16.msra.mxu0 %v2026
  %2533 = vmatprep.subr.bf16.mxu0 %v2035
  %2534 = vmatpush1.bf16.msra.mxu0 %v2034
  %2535 = vmatprep.subr.bf16.mxu0 %v2043
  %2536 = vmatpush1.bf16.msra.mxu0 %v2042
  %2537 = vmatprep.subr.bf16.mxu0 %v2051
  %2538 = vmatpush1.bf16.msra.mxu0 %v2050
  %2539 = vmatprep.subr.bf16.mxu0 %v2059
  %2540 = vmatpush1.bf16.msra.mxu0 %v2058
  %2541 = vmatprep.subr.bf16.mxu0 %v2067
  %2542 = vmatpush1.bf16.msra.mxu0 %v2066
  %2543 = vmatprep.subr.bf16.mxu0 %v2075
  %2544 = vmatpush1.bf16.msra.mxu0 %v2074
  %2545 = vmatprep.subr.bf16.mxu0 %v2083
  %2546 = vmatpush1.bf16.msra.mxu0 %v2082
  %2547 = vmatprep.subr.bf16.mxu0 %v2091
  %2548 = vmatpush1.bf16.msra.mxu0 %v2090
  %2549 = vmatprep.subr.bf16.mxu0 %v2099
  %2550 = vmatpush1.bf16.msra.mxu0 %v2098
  %2551 = vmatprep.subr.bf16.mxu0 %v2107
  %2552 = vmatpush1.bf16.msra.mxu0 %v2106
  %2553 = vmatprep.subr.bf16.mxu0 %v2115
  %2554 = vmatpush1.bf16.msra.mxu0 %v2114
  %2555 = vmatprep.subr.bf16.mxu0 %v2123
  %2556 = vmatpush1.bf16.msra.mxu0 %v2122
  %2557 = vmatprep.subr.bf16.mxu0 %v2131
  %2558 = vmatpush1.bf16.msra.mxu0 %v2130
  %2559 = vmatprep.subr.bf16.mxu0 %v2139
  %2560 = vmatpush1.bf16.msra.mxu0 %v2138
  %2561 = vmatprep.mubr.bf16.mxu0 %v821
  %2562 = vmatmul.mubr.bf16.gmra.mrb[0].mxu0 %v820
  %v2563 = vpop.f32.mrb[0].mxu0
  %v2564 = vadd.f32 %v2521, %v2563
  %v2565 = vpop.f32.mrb[0].mxu0
  %v2566 = vadd.f32 %v2523, %v2565
  %v2567 = vpop.f32.mrb[0].mxu0
  %v2568 = vadd.f32 %v2525, %v2567
  %v2569 = vpop.f32.mrb[0].mxu0
  %v2570 = vadd.f32 %v2527, %v2569
  %2571 = vdwg.mxu0
  %2572 = vmatprep.subr.bf16.mxu0 %v1893
  %2573 = vmatpush1.bf16.msra.mxu0 %v1892
  %2574 = vmatprep.subr.bf16.mxu0 %v1901
  %2575 = vmatpush1.bf16.msra.mxu0 %v1900
  %2576 = vmatprep.subr.bf16.mxu0 %v1909
  %2577 = vmatpush1.bf16.msra.mxu0 %v1908
  %2578 = vmatprep.subr.bf16.mxu0 %v1917
  %2579 = vmatpush1.bf16.msra.mxu0 %v1916
  %2580 = vmatprep.subr.bf16.mxu0 %v1925
  %2581 = vmatpush1.bf16.msra.mxu0 %v1924
  %2582 = vmatprep.subr.bf16.mxu0 %v1933
  %2583 = vmatpush1.bf16.msra.mxu0 %v1932
  %2584 = vmatprep.subr.bf16.mxu0 %v1941
  %2585 = vmatpush1.bf16.msra.mxu0 %v1940
  %2586 = vmatprep.subr.bf16.mxu0 %v1949
  %2587 = vmatpush1.bf16.msra.mxu0 %v1948
  %2588 = vmatprep.subr.bf16.mxu0 %v1957
  %2589 = vmatpush1.bf16.msra.mxu0 %v1956
  %2590 = vmatprep.subr.bf16.mxu0 %v1965
  %2591 = vmatpush1.bf16.msra.mxu0 %v1964
  %2592 = vmatprep.subr.bf16.mxu0 %v1973
  %2593 = vmatpush1.bf16.msra.mxu0 %v1972
  %2594 = vmatprep.subr.bf16.mxu0 %v1981
  %2595 = vmatpush1.bf16.msra.mxu0 %v1980
  %2596 = vmatprep.subr.bf16.mxu0 %v1989
  %2597 = vmatpush1.bf16.msra.mxu0 %v1988
  %2598 = vmatprep.subr.bf16.mxu0 %v1997
  %2599 = vmatpush1.bf16.msra.mxu0 %v1996
  %2600 = vmatprep.subr.bf16.mxu0 %v2005
  %2601 = vmatpush1.bf16.msra.mxu0 %v2004
  %2602 = vmatprep.subr.bf16.mxu0 %v2013
  %2603 = vmatpush1.bf16.msra.mxu0 %v2012
  %2604 = vmatprep.mubr.bf16.mxu0 %v819
  %2605 = vmatmul.mubr.bf16.gmra.mrb[0].mxu0 %v818
  %v2606 = vpop.f32.mrb[0].mxu0
  %v2607 = vadd.f32 %v1099, %v2606
  %v2608 = vpop.f32.mrb[0].mxu0
  %v2609 = vadd.f32 %v1103, %v2608
  %v2610 = vpop.f32.mrb[0].mxu0
  %v2611 = vadd.f32 %v1099, %v2610
  %v2612 = vpop.f32.mrb[0].mxu0
  %v2613 = vadd.f32 %v1103, %v2612
  %2614 = vdwg.mxu0
  %2615 = vmatprep.subr.bf16.mxu0 %v2021
  %2616 = vmatpush1.bf16.msra.mxu0 %v2020
  %2617 = vmatprep.subr.bf16.mxu0 %v2029
  %2618 = vmatpush1.bf16.msra.mxu0 %v2028
  %2619 = vmatprep.subr.bf16.mxu0 %v2037
  %2620 = vmatpush1.bf16.msra.mxu0 %v2036
  %2621 = vmatprep.subr.bf16.mxu0 %v2045
  %2622 = vmatpush1.bf16.msra.mxu0 %v2044
  %2623 = vmatprep.subr.bf16.mxu0 %v2053
  %2624 = vmatpush1.bf16.msra.mxu0 %v2052
  %2625 = vmatprep.subr.bf16.mxu0 %v2061
  %2626 = vmatpush1.bf16.msra.mxu0 %v2060
  %2627 = vmatprep.subr.bf16.mxu0 %v2069
  %2628 = vmatpush1.bf16.msra.mxu0 %v2068
  %2629 = vmatprep.subr.bf16.mxu0 %v2077
  %2630 = vmatpush1.bf16.msra.mxu0 %v2076
  %2631 = vmatprep.subr.bf16.mxu0 %v2085
  %2632 = vmatpush1.bf16.msra.mxu0 %v2084
  %2633 = vmatprep.subr.bf16.mxu0 %v2093
  %2634 = vmatpush1.bf16.msra.mxu0 %v2092
  %2635 = vmatprep.subr.bf16.mxu0 %v2101
  %2636 = vmatpush1.bf16.msra.mxu0 %v2100
  %2637 = vmatprep.subr.bf16.mxu0 %v2109
  %2638 = vmatpush1.bf16.msra.mxu0 %v2108
  %2639 = vmatprep.subr.bf16.mxu0 %v2117
  %2640 = vmatpush1.bf16.msra.mxu0 %v2116
  %2641 = vmatprep.subr.bf16.mxu0 %v2125
  %2642 = vmatpush1.bf16.msra.mxu0 %v2124
  %2643 = vmatprep.subr.bf16.mxu0 %v2133
  %2644 = vmatpush1.bf16.msra.mxu0 %v2132
  %2645 = vmatprep.subr.bf16.mxu0 %v2141
  %2646 = vmatpush1.bf16.msra.mxu0 %v2140
  %2647 = vmatprep.mubr.bf16.mxu0 %v821
  %2648 = vmatmul.mubr.bf16.gmra.mrb[0].mxu0 %v820
  %v2649 = vpop.f32.mrb[0].mxu0
  %v2650 = vadd.f32 %v2607, %v2649
  %v2651 = vpop.f32.mrb[0].mxu0
  %v2652 = vadd.f32 %v2609, %v2651
  %v2653 = vpop.f32.mrb[0].mxu0
  %v2654 = vadd.f32 %v2611, %v2653
  %v2655 = vpop.f32.mrb[0].mxu0
  %v2656 = vadd.f32 %v2613, %v2655
  %2657 = vdwg.mxu0
  %2658 = vmatprep.subr.bf16.mxu0 %v1895
  %2659 = vmatpush1.bf16.msra.mxu0 %v1894
  %2660 = vmatprep.subr.bf16.mxu0 %v1903
  %2661 = vmatpush1.bf16.msra.mxu0 %v1902
  %2662 = vmatprep.subr.bf16.mxu0 %v1911
  %2663 = vmatpush1.bf16.msra.mxu0 %v1910
  %2664 = vmatprep.subr.bf16.mxu0 %v1919
  %2665 = vmatpush1.bf16.msra.mxu0 %v1918
  %2666 = vmatprep.subr.bf16.mxu0 %v1927
  %2667 = vmatpush1.bf16.msra.mxu0 %v1926
  %2668 = vmatprep.subr.bf16.mxu0 %v1935
  %2669 = vmatpush1.bf16.msra.mxu0 %v1934
  %2670 = vmatprep.subr.bf16.mxu0 %v1943
  %2671 = vmatpush1.bf16.msra.mxu0 %v1942
  %2672 = vmatprep.subr.bf16.mxu0 %v1951
  %2673 = vmatpush1.bf16.msra.mxu0 %v1950
  %2674 = vmatprep.subr.bf16.mxu0 %v1959
  %2675 = vmatpush1.bf16.msra.mxu0 %v1958
  %2676 = vmatprep.subr.bf16.mxu0 %v1967
  %2677 = vmatpush1.bf16.msra.mxu0 %v1966
  %2678 = vmatprep.subr.bf16.mxu0 %v1975
  %2679 = vmatpush1.bf16.msra.mxu0 %v1974
  %2680 = vmatprep.subr.bf16.mxu0 %v1983
  %2681 = vmatpush1.bf16.msra.mxu0 %v1982
  %2682 = vmatprep.subr.bf16.mxu0 %v1991
  %2683 = vmatpush1.bf16.msra.mxu0 %v1990
  %2684 = vmatprep.subr.bf16.mxu0 %v1999
  %2685 = vmatpush1.bf16.msra.mxu0 %v1998
  %2686 = vmatprep.subr.bf16.mxu0 %v2007
  %2687 = vmatpush1.bf16.msra.mxu0 %v2006
  %2688 = vmatprep.subr.bf16.mxu0 %v2015
  %2689 = vmatpush1.bf16.msra.mxu0 %v2014
  %2690 = vmatprep.mubr.bf16.mxu0 %v819
  %2691 = vmatmul.mubr.bf16.gmra.mrb[0].mxu0 %v818
  %v2692 = vpop.f32.mrb[0].mxu0
  %v2693 = vadd.f32 %v1107, %v2692
  %v2694 = vpop.f32.mrb[0].mxu0
  %v2695 = vadd.f32 %v1111, %v2694
  %v2696 = vpop.f32.mrb[0].mxu0
  %v2697 = vadd.f32 %v1107, %v2696
  %v2698 = vpop.f32.mrb[0].mxu0
  %v2699 = vadd.f32 %v1111, %v2698
  %2700 = vdwg.mxu0
  %2701 = vmatprep.subr.bf16.mxu0 %v2023
  %2702 = vmatpush1.bf16.msra.mxu0 %v2022
  %2703 = vmatprep.subr.bf16.mxu0 %v2031
  %2704 = vmatpush1.bf16.msra.mxu0 %v2030
  %2705 = vmatprep.subr.bf16.mxu0 %v2039
  %2706 = vmatpush1.bf16.msra.mxu0 %v2038
  %2707 = vmatprep.subr.bf16.mxu0 %v2047
  %2708 = vmatpush1.bf16.msra.mxu0 %v2046
  %2709 = vmatprep.subr.bf16.mxu0 %v2055
  %2710 = vmatpush1.bf16.msra.mxu0 %v2054
  %2711 = vmatprep.subr.bf16.mxu0 %v2063
  %2712 = vmatpush1.bf16.msra.mxu0 %v2062
  %2713 = vmatprep.subr.bf16.mxu0 %v2071
  %2714 = vmatpush1.bf16.msra.mxu0 %v2070
  %2715 = vmatprep.subr.bf16.mxu0 %v2079
  %2716 = vmatpush1.bf16.msra.mxu0 %v2078
  %2717 = vmatprep.subr.bf16.mxu0 %v2087
  %2718 = vmatpush1.bf16.msra.mxu0 %v2086
  %2719 = vmatprep.subr.bf16.mxu0 %v2095
  %2720 = vmatpush1.bf16.msra.mxu0 %v2094
  %2721 = vmatprep.subr.bf16.mxu0 %v2103
  %2722 = vmatpush1.bf16.msra.mxu0 %v2102
  %2723 = vmatprep.subr.bf16.mxu0 %v2111
  %2724 = vmatpush1.bf16.msra.mxu0 %v2110
  %2725 = vmatprep.subr.bf16.mxu0 %v2119
  %2726 = vmatpush1.bf16.msra.mxu0 %v2118
  %2727 = vmatprep.subr.bf16.mxu0 %v2127
  %2728 = vmatpush1.bf16.msra.mxu0 %v2126
  %2729 = vmatprep.subr.bf16.mxu0 %v2135
  %2730 = vmatpush1.bf16.msra.mxu0 %v2134
  %2731 = vmatprep.subr.bf16.mxu0 %v2143
  %2732 = vmatpush1.bf16.msra.mxu0 %v2142
  %2733 = vmatprep.mubr.bf16.mxu0 %v821
  %2734 = vmatmul.mubr.bf16.gmra.mrb[0].mxu0 %v820
  %v2735 = vpop.f32.mrb[0].mxu0
  %v2736 = vadd.f32 %v2693, %v2735
  %v2737 = vpop.f32.mrb[0].mxu0
  %v2738 = vadd.f32 %v2695, %v2737
  %v2739 = vpop.f32.mrb[0].mxu0
  %v2740 = vadd.f32 %v2697, %v2739
  %v2741 = vpop.f32.mrb[0].mxu0
  %v2742 = vadd.f32 %v2699, %v2741
  %2743 = vdwg.mxu0
  %vm2744 = vcmp.gt.f32.partialorder %v2478, 0.0
  %vm2745 = vcmp.gt.f32.partialorder %v2480, 0.0
  %vm2746 = vcmp.gt.f32.partialorder %v2564, 0.0
  %vm2747 = vcmp.gt.f32.partialorder %v2566, 0.0
  %vm2748 = vcmp.gt.f32.partialorder %v2650, 0.0
  %vm2749 = vcmp.gt.f32.partialorder %v2652, 0.0
  %vm2750 = vcmp.gt.f32.partialorder %v2736, 0.0
  %vm2751 = vcmp.gt.f32.partialorder %v2738, 0.0
  %vm2752 = vcmp.gt.f32.partialorder %v2482, 0.0
  %vm2753 = vcmp.gt.f32.partialorder %v2484, 0.0
  %vm2754 = vcmp.gt.f32.partialorder %v2568, 0.0
  %vm2755 = vcmp.gt.f32.partialorder %v2570, 0.0
  %vm2756 = vcmp.gt.f32.partialorder %v2654, 0.0
  %vm2757 = vcmp.gt.f32.partialorder %v2656, 0.0
  %vm2758 = vcmp.gt.f32.partialorder %v2740, 0.0
  %vm2759 = vcmp.gt.f32.partialorder %v2742, 0.0
  %v2760 = vmul.f32 %v2478, 0.2
  %v2761 = vmul.f32 %v2480, 0.2
  %v2762 = vmul.f32 %v2564, 0.2
  %v2763 = vmul.f32 %v2566, 0.2
  %v2764 = vmul.f32 %v2650, 0.2
  %v2765 = vmul.f32 %v2652, 0.2
  %v2766 = vmul.f32 %v2736, 0.2
  %v2767 = vmul.f32 %v2738, 0.2
  %v2768 = vmul.f32 %v2482, 0.2
  %v2769 = vmul.f32 %v2484, 0.2
  %v2770 = vmul.f32 %v2568, 0.2
  %v2771 = vmul.f32 %v2570, 0.2
  %v2772 = vmul.f32 %v2654, 0.2
  %v2773 = vmul.f32 %v2656, 0.2
  %v2774 = vmul.f32 %v2740, 0.2
  %v2775 = vmul.f32 %v2742, 0.2
  %v2776 = vsel %vm2744, %v2478, %v2760
  %v2777 = vsel %vm2745, %v2480, %v2761
  %v2778 = vsel %vm2746, %v2564, %v2762
  %v2779 = vsel %vm2747, %v2566, %v2763
  %v2780 = vsel %vm2748, %v2650, %v2764
  %v2781 = vsel %vm2749, %v2652, %v2765
  %v2782 = vsel %vm2750, %v2736, %v2766
  %v2783 = vsel %vm2751, %v2738, %v2767
  %v2784 = vsel %vm2752, %v2482, %v2768
  %v2785 = vsel %vm2753, %v2484, %v2769
  %v2786 = vsel %vm2754, %v2568, %v2770
  %v2787 = vsel %vm2755, %v2570, %v2771
  %v2788 = vsel %vm2756, %v2654, %v2772
  %v2789 = vsel %vm2757, %v2656, %v2773
  %v2790 = vsel %vm2758, %v2740, %v2774
  %v2791 = vsel %vm2759, %v2742, %v2775
  %v2792 = vpack.c.bf16 %v2784, %v2776
  %v2793 = vpack.c.bf16 %v2785, %v2777
  %v2794 = vpack.c.bf16 %v2786, %v2778
  %v2795 = vpack.c.bf16 %v2787, %v2779
  %v2796 = vpack.c.bf16 %v2788, %v2780
  %v2797 = vpack.c.bf16 %v2789, %v2781
  %v2798 = vpack.c.bf16 %v2790, %v2782
  %v2799 = vpack.c.bf16 %v2791, %v2783
  %v2800 = vld [vmem:[%s9] sm:$0xff]
  %v2801 = vld [vmem:[%s9 + $0x8] sm:$0xff]
  %v2802 = vld [vmem:[%s9 + $0x10] sm:$0xff]
  %v2803 = vld [vmem:[%s9 + $0x18] sm:$0xff]
  %v2804 = vld [vmem:[%s9 + $0x20] sm:$0xff]
  %v2805 = vld [vmem:[%s9 + $0x28] sm:$0xff]
  %v2806 = vld [vmem:[%s9 + $0x30] sm:$0xff]
  %v2807 = vld [vmem:[%s9 + $0x38] sm:$0xff]
  %v2808 = vld [vmem:[%s9 + $0x40] sm:$0xff]
  %v2809 = vld [vmem:[%s9 + $0x48] sm:$0xff]
  %v2810 = vld [vmem:[%s9 + $0x50] sm:$0xff]
  %v2811 = vld [vmem:[%s9 + $0x58] sm:$0xff]
  %v2812 = vld [vmem:[%s9 + $0x60] sm:$0xff]
  %v2813 = vld [vmem:[%s9 + $0x68] sm:$0xff]
  %v2814 = vld [vmem:[%s9 + $0x70] sm:$0xff]
  %v2815 = vld [vmem:[%s9 + $0x78] sm:$0xff]
  %v2816 = vld [vmem:[%s9 + $0x80] sm:$0xff]
  %v2817 = vld [vmem:[%s9 + $0x88] sm:$0xff]
  %v2818 = vld [vmem:[%s9 + $0x90] sm:$0xff]
  %v2819 = vld [vmem:[%s9 + $0x98] sm:$0xff]
  %v2820 = vld [vmem:[%s9 + $0xa0] sm:$0xff]
  %v2821 = vld [vmem:[%s9 + $0xa8] sm:$0xff]
  %v2822 = vld [vmem:[%s9 + $0xb0] sm:$0xff]
  %v2823 = vld [vmem:[%s9 + $0xb8] sm:$0xff]
  %v2824 = vld [vmem:[%s9 + $0xc0] sm:$0xff]
  %v2825 = vld [vmem:[%s9 + $0xc8] sm:$0xff]
  %v2826 = vld [vmem:[%s9 + $0xd0] sm:$0xff]
  %v2827 = vld [vmem:[%s9 + $0xd8] sm:$0xff]
  %v2828 = vld [vmem:[%s9 + $0xe0] sm:$0xff]
  %v2829 = vld [vmem:[%s9 + $0xe8] sm:$0xff]
  %v2830 = vld [vmem:[%s9 + $0xf0] sm:$0xff]
  %v2831 = vld [vmem:[%s9 + $0xf8] sm:$0xff]
  %v2832 = vld [vmem:[%s9 + $0x100] sm:$0xff]
  %v2833 = vld [vmem:[%s9 + $0x108] sm:$0xff]
  %v2834 = vld [vmem:[%s9 + $0x110] sm:$0xff]
  %v2835 = vld [vmem:[%s9 + $0x118] sm:$0xff]
  %v2836 = vld [vmem:[%s9 + $0x120] sm:$0xff]
  %v2837 = vld [vmem:[%s9 + $0x128] sm:$0xff]
  %v2838 = vld [vmem:[%s9 + $0x130] sm:$0xff]
  %v2839 = vld [vmem:[%s9 + $0x138] sm:$0xff]
  %v2840 = vld [vmem:[%s9 + $0x140] sm:$0xff]
  %v2841 = vld [vmem:[%s9 + $0x148] sm:$0xff]
  %v2842 = vld [vmem:[%s9 + $0x150] sm:$0xff]
  %v2843 = vld [vmem:[%s9 + $0x158] sm:$0xff]
  %v2844 = vld [vmem:[%s9 + $0x160] sm:$0xff]
  %v2845 = vld [vmem:[%s9 + $0x168] sm:$0xff]
  %v2846 = vld [vmem:[%s9 + $0x170] sm:$0xff]
  %v2847 = vld [vmem:[%s9 + $0x178] sm:$0xff]
  %v2848 = vld [vmem:[%s9 + $0x180] sm:$0xff]
  %v2849 = vld [vmem:[%s9 + $0x188] sm:$0xff]
  %v2850 = vld [vmem:[%s9 + $0x190] sm:$0xff]
  %v2851 = vld [vmem:[%s9 + $0x198] sm:$0xff]
  %v2852 = vld [vmem:[%s9 + $0x1a0] sm:$0xff]
  %v2853 = vld [vmem:[%s9 + $0x1a8] sm:$0xff]
  %v2854 = vld [vmem:[%s9 + $0x1b0] sm:$0xff]
  %v2855 = vld [vmem:[%s9 + $0x1b8] sm:$0xff]
  %v2856 = vld [vmem:[%s9 + $0x1c0] sm:$0xff]
  %v2857 = vld [vmem:[%s9 + $0x1c8] sm:$0xff]
  %v2858 = vld [vmem:[%s9 + $0x1d0] sm:$0xff]
  %v2859 = vld [vmem:[%s9 + $0x1d8] sm:$0xff]
  %v2860 = vld [vmem:[%s9 + $0x1e0] sm:$0xff]
  %v2861 = vld [vmem:[%s9 + $0x1e8] sm:$0xff]
  %v2862 = vld [vmem:[%s9 + $0x1f0] sm:$0xff]
  %v2863 = vld [vmem:[%s9 + $0x1f8] sm:$0xff]
  %v2864 = vld [vmem:[%s9 + $0x200] sm:$0xff]
  %v2865 = vld [vmem:[%s9 + $0x208] sm:$0xff]
  %v2866 = vld [vmem:[%s9 + $0x210] sm:$0xff]
  %v2867 = vld [vmem:[%s9 + $0x218] sm:$0xff]
  %v2868 = vld [vmem:[%s9 + $0x220] sm:$0xff]
  %v2869 = vld [vmem:[%s9 + $0x228] sm:$0xff]
  %v2870 = vld [vmem:[%s9 + $0x230] sm:$0xff]
  %v2871 = vld [vmem:[%s9 + $0x238] sm:$0xff]
  %v2872 = vld [vmem:[%s9 + $0x240] sm:$0xff]
  %v2873 = vld [vmem:[%s9 + $0x248] sm:$0xff]
  %v2874 = vld [vmem:[%s9 + $0x250] sm:$0xff]
  %v2875 = vld [vmem:[%s9 + $0x258] sm:$0xff]
  %v2876 = vld [vmem:[%s9 + $0x260] sm:$0xff]
  %v2877 = vld [vmem:[%s9 + $0x268] sm:$0xff]
  %v2878 = vld [vmem:[%s9 + $0x270] sm:$0xff]
  %v2879 = vld [vmem:[%s9 + $0x278] sm:$0xff]
  %v2880 = vld [vmem:[%s9 + $0x280] sm:$0xff]
  %v2881 = vld [vmem:[%s9 + $0x288] sm:$0xff]
  %v2882 = vld [vmem:[%s9 + $0x290] sm:$0xff]
  %v2883 = vld [vmem:[%s9 + $0x298] sm:$0xff]
  %v2884 = vld [vmem:[%s9 + $0x2a0] sm:$0xff]
  %v2885 = vld [vmem:[%s9 + $0x2a8] sm:$0xff]
  %v2886 = vld [vmem:[%s9 + $0x2b0] sm:$0xff]
  %v2887 = vld [vmem:[%s9 + $0x2b8] sm:$0xff]
  %v2888 = vld [vmem:[%s9 + $0x2c0] sm:$0xff]
  %v2889 = vld [vmem:[%s9 + $0x2c8] sm:$0xff]
  %v2890 = vld [vmem:[%s9 + $0x2d0] sm:$0xff]
  %v2891 = vld [vmem:[%s9 + $0x2d8] sm:$0xff]
  %v2892 = vld [vmem:[%s9 + $0x2e0] sm:$0xff]
  %v2893 = vld [vmem:[%s9 + $0x2e8] sm:$0xff]
  %v2894 = vld [vmem:[%s9 + $0x2f0] sm:$0xff]
  %v2895 = vld [vmem:[%s9 + $0x2f8] sm:$0xff]
  %v2896 = vld [vmem:[%s9 + $0x300] sm:$0xff]
  %v2897 = vld [vmem:[%s9 + $0x308] sm:$0xff]
  %v2898 = vld [vmem:[%s9 + $0x310] sm:$0xff]
  %v2899 = vld [vmem:[%s9 + $0x318] sm:$0xff]
  %v2900 = vld [vmem:[%s9 + $0x320] sm:$0xff]
  %v2901 = vld [vmem:[%s9 + $0x328] sm:$0xff]
  %v2902 = vld [vmem:[%s9 + $0x330] sm:$0xff]
  %v2903 = vld [vmem:[%s9 + $0x338] sm:$0xff]
  %v2904 = vld [vmem:[%s9 + $0x340] sm:$0xff]
  %v2905 = vld [vmem:[%s9 + $0x348] sm:$0xff]
  %v2906 = vld [vmem:[%s9 + $0x350] sm:$0xff]
  %v2907 = vld [vmem:[%s9 + $0x358] sm:$0xff]
  %v2908 = vld [vmem:[%s9 + $0x360] sm:$0xff]
  %v2909 = vld [vmem:[%s9 + $0x368] sm:$0xff]
  %v2910 = vld [vmem:[%s9 + $0x370] sm:$0xff]
  %v2911 = vld [vmem:[%s9 + $0x378] sm:$0xff]
  %v2912 = vld [vmem:[%s9 + $0x380] sm:$0xff]
  %v2913 = vld [vmem:[%s9 + $0x388] sm:$0xff]
  %v2914 = vld [vmem:[%s9 + $0x390] sm:$0xff]
  %v2915 = vld [vmem:[%s9 + $0x398] sm:$0xff]
  %v2916 = vld [vmem:[%s9 + $0x3a0] sm:$0xff]
  %v2917 = vld [vmem:[%s9 + $0x3a8] sm:$0xff]
  %v2918 = vld [vmem:[%s9 + $0x3b0] sm:$0xff]
  %v2919 = vld [vmem:[%s9 + $0x3b8] sm:$0xff]
  %v2920 = vld [vmem:[%s9 + $0x3c0] sm:$0xff]
  %v2921 = vld [vmem:[%s9 + $0x3c8] sm:$0xff]
  %v2922 = vld [vmem:[%s9 + $0x3d0] sm:$0xff]
  %v2923 = vld [vmem:[%s9 + $0x3d8] sm:$0xff]
  %v2924 = vld [vmem:[%s9 + $0x3e0] sm:$0xff]
  %v2925 = vld [vmem:[%s9 + $0x3e8] sm:$0xff]
  %v2926 = vld [vmem:[%s9 + $0x3f0] sm:$0xff]
  %v2927 = vld [vmem:[%s9 + $0x3f8] sm:$0xff]
  %v2928 = vld [vmem:[%s9 + $0x400] sm:$0xff]
  %v2929 = vld [vmem:[%s9 + $0x408] sm:$0xff]
  %v2930 = vld [vmem:[%s9 + $0x410] sm:$0xff]
  %v2931 = vld [vmem:[%s9 + $0x418] sm:$0xff]
  %v2932 = vld [vmem:[%s9 + $0x420] sm:$0xff]
  %v2933 = vld [vmem:[%s9 + $0x428] sm:$0xff]
  %v2934 = vld [vmem:[%s9 + $0x430] sm:$0xff]
  %v2935 = vld [vmem:[%s9 + $0x438] sm:$0xff]
  %v2936 = vld [vmem:[%s9 + $0x440] sm:$0xff]
  %v2937 = vld [vmem:[%s9 + $0x448] sm:$0xff]
  %v2938 = vld [vmem:[%s9 + $0x450] sm:$0xff]
  %v2939 = vld [vmem:[%s9 + $0x458] sm:$0xff]
  %v2940 = vld [vmem:[%s9 + $0x460] sm:$0xff]
  %v2941 = vld [vmem:[%s9 + $0x468] sm:$0xff]
  %v2942 = vld [vmem:[%s9 + $0x470] sm:$0xff]
  %v2943 = vld [vmem:[%s9 + $0x478] sm:$0xff]
  %v2944 = vld [vmem:[%s9 + $0x480] sm:$0xff]
  %v2945 = vld [vmem:[%s9 + $0x488] sm:$0xff]
  %v2946 = vld [vmem:[%s9 + $0x490] sm:$0xff]
  %v2947 = vld [vmem:[%s9 + $0x498] sm:$0xff]
  %v2948 = vld [vmem:[%s9 + $0x4a0] sm:$0xff]
  %v2949 = vld [vmem:[%s9 + $0x4a8] sm:$0xff]
  %v2950 = vld [vmem:[%s9 + $0x4b0] sm:$0xff]
  %v2951 = vld [vmem:[%s9 + $0x4b8] sm:$0xff]
  %v2952 = vld [vmem:[%s9 + $0x4c0] sm:$0xff]
  %v2953 = vld [vmem:[%s9 + $0x4c8] sm:$0xff]
  %v2954 = vld [vmem:[%s9 + $0x4d0] sm:$0xff]
  %v2955 = vld [vmem:[%s9 + $0x4d8] sm:$0xff]
  %v2956 = vld [vmem:[%s9 + $0x4e0] sm:$0xff]
  %v2957 = vld [vmem:[%s9 + $0x4e8] sm:$0xff]
  %v2958 = vld [vmem:[%s9 + $0x4f0] sm:$0xff]
  %v2959 = vld [vmem:[%s9 + $0x4f8] sm:$0xff]
  %v2960 = vld [vmem:[%s9 + $0x500] sm:$0xff]
  %v2961 = vld [vmem:[%s9 + $0x508] sm:$0xff]
  %v2962 = vld [vmem:[%s9 + $0x510] sm:$0xff]
  %v2963 = vld [vmem:[%s9 + $0x518] sm:$0xff]
  %v2964 = vld [vmem:[%s9 + $0x520] sm:$0xff]
  %v2965 = vld [vmem:[%s9 + $0x528] sm:$0xff]
  %v2966 = vld [vmem:[%s9 + $0x530] sm:$0xff]
  %v2967 = vld [vmem:[%s9 + $0x538] sm:$0xff]
  %v2968 = vld [vmem:[%s9 + $0x540] sm:$0xff]
  %v2969 = vld [vmem:[%s9 + $0x548] sm:$0xff]
  %v2970 = vld [vmem:[%s9 + $0x550] sm:$0xff]
  %v2971 = vld [vmem:[%s9 + $0x558] sm:$0xff]
  %v2972 = vld [vmem:[%s9 + $0x560] sm:$0xff]
  %v2973 = vld [vmem:[%s9 + $0x568] sm:$0xff]
  %v2974 = vld [vmem:[%s9 + $0x570] sm:$0xff]
  %v2975 = vld [vmem:[%s9 + $0x578] sm:$0xff]
  %v2976 = vld [vmem:[%s9 + $0x580] sm:$0xff]
  %v2977 = vld [vmem:[%s9 + $0x588] sm:$0xff]
  %v2978 = vld [vmem:[%s9 + $0x590] sm:$0xff]
  %v2979 = vld [vmem:[%s9 + $0x598] sm:$0xff]
  %v2980 = vld [vmem:[%s9 + $0x5a0] sm:$0xff]
  %v2981 = vld [vmem:[%s9 + $0x5a8] sm:$0xff]
  %v2982 = vld [vmem:[%s9 + $0x5b0] sm:$0xff]
  %v2983 = vld [vmem:[%s9 + $0x5b8] sm:$0xff]
  %v2984 = vld [vmem:[%s9 + $0x5c0] sm:$0xff]
  %v2985 = vld [vmem:[%s9 + $0x5c8] sm:$0xff]
  %v2986 = vld [vmem:[%s9 + $0x5d0] sm:$0xff]
  %v2987 = vld [vmem:[%s9 + $0x5d8] sm:$0xff]
  %v2988 = vld [vmem:[%s9 + $0x5e0] sm:$0xff]
  %v2989 = vld [vmem:[%s9 + $0x5e8] sm:$0xff]
  %v2990 = vld [vmem:[%s9 + $0x5f0] sm:$0xff]
  %v2991 = vld [vmem:[%s9 + $0x5f8] sm:$0xff]
  %v2992 = vld [vmem:[%s9 + $0x600] sm:$0xff]
  %v2993 = vld [vmem:[%s9 + $0x608] sm:$0xff]
  %v2994 = vld [vmem:[%s9 + $0x610] sm:$0xff]
  %v2995 = vld [vmem:[%s9 + $0x618] sm:$0xff]
  %v2996 = vld [vmem:[%s9 + $0x620] sm:$0xff]
  %v2997 = vld [vmem:[%s9 + $0x628] sm:$0xff]
  %v2998 = vld [vmem:[%s9 + $0x630] sm:$0xff]
  %v2999 = vld [vmem:[%s9 + $0x638] sm:$0xff]
  %v3000 = vld [vmem:[%s9 + $0x640] sm:$0xff]
  %v3001 = vld [vmem:[%s9 + $0x648] sm:$0xff]
  %v3002 = vld [vmem:[%s9 + $0x650] sm:$0xff]
  %v3003 = vld [vmem:[%s9 + $0x658] sm:$0xff]
  %v3004 = vld [vmem:[%s9 + $0x660] sm:$0xff]
  %v3005 = vld [vmem:[%s9 + $0x668] sm:$0xff]
  %v3006 = vld [vmem:[%s9 + $0x670] sm:$0xff]
  %v3007 = vld [vmem:[%s9 + $0x678] sm:$0xff]
  %v3008 = vld [vmem:[%s9 + $0x680] sm:$0xff]
  %v3009 = vld [vmem:[%s9 + $0x688] sm:$0xff]
  %v3010 = vld [vmem:[%s9 + $0x690] sm:$0xff]
  %v3011 = vld [vmem:[%s9 + $0x698] sm:$0xff]
  %v3012 = vld [vmem:[%s9 + $0x6a0] sm:$0xff]
  %v3013 = vld [vmem:[%s9 + $0x6a8] sm:$0xff]
  %v3014 = vld [vmem:[%s9 + $0x6b0] sm:$0xff]
  %v3015 = vld [vmem:[%s9 + $0x6b8] sm:$0xff]
  %v3016 = vld [vmem:[%s9 + $0x6c0] sm:$0xff]
  %v3017 = vld [vmem:[%s9 + $0x6c8] sm:$0xff]
  %v3018 = vld [vmem:[%s9 + $0x6d0] sm:$0xff]
  %v3019 = vld [vmem:[%s9 + $0x6d8] sm:$0xff]
  %v3020 = vld [vmem:[%s9 + $0x6e0] sm:$0xff]
  %v3021 = vld [vmem:[%s9 + $0x6e8] sm:$0xff]
  %v3022 = vld [vmem:[%s9 + $0x6f0] sm:$0xff]
  %v3023 = vld [vmem:[%s9 + $0x6f8] sm:$0xff]
  %v3024 = vld [vmem:[%s9 + $0x700] sm:$0xff]
  %v3025 = vld [vmem:[%s9 + $0x708] sm:$0xff]
  %v3026 = vld [vmem:[%s9 + $0x710] sm:$0xff]
  %v3027 = vld [vmem:[%s9 + $0x718] sm:$0xff]
  %v3028 = vld [vmem:[%s9 + $0x720] sm:$0xff]
  %v3029 = vld [vmem:[%s9 + $0x728] sm:$0xff]
  %v3030 = vld [vmem:[%s9 + $0x730] sm:$0xff]
  %v3031 = vld [vmem:[%s9 + $0x738] sm:$0xff]
  %v3032 = vld [vmem:[%s9 + $0x740] sm:$0xff]
  %v3033 = vld [vmem:[%s9 + $0x748] sm:$0xff]
  %v3034 = vld [vmem:[%s9 + $0x750] sm:$0xff]
  %v3035 = vld [vmem:[%s9 + $0x758] sm:$0xff]
  %v3036 = vld [vmem:[%s9 + $0x760] sm:$0xff]
  %v3037 = vld [vmem:[%s9 + $0x768] sm:$0xff]
  %v3038 = vld [vmem:[%s9 + $0x770] sm:$0xff]
  %v3039 = vld [vmem:[%s9 + $0x778] sm:$0xff]
  %v3040 = vld [vmem:[%s9 + $0x780] sm:$0xff]
  %v3041 = vld [vmem:[%s9 + $0x788] sm:$0xff]
  %v3042 = vld [vmem:[%s9 + $0x790] sm:$0xff]
  %v3043 = vld [vmem:[%s9 + $0x798] sm:$0xff]
  %v3044 = vld [vmem:[%s9 + $0x7a0] sm:$0xff]
  %v3045 = vld [vmem:[%s9 + $0x7a8] sm:$0xff]
  %v3046 = vld [vmem:[%s9 + $0x7b0] sm:$0xff]
  %v3047 = vld [vmem:[%s9 + $0x7b8] sm:$0xff]
  %v3048 = vld [vmem:[%s9 + $0x7c0] sm:$0xff]
  %v3049 = vld [vmem:[%s9 + $0x7c8] sm:$0xff]
  %v3050 = vld [vmem:[%s9 + $0x7d0] sm:$0xff]
  %v3051 = vld [vmem:[%s9 + $0x7d8] sm:$0xff]
  %v3052 = vld [vmem:[%s9 + $0x7e0] sm:$0xff]
  %v3053 = vld [vmem:[%s9 + $0x7e8] sm:$0xff]
  %v3054 = vld [vmem:[%s9 + $0x7f0] sm:$0xff]
  %v3055 = vld [vmem:[%s9 + $0x7f8] sm:$0xff]
  %v3056 = vld [vmem:[%s9 + $0x800] sm:$0xff]
  %v3057 = vld [vmem:[%s9 + $0x808] sm:$0xff]
  %v3058 = vld [vmem:[%s9 + $0x810] sm:$0xff]
  %v3059 = vld [vmem:[%s9 + $0x818] sm:$0xff]
  %v3060 = vld [vmem:[%s9 + $0x820] sm:$0xff]
  %v3061 = vld [vmem:[%s9 + $0x828] sm:$0xff]
  %v3062 = vld [vmem:[%s9 + $0x830] sm:$0xff]
  %v3063 = vld [vmem:[%s9 + $0x838] sm:$0xff]
  %v3064 = vld [vmem:[%s9 + $0x840] sm:$0xff]
  %v3065 = vld [vmem:[%s9 + $0x848] sm:$0xff]
  %v3066 = vld [vmem:[%s9 + $0x850] sm:$0xff]
  %v3067 = vld [vmem:[%s9 + $0x858] sm:$0xff]
  %v3068 = vld [vmem:[%s9 + $0x860] sm:$0xff]
  %v3069 = vld [vmem:[%s9 + $0x868] sm:$0xff]
  %v3070 = vld [vmem:[%s9 + $0x870] sm:$0xff]
  %v3071 = vld [vmem:[%s9 + $0x878] sm:$0xff]
  %v3072 = vld [vmem:[%s9 + $0x880] sm:$0xff]
  %v3073 = vld [vmem:[%s9 + $0x888] sm:$0xff]
  %v3074 = vld [vmem:[%s9 + $0x890] sm:$0xff]
  %v3075 = vld [vmem:[%s9 + $0x898] sm:$0xff]
  %v3076 = vld [vmem:[%s9 + $0x8a0] sm:$0xff]
  %v3077 = vld [vmem:[%s9 + $0x8a8] sm:$0xff]
  %v3078 = vld [vmem:[%s9 + $0x8b0] sm:$0xff]
  %v3079 = vld [vmem:[%s9 + $0x8b8] sm:$0xff]
  %v3080 = vld [vmem:[%s9 + $0x8c0] sm:$0xff]
  %v3081 = vld [vmem:[%s9 + $0x8c8] sm:$0xff]
  %v3082 = vld [vmem:[%s9 + $0x8d0] sm:$0xff]
  %v3083 = vld [vmem:[%s9 + $0x8d8] sm:$0xff]
  %v3084 = vld [vmem:[%s9 + $0x8e0] sm:$0xff]
  %v3085 = vld [vmem:[%s9 + $0x8e8] sm:$0xff]
  %v3086 = vld [vmem:[%s9 + $0x8f0] sm:$0xff]
  %v3087 = vld [vmem:[%s9 + $0x8f8] sm:$0xff]
  %v3088 = vld [vmem:[%s9 + $0x900] sm:$0xff]
  %v3089 = vld [vmem:[%s9 + $0x908] sm:$0xff]
  %v3090 = vld [vmem:[%s9 + $0x910] sm:$0xff]
  %v3091 = vld [vmem:[%s9 + $0x918] sm:$0xff]
  %v3092 = vld [vmem:[%s9 + $0x920] sm:$0xff]
  %v3093 = vld [vmem:[%s9 + $0x928] sm:$0xff]
  %v3094 = vld [vmem:[%s9 + $0x930] sm:$0xff]
  %v3095 = vld [vmem:[%s9 + $0x938] sm:$0xff]
  %v3096 = vld [vmem:[%s9 + $0x940] sm:$0xff]
  %v3097 = vld [vmem:[%s9 + $0x948] sm:$0xff]
  %v3098 = vld [vmem:[%s9 + $0x950] sm:$0xff]
  %v3099 = vld [vmem:[%s9 + $0x958] sm:$0xff]
  %v3100 = vld [vmem:[%s9 + $0x960] sm:$0xff]
  %v3101 = vld [vmem:[%s9 + $0x968] sm:$0xff]
  %v3102 = vld [vmem:[%s9 + $0x970] sm:$0xff]
  %v3103 = vld [vmem:[%s9 + $0x978] sm:$0xff]
  %v3104 = vld [vmem:[%s9 + $0x980] sm:$0xff]
  %v3105 = vld [vmem:[%s9 + $0x988] sm:$0xff]
  %v3106 = vld [vmem:[%s9 + $0x990] sm:$0xff]
  %v3107 = vld [vmem:[%s9 + $0x998] sm:$0xff]
  %v3108 = vld [vmem:[%s9 + $0x9a0] sm:$0xff]
  %v3109 = vld [vmem:[%s9 + $0x9a8] sm:$0xff]
  %v3110 = vld [vmem:[%s9 + $0x9b0] sm:$0xff]
  %v3111 = vld [vmem:[%s9 + $0x9b8] sm:$0xff]
  %v3112 = vld [vmem:[%s9 + $0x9c0] sm:$0xff]
  %v3113 = vld [vmem:[%s9 + $0x9c8] sm:$0xff]
  %v3114 = vld [vmem:[%s9 + $0x9d0] sm:$0xff]
  %v3115 = vld [vmem:[%s9 + $0x9d8] sm:$0xff]
  %v3116 = vld [vmem:[%s9 + $0x9e0] sm:$0xff]
  %v3117 = vld [vmem:[%s9 + $0x9e8] sm:$0xff]
  %v3118 = vld [vmem:[%s9 + $0x9f0] sm:$0xff]
  %v3119 = vld [vmem:[%s9 + $0x9f8] sm:$0xff]
  %v3120 = vld [vmem:[%s9 + $0xa00] sm:$0xff]
  %v3121 = vld [vmem:[%s9 + $0xa08] sm:$0xff]
  %v3122 = vld [vmem:[%s9 + $0xa10] sm:$0xff]
  %v3123 = vld [vmem:[%s9 + $0xa18] sm:$0xff]
  %v3124 = vld [vmem:[%s9 + $0xa20] sm:$0xff]
  %v3125 = vld [vmem:[%s9 + $0xa28] sm:$0xff]
  %v3126 = vld [vmem:[%s9 + $0xa30] sm:$0xff]
  %v3127 = vld [vmem:[%s9 + $0xa38] sm:$0xff]
  %v3128 = vld [vmem:[%s9 + $0xa40] sm:$0xff]
  %v3129 = vld [vmem:[%s9 + $0xa48] sm:$0xff]
  %v3130 = vld [vmem:[%s9 + $0xa50] sm:$0xff]
  %v3131 = vld [vmem:[%s9 + $0xa58] sm:$0xff]
  %v3132 = vld [vmem:[%s9 + $0xa60] sm:$0xff]
  %v3133 = vld [vmem:[%s9 + $0xa68] sm:$0xff]
  %v3134 = vld [vmem:[%s9 + $0xa70] sm:$0xff]
  %v3135 = vld [vmem:[%s9 + $0xa78] sm:$0xff]
  %v3136 = vld [vmem:[%s9 + $0xa80] sm:$0xff]
  %v3137 = vld [vmem:[%s9 + $0xa88] sm:$0xff]
  %v3138 = vld [vmem:[%s9 + $0xa90] sm:$0xff]
  %v3139 = vld [vmem:[%s9 + $0xa98] sm:$0xff]
  %v3140 = vld [vmem:[%s9 + $0xaa0] sm:$0xff]
  %v3141 = vld [vmem:[%s9 + $0xaa8] sm:$0xff]
  %v3142 = vld [vmem:[%s9 + $0xab0] sm:$0xff]
  %v3143 = vld [vmem:[%s9 + $0xab8] sm:$0xff]
  %v3144 = vld [vmem:[%s9 + $0xac0] sm:$0xff]
  %v3145 = vld [vmem:[%s9 + $0xac8] sm:$0xff]
  %v3146 = vld [vmem:[%s9 + $0xad0] sm:$0xff]
  %v3147 = vld [vmem:[%s9 + $0xad8] sm:$0xff]
  %v3148 = vld [vmem:[%s9 + $0xae0] sm:$0xff]
  %v3149 = vld [vmem:[%s9 + $0xae8] sm:$0xff]
  %v3150 = vld [vmem:[%s9 + $0xaf0] sm:$0xff]
  %v3151 = vld [vmem:[%s9 + $0xaf8] sm:$0xff]
  %v3152 = vld [vmem:[%s9 + $0xb00] sm:$0xff]
  %v3153 = vld [vmem:[%s9 + $0xb08] sm:$0xff]
  %v3154 = vld [vmem:[%s9 + $0xb10] sm:$0xff]
  %v3155 = vld [vmem:[%s9 + $0xb18] sm:$0xff]
  %v3156 = vld [vmem:[%s9 + $0xb20] sm:$0xff]
  %v3157 = vld [vmem:[%s9 + $0xb28] sm:$0xff]
  %v3158 = vld [vmem:[%s9 + $0xb30] sm:$0xff]
  %v3159 = vld [vmem:[%s9 + $0xb38] sm:$0xff]
  %v3160 = vld [vmem:[%s9 + $0xb40] sm:$0xff]
  %v3161 = vld [vmem:[%s9 + $0xb48] sm:$0xff]
  %v3162 = vld [vmem:[%s9 + $0xb50] sm:$0xff]
  %v3163 = vld [vmem:[%s9 + $0xb58] sm:$0xff]
  %v3164 = vld [vmem:[%s9 + $0xb60] sm:$0xff]
  %v3165 = vld [vmem:[%s9 + $0xb68] sm:$0xff]
  %v3166 = vld [vmem:[%s9 + $0xb70] sm:$0xff]
  %v3167 = vld [vmem:[%s9 + $0xb78] sm:$0xff]
  %v3168 = vld [vmem:[%s9 + $0xb80] sm:$0xff]
  %v3169 = vld [vmem:[%s9 + $0xb88] sm:$0xff]
  %v3170 = vld [vmem:[%s9 + $0xb90] sm:$0xff]
  %v3171 = vld [vmem:[%s9 + $0xb98] sm:$0xff]
  %v3172 = vld [vmem:[%s9 + $0xba0] sm:$0xff]
  %v3173 = vld [vmem:[%s9 + $0xba8] sm:$0xff]
  %v3174 = vld [vmem:[%s9 + $0xbb0] sm:$0xff]
  %v3175 = vld [vmem:[%s9 + $0xbb8] sm:$0xff]
  %v3176 = vld [vmem:[%s9 + $0xbc0] sm:$0xff]
  %v3177 = vld [vmem:[%s9 + $0xbc8] sm:$0xff]
  %v3178 = vld [vmem:[%s9 + $0xbd0] sm:$0xff]
  %v3179 = vld [vmem:[%s9 + $0xbd8] sm:$0xff]
  %v3180 = vld [vmem:[%s9 + $0xbe0] sm:$0xff]
  %v3181 = vld [vmem:[%s9 + $0xbe8] sm:$0xff]
  %v3182 = vld [vmem:[%s9 + $0xbf0] sm:$0xff]
  %v3183 = vld [vmem:[%s9 + $0xbf8] sm:$0xff]
  %v3184 = vld [vmem:[%s9 + $0xc00] sm:$0xff]
  %v3185 = vld [vmem:[%s9 + $0xc08] sm:$0xff]
  %v3186 = vld [vmem:[%s9 + $0xc10] sm:$0xff]
  %v3187 = vld [vmem:[%s9 + $0xc18] sm:$0xff]
  %v3188 = vld [vmem:[%s9 + $0xc20] sm:$0xff]
  %v3189 = vld [vmem:[%s9 + $0xc28] sm:$0xff]
  %v3190 = vld [vmem:[%s9 + $0xc30] sm:$0xff]
  %v3191 = vld [vmem:[%s9 + $0xc38] sm:$0xff]
  %v3192 = vld [vmem:[%s9 + $0xc40] sm:$0xff]
  %v3193 = vld [vmem:[%s9 + $0xc48] sm:$0xff]
  %v3194 = vld [vmem:[%s9 + $0xc50] sm:$0xff]
  %v3195 = vld [vmem:[%s9 + $0xc58] sm:$0xff]
  %v3196 = vld [vmem:[%s9 + $0xc60] sm:$0xff]
  %v3197 = vld [vmem:[%s9 + $0xc68] sm:$0xff]
  %v3198 = vld [vmem:[%s9 + $0xc70] sm:$0xff]
  %v3199 = vld [vmem:[%s9 + $0xc78] sm:$0xff]
  %v3200 = vld [vmem:[%s9 + $0xc80] sm:$0xff]
  %v3201 = vld [vmem:[%s9 + $0xc88] sm:$0xff]
  %v3202 = vld [vmem:[%s9 + $0xc90] sm:$0xff]
  %v3203 = vld [vmem:[%s9 + $0xc98] sm:$0xff]
  %v3204 = vld [vmem:[%s9 + $0xca0] sm:$0xff]
  %v3205 = vld [vmem:[%s9 + $0xca8] sm:$0xff]
  %v3206 = vld [vmem:[%s9 + $0xcb0] sm:$0xff]
  %v3207 = vld [vmem:[%s9 + $0xcb8] sm:$0xff]
  %v3208 = vld [vmem:[%s9 + $0xcc0] sm:$0xff]
  %v3209 = vld [vmem:[%s9 + $0xcc8] sm:$0xff]
  %v3210 = vld [vmem:[%s9 + $0xcd0] sm:$0xff]
  %v3211 = vld [vmem:[%s9 + $0xcd8] sm:$0xff]
  %v3212 = vld [vmem:[%s9 + $0xce0] sm:$0xff]
  %v3213 = vld [vmem:[%s9 + $0xce8] sm:$0xff]
  %v3214 = vld [vmem:[%s9 + $0xcf0] sm:$0xff]
  %v3215 = vld [vmem:[%s9 + $0xcf8] sm:$0xff]
  %v3216 = vld [vmem:[%s9 + $0xd00] sm:$0xff]
  %v3217 = vld [vmem:[%s9 + $0xd08] sm:$0xff]
  %v3218 = vld [vmem:[%s9 + $0xd10] sm:$0xff]
  %v3219 = vld [vmem:[%s9 + $0xd18] sm:$0xff]
  %v3220 = vld [vmem:[%s9 + $0xd20] sm:$0xff]
  %v3221 = vld [vmem:[%s9 + $0xd28] sm:$0xff]
  %v3222 = vld [vmem:[%s9 + $0xd30] sm:$0xff]
  %v3223 = vld [vmem:[%s9 + $0xd38] sm:$0xff]
  %v3224 = vld [vmem:[%s9 + $0xd40] sm:$0xff]
  %v3225 = vld [vmem:[%s9 + $0xd48] sm:$0xff]
  %v3226 = vld [vmem:[%s9 + $0xd50] sm:$0xff]
  %v3227 = vld [vmem:[%s9 + $0xd58] sm:$0xff]
  %v3228 = vld [vmem:[%s9 + $0xd60] sm:$0xff]
  %v3229 = vld [vmem:[%s9 + $0xd68] sm:$0xff]
  %v3230 = vld [vmem:[%s9 + $0xd70] sm:$0xff]
  %v3231 = vld [vmem:[%s9 + $0xd78] sm:$0xff]
  %v3232 = vld [vmem:[%s9 + $0xd80] sm:$0xff]
  %v3233 = vld [vmem:[%s9 + $0xd88] sm:$0xff]
  %v3234 = vld [vmem:[%s9 + $0xd90] sm:$0xff]
  %v3235 = vld [vmem:[%s9 + $0xd98] sm:$0xff]
  %v3236 = vld [vmem:[%s9 + $0xda0] sm:$0xff]
  %v3237 = vld [vmem:[%s9 + $0xda8] sm:$0xff]
  %v3238 = vld [vmem:[%s9 + $0xdb0] sm:$0xff]
  %v3239 = vld [vmem:[%s9 + $0xdb8] sm:$0xff]
  %v3240 = vld [vmem:[%s9 + $0xdc0] sm:$0xff]
  %v3241 = vld [vmem:[%s9 + $0xdc8] sm:$0xff]
  %v3242 = vld [vmem:[%s9 + $0xdd0] sm:$0xff]
  %v3243 = vld [vmem:[%s9 + $0xdd8] sm:$0xff]
  %v3244 = vld [vmem:[%s9 + $0xde0] sm:$0xff]
  %v3245 = vld [vmem:[%s9 + $0xde8] sm:$0xff]
  %v3246 = vld [vmem:[%s9 + $0xdf0] sm:$0xff]
  %v3247 = vld [vmem:[%s9 + $0xdf8] sm:$0xff]
  %v3248 = vld [vmem:[%s9 + $0xe00] sm:$0xff]
  %v3249 = vld [vmem:[%s9 + $0xe08] sm:$0xff]
  %v3250 = vld [vmem:[%s9 + $0xe10] sm:$0xff]
  %v3251 = vld [vmem:[%s9 + $0xe18] sm:$0xff]
  %v3252 = vld [vmem:[%s9 + $0xe20] sm:$0xff]
  %v3253 = vld [vmem:[%s9 + $0xe28] sm:$0xff]
  %v3254 = vld [vmem:[%s9 + $0xe30] sm:$0xff]
  %v3255 = vld [vmem:[%s9 + $0xe38] sm:$0xff]
  %v3256 = vld [vmem:[%s9 + $0xe40] sm:$0xff]
  %v3257 = vld [vmem:[%s9 + $0xe48] sm:$0xff]
  %v3258 = vld [vmem:[%s9 + $0xe50] sm:$0xff]
  %v3259 = vld [vmem:[%s9 + $0xe58] sm:$0xff]
  %v3260 = vld [vmem:[%s9 + $0xe60] sm:$0xff]
  %v3261 = vld [vmem:[%s9 + $0xe68] sm:$0xff]
  %v3262 = vld [vmem:[%s9 + $0xe70] sm:$0xff]
  %v3263 = vld [vmem:[%s9 + $0xe78] sm:$0xff]
  %v3264 = vld [vmem:[%s9 + $0xe80] sm:$0xff]
  %v3265 = vld [vmem:[%s9 + $0xe88] sm:$0xff]
  %v3266 = vld [vmem:[%s9 + $0xe90] sm:$0xff]
  %v3267 = vld [vmem:[%s9 + $0xe98] sm:$0xff]
  %v3268 = vld [vmem:[%s9 + $0xea0] sm:$0xff]
  %v3269 = vld [vmem:[%s9 + $0xea8] sm:$0xff]
  %v3270 = vld [vmem:[%s9 + $0xeb0] sm:$0xff]
  %v3271 = vld [vmem:[%s9 + $0xeb8] sm:$0xff]
  %v3272 = vld [vmem:[%s9 + $0xec0] sm:$0xff]
  %v3273 = vld [vmem:[%s9 + $0xec8] sm:$0xff]
  %v3274 = vld [vmem:[%s9 + $0xed0] sm:$0xff]
  %v3275 = vld [vmem:[%s9 + $0xed8] sm:$0xff]
  %v3276 = vld [vmem:[%s9 + $0xee0] sm:$0xff]
  %v3277 = vld [vmem:[%s9 + $0xee8] sm:$0xff]
  %v3278 = vld [vmem:[%s9 + $0xef0] sm:$0xff]
  %v3279 = vld [vmem:[%s9 + $0xef8] sm:$0xff]
  %v3280 = vld [vmem:[%s9 + $0xf00] sm:$0xff]
  %v3281 = vld [vmem:[%s9 + $0xf08] sm:$0xff]
  %v3282 = vld [vmem:[%s9 + $0xf10] sm:$0xff]
  %v3283 = vld [vmem:[%s9 + $0xf18] sm:$0xff]
  %v3284 = vld [vmem:[%s9 + $0xf20] sm:$0xff]
  %v3285 = vld [vmem:[%s9 + $0xf28] sm:$0xff]
  %v3286 = vld [vmem:[%s9 + $0xf30] sm:$0xff]
  %v3287 = vld [vmem:[%s9 + $0xf38] sm:$0xff]
  %v3288 = vld [vmem:[%s9 + $0xf40] sm:$0xff]
  %v3289 = vld [vmem:[%s9 + $0xf48] sm:$0xff]
  %v3290 = vld [vmem:[%s9 + $0xf50] sm:$0xff]
  %v3291 = vld [vmem:[%s9 + $0xf58] sm:$0xff]
  %v3292 = vld [vmem:[%s9 + $0xf60] sm:$0xff]
  %v3293 = vld [vmem:[%s9 + $0xf68] sm:$0xff]
  %v3294 = vld [vmem:[%s9 + $0xf70] sm:$0xff]
  %v3295 = vld [vmem:[%s9 + $0xf78] sm:$0xff]
  %v3296 = vld [vmem:[%s9 + $0xf80] sm:$0xff]
  %v3297 = vld [vmem:[%s9 + $0xf88] sm:$0xff]
  %v3298 = vld [vmem:[%s9 + $0xf90] sm:$0xff]
  %v3299 = vld [vmem:[%s9 + $0xf98] sm:$0xff]
  %v3300 = vld [vmem:[%s9 + $0xfa0] sm:$0xff]
  %v3301 = vld [vmem:[%s9 + $0xfa8] sm:$0xff]
  %v3302 = vld [vmem:[%s9 + $0xfb0] sm:$0xff]
  %v3303 = vld [vmem:[%s9 + $0xfb8] sm:$0xff]
  %v3304 = vld [vmem:[%s9 + $0xfc0] sm:$0xff]
  %v3305 = vld [vmem:[%s9 + $0xfc8] sm:$0xff]
  %v3306 = vld [vmem:[%s9 + $0xfd0] sm:$0xff]
  %v3307 = vld [vmem:[%s9 + $0xfd8] sm:$0xff]
  %v3308 = vld [vmem:[%s9 + $0xfe0] sm:$0xff]
  %v3309 = vld [vmem:[%s9 + $0xfe8] sm:$0xff]
  %v3310 = vld [vmem:[%s9 + $0xff0] sm:$0xff]
  %v3311 = vld [vmem:[%s9 + $0xff8] sm:$0xff]
  %v3312 = vld [vmem:[%s9 + $0x1000] sm:$0xff]
  %v3313 = vld [vmem:[%s9 + $0x1008] sm:$0xff]
  %v3314 = vld [vmem:[%s9 + $0x1010] sm:$0xff]
  %v3315 = vld [vmem:[%s9 + $0x1018] sm:$0xff]
  %v3316 = vld [vmem:[%s9 + $0x1020] sm:$0xff]
  %v3317 = vld [vmem:[%s9 + $0x1028] sm:$0xff]
  %v3318 = vld [vmem:[%s9 + $0x1030] sm:$0xff]
  %v3319 = vld [vmem:[%s9 + $0x1038] sm:$0xff]
  %v3320 = vld [vmem:[%s9 + $0x1040] sm:$0xff]
  %v3321 = vld [vmem:[%s9 + $0x1048] sm:$0xff]
  %v3322 = vld [vmem:[%s9 + $0x1050] sm:$0xff]
  %v3323 = vld [vmem:[%s9 + $0x1058] sm:$0xff]
  %v3324 = vld [vmem:[%s9 + $0x1060] sm:$0xff]
  %v3325 = vld [vmem:[%s9 + $0x1068] sm:$0xff]
  %v3326 = vld [vmem:[%s9 + $0x1070] sm:$0xff]
  %v3327 = vld [vmem:[%s9 + $0x1078] sm:$0xff]
  %v3328 = vld [vmem:[%s9 + $0x1080] sm:$0xff]
  %v3329 = vld [vmem:[%s9 + $0x1088] sm:$0xff]
  %v3330 = vld [vmem:[%s9 + $0x1090] sm:$0xff]
  %v3331 = vld [vmem:[%s9 + $0x1098] sm:$0xff]
  %v3332 = vld [vmem:[%s9 + $0x10a0] sm:$0xff]
  %v3333 = vld [vmem:[%s9 + $0x10a8] sm:$0xff]
  %v3334 = vld [vmem:[%s9 + $0x10b0] sm:$0xff]
  %v3335 = vld [vmem:[%s9 + $0x10b8] sm:$0xff]
  %v3336 = vld [vmem:[%s9 + $0x10c0] sm:$0xff]
  %v3337 = vld [vmem:[%s9 + $0x10c8] sm:$0xff]
  %v3338 = vld [vmem:[%s9 + $0x10d0] sm:$0xff]
  %v3339 = vld [vmem:[%s9 + $0x10d8] sm:$0xff]
  %v3340 = vld [vmem:[%s9 + $0x10e0] sm:$0xff]
  %v3341 = vld [vmem:[%s9 + $0x10e8] sm:$0xff]
  %v3342 = vld [vmem:[%s9 + $0x10f0] sm:$0xff]
  %v3343 = vld [vmem:[%s9 + $0x10f8] sm:$0xff]
  %v3344 = vld [vmem:[%s9 + $0x1100] sm:$0xff]
  %v3345 = vld [vmem:[%s9 + $0x1108] sm:$0xff]
  %v3346 = vld [vmem:[%s9 + $0x1110] sm:$0xff]
  %v3347 = vld [vmem:[%s9 + $0x1118] sm:$0xff]
  %v3348 = vld [vmem:[%s9 + $0x1120] sm:$0xff]
  %v3349 = vld [vmem:[%s9 + $0x1128] sm:$0xff]
  %v3350 = vld [vmem:[%s9 + $0x1130] sm:$0xff]
  %v3351 = vld [vmem:[%s9 + $0x1138] sm:$0xff]
  %v3352 = vld [vmem:[%s9 + $0x1140] sm:$0xff]
  %v3353 = vld [vmem:[%s9 + $0x1148] sm:$0xff]
  %v3354 = vld [vmem:[%s9 + $0x1150] sm:$0xff]
  %v3355 = vld [vmem:[%s9 + $0x1158] sm:$0xff]
  %v3356 = vld [vmem:[%s9 + $0x1160] sm:$0xff]
  %v3357 = vld [vmem:[%s9 + $0x1168] sm:$0xff]
  %v3358 = vld [vmem:[%s9 + $0x1170] sm:$0xff]
  %v3359 = vld [vmem:[%s9 + $0x1178] sm:$0xff]
  %v3360 = vld [vmem:[%s9 + $0x1180] sm:$0xff]
  %v3361 = vld [vmem:[%s9 + $0x1188] sm:$0xff]
  %v3362 = vld [vmem:[%s9 + $0x1190] sm:$0xff]
  %v3363 = vld [vmem:[%s9 + $0x1198] sm:$0xff]
  %v3364 = vld [vmem:[%s9 + $0x11a0] sm:$0xff]
  %v3365 = vld [vmem:[%s9 + $0x11a8] sm:$0xff]
  %v3366 = vld [vmem:[%s9 + $0x11b0] sm:$0xff]
  %v3367 = vld [vmem:[%s9 + $0x11b8] sm:$0xff]
  %v3368 = vld [vmem:[%s9 + $0x11c0] sm:$0xff]
  %v3369 = vld [vmem:[%s9 + $0x11c8] sm:$0xff]
  %v3370 = vld [vmem:[%s9 + $0x11d0] sm:$0xff]
  %v3371 = vld [vmem:[%s9 + $0x11d8] sm:$0xff]
  %v3372 = vld [vmem:[%s9 + $0x11e0] sm:$0xff]
  %v3373 = vld [vmem:[%s9 + $0x11e8] sm:$0xff]
  %v3374 = vld [vmem:[%s9 + $0x11f0] sm:$0xff]
  %v3375 = vld [vmem:[%s9 + $0x11f8] sm:$0xff]
  %v3376 = vld [vmem:[%s9 + $0x1200] sm:$0xff]
  %v3377 = vld [vmem:[%s9 + $0x1208] sm:$0xff]
  %v3378 = vld [vmem:[%s9 + $0x1210] sm:$0xff]
  %v3379 = vld [vmem:[%s9 + $0x1218] sm:$0xff]
  %v3380 = vld [vmem:[%s9 + $0x1220] sm:$0xff]
  %v3381 = vld [vmem:[%s9 + $0x1228] sm:$0xff]
  %v3382 = vld [vmem:[%s9 + $0x1230] sm:$0xff]
  %v3383 = vld [vmem:[%s9 + $0x1238] sm:$0xff]
  %v3384 = vld [vmem:[%s9 + $0x1240] sm:$0xff]
  %v3385 = vld [vmem:[%s9 + $0x1248] sm:$0xff]
  %v3386 = vld [vmem:[%s9 + $0x1250] sm:$0xff]
  %v3387 = vld [vmem:[%s9 + $0x1258] sm:$0xff]
  %v3388 = vld [vmem:[%s9 + $0x1260] sm:$0xff]
  %v3389 = vld [vmem:[%s9 + $0x1268] sm:$0xff]
  %v3390 = vld [vmem:[%s9 + $0x1270] sm:$0xff]
  %v3391 = vld [vmem:[%s9 + $0x1278] sm:$0xff]
  %v3392 = vld [vmem:[%s9 + $0x1280] sm:$0xff]
  %v3393 = vld [vmem:[%s9 + $0x1288] sm:$0xff]
  %v3394 = vld [vmem:[%s9 + $0x1290] sm:$0xff]
  %v3395 = vld [vmem:[%s9 + $0x1298] sm:$0xff]
  %v3396 = vld [vmem:[%s9 + $0x12a0] sm:$0xff]
  %v3397 = vld [vmem:[%s9 + $0x12a8] sm:$0xff]
  %v3398 = vld [vmem:[%s9 + $0x12b0] sm:$0xff]
  %v3399 = vld [vmem:[%s9 + $0x12b8] sm:$0xff]
  %v3400 = vld [vmem:[%s9 + $0x12c0] sm:$0xff]
  %v3401 = vld [vmem:[%s9 + $0x12c8] sm:$0xff]
  %v3402 = vld [vmem:[%s9 + $0x12d0] sm:$0xff]
  %v3403 = vld [vmem:[%s9 + $0x12d8] sm:$0xff]
  %v3404 = vld [vmem:[%s9 + $0x12e0] sm:$0xff]
  %v3405 = vld [vmem:[%s9 + $0x12e8] sm:$0xff]
  %v3406 = vld [vmem:[%s9 + $0x12f0] sm:$0xff]
  %v3407 = vld [vmem:[%s9 + $0x12f8] sm:$0xff]
  %v3408 = vld [vmem:[%s9 + $0x1300] sm:$0xff]
  %v3409 = vld [vmem:[%s9 + $0x1308] sm:$0xff]
  %v3410 = vld [vmem:[%s9 + $0x1310] sm:$0xff]
  %v3411 = vld [vmem:[%s9 + $0x1318] sm:$0xff]
  %v3412 = vld [vmem:[%s9 + $0x1320] sm:$0xff]
  %v3413 = vld [vmem:[%s9 + $0x1328] sm:$0xff]
  %v3414 = vld [vmem:[%s9 + $0x1330] sm:$0xff]
  %v3415 = vld [vmem:[%s9 + $0x1338] sm:$0xff]
  %v3416 = vld [vmem:[%s9 + $0x1340] sm:$0xff]
  %v3417 = vld [vmem:[%s9 + $0x1348] sm:$0xff]
  %v3418 = vld [vmem:[%s9 + $0x1350] sm:$0xff]
  %v3419 = vld [vmem:[%s9 + $0x1358] sm:$0xff]
  %v3420 = vld [vmem:[%s9 + $0x1360] sm:$0xff]
  %v3421 = vld [vmem:[%s9 + $0x1368] sm:$0xff]
  %v3422 = vld [vmem:[%s9 + $0x1370] sm:$0xff]
  %v3423 = vld [vmem:[%s9 + $0x1378] sm:$0xff]
  %v3424 = vld [vmem:[%s9 + $0x1380] sm:$0xff]
  %v3425 = vld [vmem:[%s9 + $0x1388] sm:$0xff]
  %v3426 = vld [vmem:[%s9 + $0x1390] sm:$0xff]
  %v3427 = vld [vmem:[%s9 + $0x1398] sm:$0xff]
  %v3428 = vld [vmem:[%s9 + $0x13a0] sm:$0xff]
  %v3429 = vld [vmem:[%s9 + $0x13a8] sm:$0xff]
  %v3430 = vld [vmem:[%s9 + $0x13b0] sm:$0xff]
  %v3431 = vld [vmem:[%s9 + $0x13b8] sm:$0xff]
  %v3432 = vld [vmem:[%s9 + $0x13c0] sm:$0xff]
  %v3433 = vld [vmem:[%s9 + $0x13c8] sm:$0xff]
  %v3434 = vld [vmem:[%s9 + $0x13d0] sm:$0xff]
  %v3435 = vld [vmem:[%s9 + $0x13d8] sm:$0xff]
  %v3436 = vld [vmem:[%s9 + $0x13e0] sm:$0xff]
  %v3437 = vld [vmem:[%s9 + $0x13e8] sm:$0xff]
  %v3438 = vld [vmem:[%s9 + $0x13f0] sm:$0xff]
  %v3439 = vld [vmem:[%s9 + $0x13f8] sm:$0xff]
  %v3440 = vld [vmem:[%s9 + $0x1400] sm:$0xff]
  %v3441 = vld [vmem:[%s9 + $0x1408] sm:$0xff]
  %v3442 = vld [vmem:[%s9 + $0x1410] sm:$0xff]
  %v3443 = vld [vmem:[%s9 + $0x1418] sm:$0xff]
  %v3444 = vld [vmem:[%s9 + $0x1420] sm:$0xff]
  %v3445 = vld [vmem:[%s9 + $0x1428] sm:$0xff]
  %v3446 = vld [vmem:[%s9 + $0x1430] sm:$0xff]
  %v3447 = vld [vmem:[%s9 + $0x1438] sm:$0xff]
  %v3448 = vld [vmem:[%s9 + $0x1440] sm:$0xff]
  %v3449 = vld [vmem:[%s9 + $0x1448] sm:$0xff]
  %v3450 = vld [vmem:[%s9 + $0x1450] sm:$0xff]
  %v3451 = vld [vmem:[%s9 + $0x1458] sm:$0xff]
  %v3452 = vld [vmem:[%s9 + $0x1460] sm:$0xff]
  %v3453 = vld [vmem:[%s9 + $0x1468] sm:$0xff]
  %v3454 = vld [vmem:[%s9 + $0x1470] sm:$0xff]
  %v3455 = vld [vmem:[%s9 + $0x1478] sm:$0xff]
  %v3456 = vld [vmem:[%s9 + $0x1480] sm:$0xff]
  %v3457 = vld [vmem:[%s9 + $0x1488] sm:$0xff]
  %v3458 = vld [vmem:[%s9 + $0x1490] sm:$0xff]
  %v3459 = vld [vmem:[%s9 + $0x1498] sm:$0xff]
  %v3460 = vld [vmem:[%s9 + $0x14a0] sm:$0xff]
  %v3461 = vld [vmem:[%s9 + $0x14a8] sm:$0xff]
  %v3462 = vld [vmem:[%s9 + $0x14b0] sm:$0xff]
  %v3463 = vld [vmem:[%s9 + $0x14b8] sm:$0xff]
  %v3464 = vld [vmem:[%s9 + $0x14c0] sm:$0xff]
  %v3465 = vld [vmem:[%s9 + $0x14c8] sm:$0xff]
  %v3466 = vld [vmem:[%s9 + $0x14d0] sm:$0xff]
  %v3467 = vld [vmem:[%s9 + $0x14d8] sm:$0xff]
  %v3468 = vld [vmem:[%s9 + $0x14e0] sm:$0xff]
  %v3469 = vld [vmem:[%s9 + $0x14e8] sm:$0xff]
  %v3470 = vld [vmem:[%s9 + $0x14f0] sm:$0xff]
  %v3471 = vld [vmem:[%s9 + $0x14f8] sm:$0xff]
  %v3472 = vld [vmem:[%s9 + $0x1500] sm:$0xff]
  %v3473 = vld [vmem:[%s9 + $0x1508] sm:$0xff]
  %v3474 = vld [vmem:[%s9 + $0x1510] sm:$0xff]
  %v3475 = vld [vmem:[%s9 + $0x1518] sm:$0xff]
  %v3476 = vld [vmem:[%s9 + $0x1520] sm:$0xff]
  %v3477 = vld [vmem:[%s9 + $0x1528] sm:$0xff]
  %v3478 = vld [vmem:[%s9 + $0x1530] sm:$0xff]
  %v3479 = vld [vmem:[%s9 + $0x1538] sm:$0xff]
  %v3480 = vld [vmem:[%s9 + $0x1540] sm:$0xff]
  %v3481 = vld [vmem:[%s9 + $0x1548] sm:$0xff]
  %v3482 = vld [vmem:[%s9 + $0x1550] sm:$0xff]
  %v3483 = vld [vmem:[%s9 + $0x1558] sm:$0xff]
  %v3484 = vld [vmem:[%s9 + $0x1560] sm:$0xff]
  %v3485 = vld [vmem:[%s9 + $0x1568] sm:$0xff]
  %v3486 = vld [vmem:[%s9 + $0x1570] sm:$0xff]
  %v3487 = vld [vmem:[%s9 + $0x1578] sm:$0xff]
  %v3488 = vld [vmem:[%s9 + $0x1580] sm:$0xff]
  %v3489 = vld [vmem:[%s9 + $0x1588] sm:$0xff]
  %v3490 = vld [vmem:[%s9 + $0x1590] sm:$0xff]
  %v3491 = vld [vmem:[%s9 + $0x1598] sm:$0xff]
  %v3492 = vld [vmem:[%s9 + $0x15a0] sm:$0xff]
  %v3493 = vld [vmem:[%s9 + $0x15a8] sm:$0xff]
  %v3494 = vld [vmem:[%s9 + $0x15b0] sm:$0xff]
  %v3495 = vld [vmem:[%s9 + $0x15b8] sm:$0xff]
  %v3496 = vld [vmem:[%s9 + $0x15c0] sm:$0xff]
  %v3497 = vld [vmem:[%s9 + $0x15c8] sm:$0xff]
  %v3498 = vld [vmem:[%s9 + $0x15d0] sm:$0xff]
  %v3499 = vld [vmem:[%s9 + $0x15d8] sm:$0xff]
  %v3500 = vld [vmem:[%s9 + $0x15e0] sm:$0xff]
  %v3501 = vld [vmem:[%s9 + $0x15e8] sm:$0xff]
  %v3502 = vld [vmem:[%s9 + $0x15f0] sm:$0xff]
  %v3503 = vld [vmem:[%s9 + $0x15f8] sm:$0xff]
  %v3504 = vld [vmem:[%s9 + $0x1600] sm:$0xff]
  %v3505 = vld [vmem:[%s9 + $0x1608] sm:$0xff]
  %v3506 = vld [vmem:[%s9 + $0x1610] sm:$0xff]
  %v3507 = vld [vmem:[%s9 + $0x1618] sm:$0xff]
  %v3508 = vld [vmem:[%s9 + $0x1620] sm:$0xff]
  %v3509 = vld [vmem:[%s9 + $0x1628] sm:$0xff]
  %v3510 = vld [vmem:[%s9 + $0x1630] sm:$0xff]
  %v3511 = vld [vmem:[%s9 + $0x1638] sm:$0xff]
  %v3512 = vld [vmem:[%s9 + $0x1640] sm:$0xff]
  %v3513 = vld [vmem:[%s9 + $0x1648] sm:$0xff]
  %v3514 = vld [vmem:[%s9 + $0x1650] sm:$0xff]
  %v3515 = vld [vmem:[%s9 + $0x1658] sm:$0xff]
  %v3516 = vld [vmem:[%s9 + $0x1660] sm:$0xff]
  %v3517 = vld [vmem:[%s9 + $0x1668] sm:$0xff]
  %v3518 = vld [vmem:[%s9 + $0x1670] sm:$0xff]
  %v3519 = vld [vmem:[%s9 + $0x1678] sm:$0xff]
  %v3520 = vld [vmem:[%s9 + $0x1680] sm:$0xff]
  %v3521 = vld [vmem:[%s9 + $0x1688] sm:$0xff]
  %v3522 = vld [vmem:[%s9 + $0x1690] sm:$0xff]
  %v3523 = vld [vmem:[%s9 + $0x1698] sm:$0xff]
  %v3524 = vld [vmem:[%s9 + $0x16a0] sm:$0xff]
  %v3525 = vld [vmem:[%s9 + $0x16a8] sm:$0xff]
  %v3526 = vld [vmem:[%s9 + $0x16b0] sm:$0xff]
  %v3527 = vld [vmem:[%s9 + $0x16b8] sm:$0xff]
  %v3528 = vld [vmem:[%s9 + $0x16c0] sm:$0xff]
  %v3529 = vld [vmem:[%s9 + $0x16c8] sm:$0xff]
  %v3530 = vld [vmem:[%s9 + $0x16d0] sm:$0xff]
  %v3531 = vld [vmem:[%s9 + $0x16d8] sm:$0xff]
  %v3532 = vld [vmem:[%s9 + $0x16e0] sm:$0xff]
  %v3533 = vld [vmem:[%s9 + $0x16e8] sm:$0xff]
  %v3534 = vld [vmem:[%s9 + $0x16f0] sm:$0xff]
  %v3535 = vld [vmem:[%s9 + $0x16f8] sm:$0xff]
  %v3536 = vld [vmem:[%s9 + $0x1700] sm:$0xff]
  %v3537 = vld [vmem:[%s9 + $0x1708] sm:$0xff]
  %v3538 = vld [vmem:[%s9 + $0x1710] sm:$0xff]
  %v3539 = vld [vmem:[%s9 + $0x1718] sm:$0xff]
  %v3540 = vld [vmem:[%s9 + $0x1720] sm:$0xff]
  %v3541 = vld [vmem:[%s9 + $0x1728] sm:$0xff]
  %v3542 = vld [vmem:[%s9 + $0x1730] sm:$0xff]
  %v3543 = vld [vmem:[%s9 + $0x1738] sm:$0xff]
  %v3544 = vld [vmem:[%s9 + $0x1740] sm:$0xff]
  %v3545 = vld [vmem:[%s9 + $0x1748] sm:$0xff]
  %v3546 = vld [vmem:[%s9 + $0x1750] sm:$0xff]
  %v3547 = vld [vmem:[%s9 + $0x1758] sm:$0xff]
  %v3548 = vld [vmem:[%s9 + $0x1760] sm:$0xff]
  %v3549 = vld [vmem:[%s9 + $0x1768] sm:$0xff]
  %v3550 = vld [vmem:[%s9 + $0x1770] sm:$0xff]
  %v3551 = vld [vmem:[%s9 + $0x1778] sm:$0xff]
  %v3552 = vld [vmem:[%s9 + $0x1780] sm:$0xff]
  %v3553 = vld [vmem:[%s9 + $0x1788] sm:$0xff]
  %v3554 = vld [vmem:[%s9 + $0x1790] sm:$0xff]
  %v3555 = vld [vmem:[%s9 + $0x1798] sm:$0xff]
  %v3556 = vld [vmem:[%s9 + $0x17a0] sm:$0xff]
  %v3557 = vld [vmem:[%s9 + $0x17a8] sm:$0xff]
  %v3558 = vld [vmem:[%s9 + $0x17b0] sm:$0xff]
  %v3559 = vld [vmem:[%s9 + $0x17b8] sm:$0xff]
  %v3560 = vld [vmem:[%s9 + $0x17c0] sm:$0xff]
  %v3561 = vld [vmem:[%s9 + $0x17c8] sm:$0xff]
  %v3562 = vld [vmem:[%s9 + $0x17d0] sm:$0xff]
  %v3563 = vld [vmem:[%s9 + $0x17d8] sm:$0xff]
  %v3564 = vld [vmem:[%s9 + $0x17e0] sm:$0xff]
  %v3565 = vld [vmem:[%s9 + $0x17e8] sm:$0xff]
  %v3566 = vld [vmem:[%s9 + $0x17f0] sm:$0xff]
  %v3567 = vld [vmem:[%s9 + $0x17f8] sm:$0xff]
  %v3568 = vld [vmem:[%s9 + $0x1800] sm:$0xff]
  %v3569 = vld [vmem:[%s9 + $0x1808] sm:$0xff]
  %v3570 = vld [vmem:[%s9 + $0x1810] sm:$0xff]
  %v3571 = vld [vmem:[%s9 + $0x1818] sm:$0xff]
  %v3572 = vld [vmem:[%s9 + $0x1820] sm:$0xff]
  %v3573 = vld [vmem:[%s9 + $0x1828] sm:$0xff]
  %v3574 = vld [vmem:[%s9 + $0x1830] sm:$0xff]
  %v3575 = vld [vmem:[%s9 + $0x1838] sm:$0xff]
  %v3576 = vld [vmem:[%s9 + $0x1840] sm:$0xff]
  %v3577 = vld [vmem:[%s9 + $0x1848] sm:$0xff]
  %v3578 = vld [vmem:[%s9 + $0x1850] sm:$0xff]
  %v3579 = vld [vmem:[%s9 + $0x1858] sm:$0xff]
  %v3580 = vld [vmem:[%s9 + $0x1860] sm:$0xff]
  %v3581 = vld [vmem:[%s9 + $0x1868] sm:$0xff]
  %v3582 = vld [vmem:[%s9 + $0x1870] sm:$0xff]
  %v3583 = vld [vmem:[%s9 + $0x1878] sm:$0xff]
  %v3584 = vld [vmem:[%s9 + $0x1880] sm:$0xff]
  %v3585 = vld [vmem:[%s9 + $0x1888] sm:$0xff]
  %v3586 = vld [vmem:[%s9 + $0x1890] sm:$0xff]
  %v3587 = vld [vmem:[%s9 + $0x1898] sm:$0xff]
  %v3588 = vld [vmem:[%s9 + $0x18a0] sm:$0xff]
  %v3589 = vld [vmem:[%s9 + $0x18a8] sm:$0xff]
  %v3590 = vld [vmem:[%s9 + $0x18b0] sm:$0xff]
  %v3591 = vld [vmem:[%s9 + $0x18b8] sm:$0xff]
  %v3592 = vld [vmem:[%s9 + $0x18c0] sm:$0xff]
  %v3593 = vld [vmem:[%s9 + $0x18c8] sm:$0xff]
  %v3594 = vld [vmem:[%s9 + $0x18d0] sm:$0xff]
  %v3595 = vld [vmem:[%s9 + $0x18d8] sm:$0xff]
  %v3596 = vld [vmem:[%s9 + $0x18e0] sm:$0xff]
  %v3597 = vld [vmem:[%s9 + $0x18e8] sm:$0xff]
  %v3598 = vld [vmem:[%s9 + $0x18f0] sm:$0xff]
  %v3599 = vld [vmem:[%s9 + $0x18f8] sm:$0xff]
  %v3600 = vld [vmem:[%s9 + $0x1900] sm:$0xff]
  %v3601 = vld [vmem:[%s9 + $0x1908] sm:$0xff]
  %v3602 = vld [vmem:[%s9 + $0x1910] sm:$0xff]
  %v3603 = vld [vmem:[%s9 + $0x1918] sm:$0xff]
  %v3604 = vld [vmem:[%s9 + $0x1920] sm:$0xff]
  %v3605 = vld [vmem:[%s9 + $0x1928] sm:$0xff]
  %v3606 = vld [vmem:[%s9 + $0x1930] sm:$0xff]
  %v3607 = vld [vmem:[%s9 + $0x1938] sm:$0xff]
  %v3608 = vld [vmem:[%s9 + $0x1940] sm:$0xff]
  %v3609 = vld [vmem:[%s9 + $0x1948] sm:$0xff]
  %v3610 = vld [vmem:[%s9 + $0x1950] sm:$0xff]
  %v3611 = vld [vmem:[%s9 + $0x1958] sm:$0xff]
  %v3612 = vld [vmem:[%s9 + $0x1960] sm:$0xff]
  %v3613 = vld [vmem:[%s9 + $0x1968] sm:$0xff]
  %v3614 = vld [vmem:[%s9 + $0x1970] sm:$0xff]
  %v3615 = vld [vmem:[%s9 + $0x1978] sm:$0xff]
  %v3616 = vld [vmem:[%s9 + $0x1980] sm:$0xff]
  %v3617 = vld [vmem:[%s9 + $0x1988] sm:$0xff]
  %v3618 = vld [vmem:[%s9 + $0x1990] sm:$0xff]
  %v3619 = vld [vmem:[%s9 + $0x1998] sm:$0xff]
  %v3620 = vld [vmem:[%s9 + $0x19a0] sm:$0xff]
  %v3621 = vld [vmem:[%s9 + $0x19a8] sm:$0xff]
  %v3622 = vld [vmem:[%s9 + $0x19b0] sm:$0xff]
  %v3623 = vld [vmem:[%s9 + $0x19b8] sm:$0xff]
  %v3624 = vld [vmem:[%s9 + $0x19c0] sm:$0xff]
  %v3625 = vld [vmem:[%s9 + $0x19c8] sm:$0xff]
  %v3626 = vld [vmem:[%s9 + $0x19d0] sm:$0xff]
  %v3627 = vld [vmem:[%s9 + $0x19d8] sm:$0xff]
  %v3628 = vld [vmem:[%s9 + $0x19e0] sm:$0xff]
  %v3629 = vld [vmem:[%s9 + $0x19e8] sm:$0xff]
  %v3630 = vld [vmem:[%s9 + $0x19f0] sm:$0xff]
  %v3631 = vld [vmem:[%s9 + $0x19f8] sm:$0xff]
  %v3632 = vld [vmem:[%s9 + $0x1a00] sm:$0xff]
  %v3633 = vld [vmem:[%s9 + $0x1a08] sm:$0xff]
  %v3634 = vld [vmem:[%s9 + $0x1a10] sm:$0xff]
  %v3635 = vld [vmem:[%s9 + $0x1a18] sm:$0xff]
  %v3636 = vld [vmem:[%s9 + $0x1a20] sm:$0xff]
  %v3637 = vld [vmem:[%s9 + $0x1a28] sm:$0xff]
  %v3638 = vld [vmem:[%s9 + $0x1a30] sm:$0xff]
  %v3639 = vld [vmem:[%s9 + $0x1a38] sm:$0xff]
  %v3640 = vld [vmem:[%s9 + $0x1a40] sm:$0xff]
  %v3641 = vld [vmem:[%s9 + $0x1a48] sm:$0xff]
  %v3642 = vld [vmem:[%s9 + $0x1a50] sm:$0xff]
  %v3643 = vld [vmem:[%s9 + $0x1a58] sm:$0xff]
  %v3644 = vld [vmem:[%s9 + $0x1a60] sm:$0xff]
  %v3645 = vld [vmem:[%s9 + $0x1a68] sm:$0xff]
  %v3646 = vld [vmem:[%s9 + $0x1a70] sm:$0xff]
  %v3647 = vld [vmem:[%s9 + $0x1a78] sm:$0xff]
  %v3648 = vld [vmem:[%s9 + $0x1a80] sm:$0xff]
  %v3649 = vld [vmem:[%s9 + $0x1a88] sm:$0xff]
  %v3650 = vld [vmem:[%s9 + $0x1a90] sm:$0xff]
  %v3651 = vld [vmem:[%s9 + $0x1a98] sm:$0xff]
  %v3652 = vld [vmem:[%s9 + $0x1aa0] sm:$0xff]
  %v3653 = vld [vmem:[%s9 + $0x1aa8] sm:$0xff]
  %v3654 = vld [vmem:[%s9 + $0x1ab0] sm:$0xff]
  %v3655 = vld [vmem:[%s9 + $0x1ab8] sm:$0xff]
  %v3656 = vld [vmem:[%s9 + $0x1ac0] sm:$0xff]
  %v3657 = vld [vmem:[%s9 + $0x1ac8] sm:$0xff]
  %v3658 = vld [vmem:[%s9 + $0x1ad0] sm:$0xff]
  %v3659 = vld [vmem:[%s9 + $0x1ad8] sm:$0xff]
  %v3660 = vld [vmem:[%s9 + $0x1ae0] sm:$0xff]
  %v3661 = vld [vmem:[%s9 + $0x1ae8] sm:$0xff]
  %v3662 = vld [vmem:[%s9 + $0x1af0] sm:$0xff]
  %v3663 = vld [vmem:[%s9 + $0x1af8] sm:$0xff]
  %v3664 = vld [vmem:[%s9 + $0x1b00] sm:$0xff]
  %v3665 = vld [vmem:[%s9 + $0x1b08] sm:$0xff]
  %v3666 = vld [vmem:[%s9 + $0x1b10] sm:$0xff]
  %v3667 = vld [vmem:[%s9 + $0x1b18] sm:$0xff]
  %v3668 = vld [vmem:[%s9 + $0x1b20] sm:$0xff]
  %v3669 = vld [vmem:[%s9 + $0x1b28] sm:$0xff]
  %v3670 = vld [vmem:[%s9 + $0x1b30] sm:$0xff]
  %v3671 = vld [vmem:[%s9 + $0x1b38] sm:$0xff]
  %v3672 = vld [vmem:[%s9 + $0x1b40] sm:$0xff]
  %v3673 = vld [vmem:[%s9 + $0x1b48] sm:$0xff]
  %v3674 = vld [vmem:[%s9 + $0x1b50] sm:$0xff]
  %v3675 = vld [vmem:[%s9 + $0x1b58] sm:$0xff]
  %v3676 = vld [vmem:[%s9 + $0x1b60] sm:$0xff]
  %v3677 = vld [vmem:[%s9 + $0x1b68] sm:$0xff]
  %v3678 = vld [vmem:[%s9 + $0x1b70] sm:$0xff]
  %v3679 = vld [vmem:[%s9 + $0x1b78] sm:$0xff]
  %v3680 = vld [vmem:[%s9 + $0x1b80] sm:$0xff]
  %v3681 = vld [vmem:[%s9 + $0x1b88] sm:$0xff]
  %v3682 = vld [vmem:[%s9 + $0x1b90] sm:$0xff]
  %v3683 = vld [vmem:[%s9 + $0x1b98] sm:$0xff]
  %v3684 = vld [vmem:[%s9 + $0x1ba0] sm:$0xff]
  %v3685 = vld [vmem:[%s9 + $0x1ba8] sm:$0xff]
  %v3686 = vld [vmem:[%s9 + $0x1bb0] sm:$0xff]
  %v3687 = vld [vmem:[%s9 + $0x1bb8] sm:$0xff]
  %v3688 = vld [vmem:[%s9 + $0x1bc0] sm:$0xff]
  %v3689 = vld [vmem:[%s9 + $0x1bc8] sm:$0xff]
  %v3690 = vld [vmem:[%s9 + $0x1bd0] sm:$0xff]
  %v3691 = vld [vmem:[%s9 + $0x1bd8] sm:$0xff]
  %v3692 = vld [vmem:[%s9 + $0x1be0] sm:$0xff]
  %v3693 = vld [vmem:[%s9 + $0x1be8] sm:$0xff]
  %v3694 = vld [vmem:[%s9 + $0x1bf0] sm:$0xff]
  %v3695 = vld [vmem:[%s9 + $0x1bf8] sm:$0xff]
  %v3696 = vld [vmem:[%s9 + $0x1c00] sm:$0xff]
  %v3697 = vld [vmem:[%s9 + $0x1c08] sm:$0xff]
  %v3698 = vld [vmem:[%s9 + $0x1c10] sm:$0xff]
  %v3699 = vld [vmem:[%s9 + $0x1c18] sm:$0xff]
  %v3700 = vld [vmem:[%s9 + $0x1c20] sm:$0xff]
  %v3701 = vld [vmem:[%s9 + $0x1c28] sm:$0xff]
  %v3702 = vld [vmem:[%s9 + $0x1c30] sm:$0xff]
  %v3703 = vld [vmem:[%s9 + $0x1c38] sm:$0xff]
  %v3704 = vld [vmem:[%s9 + $0x1c40] sm:$0xff]
  %v3705 = vld [vmem:[%s9 + $0x1c48] sm:$0xff]
  %v3706 = vld [vmem:[%s9 + $0x1c50] sm:$0xff]
  %v3707 = vld [vmem:[%s9 + $0x1c58] sm:$0xff]
  %v3708 = vld [vmem:[%s9 + $0x1c60] sm:$0xff]
  %v3709 = vld [vmem:[%s9 + $0x1c68] sm:$0xff]
  %v3710 = vld [vmem:[%s9 + $0x1c70] sm:$0xff]
  %v3711 = vld [vmem:[%s9 + $0x1c78] sm:$0xff]
  %v3712 = vld [vmem:[%s9 + $0x1c80] sm:$0xff]
  %v3713 = vld [vmem:[%s9 + $0x1c88] sm:$0xff]
  %v3714 = vld [vmem:[%s9 + $0x1c90] sm:$0xff]
  %v3715 = vld [vmem:[%s9 + $0x1c98] sm:$0xff]
  %v3716 = vld [vmem:[%s9 + $0x1ca0] sm:$0xff]
  %v3717 = vld [vmem:[%s9 + $0x1ca8] sm:$0xff]
  %v3718 = vld [vmem:[%s9 + $0x1cb0] sm:$0xff]
  %v3719 = vld [vmem:[%s9 + $0x1cb8] sm:$0xff]
  %v3720 = vld [vmem:[%s9 + $0x1cc0] sm:$0xff]
  %v3721 = vld [vmem:[%s9 + $0x1cc8] sm:$0xff]
  %v3722 = vld [vmem:[%s9 + $0x1cd0] sm:$0xff]
  %v3723 = vld [vmem:[%s9 + $0x1cd8] sm:$0xff]
  %v3724 = vld [vmem:[%s9 + $0x1ce0] sm:$0xff]
  %v3725 = vld [vmem:[%s9 + $0x1ce8] sm:$0xff]
  %v3726 = vld [vmem:[%s9 + $0x1cf0] sm:$0xff]
  %v3727 = vld [vmem:[%s9 + $0x1cf8] sm:$0xff]
  %v3728 = vld [vmem:[%s9 + $0x1d00] sm:$0xff]
  %v3729 = vld [vmem:[%s9 + $0x1d08] sm:$0xff]
  %v3730 = vld [vmem:[%s9 + $0x1d10] sm:$0xff]
  %v3731 = vld [vmem:[%s9 + $0x1d18] sm:$0xff]
  %v3732 = vld [vmem:[%s9 + $0x1d20] sm:$0xff]
  %v3733 = vld [vmem:[%s9 + $0x1d28] sm:$0xff]
  %v3734 = vld [vmem:[%s9 + $0x1d30] sm:$0xff]
  %v3735 = vld [vmem:[%s9 + $0x1d38] sm:$0xff]
  %v3736 = vld [vmem:[%s9 + $0x1d40] sm:$0xff]
  %v3737 = vld [vmem:[%s9 + $0x1d48] sm:$0xff]
  %v3738 = vld [vmem:[%s9 + $0x1d50] sm:$0xff]
  %v3739 = vld [vmem:[%s9 + $0x1d58] sm:$0xff]
  %v3740 = vld [vmem:[%s9 + $0x1d60] sm:$0xff]
  %v3741 = vld [vmem:[%s9 + $0x1d68] sm:$0xff]
  %v3742 = vld [vmem:[%s9 + $0x1d70] sm:$0xff]
  %v3743 = vld [vmem:[%s9 + $0x1d78] sm:$0xff]
  %v3744 = vld [vmem:[%s9 + $0x1d80] sm:$0xff]
  %v3745 = vld [vmem:[%s9 + $0x1d88] sm:$0xff]
  %v3746 = vld [vmem:[%s9 + $0x1d90] sm:$0xff]
  %v3747 = vld [vmem:[%s9 + $0x1d98] sm:$0xff]
  %v3748 = vld [vmem:[%s9 + $0x1da0] sm:$0xff]
  %v3749 = vld [vmem:[%s9 + $0x1da8] sm:$0xff]
  %v3750 = vld [vmem:[%s9 + $0x1db0] sm:$0xff]
  %v3751 = vld [vmem:[%s9 + $0x1db8] sm:$0xff]
  %v3752 = vld [vmem:[%s9 + $0x1dc0] sm:$0xff]
  %v3753 = vld [vmem:[%s9 + $0x1dc8] sm:$0xff]
  %v3754 = vld [vmem:[%s9 + $0x1dd0] sm:$0xff]
  %v3755 = vld [vmem:[%s9 + $0x1dd8] sm:$0xff]
  %v3756 = vld [vmem:[%s9 + $0x1de0] sm:$0xff]
  %v3757 = vld [vmem:[%s9 + $0x1de8] sm:$0xff]
  %v3758 = vld [vmem:[%s9 + $0x1df0] sm:$0xff]
  %v3759 = vld [vmem:[%s9 + $0x1df8] sm:$0xff]
  %v3760 = vld [vmem:[%s9 + $0x1e00] sm:$0xff]
  %v3761 = vld [vmem:[%s9 + $0x1e08] sm:$0xff]
  %v3762 = vld [vmem:[%s9 + $0x1e10] sm:$0xff]
  %v3763 = vld [vmem:[%s9 + $0x1e18] sm:$0xff]
  %v3764 = vld [vmem:[%s9 + $0x1e20] sm:$0xff]
  %v3765 = vld [vmem:[%s9 + $0x1e28] sm:$0xff]
  %v3766 = vld [vmem:[%s9 + $0x1e30] sm:$0xff]
  %v3767 = vld [vmem:[%s9 + $0x1e38] sm:$0xff]
  %v3768 = vld [vmem:[%s9 + $0x1e40] sm:$0xff]
  %v3769 = vld [vmem:[%s9 + $0x1e48] sm:$0xff]
  %v3770 = vld [vmem:[%s9 + $0x1e50] sm:$0xff]
  %v3771 = vld [vmem:[%s9 + $0x1e58] sm:$0xff]
  %v3772 = vld [vmem:[%s9 + $0x1e60] sm:$0xff]
  %v3773 = vld [vmem:[%s9 + $0x1e68] sm:$0xff]
  %v3774 = vld [vmem:[%s9 + $0x1e70] sm:$0xff]
  %v3775 = vld [vmem:[%s9 + $0x1e78] sm:$0xff]
  %v3776 = vld [vmem:[%s9 + $0x1e80] sm:$0xff]
  %v3777 = vld [vmem:[%s9 + $0x1e88] sm:$0xff]
  %v3778 = vld [vmem:[%s9 + $0x1e90] sm:$0xff]
  %v3779 = vld [vmem:[%s9 + $0x1e98] sm:$0xff]
  %v3780 = vld [vmem:[%s9 + $0x1ea0] sm:$0xff]
  %v3781 = vld [vmem:[%s9 + $0x1ea8] sm:$0xff]
  %v3782 = vld [vmem:[%s9 + $0x1eb0] sm:$0xff]
  %v3783 = vld [vmem:[%s9 + $0x1eb8] sm:$0xff]
  %v3784 = vld [vmem:[%s9 + $0x1ec0] sm:$0xff]
  %v3785 = vld [vmem:[%s9 + $0x1ec8] sm:$0xff]
  %v3786 = vld [vmem:[%s9 + $0x1ed0] sm:$0xff]
  %v3787 = vld [vmem:[%s9 + $0x1ed8] sm:$0xff]
  %v3788 = vld [vmem:[%s9 + $0x1ee0] sm:$0xff]
  %v3789 = vld [vmem:[%s9 + $0x1ee8] sm:$0xff]
  %v3790 = vld [vmem:[%s9 + $0x1ef0] sm:$0xff]
  %v3791 = vld [vmem:[%s9 + $0x1ef8] sm:$0xff]
  %v3792 = vld [vmem:[%s9 + $0x1f00] sm:$0xff]
  %v3793 = vld [vmem:[%s9 + $0x1f08] sm:$0xff]
  %v3794 = vld [vmem:[%s9 + $0x1f10] sm:$0xff]
  %v3795 = vld [vmem:[%s9 + $0x1f18] sm:$0xff]
  %v3796 = vld [vmem:[%s9 + $0x1f20] sm:$0xff]
  %v3797 = vld [vmem:[%s9 + $0x1f28] sm:$0xff]
  %v3798 = vld [vmem:[%s9 + $0x1f30] sm:$0xff]
  %v3799 = vld [vmem:[%s9 + $0x1f38] sm:$0xff]
  %v3800 = vld [vmem:[%s9 + $0x1f40] sm:$0xff]
  %v3801 = vld [vmem:[%s9 + $0x1f48] sm:$0xff]
  %v3802 = vld [vmem:[%s9 + $0x1f50] sm:$0xff]
  %v3803 = vld [vmem:[%s9 + $0x1f58] sm:$0xff]
  %v3804 = vld [vmem:[%s9 + $0x1f60] sm:$0xff]
  %v3805 = vld [vmem:[%s9 + $0x1f68] sm:$0xff]
  %v3806 = vld [vmem:[%s9 + $0x1f70] sm:$0xff]
  %v3807 = vld [vmem:[%s9 + $0x1f78] sm:$0xff]
  %v3808 = vld [vmem:[%s9 + $0x1f80] sm:$0xff]
  %v3809 = vld [vmem:[%s9 + $0x1f88] sm:$0xff]
  %v3810 = vld [vmem:[%s9 + $0x1f90] sm:$0xff]
  %v3811 = vld [vmem:[%s9 + $0x1f98] sm:$0xff]
  %v3812 = vld [vmem:[%s9 + $0x1fa0] sm:$0xff]
  %v3813 = vld [vmem:[%s9 + $0x1fa8] sm:$0xff]
  %v3814 = vld [vmem:[%s9 + $0x1fb0] sm:$0xff]
  %v3815 = vld [vmem:[%s9 + $0x1fb8] sm:$0xff]
  %v3816 = vld [vmem:[%s9 + $0x1fc0] sm:$0xff]
  %v3817 = vld [vmem:[%s9 + $0x1fc8] sm:$0xff]
  %v3818 = vld [vmem:[%s9 + $0x1fd0] sm:$0xff]
  %v3819 = vld [vmem:[%s9 + $0x1fd8] sm:$0xff]
  %v3820 = vld [vmem:[%s9 + $0x1fe0] sm:$0xff]
  %v3821 = vld [vmem:[%s9 + $0x1fe8] sm:$0xff]
  %v3822 = vld [vmem:[%s9 + $0x1ff0] sm:$0xff]
  %v3823 = vld [vmem:[%s9 + $0x1ff8] sm:$0xff]
  %v3824 = vld [vmem:[%s9 + $0x2000] sm:$0xff]
  %v3825 = vld [vmem:[%s9 + $0x2008] sm:$0xff]
  %v3826 = vld [vmem:[%s9 + $0x2010] sm:$0xff]
  %v3827 = vld [vmem:[%s9 + $0x2018] sm:$0xff]
  %v3828 = vld [vmem:[%s9 + $0x2020] sm:$0xff]
  %v3829 = vld [vmem:[%s9 + $0x2028] sm:$0xff]
  %v3830 = vld [vmem:[%s9 + $0x2030] sm:$0xff]
  %v3831 = vld [vmem:[%s9 + $0x2038] sm:$0xff]
  %v3832 = vld [vmem:[%s9 + $0x2040] sm:$0xff]
  %v3833 = vld [vmem:[%s9 + $0x2048] sm:$0xff]
  %v3834 = vld [vmem:[%s9 + $0x2050] sm:$0xff]
  %v3835 = vld [vmem:[%s9 + $0x2058] sm:$0xff]
  %v3836 = vld [vmem:[%s9 + $0x2060] sm:$0xff]
  %v3837 = vld [vmem:[%s9 + $0x2068] sm:$0xff]
  %v3838 = vld [vmem:[%s9 + $0x2070] sm:$0xff]
  %v3839 = vld [vmem:[%s9 + $0x2078] sm:$0xff]
  %v3840 = vld [vmem:[%s9 + $0x2080] sm:$0xff]
  %v3841 = vld [vmem:[%s9 + $0x2088] sm:$0xff]
  %v3842 = vld [vmem:[%s9 + $0x2090] sm:$0xff]
  %v3843 = vld [vmem:[%s9 + $0x2098] sm:$0xff]
  %v3844 = vld [vmem:[%s9 + $0x20a0] sm:$0xff]
  %v3845 = vld [vmem:[%s9 + $0x20a8] sm:$0xff]
  %v3846 = vld [vmem:[%s9 + $0x20b0] sm:$0xff]
  %v3847 = vld [vmem:[%s9 + $0x20b8] sm:$0xff]
  %v3848 = vld [vmem:[%s9 + $0x20c0] sm:$0xff]
  %v3849 = vld [vmem:[%s9 + $0x20c8] sm:$0xff]
  %v3850 = vld [vmem:[%s9 + $0x20d0] sm:$0xff]
  %v3851 = vld [vmem:[%s9 + $0x20d8] sm:$0xff]
  %v3852 = vld [vmem:[%s9 + $0x20e0] sm:$0xff]
  %v3853 = vld [vmem:[%s9 + $0x20e8] sm:$0xff]
  %v3854 = vld [vmem:[%s9 + $0x20f0] sm:$0xff]
  %v3855 = vld [vmem:[%s9 + $0x20f8] sm:$0xff]
  %v3856 = vld [vmem:[%s9 + $0x2100] sm:$0xff]
  %v3857 = vld [vmem:[%s9 + $0x2108] sm:$0xff]
  %v3858 = vld [vmem:[%s9 + $0x2110] sm:$0xff]
  %v3859 = vld [vmem:[%s9 + $0x2118] sm:$0xff]
  %v3860 = vld [vmem:[%s9 + $0x2120] sm:$0xff]
  %v3861 = vld [vmem:[%s9 + $0x2128] sm:$0xff]
  %v3862 = vld [vmem:[%s9 + $0x2130] sm:$0xff]
  %v3863 = vld [vmem:[%s9 + $0x2138] sm:$0xff]
  %v3864 = vld [vmem:[%s9 + $0x2140] sm:$0xff]
  %v3865 = vld [vmem:[%s9 + $0x2148] sm:$0xff]
  %v3866 = vld [vmem:[%s9 + $0x2150] sm:$0xff]
  %v3867 = vld [vmem:[%s9 + $0x2158] sm:$0xff]
  %v3868 = vld [vmem:[%s9 + $0x2160] sm:$0xff]
  %v3869 = vld [vmem:[%s9 + $0x2168] sm:$0xff]
  %v3870 = vld [vmem:[%s9 + $0x2170] sm:$0xff]
  %v3871 = vld [vmem:[%s9 + $0x2178] sm:$0xff]
  %v3872 = vld [vmem:[%s9 + $0x2180] sm:$0xff]
  %v3873 = vld [vmem:[%s9 + $0x2188] sm:$0xff]
  %v3874 = vld [vmem:[%s9 + $0x2190] sm:$0xff]
  %v3875 = vld [vmem:[%s9 + $0x2198] sm:$0xff]
  %v3876 = vld [vmem:[%s9 + $0x21a0] sm:$0xff]
  %v3877 = vld [vmem:[%s9 + $0x21a8] sm:$0xff]
  %v3878 = vld [vmem:[%s9 + $0x21b0] sm:$0xff]
  %v3879 = vld [vmem:[%s9 + $0x21b8] sm:$0xff]
  %v3880 = vld [vmem:[%s9 + $0x21c0] sm:$0xff]
  %v3881 = vld [vmem:[%s9 + $0x21c8] sm:$0xff]
  %v3882 = vld [vmem:[%s9 + $0x21d0] sm:$0xff]
  %v3883 = vld [vmem:[%s9 + $0x21d8] sm:$0xff]
  %v3884 = vld [vmem:[%s9 + $0x21e0] sm:$0xff]
  %v3885 = vld [vmem:[%s9 + $0x21e8] sm:$0xff]
  %v3886 = vld [vmem:[%s9 + $0x21f0] sm:$0xff]
  %v3887 = vld [vmem:[%s9 + $0x21f8] sm:$0xff]
  %v3888 = vld [vmem:[%s9 + $0x2200] sm:$0xff]
  %v3889 = vld [vmem:[%s9 + $0x2208] sm:$0xff]
  %v3890 = vld [vmem:[%s9 + $0x2210] sm:$0xff]
  %v3891 = vld [vmem:[%s9 + $0x2218] sm:$0xff]
  %v3892 = vld [vmem:[%s9 + $0x2220] sm:$0xff]
  %v3893 = vld [vmem:[%s9 + $0x2228] sm:$0xff]
  %v3894 = vld [vmem:[%s9 + $0x2230] sm:$0xff]
  %v3895 = vld [vmem:[%s9 + $0x2238] sm:$0xff]
  %v3896 = vld [vmem:[%s9 + $0x2240] sm:$0xff]
  %v3897 = vld [vmem:[%s9 + $0x2248] sm:$0xff]
  %v3898 = vld [vmem:[%s9 + $0x2250] sm:$0xff]
  %v3899 = vld [vmem:[%s9 + $0x2258] sm:$0xff]
  %v3900 = vld [vmem:[%s9 + $0x2260] sm:$0xff]
  %v3901 = vld [vmem:[%s9 + $0x2268] sm:$0xff]
  %v3902 = vld [vmem:[%s9 + $0x2270] sm:$0xff]
  %v3903 = vld [vmem:[%s9 + $0x2278] sm:$0xff]
  %v3904 = vld [vmem:[%s9 + $0x2280] sm:$0xff]
  %v3905 = vld [vmem:[%s9 + $0x2288] sm:$0xff]
  %v3906 = vld [vmem:[%s9 + $0x2290] sm:$0xff]
  %v3907 = vld [vmem:[%s9 + $0x2298] sm:$0xff]
  %v3908 = vld [vmem:[%s9 + $0x22a0] sm:$0xff]
  %v3909 = vld [vmem:[%s9 + $0x22a8] sm:$0xff]
  %v3910 = vld [vmem:[%s9 + $0x22b0] sm:$0xff]
  %v3911 = vld [vmem:[%s9 + $0x22b8] sm:$0xff]
  %v3912 = vld [vmem:[%s9 + $0x22c0] sm:$0xff]
  %v3913 = vld [vmem:[%s9 + $0x22c8] sm:$0xff]
  %v3914 = vld [vmem:[%s9 + $0x22d0] sm:$0xff]
  %v3915 = vld [vmem:[%s9 + $0x22d8] sm:$0xff]
  %v3916 = vld [vmem:[%s9 + $0x22e0] sm:$0xff]
  %v3917 = vld [vmem:[%s9 + $0x22e8] sm:$0xff]
  %v3918 = vld [vmem:[%s9 + $0x22f0] sm:$0xff]
  %v3919 = vld [vmem:[%s9 + $0x22f8] sm:$0xff]
  %v3920 = vld [vmem:[%s9 + $0x2300] sm:$0xff]
  %v3921 = vld [vmem:[%s9 + $0x2308] sm:$0xff]
  %v3922 = vld [vmem:[%s9 + $0x2310] sm:$0xff]
  %v3923 = vld [vmem:[%s9 + $0x2318] sm:$0xff]
  %v3924 = vld [vmem:[%s9 + $0x2320] sm:$0xff]
  %v3925 = vld [vmem:[%s9 + $0x2328] sm:$0xff]
  %v3926 = vld [vmem:[%s9 + $0x2330] sm:$0xff]
  %v3927 = vld [vmem:[%s9 + $0x2338] sm:$0xff]
  %v3928 = vld [vmem:[%s9 + $0x2340] sm:$0xff]
  %v3929 = vld [vmem:[%s9 + $0x2348] sm:$0xff]
  %v3930 = vld [vmem:[%s9 + $0x2350] sm:$0xff]
  %v3931 = vld [vmem:[%s9 + $0x2358] sm:$0xff]
  %v3932 = vld [vmem:[%s9 + $0x2360] sm:$0xff]
  %v3933 = vld [vmem:[%s9 + $0x2368] sm:$0xff]
  %v3934 = vld [vmem:[%s9 + $0x2370] sm:$0xff]
  %v3935 = vld [vmem:[%s9 + $0x2378] sm:$0xff]
  %v3936 = vld [vmem:[%s9 + $0x2380] sm:$0xff]
  %v3937 = vld [vmem:[%s9 + $0x2388] sm:$0xff]
  %v3938 = vld [vmem:[%s9 + $0x2390] sm:$0xff]
  %v3939 = vld [vmem:[%s9 + $0x2398] sm:$0xff]
  %v3940 = vld [vmem:[%s9 + $0x23a0] sm:$0xff]
  %v3941 = vld [vmem:[%s9 + $0x23a8] sm:$0xff]
  %v3942 = vld [vmem:[%s9 + $0x23b0] sm:$0xff]
  %v3943 = vld [vmem:[%s9 + $0x23b8] sm:$0xff]
  %v3944 = vld [vmem:[%s9 + $0x23c0] sm:$0xff]
  %v3945 = vld [vmem:[%s9 + $0x23c8] sm:$0xff]
  %v3946 = vld [vmem:[%s9 + $0x23d0] sm:$0xff]
  %v3947 = vld [vmem:[%s9 + $0x23d8] sm:$0xff]
  %v3948 = vld [vmem:[%s9 + $0x23e0] sm:$0xff]
  %v3949 = vld [vmem:[%s9 + $0x23e8] sm:$0xff]
  %v3950 = vld [vmem:[%s9 + $0x23f0] sm:$0xff]
  %v3951 = vld [vmem:[%s9 + $0x23f8] sm:$0xff]
  %v3952 = vld [vmem:[%s9 + $0x2400] sm:$0xff]
  %v3953 = vld [vmem:[%s9 + $0x2408] sm:$0xff]
  %v3954 = vld [vmem:[%s9 + $0x2410] sm:$0xff]
  %v3955 = vld [vmem:[%s9 + $0x2418] sm:$0xff]
  %v3956 = vld [vmem:[%s9 + $0x2420] sm:$0xff]
  %v3957 = vld [vmem:[%s9 + $0x2428] sm:$0xff]
  %v3958 = vld [vmem:[%s9 + $0x2430] sm:$0xff]
  %v3959 = vld [vmem:[%s9 + $0x2438] sm:$0xff]
  %v3960 = vld [vmem:[%s9 + $0x2440] sm:$0xff]
  %v3961 = vld [vmem:[%s9 + $0x2448] sm:$0xff]
  %v3962 = vld [vmem:[%s9 + $0x2450] sm:$0xff]
  %v3963 = vld [vmem:[%s9 + $0x2458] sm:$0xff]
  %v3964 = vld [vmem:[%s9 + $0x2460] sm:$0xff]
  %v3965 = vld [vmem:[%s9 + $0x2468] sm:$0xff]
  %v3966 = vld [vmem:[%s9 + $0x2470] sm:$0xff]
  %v3967 = vld [vmem:[%s9 + $0x2478] sm:$0xff]
  %v3968 = vld [vmem:[%s9 + $0x2480] sm:$0xff]
  %v3969 = vld [vmem:[%s9 + $0x2488] sm:$0xff]
  %v3970 = vld [vmem:[%s9 + $0x2490] sm:$0xff]
  %v3971 = vld [vmem:[%s9 + $0x2498] sm:$0xff]
  %v3972 = vld [vmem:[%s9 + $0x24a0] sm:$0xff]
  %v3973 = vld [vmem:[%s9 + $0x24a8] sm:$0xff]
  %v3974 = vld [vmem:[%s9 + $0x24b0] sm:$0xff]
  %v3975 = vld [vmem:[%s9 + $0x24b8] sm:$0xff]
  %v3976 = vld [vmem:[%s9 + $0x24c0] sm:$0xff]
  %v3977 = vld [vmem:[%s9 + $0x24c8] sm:$0xff]
  %v3978 = vld [vmem:[%s9 + $0x24d0] sm:$0xff]
  %v3979 = vld [vmem:[%s9 + $0x24d8] sm:$0xff]
  %v3980 = vld [vmem:[%s9 + $0x24e0] sm:$0xff]
  %v3981 = vld [vmem:[%s9 + $0x24e8] sm:$0xff]
  %v3982 = vld [vmem:[%s9 + $0x24f0] sm:$0xff]
  %v3983 = vld [vmem:[%s9 + $0x24f8] sm:$0xff]
  %v3984 = vld [vmem:[%s9 + $0x2500] sm:$0xff]
  %v3985 = vld [vmem:[%s9 + $0x2508] sm:$0xff]
  %v3986 = vld [vmem:[%s9 + $0x2510] sm:$0xff]
  %v3987 = vld [vmem:[%s9 + $0x2518] sm:$0xff]
  %v3988 = vld [vmem:[%s9 + $0x2520] sm:$0xff]
  %v3989 = vld [vmem:[%s9 + $0x2528] sm:$0xff]
  %v3990 = vld [vmem:[%s9 + $0x2530] sm:$0xff]
  %v3991 = vld [vmem:[%s9 + $0x2538] sm:$0xff]
  %v3992 = vld [vmem:[%s9 + $0x2540] sm:$0xff]
  %v3993 = vld [vmem:[%s9 + $0x2548] sm:$0xff]
  %v3994 = vld [vmem:[%s9 + $0x2550] sm:$0xff]
  %v3995 = vld [vmem:[%s9 + $0x2558] sm:$0xff]
  %v3996 = vld [vmem:[%s9 + $0x2560] sm:$0xff]
  %v3997 = vld [vmem:[%s9 + $0x2568] sm:$0xff]
  %v3998 = vld [vmem:[%s9 + $0x2570] sm:$0xff]
  %v3999 = vld [vmem:[%s9 + $0x2578] sm:$0xff]
  %v4000 = vld [vmem:[%s9 + $0x2580] sm:$0xff]
  %v4001 = vld [vmem:[%s9 + $0x2588] sm:$0xff]
  %v4002 = vld [vmem:[%s9 + $0x2590] sm:$0xff]
  %v4003 = vld [vmem:[%s9 + $0x2598] sm:$0xff]
  %v4004 = vld [vmem:[%s9 + $0x25a0] sm:$0xff]
  %v4005 = vld [vmem:[%s9 + $0x25a8] sm:$0xff]
  %v4006 = vld [vmem:[%s9 + $0x25b0] sm:$0xff]
  %v4007 = vld [vmem:[%s9 + $0x25b8] sm:$0xff]
  %v4008 = vld [vmem:[%s9 + $0x25c0] sm:$0xff]
  %v4009 = vld [vmem:[%s9 + $0x25c8] sm:$0xff]
  %v4010 = vld [vmem:[%s9 + $0x25d0] sm:$0xff]
  %v4011 = vld [vmem:[%s9 + $0x25d8] sm:$0xff]
  %v4012 = vld [vmem:[%s9 + $0x25e0] sm:$0xff]
  %v4013 = vld [vmem:[%s9 + $0x25e8] sm:$0xff]
  %v4014 = vld [vmem:[%s9 + $0x25f0] sm:$0xff]
  %v4015 = vld [vmem:[%s9 + $0x25f8] sm:$0xff]
  %v4016 = vld [vmem:[%s9 + $0x2600] sm:$0xff]
  %v4017 = vld [vmem:[%s9 + $0x2608] sm:$0xff]
  %v4018 = vld [vmem:[%s9 + $0x2610] sm:$0xff]
  %v4019 = vld [vmem:[%s9 + $0x2618] sm:$0xff]
  %v4020 = vld [vmem:[%s9 + $0x2620] sm:$0xff]
  %v4021 = vld [vmem:[%s9 + $0x2628] sm:$0xff]
  %v4022 = vld [vmem:[%s9 + $0x2630] sm:$0xff]
  %v4023 = vld [vmem:[%s9 + $0x2638] sm:$0xff]
  %v4024 = vld [vmem:[%s9 + $0x2640] sm:$0xff]
  %v4025 = vld [vmem:[%s9 + $0x2648] sm:$0xff]
  %v4026 = vld [vmem:[%s9 + $0x2650] sm:$0xff]
  %v4027 = vld [vmem:[%s9 + $0x2658] sm:$0xff]
  %v4028 = vld [vmem:[%s9 + $0x2660] sm:$0xff]
  %v4029 = vld [vmem:[%s9 + $0x2668] sm:$0xff]
  %v4030 = vld [vmem:[%s9 + $0x2670] sm:$0xff]
  %v4031 = vld [vmem:[%s9 + $0x2678] sm:$0xff]
  %v4032 = vld [vmem:[%s9 + $0x2680] sm:$0xff]
  %v4033 = vld [vmem:[%s9 + $0x2688] sm:$0xff]
  %v4034 = vld [vmem:[%s9 + $0x2690] sm:$0xff]
  %v4035 = vld [vmem:[%s9 + $0x2698] sm:$0xff]
  %v4036 = vld [vmem:[%s9 + $0x26a0] sm:$0xff]
  %v4037 = vld [vmem:[%s9 + $0x26a8] sm:$0xff]
  %v4038 = vld [vmem:[%s9 + $0x26b0] sm:$0xff]
  %v4039 = vld [vmem:[%s9 + $0x26b8] sm:$0xff]
  %v4040 = vld [vmem:[%s9 + $0x26c0] sm:$0xff]
  %v4041 = vld [vmem:[%s9 + $0x26c8] sm:$0xff]
  %v4042 = vld [vmem:[%s9 + $0x26d0] sm:$0xff]
  %v4043 = vld [vmem:[%s9 + $0x26d8] sm:$0xff]
  %v4044 = vld [vmem:[%s9 + $0x26e0] sm:$0xff]
  %v4045 = vld [vmem:[%s9 + $0x26e8] sm:$0xff]
  %v4046 = vld [vmem:[%s9 + $0x26f0] sm:$0xff]
  %v4047 = vld [vmem:[%s9 + $0x26f8] sm:$0xff]
  %v4048 = vld [vmem:[%s9 + $0x2700] sm:$0xff]
  %v4049 = vld [vmem:[%s9 + $0x2708] sm:$0xff]
  %v4050 = vld [vmem:[%s9 + $0x2710] sm:$0xff]
  %v4051 = vld [vmem:[%s9 + $0x2718] sm:$0xff]
  %v4052 = vld [vmem:[%s9 + $0x2720] sm:$0xff]
  %v4053 = vld [vmem:[%s9 + $0x2728] sm:$0xff]
  %v4054 = vld [vmem:[%s9 + $0x2730] sm:$0xff]
  %v4055 = vld [vmem:[%s9 + $0x2738] sm:$0xff]
  %v4056 = vld [vmem:[%s9 + $0x2740] sm:$0xff]
  %v4057 = vld [vmem:[%s9 + $0x2748] sm:$0xff]
  %v4058 = vld [vmem:[%s9 + $0x2750] sm:$0xff]
  %v4059 = vld [vmem:[%s9 + $0x2758] sm:$0xff]
  %v4060 = vld [vmem:[%s9 + $0x2760] sm:$0xff]
  %v4061 = vld [vmem:[%s9 + $0x2768] sm:$0xff]
  %v4062 = vld [vmem:[%s9 + $0x2770] sm:$0xff]
  %v4063 = vld [vmem:[%s9 + $0x2778] sm:$0xff]
  %v4064 = vld [vmem:[%s9 + $0x2780] sm:$0xff]
  %v4065 = vld [vmem:[%s9 + $0x2788] sm:$0xff]
  %v4066 = vld [vmem:[%s9 + $0x2790] sm:$0xff]
  %v4067 = vld [vmem:[%s9 + $0x2798] sm:$0xff]
  %v4068 = vld [vmem:[%s9 + $0x27a0] sm:$0xff]
  %v4069 = vld [vmem:[%s9 + $0x27a8] sm:$0xff]
  %v4070 = vld [vmem:[%s9 + $0x27b0] sm:$0xff]
  %v4071 = vld [vmem:[%s9 + $0x27b8] sm:$0xff]
  %v4072 = vld [vmem:[%s9 + $0x27c0] sm:$0xff]
  %v4073 = vld [vmem:[%s9 + $0x27c8] sm:$0xff]
  %v4074 = vld [vmem:[%s9 + $0x27d0] sm:$0xff]
  %v4075 = vld [vmem:[%s9 + $0x27d8] sm:$0xff]
  %v4076 = vld [vmem:[%s9 + $0x27e0] sm:$0xff]
  %v4077 = vld [vmem:[%s9 + $0x27e8] sm:$0xff]
  %v4078 = vld [vmem:[%s9 + $0x27f0] sm:$0xff]
  %v4079 = vld [vmem:[%s9 + $0x27f8] sm:$0xff]
  %v4080 = vld [vmem:[%s9 + $0x2800] sm:$0xff]
  %v4081 = vld [vmem:[%s9 + $0x2808] sm:$0xff]
  %v4082 = vld [vmem:[%s9 + $0x2810] sm:$0xff]
  %v4083 = vld [vmem:[%s9 + $0x2818] sm:$0xff]
  %v4084 = vld [vmem:[%s9 + $0x2820] sm:$0xff]
  %v4085 = vld [vmem:[%s9 + $0x2828] sm:$0xff]
  %v4086 = vld [vmem:[%s9 + $0x2830] sm:$0xff]
  %v4087 = vld [vmem:[%s9 + $0x2838] sm:$0xff]
  %v4088 = vld [vmem:[%s9 + $0x2840] sm:$0xff]
  %v4089 = vld [vmem:[%s9 + $0x2848] sm:$0xff]
  %v4090 = vld [vmem:[%s9 + $0x2850] sm:$0xff]
  %v4091 = vld [vmem:[%s9 + $0x2858] sm:$0xff]
  %v4092 = vld [vmem:[%s9 + $0x2860] sm:$0xff]
  %v4093 = vld [vmem:[%s9 + $0x2868] sm:$0xff]
  %v4094 = vld [vmem:[%s9 + $0x2870] sm:$0xff]
  %v4095 = vld [vmem:[%s9 + $0x2878] sm:$0xff]
  %v4096 = vld [vmem:[%s9 + $0x2880] sm:$0xff]
  %v4097 = vld [vmem:[%s9 + $0x2888] sm:$0xff]
  %v4098 = vld [vmem:[%s9 + $0x2890] sm:$0xff]
  %v4099 = vld [vmem:[%s9 + $0x2898] sm:$0xff]
  %v4100 = vld [vmem:[%s9 + $0x28a0] sm:$0xff]
  %v4101 = vld [vmem:[%s9 + $0x28a8] sm:$0xff]
  %v4102 = vld [vmem:[%s9 + $0x28b0] sm:$0xff]
  %v4103 = vld [vmem:[%s9 + $0x28b8] sm:$0xff]
  %v4104 = vld [vmem:[%s9 + $0x28c0] sm:$0xff]
  %v4105 = vld [vmem:[%s9 + $0x28c8] sm:$0xff]
  %v4106 = vld [vmem:[%s9 + $0x28d0] sm:$0xff]
  %v4107 = vld [vmem:[%s9 + $0x28d8] sm:$0xff]
  %v4108 = vld [vmem:[%s9 + $0x28e0] sm:$0xff]
  %v4109 = vld [vmem:[%s9 + $0x28e8] sm:$0xff]
  %v4110 = vld [vmem:[%s9 + $0x28f0] sm:$0xff]
  %v4111 = vld [vmem:[%s9 + $0x28f8] sm:$0xff]
  %v4112 = vld [vmem:[%s9 + $0x2900] sm:$0xff]
  %v4113 = vld [vmem:[%s9 + $0x2908] sm:$0xff]
  %v4114 = vld [vmem:[%s9 + $0x2910] sm:$0xff]
  %v4115 = vld [vmem:[%s9 + $0x2918] sm:$0xff]
  %v4116 = vld [vmem:[%s9 + $0x2920] sm:$0xff]
  %v4117 = vld [vmem:[%s9 + $0x2928] sm:$0xff]
  %v4118 = vld [vmem:[%s9 + $0x2930] sm:$0xff]
  %v4119 = vld [vmem:[%s9 + $0x2938] sm:$0xff]
  %v4120 = vld [vmem:[%s9 + $0x2940] sm:$0xff]
  %v4121 = vld [vmem:[%s9 + $0x2948] sm:$0xff]
  %v4122 = vld [vmem:[%s9 + $0x2950] sm:$0xff]
  %v4123 = vld [vmem:[%s9 + $0x2958] sm:$0xff]
  %v4124 = vld [vmem:[%s9 + $0x2960] sm:$0xff]
  %v4125 = vld [vmem:[%s9 + $0x2968] sm:$0xff]
  %v4126 = vld [vmem:[%s9 + $0x2970] sm:$0xff]
  %v4127 = vld [vmem:[%s9 + $0x2978] sm:$0xff]
  %v4128 = vld [vmem:[%s9 + $0x2980] sm:$0xff]
  %v4129 = vld [vmem:[%s9 + $0x2988] sm:$0xff]
  %v4130 = vld [vmem:[%s9 + $0x2990] sm:$0xff]
  %v4131 = vld [vmem:[%s9 + $0x2998] sm:$0xff]
  %v4132 = vld [vmem:[%s9 + $0x29a0] sm:$0xff]
  %v4133 = vld [vmem:[%s9 + $0x29a8] sm:$0xff]
  %v4134 = vld [vmem:[%s9 + $0x29b0] sm:$0xff]
  %v4135 = vld [vmem:[%s9 + $0x29b8] sm:$0xff]
  %v4136 = vld [vmem:[%s9 + $0x29c0] sm:$0xff]
  %v4137 = vld [vmem:[%s9 + $0x29c8] sm:$0xff]
  %v4138 = vld [vmem:[%s9 + $0x29d0] sm:$0xff]
  %v4139 = vld [vmem:[%s9 + $0x29d8] sm:$0xff]
  %v4140 = vld [vmem:[%s9 + $0x29e0] sm:$0xff]
  %v4141 = vld [vmem:[%s9 + $0x29e8] sm:$0xff]
  %v4142 = vld [vmem:[%s9 + $0x29f0] sm:$0xff]
  %v4143 = vld [vmem:[%s9 + $0x29f8] sm:$0xff]
  %v4144 = vld [vmem:[%s9 + $0x2a00] sm:$0xff]
  %v4145 = vld [vmem:[%s9 + $0x2a08] sm:$0xff]
  %v4146 = vld [vmem:[%s9 + $0x2a10] sm:$0xff]
  %v4147 = vld [vmem:[%s9 + $0x2a18] sm:$0xff]
  %v4148 = vld [vmem:[%s9 + $0x2a20] sm:$0xff]
  %v4149 = vld [vmem:[%s9 + $0x2a28] sm:$0xff]
  %v4150 = vld [vmem:[%s9 + $0x2a30] sm:$0xff]
  %v4151 = vld [vmem:[%s9 + $0x2a38] sm:$0xff]
  %v4152 = vld [vmem:[%s9 + $0x2a40] sm:$0xff]
  %v4153 = vld [vmem:[%s9 + $0x2a48] sm:$0xff]
  %v4154 = vld [vmem:[%s9 + $0x2a50] sm:$0xff]
  %v4155 = vld [vmem:[%s9 + $0x2a58] sm:$0xff]
  %v4156 = vld [vmem:[%s9 + $0x2a60] sm:$0xff]
  %v4157 = vld [vmem:[%s9 + $0x2a68] sm:$0xff]
  %v4158 = vld [vmem:[%s9 + $0x2a70] sm:$0xff]
  %v4159 = vld [vmem:[%s9 + $0x2a78] sm:$0xff]
  %v4160 = vld [vmem:[%s9 + $0x2a80] sm:$0xff]
  %v4161 = vld [vmem:[%s9 + $0x2a88] sm:$0xff]
  %v4162 = vld [vmem:[%s9 + $0x2a90] sm:$0xff]
  %v4163 = vld [vmem:[%s9 + $0x2a98] sm:$0xff]
  %v4164 = vld [vmem:[%s9 + $0x2aa0] sm:$0xff]
  %v4165 = vld [vmem:[%s9 + $0x2aa8] sm:$0xff]
  %v4166 = vld [vmem:[%s9 + $0x2ab0] sm:$0xff]
  %v4167 = vld [vmem:[%s9 + $0x2ab8] sm:$0xff]
  %v4168 = vld [vmem:[%s9 + $0x2ac0] sm:$0xff]
  %v4169 = vld [vmem:[%s9 + $0x2ac8] sm:$0xff]
  %v4170 = vld [vmem:[%s9 + $0x2ad0] sm:$0xff]
  %v4171 = vld [vmem:[%s9 + $0x2ad8] sm:$0xff]
  %v4172 = vld [vmem:[%s9 + $0x2ae0] sm:$0xff]
  %v4173 = vld [vmem:[%s9 + $0x2ae8] sm:$0xff]
  %v4174 = vld [vmem:[%s9 + $0x2af0] sm:$0xff]
  %v4175 = vld [vmem:[%s9 + $0x2af8] sm:$0xff]
  %v4176 = vld [vmem:[%s9 + $0x2b00] sm:$0xff]
  %v4177 = vld [vmem:[%s9 + $0x2b08] sm:$0xff]
  %v4178 = vld [vmem:[%s9 + $0x2b10] sm:$0xff]
  %v4179 = vld [vmem:[%s9 + $0x2b18] sm:$0xff]
  %v4180 = vld [vmem:[%s9 + $0x2b20] sm:$0xff]
  %v4181 = vld [vmem:[%s9 + $0x2b28] sm:$0xff]
  %v4182 = vld [vmem:[%s9 + $0x2b30] sm:$0xff]
  %v4183 = vld [vmem:[%s9 + $0x2b38] sm:$0xff]
  %v4184 = vld [vmem:[%s9 + $0x2b40] sm:$0xff]
  %v4185 = vld [vmem:[%s9 + $0x2b48] sm:$0xff]
  %v4186 = vld [vmem:[%s9 + $0x2b50] sm:$0xff]
  %v4187 = vld [vmem:[%s9 + $0x2b58] sm:$0xff]
  %v4188 = vld [vmem:[%s9 + $0x2b60] sm:$0xff]
  %v4189 = vld [vmem:[%s9 + $0x2b68] sm:$0xff]
  %v4190 = vld [vmem:[%s9 + $0x2b70] sm:$0xff]
  %v4191 = vld [vmem:[%s9 + $0x2b78] sm:$0xff]
  %v4192 = vld [vmem:[%s9 + $0x2b80] sm:$0xff]
  %v4193 = vld [vmem:[%s9 + $0x2b88] sm:$0xff]
  %v4194 = vld [vmem:[%s9 + $0x2b90] sm:$0xff]
  %v4195 = vld [vmem:[%s9 + $0x2b98] sm:$0xff]
  %v4196 = vld [vmem:[%s9 + $0x2ba0] sm:$0xff]
  %v4197 = vld [vmem:[%s9 + $0x2ba8] sm:$0xff]
  %v4198 = vld [vmem:[%s9 + $0x2bb0] sm:$0xff]
  %v4199 = vld [vmem:[%s9 + $0x2bb8] sm:$0xff]
  %v4200 = vld [vmem:[%s9 + $0x2bc0] sm:$0xff]
  %v4201 = vld [vmem:[%s9 + $0x2bc8] sm:$0xff]
  %v4202 = vld [vmem:[%s9 + $0x2bd0] sm:$0xff]
  %v4203 = vld [vmem:[%s9 + $0x2bd8] sm:$0xff]
  %v4204 = vld [vmem:[%s9 + $0x2be0] sm:$0xff]
  %v4205 = vld [vmem:[%s9 + $0x2be8] sm:$0xff]
  %v4206 = vld [vmem:[%s9 + $0x2bf0] sm:$0xff]
  %v4207 = vld [vmem:[%s9 + $0x2bf8] sm:$0xff]
  %v4208 = vld [vmem:[%s9 + $0x2c00] sm:$0xff]
  %v4209 = vld [vmem:[%s9 + $0x2c08] sm:$0xff]
  %v4210 = vld [vmem:[%s9 + $0x2c10] sm:$0xff]
  %v4211 = vld [vmem:[%s9 + $0x2c18] sm:$0xff]
  %v4212 = vld [vmem:[%s9 + $0x2c20] sm:$0xff]
  %v4213 = vld [vmem:[%s9 + $0x2c28] sm:$0xff]
  %v4214 = vld [vmem:[%s9 + $0x2c30] sm:$0xff]
  %v4215 = vld [vmem:[%s9 + $0x2c38] sm:$0xff]
  %v4216 = vld [vmem:[%s9 + $0x2c40] sm:$0xff]
  %v4217 = vld [vmem:[%s9 + $0x2c48] sm:$0xff]
  %v4218 = vld [vmem:[%s9 + $0x2c50] sm:$0xff]
  %v4219 = vld [vmem:[%s9 + $0x2c58] sm:$0xff]
  %v4220 = vld [vmem:[%s9 + $0x2c60] sm:$0xff]
  %v4221 = vld [vmem:[%s9 + $0x2c68] sm:$0xff]
  %v4222 = vld [vmem:[%s9 + $0x2c70] sm:$0xff]
  %v4223 = vld [vmem:[%s9 + $0x2c78] sm:$0xff]
  %v4224 = vld [vmem:[%s9 + $0x2c80] sm:$0xff]
  %v4225 = vld [vmem:[%s9 + $0x2c88] sm:$0xff]
  %v4226 = vld [vmem:[%s9 + $0x2c90] sm:$0xff]
  %v4227 = vld [vmem:[%s9 + $0x2c98] sm:$0xff]
  %v4228 = vld [vmem:[%s9 + $0x2ca0] sm:$0xff]
  %v4229 = vld [vmem:[%s9 + $0x2ca8] sm:$0xff]
  %v4230 = vld [vmem:[%s9 + $0x2cb0] sm:$0xff]
  %v4231 = vld [vmem:[%s9 + $0x2cb8] sm:$0xff]
  %v4232 = vld [vmem:[%s9 + $0x2cc0] sm:$0xff]
  %v4233 = vld [vmem:[%s9 + $0x2cc8] sm:$0xff]
  %v4234 = vld [vmem:[%s9 + $0x2cd0] sm:$0xff]
  %v4235 = vld [vmem:[%s9 + $0x2cd8] sm:$0xff]
  %v4236 = vld [vmem:[%s9 + $0x2ce0] sm:$0xff]
  %v4237 = vld [vmem:[%s9 + $0x2ce8] sm:$0xff]
  %v4238 = vld [vmem:[%s9 + $0x2cf0] sm:$0xff]
  %v4239 = vld [vmem:[%s9 + $0x2cf8] sm:$0xff]
  %v4240 = vld [vmem:[%s9 + $0x2d00] sm:$0xff]
  %v4241 = vld [vmem:[%s9 + $0x2d08] sm:$0xff]
  %v4242 = vld [vmem:[%s9 + $0x2d10] sm:$0xff]
  %v4243 = vld [vmem:[%s9 + $0x2d18] sm:$0xff]
  %v4244 = vld [vmem:[%s9 + $0x2d20] sm:$0xff]
  %v4245 = vld [vmem:[%s9 + $0x2d28] sm:$0xff]
  %v4246 = vld [vmem:[%s9 + $0x2d30] sm:$0xff]
  %v4247 = vld [vmem:[%s9 + $0x2d38] sm:$0xff]
  %v4248 = vld [vmem:[%s9 + $0x2d40] sm:$0xff]
  %v4249 = vld [vmem:[%s9 + $0x2d48] sm:$0xff]
  %v4250 = vld [vmem:[%s9 + $0x2d50] sm:$0xff]
  %v4251 = vld [vmem:[%s9 + $0x2d58] sm:$0xff]
  %v4252 = vld [vmem:[%s9 + $0x2d60] sm:$0xff]
  %v4253 = vld [vmem:[%s9 + $0x2d68] sm:$0xff]
  %v4254 = vld [vmem:[%s9 + $0x2d70] sm:$0xff]
  %v4255 = vld [vmem:[%s9 + $0x2d78] sm:$0xff]
  %v4256 = vld [vmem:[%s9 + $0x2d80] sm:$0xff]
  %v4257 = vld [vmem:[%s9 + $0x2d88] sm:$0xff]
  %v4258 = vld [vmem:[%s9 + $0x2d90] sm:$0xff]
  %v4259 = vld [vmem:[%s9 + $0x2d98] sm:$0xff]
  %v4260 = vld [vmem:[%s9 + $0x2da0] sm:$0xff]
  %v4261 = vld [vmem:[%s9 + $0x2da8] sm:$0xff]
  %v4262 = vld [vmem:[%s9 + $0x2db0] sm:$0xff]
  %v4263 = vld [vmem:[%s9 + $0x2db8] sm:$0xff]
  %v4264 = vld [vmem:[%s9 + $0x2dc0] sm:$0xff]
  %v4265 = vld [vmem:[%s9 + $0x2dc8] sm:$0xff]
  %v4266 = vld [vmem:[%s9 + $0x2dd0] sm:$0xff]
  %v4267 = vld [vmem:[%s9 + $0x2dd8] sm:$0xff]
  %v4268 = vld [vmem:[%s9 + $0x2de0] sm:$0xff]
  %v4269 = vld [vmem:[%s9 + $0x2de8] sm:$0xff]
  %v4270 = vld [vmem:[%s9 + $0x2df0] sm:$0xff]
  %v4271 = vld [vmem:[%s9 + $0x2df8] sm:$0xff]
  %v4272 = vld [vmem:[%s9 + $0x2e00] sm:$0xff]
  %v4273 = vld [vmem:[%s9 + $0x2e08] sm:$0xff]
  %v4274 = vld [vmem:[%s9 + $0x2e10] sm:$0xff]
  %v4275 = vld [vmem:[%s9 + $0x2e18] sm:$0xff]
  %v4276 = vld [vmem:[%s9 + $0x2e20] sm:$0xff]
  %v4277 = vld [vmem:[%s9 + $0x2e28] sm:$0xff]
  %v4278 = vld [vmem:[%s9 + $0x2e30] sm:$0xff]
  %v4279 = vld [vmem:[%s9 + $0x2e38] sm:$0xff]
  %v4280 = vld [vmem:[%s9 + $0x2e40] sm:$0xff]
  %v4281 = vld [vmem:[%s9 + $0x2e48] sm:$0xff]
  %v4282 = vld [vmem:[%s9 + $0x2e50] sm:$0xff]
  %v4283 = vld [vmem:[%s9 + $0x2e58] sm:$0xff]
  %v4284 = vld [vmem:[%s9 + $0x2e60] sm:$0xff]
  %v4285 = vld [vmem:[%s9 + $0x2e68] sm:$0xff]
  %v4286 = vld [vmem:[%s9 + $0x2e70] sm:$0xff]
  %v4287 = vld [vmem:[%s9 + $0x2e78] sm:$0xff]
  %v4288 = vld [vmem:[%s9 + $0x2e80] sm:$0xff]
  %v4289 = vld [vmem:[%s9 + $0x2e88] sm:$0xff]
  %v4290 = vld [vmem:[%s9 + $0x2e90] sm:$0xff]
  %v4291 = vld [vmem:[%s9 + $0x2e98] sm:$0xff]
  %v4292 = vld [vmem:[%s9 + $0x2ea0] sm:$0xff]
  %v4293 = vld [vmem:[%s9 + $0x2ea8] sm:$0xff]
  %v4294 = vld [vmem:[%s9 + $0x2eb0] sm:$0xff]
  %v4295 = vld [vmem:[%s9 + $0x2eb8] sm:$0xff]
  %v4296 = vld [vmem:[%s9 + $0x2ec0] sm:$0xff]
  %v4297 = vld [vmem:[%s9 + $0x2ec8] sm:$0xff]
  %v4298 = vld [vmem:[%s9 + $0x2ed0] sm:$0xff]
  %v4299 = vld [vmem:[%s9 + $0x2ed8] sm:$0xff]
  %v4300 = vld [vmem:[%s9 + $0x2ee0] sm:$0xff]
  %v4301 = vld [vmem:[%s9 + $0x2ee8] sm:$0xff]
  %v4302 = vld [vmem:[%s9 + $0x2ef0] sm:$0xff]
  %v4303 = vld [vmem:[%s9 + $0x2ef8] sm:$0xff]
  %v4304 = vld [vmem:[%s9 + $0x2f00] sm:$0xff]
  %v4305 = vld [vmem:[%s9 + $0x2f08] sm:$0xff]
  %v4306 = vld [vmem:[%s9 + $0x2f10] sm:$0xff]
  %v4307 = vld [vmem:[%s9 + $0x2f18] sm:$0xff]
  %v4308 = vld [vmem:[%s9 + $0x2f20] sm:$0xff]
  %v4309 = vld [vmem:[%s9 + $0x2f28] sm:$0xff]
  %v4310 = vld [vmem:[%s9 + $0x2f30] sm:$0xff]
  %v4311 = vld [vmem:[%s9 + $0x2f38] sm:$0xff]
  %v4312 = vld [vmem:[%s9 + $0x2f40] sm:$0xff]
  %v4313 = vld [vmem:[%s9 + $0x2f48] sm:$0xff]
  %v4314 = vld [vmem:[%s9 + $0x2f50] sm:$0xff]
  %v4315 = vld [vmem:[%s9 + $0x2f58] sm:$0xff]
  %v4316 = vld [vmem:[%s9 + $0x2f60] sm:$0xff]
  %v4317 = vld [vmem:[%s9 + $0x2f68] sm:$0xff]
  %v4318 = vld [vmem:[%s9 + $0x2f70] sm:$0xff]
  %v4319 = vld [vmem:[%s9 + $0x2f78] sm:$0xff]
  %v4320 = vld [vmem:[%s9 + $0x2f80] sm:$0xff]
  %v4321 = vld [vmem:[%s9 + $0x2f88] sm:$0xff]
  %v4322 = vld [vmem:[%s9 + $0x2f90] sm:$0xff]
  %v4323 = vld [vmem:[%s9 + $0x2f98] sm:$0xff]
  %v4324 = vld [vmem:[%s9 + $0x2fa0] sm:$0xff]
  %v4325 = vld [vmem:[%s9 + $0x2fa8] sm:$0xff]
  %v4326 = vld [vmem:[%s9 + $0x2fb0] sm:$0xff]
  %v4327 = vld [vmem:[%s9 + $0x2fb8] sm:$0xff]
  %v4328 = vld [vmem:[%s9 + $0x2fc0] sm:$0xff]
  %v4329 = vld [vmem:[%s9 + $0x2fc8] sm:$0xff]
  %v4330 = vld [vmem:[%s9 + $0x2fd0] sm:$0xff]
  %v4331 = vld [vmem:[%s9 + $0x2fd8] sm:$0xff]
  %v4332 = vld [vmem:[%s9 + $0x2fe0] sm:$0xff]
  %v4333 = vld [vmem:[%s9 + $0x2fe8] sm:$0xff]
  %v4334 = vld [vmem:[%s9 + $0x2ff0] sm:$0xff]
  %v4335 = vld [vmem:[%s9 + $0x2ff8] sm:$0xff]
  %v4336 = vld [vmem:[%s10] sm:$0xff]
  %v4337 = vld [vmem:[%s10 + $0x8] sm:$0xff]
  %v4338 = vld [vmem:[%s10 + $0x10] sm:$0xff]
  %v4342 = vlaneseq
  %v4343 = vshrl.u32 %v4342, 7
  %v4344 = vsub.s32 0, %v4343
  %v4345 = vrot.slane %v4336, %v4344
  %v4346 = vlaneseq
  %v4347 = vshrl.u32 %v4346, 7
  %v4348 = vsub.s32 1, %v4347
  %v4349 = vrot.slane %v4336, %v4348
  %v4350 = vlaneseq
  %v4351 = vshrl.u32 %v4350, 7
  %v4352 = vsub.s32 2, %v4351
  %v4353 = vrot.slane %v4336, %v4352
  %v4354 = vlaneseq
  %v4355 = vshrl.u32 %v4354, 7
  %v4356 = vsub.s32 3, %v4355
  %v4357 = vrot.slane %v4336, %v4356
  %v4358 = vlaneseq
  %v4359 = vshrl.u32 %v4358, 7
  %v4360 = vsub.s32 4, %v4359
  %v4361 = vrot.slane %v4336, %v4360
  %v4362 = vlaneseq
  %v4363 = vshrl.u32 %v4362, 7
  %v4364 = vsub.s32 5, %v4363
  %v4365 = vrot.slane %v4336, %v4364
  %v4366 = vlaneseq
  %v4367 = vshrl.u32 %v4366, 7
  %v4368 = vsub.s32 6, %v4367
  %v4369 = vrot.slane %v4336, %v4368
  %v4370 = vlaneseq
  %v4371 = vshrl.u32 %v4370, 7
  %v4372 = vsub.s32 7, %v4371
  %v4373 = vrot.slane %v4336, %v4372
  %v4374 = vlaneseq
  %v4375 = vshrl.u32 %v4374, 7
  %v4376 = vsub.s32 0, %v4375
  %v4377 = vrot.slane %v4337, %v4376
  %v4378 = vlaneseq
  %v4379 = vshrl.u32 %v4378, 7
  %v4380 = vsub.s32 1, %v4379
  %v4381 = vrot.slane %v4337, %v4380
  %v4382 = vlaneseq
  %v4383 = vshrl.u32 %v4382, 7
  %v4384 = vsub.s32 2, %v4383
  %v4385 = vrot.slane %v4337, %v4384
  %v4386 = vlaneseq
  %v4387 = vshrl.u32 %v4386, 7
  %v4388 = vsub.s32 3, %v4387
  %v4389 = vrot.slane %v4337, %v4388
  %v4390 = vlaneseq
  %v4391 = vshrl.u32 %v4390, 7
  %v4392 = vsub.s32 4, %v4391
  %v4393 = vrot.slane %v4337, %v4392
  %v4394 = vlaneseq
  %v4395 = vshrl.u32 %v4394, 7
  %v4396 = vsub.s32 5, %v4395
  %v4397 = vrot.slane %v4337, %v4396
  %v4398 = vlaneseq
  %v4399 = vshrl.u32 %v4398, 7
  %v4400 = vsub.s32 6, %v4399
  %v4401 = vrot.slane %v4337, %v4400
  %v4402 = vlaneseq
  %v4403 = vshrl.u32 %v4402, 7
  %v4404 = vsub.s32 7, %v4403
  %v4405 = vrot.slane %v4337, %v4404
  %v4406 = vlaneseq
  %v4407 = vshrl.u32 %v4406, 7
  %v4408 = vsub.s32 0, %v4407
  %v4409 = vrot.slane %v4338, %v4408
  %v4410 = vlaneseq
  %v4411 = vshrl.u32 %v4410, 7
  %v4412 = vsub.s32 1, %v4411
  %v4413 = vrot.slane %v4338, %v4412
  %v4414 = vlaneseq
  %v4415 = vshrl.u32 %v4414, 7
  %v4416 = vsub.s32 2, %v4415
  %v4417 = vrot.slane %v4338, %v4416
  %v4418 = vlaneseq
  %v4419 = vshrl.u32 %v4418, 7
  %v4420 = vsub.s32 3, %v4419
  %v4421 = vrot.slane %v4338, %v4420
  %v4422 = vlaneseq
  %v4423 = vshrl.u32 %v4422, 7
  %v4424 = vsub.s32 4, %v4423
  %v4425 = vrot.slane %v4338, %v4424
  %v4426 = vlaneseq
  %v4427 = vshrl.u32 %v4426, 7
  %v4428 = vsub.s32 5, %v4427
  %v4429 = vrot.slane %v4338, %v4428
  %v4430 = vlaneseq
  %v4431 = vshrl.u32 %v4430, 7
  %v4432 = vsub.s32 6, %v4431
  %v4433 = vrot.slane %v4338, %v4432
  %v4434 = vlaneseq
  %v4435 = vshrl.u32 %v4434, 7
  %v4436 = vsub.s32 7, %v4435
  %v4437 = vrot.slane %v4338, %v4436
  %v5998 = vunpack.c.l.b16 %v2800
  %v5999 = vunpack.c.h.b16 %v2800
  %v6000 = vunpack.c.l.b16 %v2801
  %v6001 = vunpack.c.h.b16 %v2801
  %v6002 = vunpack.c.l.b16 %v2802
  %v6003 = vunpack.c.h.b16 %v2802
  %v6004 = vunpack.c.l.b16 %v2803
  %v6005 = vunpack.c.h.b16 %v2803
  %v6006 = vunpack.c.l.b16 %v2804
  %v6007 = vunpack.c.h.b16 %v2804
  %v6008 = vunpack.c.l.b16 %v2805
  %v6009 = vunpack.c.h.b16 %v2805
  %v6010 = vunpack.c.l.b16 %v2806
  %v6011 = vunpack.c.h.b16 %v2806
  %v6012 = vunpack.c.l.b16 %v2807
  %v6013 = vunpack.c.h.b16 %v2807
  %v6014 = vunpack.c.l.b16 %v2808
  %v6015 = vunpack.c.h.b16 %v2808
  %v6016 = vunpack.c.l.b16 %v2809
  %v6017 = vunpack.c.h.b16 %v2809
  %v6018 = vunpack.c.l.b16 %v2810
  %v6019 = vunpack.c.h.b16 %v2810
  %v6020 = vunpack.c.l.b16 %v2811
  %v6021 = vunpack.c.h.b16 %v2811
  %v6022 = vunpack.c.l.b16 %v2812
  %v6023 = vunpack.c.h.b16 %v2812
  %v6024 = vunpack.c.l.b16 %v2813
  %v6025 = vunpack.c.h.b16 %v2813
  %v6026 = vunpack.c.l.b16 %v2814
  %v6027 = vunpack.c.h.b16 %v2814
  %v6028 = vunpack.c.l.b16 %v2815
  %v6029 = vunpack.c.h.b16 %v2815
  %v6030 = vunpack.c.l.b16 %v2816
  %v6031 = vunpack.c.h.b16 %v2816
  %v6032 = vunpack.c.l.b16 %v2817
  %v6033 = vunpack.c.h.b16 %v2817
  %v6034 = vunpack.c.l.b16 %v2818
  %v6035 = vunpack.c.h.b16 %v2818
  %v6036 = vunpack.c.l.b16 %v2819
  %v6037 = vunpack.c.h.b16 %v2819
  %v6038 = vunpack.c.l.b16 %v2820
  %v6039 = vunpack.c.h.b16 %v2820
  %v6040 = vunpack.c.l.b16 %v2821
  %v6041 = vunpack.c.h.b16 %v2821
  %v6042 = vunpack.c.l.b16 %v2822
  %v6043 = vunpack.c.h.b16 %v2822
  %v6044 = vunpack.c.l.b16 %v2823
  %v6045 = vunpack.c.h.b16 %v2823
  %v6046 = vunpack.c.l.b16 %v2824
  %v6047 = vunpack.c.h.b16 %v2824
  %v6048 = vunpack.c.l.b16 %v2825
  %v6049 = vunpack.c.h.b16 %v2825
  %v6050 = vunpack.c.l.b16 %v2826
  %v6051 = vunpack.c.h.b16 %v2826
  %v6052 = vunpack.c.l.b16 %v2827
  %v6053 = vunpack.c.h.b16 %v2827
  %v6054 = vunpack.c.l.b16 %v2828
  %v6055 = vunpack.c.h.b16 %v2828
  %v6056 = vunpack.c.l.b16 %v2829
  %v6057 = vunpack.c.h.b16 %v2829
  %v6058 = vunpack.c.l.b16 %v2830
  %v6059 = vunpack.c.h.b16 %v2830
  %v6060 = vunpack.c.l.b16 %v2831
  %v6061 = vunpack.c.h.b16 %v2831
  %v6062 = vunpack.c.l.b16 %v2832
  %v6063 = vunpack.c.h.b16 %v2832
  %v6064 = vunpack.c.l.b16 %v2833
  %v6065 = vunpack.c.h.b16 %v2833
  %v6066 = vunpack.c.l.b16 %v2834
  %v6067 = vunpack.c.h.b16 %v2834
  %v6068 = vunpack.c.l.b16 %v2835
  %v6069 = vunpack.c.h.b16 %v2835
  %v6070 = vunpack.c.l.b16 %v2836
  %v6071 = vunpack.c.h.b16 %v2836
  %v6072 = vunpack.c.l.b16 %v2837
  %v6073 = vunpack.c.h.b16 %v2837
  %v6074 = vunpack.c.l.b16 %v2838
  %v6075 = vunpack.c.h.b16 %v2838
  %v6076 = vunpack.c.l.b16 %v2839
  %v6077 = vunpack.c.h.b16 %v2839
  %v6078 = vunpack.c.l.b16 %v2840
  %v6079 = vunpack.c.h.b16 %v2840
  %v6080 = vunpack.c.l.b16 %v2841
  %v6081 = vunpack.c.h.b16 %v2841
  %v6082 = vunpack.c.l.b16 %v2842
  %v6083 = vunpack.c.h.b16 %v2842
  %v6084 = vunpack.c.l.b16 %v2843
  %v6085 = vunpack.c.h.b16 %v2843
  %v6086 = vunpack.c.l.b16 %v2844
  %v6087 = vunpack.c.h.b16 %v2844
  %v6088 = vunpack.c.l.b16 %v2845
  %v6089 = vunpack.c.h.b16 %v2845
  %v6090 = vunpack.c.l.b16 %v2846
  %v6091 = vunpack.c.h.b16 %v2846
  %v6092 = vunpack.c.l.b16 %v2847
  %v6093 = vunpack.c.h.b16 %v2847
  %v6094 = vunpack.c.l.b16 %v2848
  %v6095 = vunpack.c.h.b16 %v2848
  %v6096 = vunpack.c.l.b16 %v2849
  %v6097 = vunpack.c.h.b16 %v2849
  %v6098 = vunpack.c.l.b16 %v2850
  %v6099 = vunpack.c.h.b16 %v2850
  %v6100 = vunpack.c.l.b16 %v2851
  %v6101 = vunpack.c.h.b16 %v2851
  %v6102 = vunpack.c.l.b16 %v2852
  %v6103 = vunpack.c.h.b16 %v2852
  %v6104 = vunpack.c.l.b16 %v2853
  %v6105 = vunpack.c.h.b16 %v2853
  %v6106 = vunpack.c.l.b16 %v2854
  %v6107 = vunpack.c.h.b16 %v2854
  %v6108 = vunpack.c.l.b16 %v2855
  %v6109 = vunpack.c.h.b16 %v2855
  %v6110 = vunpack.c.l.b16 %v2856
  %v6111 = vunpack.c.h.b16 %v2856
  %v6112 = vunpack.c.l.b16 %v2857
  %v6113 = vunpack.c.h.b16 %v2857
  %v6114 = vunpack.c.l.b16 %v2858
  %v6115 = vunpack.c.h.b16 %v2858
  %v6116 = vunpack.c.l.b16 %v2859
  %v6117 = vunpack.c.h.b16 %v2859
  %v6118 = vunpack.c.l.b16 %v2860
  %v6119 = vunpack.c.h.b16 %v2860
  %v6120 = vunpack.c.l.b16 %v2861
  %v6121 = vunpack.c.h.b16 %v2861
  %v6122 = vunpack.c.l.b16 %v2862
  %v6123 = vunpack.c.h.b16 %v2862
  %v6124 = vunpack.c.l.b16 %v2863
  %v6125 = vunpack.c.h.b16 %v2863
  %v6126 = vunpack.c.l.b16 %v2864
  %v6127 = vunpack.c.h.b16 %v2864
  %v6128 = vunpack.c.l.b16 %v2865
  %v6129 = vunpack.c.h.b16 %v2865
  %v6130 = vunpack.c.l.b16 %v2866
  %v6131 = vunpack.c.h.b16 %v2866
  %v6132 = vunpack.c.l.b16 %v2867
  %v6133 = vunpack.c.h.b16 %v2867
  %v6134 = vunpack.c.l.b16 %v2868
  %v6135 = vunpack.c.h.b16 %v2868
  %v6136 = vunpack.c.l.b16 %v2869
  %v6137 = vunpack.c.h.b16 %v2869
  %v6138 = vunpack.c.l.b16 %v2870
  %v6139 = vunpack.c.h.b16 %v2870
  %v6140 = vunpack.c.l.b16 %v2871
  %v6141 = vunpack.c.h.b16 %v2871
  %v6142 = vunpack.c.l.b16 %v2872
  %v6143 = vunpack.c.h.b16 %v2872
  %v6144 = vunpack.c.l.b16 %v2873
  %v6145 = vunpack.c.h.b16 %v2873
  %v6146 = vunpack.c.l.b16 %v2874
  %v6147 = vunpack.c.h.b16 %v2874
  %v6148 = vunpack.c.l.b16 %v2875
  %v6149 = vunpack.c.h.b16 %v2875
  %v6150 = vunpack.c.l.b16 %v2876
  %v6151 = vunpack.c.h.b16 %v2876
  %v6152 = vunpack.c.l.b16 %v2877
  %v6153 = vunpack.c.h.b16 %v2877
  %v6154 = vunpack.c.l.b16 %v2878
  %v6155 = vunpack.c.h.b16 %v2878
  %v6156 = vunpack.c.l.b16 %v2879
  %v6157 = vunpack.c.h.b16 %v2879
  %v6158 = vunpack.c.l.b16 %v2880
  %v6159 = vunpack.c.h.b16 %v2880
  %v6160 = vunpack.c.l.b16 %v2881
  %v6161 = vunpack.c.h.b16 %v2881
  %v6162 = vunpack.c.l.b16 %v2882
  %v6163 = vunpack.c.h.b16 %v2882
  %v6164 = vunpack.c.l.b16 %v2883
  %v6165 = vunpack.c.h.b16 %v2883
  %v6166 = vunpack.c.l.b16 %v2884
  %v6167 = vunpack.c.h.b16 %v2884
  %v6168 = vunpack.c.l.b16 %v2885
  %v6169 = vunpack.c.h.b16 %v2885
  %v6170 = vunpack.c.l.b16 %v2886
  %v6171 = vunpack.c.h.b16 %v2886
  %v6172 = vunpack.c.l.b16 %v2887
  %v6173 = vunpack.c.h.b16 %v2887
  %v6174 = vunpack.c.l.b16 %v2888
  %v6175 = vunpack.c.h.b16 %v2888
  %v6176 = vunpack.c.l.b16 %v2889
  %v6177 = vunpack.c.h.b16 %v2889
  %v6178 = vunpack.c.l.b16 %v2890
  %v6179 = vunpack.c.h.b16 %v2890
  %v6180 = vunpack.c.l.b16 %v2891
  %v6181 = vunpack.c.h.b16 %v2891
  %v6182 = vunpack.c.l.b16 %v2892
  %v6183 = vunpack.c.h.b16 %v2892
  %v6184 = vunpack.c.l.b16 %v2893
  %v6185 = vunpack.c.h.b16 %v2893
  %v6186 = vunpack.c.l.b16 %v2894
  %v6187 = vunpack.c.h.b16 %v2894
  %v6188 = vunpack.c.l.b16 %v2895
  %v6189 = vunpack.c.h.b16 %v2895
  %v6190 = vunpack.c.l.b16 %v2896
  %v6191 = vunpack.c.h.b16 %v2896
  %v6192 = vunpack.c.l.b16 %v2897
  %v6193 = vunpack.c.h.b16 %v2897
  %v6194 = vunpack.c.l.b16 %v2898
  %v6195 = vunpack.c.h.b16 %v2898
  %v6196 = vunpack.c.l.b16 %v2899
  %v6197 = vunpack.c.h.b16 %v2899
  %v6198 = vunpack.c.l.b16 %v2900
  %v6199 = vunpack.c.h.b16 %v2900
  %v6200 = vunpack.c.l.b16 %v2901
  %v6201 = vunpack.c.h.b16 %v2901
  %v6202 = vunpack.c.l.b16 %v2902
  %v6203 = vunpack.c.h.b16 %v2902
  %v6204 = vunpack.c.l.b16 %v2903
  %v6205 = vunpack.c.h.b16 %v2903
  %v6206 = vunpack.c.l.b16 %v2904
  %v6207 = vunpack.c.h.b16 %v2904
  %v6208 = vunpack.c.l.b16 %v2905
  %v6209 = vunpack.c.h.b16 %v2905
  %v6210 = vunpack.c.l.b16 %v2906
  %v6211 = vunpack.c.h.b16 %v2906
  %v6212 = vunpack.c.l.b16 %v2907
  %v6213 = vunpack.c.h.b16 %v2907
  %v6214 = vunpack.c.l.b16 %v2908
  %v6215 = vunpack.c.h.b16 %v2908
  %v6216 = vunpack.c.l.b16 %v2909
  %v6217 = vunpack.c.h.b16 %v2909
  %v6218 = vunpack.c.l.b16 %v2910
  %v6219 = vunpack.c.h.b16 %v2910
  %v6220 = vunpack.c.l.b16 %v2911
  %v6221 = vunpack.c.h.b16 %v2911
  %v6222 = vunpack.c.l.b16 %v2912
  %v6223 = vunpack.c.h.b16 %v2912
  %v6224 = vunpack.c.l.b16 %v2913
  %v6225 = vunpack.c.h.b16 %v2913
  %v6226 = vunpack.c.l.b16 %v2914
  %v6227 = vunpack.c.h.b16 %v2914
  %v6228 = vunpack.c.l.b16 %v2915
  %v6229 = vunpack.c.h.b16 %v2915
  %v6230 = vunpack.c.l.b16 %v2916
  %v6231 = vunpack.c.h.b16 %v2916
  %v6232 = vunpack.c.l.b16 %v2917
  %v6233 = vunpack.c.h.b16 %v2917
  %v6234 = vunpack.c.l.b16 %v2918
  %v6235 = vunpack.c.h.b16 %v2918
  %v6236 = vunpack.c.l.b16 %v2919
  %v6237 = vunpack.c.h.b16 %v2919
  %v6238 = vunpack.c.l.b16 %v2920
  %v6239 = vunpack.c.h.b16 %v2920
  %v6240 = vunpack.c.l.b16 %v2921
  %v6241 = vunpack.c.h.b16 %v2921
  %v6242 = vunpack.c.l.b16 %v2922
  %v6243 = vunpack.c.h.b16 %v2922
  %v6244 = vunpack.c.l.b16 %v2923
  %v6245 = vunpack.c.h.b16 %v2923
  %v6246 = vunpack.c.l.b16 %v2924
  %v6247 = vunpack.c.h.b16 %v2924
  %v6248 = vunpack.c.l.b16 %v2925
  %v6249 = vunpack.c.h.b16 %v2925
  %v6250 = vunpack.c.l.b16 %v2926
  %v6251 = vunpack.c.h.b16 %v2926
  %v6252 = vunpack.c.l.b16 %v2927
  %v6253 = vunpack.c.h.b16 %v2927
  %v6254 = vunpack.c.l.b16 %v2928
  %v6255 = vunpack.c.h.b16 %v2928
  %v6256 = vunpack.c.l.b16 %v2929
  %v6257 = vunpack.c.h.b16 %v2929
  %v6258 = vunpack.c.l.b16 %v2930
  %v6259 = vunpack.c.h.b16 %v2930
  %v6260 = vunpack.c.l.b16 %v2931
  %v6261 = vunpack.c.h.b16 %v2931
  %v6262 = vunpack.c.l.b16 %v2932
  %v6263 = vunpack.c.h.b16 %v2932
  %v6264 = vunpack.c.l.b16 %v2933
  %v6265 = vunpack.c.h.b16 %v2933
  %v6266 = vunpack.c.l.b16 %v2934
  %v6267 = vunpack.c.h.b16 %v2934
  %v6268 = vunpack.c.l.b16 %v2935
  %v6269 = vunpack.c.h.b16 %v2935
  %v6270 = vunpack.c.l.b16 %v2936
  %v6271 = vunpack.c.h.b16 %v2936
  %v6272 = vunpack.c.l.b16 %v2937
  %v6273 = vunpack.c.h.b16 %v2937
  %v6274 = vunpack.c.l.b16 %v2938
  %v6275 = vunpack.c.h.b16 %v2938
  %v6276 = vunpack.c.l.b16 %v2939
  %v6277 = vunpack.c.h.b16 %v2939
  %v6278 = vunpack.c.l.b16 %v2940
  %v6279 = vunpack.c.h.b16 %v2940
  %v6280 = vunpack.c.l.b16 %v2941
  %v6281 = vunpack.c.h.b16 %v2941
  %v6282 = vunpack.c.l.b16 %v2942
  %v6283 = vunpack.c.h.b16 %v2942
  %v6284 = vunpack.c.l.b16 %v2943
  %v6285 = vunpack.c.h.b16 %v2943
  %v6286 = vunpack.c.l.b16 %v2944
  %v6287 = vunpack.c.h.b16 %v2944
  %v6288 = vunpack.c.l.b16 %v2945
  %v6289 = vunpack.c.h.b16 %v2945
  %v6290 = vunpack.c.l.b16 %v2946
  %v6291 = vunpack.c.h.b16 %v2946
  %v6292 = vunpack.c.l.b16 %v2947
  %v6293 = vunpack.c.h.b16 %v2947
  %v6294 = vunpack.c.l.b16 %v2948
  %v6295 = vunpack.c.h.b16 %v2948
  %v6296 = vunpack.c.l.b16 %v2949
  %v6297 = vunpack.c.h.b16 %v2949
  %v6298 = vunpack.c.l.b16 %v2950
  %v6299 = vunpack.c.h.b16 %v2950
  %v6300 = vunpack.c.l.b16 %v2951
  %v6301 = vunpack.c.h.b16 %v2951
  %v6302 = vunpack.c.l.b16 %v2952
  %v6303 = vunpack.c.h.b16 %v2952
  %v6304 = vunpack.c.l.b16 %v2953
  %v6305 = vunpack.c.h.b16 %v2953
  %v6306 = vunpack.c.l.b16 %v2954
  %v6307 = vunpack.c.h.b16 %v2954
  %v6308 = vunpack.c.l.b16 %v2955
  %v6309 = vunpack.c.h.b16 %v2955
  %v6310 = vunpack.c.l.b16 %v2956
  %v6311 = vunpack.c.h.b16 %v2956
  %v6312 = vunpack.c.l.b16 %v2957
  %v6313 = vunpack.c.h.b16 %v2957
  %v6314 = vunpack.c.l.b16 %v2958
  %v6315 = vunpack.c.h.b16 %v2958
  %v6316 = vunpack.c.l.b16 %v2959
  %v6317 = vunpack.c.h.b16 %v2959
  %v6318 = vunpack.c.l.b16 %v2960
  %v6319 = vunpack.c.h.b16 %v2960
  %v6320 = vunpack.c.l.b16 %v2961
  %v6321 = vunpack.c.h.b16 %v2961
  %v6322 = vunpack.c.l.b16 %v2962
  %v6323 = vunpack.c.h.b16 %v2962
  %v6324 = vunpack.c.l.b16 %v2963
  %v6325 = vunpack.c.h.b16 %v2963
  %v6326 = vunpack.c.l.b16 %v2964
  %v6327 = vunpack.c.h.b16 %v2964
  %v6328 = vunpack.c.l.b16 %v2965
  %v6329 = vunpack.c.h.b16 %v2965
  %v6330 = vunpack.c.l.b16 %v2966
  %v6331 = vunpack.c.h.b16 %v2966
  %v6332 = vunpack.c.l.b16 %v2967
  %v6333 = vunpack.c.h.b16 %v2967
  %v6334 = vunpack.c.l.b16 %v2968
  %v6335 = vunpack.c.h.b16 %v2968
  %v6336 = vunpack.c.l.b16 %v2969
  %v6337 = vunpack.c.h.b16 %v2969
  %v6338 = vunpack.c.l.b16 %v2970
  %v6339 = vunpack.c.h.b16 %v2970
  %v6340 = vunpack.c.l.b16 %v2971
  %v6341 = vunpack.c.h.b16 %v2971
  %v6342 = vunpack.c.l.b16 %v2972
  %v6343 = vunpack.c.h.b16 %v2972
  %v6344 = vunpack.c.l.b16 %v2973
  %v6345 = vunpack.c.h.b16 %v2973
  %v6346 = vunpack.c.l.b16 %v2974
  %v6347 = vunpack.c.h.b16 %v2974
  %v6348 = vunpack.c.l.b16 %v2975
  %v6349 = vunpack.c.h.b16 %v2975
  %v6350 = vunpack.c.l.b16 %v2976
  %v6351 = vunpack.c.h.b16 %v2976
  %v6352 = vunpack.c.l.b16 %v2977
  %v6353 = vunpack.c.h.b16 %v2977
  %v6354 = vunpack.c.l.b16 %v2978
  %v6355 = vunpack.c.h.b16 %v2978
  %v6356 = vunpack.c.l.b16 %v2979
  %v6357 = vunpack.c.h.b16 %v2979
  %v6358 = vunpack.c.l.b16 %v2980
  %v6359 = vunpack.c.h.b16 %v2980
  %v6360 = vunpack.c.l.b16 %v2981
  %v6361 = vunpack.c.h.b16 %v2981
  %v6362 = vunpack.c.l.b16 %v2982
  %v6363 = vunpack.c.h.b16 %v2982
  %v6364 = vunpack.c.l.b16 %v2983
  %v6365 = vunpack.c.h.b16 %v2983
  %v6366 = vunpack.c.l.b16 %v2984
  %v6367 = vunpack.c.h.b16 %v2984
  %v6368 = vunpack.c.l.b16 %v2985
  %v6369 = vunpack.c.h.b16 %v2985
  %v6370 = vunpack.c.l.b16 %v2986
  %v6371 = vunpack.c.h.b16 %v2986
  %v6372 = vunpack.c.l.b16 %v2987
  %v6373 = vunpack.c.h.b16 %v2987
  %v6374 = vunpack.c.l.b16 %v2988
  %v6375 = vunpack.c.h.b16 %v2988
  %v6376 = vunpack.c.l.b16 %v2989
  %v6377 = vunpack.c.h.b16 %v2989
  %v6378 = vunpack.c.l.b16 %v2990
  %v6379 = vunpack.c.h.b16 %v2990
  %v6380 = vunpack.c.l.b16 %v2991
  %v6381 = vunpack.c.h.b16 %v2991
  %v6382 = vunpack.c.l.b16 %v2992
  %v6383 = vunpack.c.h.b16 %v2992
  %v6384 = vunpack.c.l.b16 %v2993
  %v6385 = vunpack.c.h.b16 %v2993
  %v6386 = vunpack.c.l.b16 %v2994
  %v6387 = vunpack.c.h.b16 %v2994
  %v6388 = vunpack.c.l.b16 %v2995
  %v6389 = vunpack.c.h.b16 %v2995
  %v6390 = vunpack.c.l.b16 %v2996
  %v6391 = vunpack.c.h.b16 %v2996
  %v6392 = vunpack.c.l.b16 %v2997
  %v6393 = vunpack.c.h.b16 %v2997
  %v6394 = vunpack.c.l.b16 %v2998
  %v6395 = vunpack.c.h.b16 %v2998
  %v6396 = vunpack.c.l.b16 %v2999
  %v6397 = vunpack.c.h.b16 %v2999
  %v6398 = vunpack.c.l.b16 %v3000
  %v6399 = vunpack.c.h.b16 %v3000
  %v6400 = vunpack.c.l.b16 %v3001
  %v6401 = vunpack.c.h.b16 %v3001
  %v6402 = vunpack.c.l.b16 %v3002
  %v6403 = vunpack.c.h.b16 %v3002
  %v6404 = vunpack.c.l.b16 %v3003
  %v6405 = vunpack.c.h.b16 %v3003
  %v6406 = vunpack.c.l.b16 %v3004
  %v6407 = vunpack.c.h.b16 %v3004
  %v6408 = vunpack.c.l.b16 %v3005
  %v6409 = vunpack.c.h.b16 %v3005
  %v6410 = vunpack.c.l.b16 %v3006
  %v6411 = vunpack.c.h.b16 %v3006
  %v6412 = vunpack.c.l.b16 %v3007
  %v6413 = vunpack.c.h.b16 %v3007
  %v6414 = vunpack.c.l.b16 %v3008
  %v6415 = vunpack.c.h.b16 %v3008
  %v6416 = vunpack.c.l.b16 %v3009
  %v6417 = vunpack.c.h.b16 %v3009
  %v6418 = vunpack.c.l.b16 %v3010
  %v6419 = vunpack.c.h.b16 %v3010
  %v6420 = vunpack.c.l.b16 %v3011
  %v6421 = vunpack.c.h.b16 %v3011
  %v6422 = vunpack.c.l.b16 %v3012
  %v6423 = vunpack.c.h.b16 %v3012
  %v6424 = vunpack.c.l.b16 %v3013
  %v6425 = vunpack.c.h.b16 %v3013
  %v6426 = vunpack.c.l.b16 %v3014
  %v6427 = vunpack.c.h.b16 %v3014
  %v6428 = vunpack.c.l.b16 %v3015
  %v6429 = vunpack.c.h.b16 %v3015
  %v6430 = vunpack.c.l.b16 %v3016
  %v6431 = vunpack.c.h.b16 %v3016
  %v6432 = vunpack.c.l.b16 %v3017
  %v6433 = vunpack.c.h.b16 %v3017
  %v6434 = vunpack.c.l.b16 %v3018
  %v6435 = vunpack.c.h.b16 %v3018
  %v6436 = vunpack.c.l.b16 %v3019
  %v6437 = vunpack.c.h.b16 %v3019
  %v6438 = vunpack.c.l.b16 %v3020
  %v6439 = vunpack.c.h.b16 %v3020
  %v6440 = vunpack.c.l.b16 %v3021
  %v6441 = vunpack.c.h.b16 %v3021
  %v6442 = vunpack.c.l.b16 %v3022
  %v6443 = vunpack.c.h.b16 %v3022
  %v6444 = vunpack.c.l.b16 %v3023
  %v6445 = vunpack.c.h.b16 %v3023
  %v6446 = vunpack.c.l.b16 %v3024
  %v6447 = vunpack.c.h.b16 %v3024
  %v6448 = vunpack.c.l.b16 %v3025
  %v6449 = vunpack.c.h.b16 %v3025
  %v6450 = vunpack.c.l.b16 %v3026
  %v6451 = vunpack.c.h.b16 %v3026
  %v6452 = vunpack.c.l.b16 %v3027
  %v6453 = vunpack.c.h.b16 %v3027
  %v6454 = vunpack.c.l.b16 %v3028
  %v6455 = vunpack.c.h.b16 %v3028
  %v6456 = vunpack.c.l.b16 %v3029
  %v6457 = vunpack.c.h.b16 %v3029
  %v6458 = vunpack.c.l.b16 %v3030
  %v6459 = vunpack.c.h.b16 %v3030
  %v6460 = vunpack.c.l.b16 %v3031
  %v6461 = vunpack.c.h.b16 %v3031
  %v6462 = vunpack.c.l.b16 %v3032
  %v6463 = vunpack.c.h.b16 %v3032
  %v6464 = vunpack.c.l.b16 %v3033
  %v6465 = vunpack.c.h.b16 %v3033
  %v6466 = vunpack.c.l.b16 %v3034
  %v6467 = vunpack.c.h.b16 %v3034
  %v6468 = vunpack.c.l.b16 %v3035
  %v6469 = vunpack.c.h.b16 %v3035
  %v6470 = vunpack.c.l.b16 %v3036
  %v6471 = vunpack.c.h.b16 %v3036
  %v6472 = vunpack.c.l.b16 %v3037
  %v6473 = vunpack.c.h.b16 %v3037
  %v6474 = vunpack.c.l.b16 %v3038
  %v6475 = vunpack.c.h.b16 %v3038
  %v6476 = vunpack.c.l.b16 %v3039
  %v6477 = vunpack.c.h.b16 %v3039
  %v6478 = vunpack.c.l.b16 %v3040
  %v6479 = vunpack.c.h.b16 %v3040
  %v6480 = vunpack.c.l.b16 %v3041
  %v6481 = vunpack.c.h.b16 %v3041
  %v6482 = vunpack.c.l.b16 %v3042
  %v6483 = vunpack.c.h.b16 %v3042
  %v6484 = vunpack.c.l.b16 %v3043
  %v6485 = vunpack.c.h.b16 %v3043
  %v6486 = vunpack.c.l.b16 %v3044
  %v6487 = vunpack.c.h.b16 %v3044
  %v6488 = vunpack.c.l.b16 %v3045
  %v6489 = vunpack.c.h.b16 %v3045
  %v6490 = vunpack.c.l.b16 %v3046
  %v6491 = vunpack.c.h.b16 %v3046
  %v6492 = vunpack.c.l.b16 %v3047
  %v6493 = vunpack.c.h.b16 %v3047
  %v6494 = vunpack.c.l.b16 %v3048
  %v6495 = vunpack.c.h.b16 %v3048
  %v6496 = vunpack.c.l.b16 %v3049
  %v6497 = vunpack.c.h.b16 %v3049
  %v6498 = vunpack.c.l.b16 %v3050
  %v6499 = vunpack.c.h.b16 %v3050
  %v6500 = vunpack.c.l.b16 %v3051
  %v6501 = vunpack.c.h.b16 %v3051
  %v6502 = vunpack.c.l.b16 %v3052
  %v6503 = vunpack.c.h.b16 %v3052
  %v6504 = vunpack.c.l.b16 %v3053
  %v6505 = vunpack.c.h.b16 %v3053
  %v6506 = vunpack.c.l.b16 %v3054
  %v6507 = vunpack.c.h.b16 %v3054
  %v6508 = vunpack.c.l.b16 %v3055
  %v6509 = vunpack.c.h.b16 %v3055
  %v6510 = vunpack.c.l.b16 %v3056
  %v6511 = vunpack.c.h.b16 %v3056
  %v6512 = vunpack.c.l.b16 %v3057
  %v6513 = vunpack.c.h.b16 %v3057
  %v6514 = vunpack.c.l.b16 %v3058
  %v6515 = vunpack.c.h.b16 %v3058
  %v6516 = vunpack.c.l.b16 %v3059
  %v6517 = vunpack.c.h.b16 %v3059
  %v6518 = vunpack.c.l.b16 %v3060
  %v6519 = vunpack.c.h.b16 %v3060
  %v6520 = vunpack.c.l.b16 %v3061
  %v6521 = vunpack.c.h.b16 %v3061
  %v6522 = vunpack.c.l.b16 %v3062
  %v6523 = vunpack.c.h.b16 %v3062
  %v6524 = vunpack.c.l.b16 %v3063
  %v6525 = vunpack.c.h.b16 %v3063
  %v6526 = vunpack.c.l.b16 %v3064
  %v6527 = vunpack.c.h.b16 %v3064
  %v6528 = vunpack.c.l.b16 %v3065
  %v6529 = vunpack.c.h.b16 %v3065
  %v6530 = vunpack.c.l.b16 %v3066
  %v6531 = vunpack.c.h.b16 %v3066
  %v6532 = vunpack.c.l.b16 %v3067
  %v6533 = vunpack.c.h.b16 %v3067
  %v6534 = vunpack.c.l.b16 %v3068
  %v6535 = vunpack.c.h.b16 %v3068
  %v6536 = vunpack.c.l.b16 %v3069
  %v6537 = vunpack.c.h.b16 %v3069
  %v6538 = vunpack.c.l.b16 %v3070
  %v6539 = vunpack.c.h.b16 %v3070
  %v6540 = vunpack.c.l.b16 %v3071
  %v6541 = vunpack.c.h.b16 %v3071
  %v6542 = vunpack.c.l.b16 %v3072
  %v6543 = vunpack.c.h.b16 %v3072
  %v6544 = vunpack.c.l.b16 %v3073
  %v6545 = vunpack.c.h.b16 %v3073
  %v6546 = vunpack.c.l.b16 %v3074
  %v6547 = vunpack.c.h.b16 %v3074
  %v6548 = vunpack.c.l.b16 %v3075
  %v6549 = vunpack.c.h.b16 %v3075
  %v6550 = vunpack.c.l.b16 %v3076
  %v6551 = vunpack.c.h.b16 %v3076
  %v6552 = vunpack.c.l.b16 %v3077
  %v6553 = vunpack.c.h.b16 %v3077
  %v6554 = vunpack.c.l.b16 %v3078
  %v6555 = vunpack.c.h.b16 %v3078
  %v6556 = vunpack.c.l.b16 %v3079
  %v6557 = vunpack.c.h.b16 %v3079
  %v6558 = vunpack.c.l.b16 %v3080
  %v6559 = vunpack.c.h.b16 %v3080
  %v6560 = vunpack.c.l.b16 %v3081
  %v6561 = vunpack.c.h.b16 %v3081
  %v6562 = vunpack.c.l.b16 %v3082
  %v6563 = vunpack.c.h.b16 %v3082
  %v6564 = vunpack.c.l.b16 %v3083
  %v6565 = vunpack.c.h.b16 %v3083
  %v6566 = vunpack.c.l.b16 %v3084
  %v6567 = vunpack.c.h.b16 %v3084
  %v6568 = vunpack.c.l.b16 %v3085
  %v6569 = vunpack.c.h.b16 %v3085
  %v6570 = vunpack.c.l.b16 %v3086
  %v6571 = vunpack.c.h.b16 %v3086
  %v6572 = vunpack.c.l.b16 %v3087
  %v6573 = vunpack.c.h.b16 %v3087
  %v6574 = vunpack.c.l.b16 %v3088
  %v6575 = vunpack.c.h.b16 %v3088
  %v6576 = vunpack.c.l.b16 %v3089
  %v6577 = vunpack.c.h.b16 %v3089
  %v6578 = vunpack.c.l.b16 %v3090
  %v6579 = vunpack.c.h.b16 %v3090
  %v6580 = vunpack.c.l.b16 %v3091
  %v6581 = vunpack.c.h.b16 %v3091
  %v6582 = vunpack.c.l.b16 %v3092
  %v6583 = vunpack.c.h.b16 %v3092
  %v6584 = vunpack.c.l.b16 %v3093
  %v6585 = vunpack.c.h.b16 %v3093
  %v6586 = vunpack.c.l.b16 %v3094
  %v6587 = vunpack.c.h.b16 %v3094
  %v6588 = vunpack.c.l.b16 %v3095
  %v6589 = vunpack.c.h.b16 %v3095
  %v6590 = vunpack.c.l.b16 %v3096
  %v6591 = vunpack.c.h.b16 %v3096
  %v6592 = vunpack.c.l.b16 %v3097
  %v6593 = vunpack.c.h.b16 %v3097
  %v6594 = vunpack.c.l.b16 %v3098
  %v6595 = vunpack.c.h.b16 %v3098
  %v6596 = vunpack.c.l.b16 %v3099
  %v6597 = vunpack.c.h.b16 %v3099
  %v6598 = vunpack.c.l.b16 %v3100
  %v6599 = vunpack.c.h.b16 %v3100
  %v6600 = vunpack.c.l.b16 %v3101
  %v6601 = vunpack.c.h.b16 %v3101
  %v6602 = vunpack.c.l.b16 %v3102
  %v6603 = vunpack.c.h.b16 %v3102
  %v6604 = vunpack.c.l.b16 %v3103
  %v6605 = vunpack.c.h.b16 %v3103
  %v6606 = vunpack.c.l.b16 %v3104
  %v6607 = vunpack.c.h.b16 %v3104
  %v6608 = vunpack.c.l.b16 %v3105
  %v6609 = vunpack.c.h.b16 %v3105
  %v6610 = vunpack.c.l.b16 %v3106
  %v6611 = vunpack.c.h.b16 %v3106
  %v6612 = vunpack.c.l.b16 %v3107
  %v6613 = vunpack.c.h.b16 %v3107
  %v6614 = vunpack.c.l.b16 %v3108
  %v6615 = vunpack.c.h.b16 %v3108
  %v6616 = vunpack.c.l.b16 %v3109
  %v6617 = vunpack.c.h.b16 %v3109
  %v6618 = vunpack.c.l.b16 %v3110
  %v6619 = vunpack.c.h.b16 %v3110
  %v6620 = vunpack.c.l.b16 %v3111
  %v6621 = vunpack.c.h.b16 %v3111
  %v6622 = vunpack.c.l.b16 %v3112
  %v6623 = vunpack.c.h.b16 %v3112
  %v6624 = vunpack.c.l.b16 %v3113
  %v6625 = vunpack.c.h.b16 %v3113
  %v6626 = vunpack.c.l.b16 %v3114
  %v6627 = vunpack.c.h.b16 %v3114
  %v6628 = vunpack.c.l.b16 %v3115
  %v6629 = vunpack.c.h.b16 %v3115
  %v6630 = vunpack.c.l.b16 %v3116
  %v6631 = vunpack.c.h.b16 %v3116
  %v6632 = vunpack.c.l.b16 %v3117
  %v6633 = vunpack.c.h.b16 %v3117
  %v6634 = vunpack.c.l.b16 %v3118
  %v6635 = vunpack.c.h.b16 %v3118
  %v6636 = vunpack.c.l.b16 %v3119
  %v6637 = vunpack.c.h.b16 %v3119
  %v6638 = vunpack.c.l.b16 %v3120
  %v6639 = vunpack.c.h.b16 %v3120
  %v6640 = vunpack.c.l.b16 %v3121
  %v6641 = vunpack.c.h.b16 %v3121
  %v6642 = vunpack.c.l.b16 %v3122
  %v6643 = vunpack.c.h.b16 %v3122
  %v6644 = vunpack.c.l.b16 %v3123
  %v6645 = vunpack.c.h.b16 %v3123
  %v6646 = vunpack.c.l.b16 %v3124
  %v6647 = vunpack.c.h.b16 %v3124
  %v6648 = vunpack.c.l.b16 %v3125
  %v6649 = vunpack.c.h.b16 %v3125
  %v6650 = vunpack.c.l.b16 %v3126
  %v6651 = vunpack.c.h.b16 %v3126
  %v6652 = vunpack.c.l.b16 %v3127
  %v6653 = vunpack.c.h.b16 %v3127
  %v6654 = vunpack.c.l.b16 %v3128
  %v6655 = vunpack.c.h.b16 %v3128
  %v6656 = vunpack.c.l.b16 %v3129
  %v6657 = vunpack.c.h.b16 %v3129
  %v6658 = vunpack.c.l.b16 %v3130
  %v6659 = vunpack.c.h.b16 %v3130
  %v6660 = vunpack.c.l.b16 %v3131
  %v6661 = vunpack.c.h.b16 %v3131
  %v6662 = vunpack.c.l.b16 %v3132
  %v6663 = vunpack.c.h.b16 %v3132
  %v6664 = vunpack.c.l.b16 %v3133
  %v6665 = vunpack.c.h.b16 %v3133
  %v6666 = vunpack.c.l.b16 %v3134
  %v6667 = vunpack.c.h.b16 %v3134
  %v6668 = vunpack.c.l.b16 %v3135
  %v6669 = vunpack.c.h.b16 %v3135
  %v6670 = vunpack.c.l.b16 %v3136
  %v6671 = vunpack.c.h.b16 %v3136
  %v6672 = vunpack.c.l.b16 %v3137
  %v6673 = vunpack.c.h.b16 %v3137
  %v6674 = vunpack.c.l.b16 %v3138
  %v6675 = vunpack.c.h.b16 %v3138
  %v6676 = vunpack.c.l.b16 %v3139
  %v6677 = vunpack.c.h.b16 %v3139
  %v6678 = vunpack.c.l.b16 %v3140
  %v6679 = vunpack.c.h.b16 %v3140
  %v6680 = vunpack.c.l.b16 %v3141
  %v6681 = vunpack.c.h.b16 %v3141
  %v6682 = vunpack.c.l.b16 %v3142
  %v6683 = vunpack.c.h.b16 %v3142
  %v6684 = vunpack.c.l.b16 %v3143
  %v6685 = vunpack.c.h.b16 %v3143
  %v6686 = vunpack.c.l.b16 %v3144
  %v6687 = vunpack.c.h.b16 %v3144
  %v6688 = vunpack.c.l.b16 %v3145
  %v6689 = vunpack.c.h.b16 %v3145
  %v6690 = vunpack.c.l.b16 %v3146
  %v6691 = vunpack.c.h.b16 %v3146
  %v6692 = vunpack.c.l.b16 %v3147
  %v6693 = vunpack.c.h.b16 %v3147
  %v6694 = vunpack.c.l.b16 %v3148
  %v6695 = vunpack.c.h.b16 %v3148
  %v6696 = vunpack.c.l.b16 %v3149
  %v6697 = vunpack.c.h.b16 %v3149
  %v6698 = vunpack.c.l.b16 %v3150
  %v6699 = vunpack.c.h.b16 %v3150
  %v6700 = vunpack.c.l.b16 %v3151
  %v6701 = vunpack.c.h.b16 %v3151
  %v6702 = vunpack.c.l.b16 %v3152
  %v6703 = vunpack.c.h.b16 %v3152
  %v6704 = vunpack.c.l.b16 %v3153
  %v6705 = vunpack.c.h.b16 %v3153
  %v6706 = vunpack.c.l.b16 %v3154
  %v6707 = vunpack.c.h.b16 %v3154
  %v6708 = vunpack.c.l.b16 %v3155
  %v6709 = vunpack.c.h.b16 %v3155
  %v6710 = vunpack.c.l.b16 %v3156
  %v6711 = vunpack.c.h.b16 %v3156
  %v6712 = vunpack.c.l.b16 %v3157
  %v6713 = vunpack.c.h.b16 %v3157
  %v6714 = vunpack.c.l.b16 %v3158
  %v6715 = vunpack.c.h.b16 %v3158
  %v6716 = vunpack.c.l.b16 %v3159
  %v6717 = vunpack.c.h.b16 %v3159
  %v6718 = vunpack.c.l.b16 %v3160
  %v6719 = vunpack.c.h.b16 %v3160
  %v6720 = vunpack.c.l.b16 %v3161
  %v6721 = vunpack.c.h.b16 %v3161
  %v6722 = vunpack.c.l.b16 %v3162
  %v6723 = vunpack.c.h.b16 %v3162
  %v6724 = vunpack.c.l.b16 %v3163
  %v6725 = vunpack.c.h.b16 %v3163
  %v6726 = vunpack.c.l.b16 %v3164
  %v6727 = vunpack.c.h.b16 %v3164
  %v6728 = vunpack.c.l.b16 %v3165
  %v6729 = vunpack.c.h.b16 %v3165
  %v6730 = vunpack.c.l.b16 %v3166
  %v6731 = vunpack.c.h.b16 %v3166
  %v6732 = vunpack.c.l.b16 %v3167
  %v6733 = vunpack.c.h.b16 %v3167
  %v6734 = vunpack.c.l.b16 %v3168
  %v6735 = vunpack.c.h.b16 %v3168
  %v6736 = vunpack.c.l.b16 %v3169
  %v6737 = vunpack.c.h.b16 %v3169
  %v6738 = vunpack.c.l.b16 %v3170
  %v6739 = vunpack.c.h.b16 %v3170
  %v6740 = vunpack.c.l.b16 %v3171
  %v6741 = vunpack.c.h.b16 %v3171
  %v6742 = vunpack.c.l.b16 %v3172
  %v6743 = vunpack.c.h.b16 %v3172
  %v6744 = vunpack.c.l.b16 %v3173
  %v6745 = vunpack.c.h.b16 %v3173
  %v6746 = vunpack.c.l.b16 %v3174
  %v6747 = vunpack.c.h.b16 %v3174
  %v6748 = vunpack.c.l.b16 %v3175
  %v6749 = vunpack.c.h.b16 %v3175
  %v6750 = vunpack.c.l.b16 %v3176
  %v6751 = vunpack.c.h.b16 %v3176
  %v6752 = vunpack.c.l.b16 %v3177
  %v6753 = vunpack.c.h.b16 %v3177
  %v6754 = vunpack.c.l.b16 %v3178
  %v6755 = vunpack.c.h.b16 %v3178
  %v6756 = vunpack.c.l.b16 %v3179
  %v6757 = vunpack.c.h.b16 %v3179
  %v6758 = vunpack.c.l.b16 %v3180
  %v6759 = vunpack.c.h.b16 %v3180
  %v6760 = vunpack.c.l.b16 %v3181
  %v6761 = vunpack.c.h.b16 %v3181
  %v6762 = vunpack.c.l.b16 %v3182
  %v6763 = vunpack.c.h.b16 %v3182
  %v6764 = vunpack.c.l.b16 %v3183
  %v6765 = vunpack.c.h.b16 %v3183
  %v6766 = vunpack.c.l.b16 %v3184
  %v6767 = vunpack.c.h.b16 %v3184
  %v6768 = vunpack.c.l.b16 %v3185
  %v6769 = vunpack.c.h.b16 %v3185
  %v6770 = vunpack.c.l.b16 %v3186
  %v6771 = vunpack.c.h.b16 %v3186
  %v6772 = vunpack.c.l.b16 %v3187
  %v6773 = vunpack.c.h.b16 %v3187
  %v6774 = vunpack.c.l.b16 %v3188
  %v6775 = vunpack.c.h.b16 %v3188
  %v6776 = vunpack.c.l.b16 %v3189
  %v6777 = vunpack.c.h.b16 %v3189
  %v6778 = vunpack.c.l.b16 %v3190
  %v6779 = vunpack.c.h.b16 %v3190
  %v6780 = vunpack.c.l.b16 %v3191
  %v6781 = vunpack.c.h.b16 %v3191
  %v6782 = vunpack.c.l.b16 %v3192
  %v6783 = vunpack.c.h.b16 %v3192
  %v6784 = vunpack.c.l.b16 %v3193
  %v6785 = vunpack.c.h.b16 %v3193
  %v6786 = vunpack.c.l.b16 %v3194
  %v6787 = vunpack.c.h.b16 %v3194
  %v6788 = vunpack.c.l.b16 %v3195
  %v6789 = vunpack.c.h.b16 %v3195
  %v6790 = vunpack.c.l.b16 %v3196
  %v6791 = vunpack.c.h.b16 %v3196
  %v6792 = vunpack.c.l.b16 %v3197
  %v6793 = vunpack.c.h.b16 %v3197
  %v6794 = vunpack.c.l.b16 %v3198
  %v6795 = vunpack.c.h.b16 %v3198
  %v6796 = vunpack.c.l.b16 %v3199
  %v6797 = vunpack.c.h.b16 %v3199
  %v6798 = vunpack.c.l.b16 %v3200
  %v6799 = vunpack.c.h.b16 %v3200
  %v6800 = vunpack.c.l.b16 %v3201
  %v6801 = vunpack.c.h.b16 %v3201
  %v6802 = vunpack.c.l.b16 %v3202
  %v6803 = vunpack.c.h.b16 %v3202
  %v6804 = vunpack.c.l.b16 %v3203
  %v6805 = vunpack.c.h.b16 %v3203
  %v6806 = vunpack.c.l.b16 %v3204
  %v6807 = vunpack.c.h.b16 %v3204
  %v6808 = vunpack.c.l.b16 %v3205
  %v6809 = vunpack.c.h.b16 %v3205
  %v6810 = vunpack.c.l.b16 %v3206
  %v6811 = vunpack.c.h.b16 %v3206
  %v6812 = vunpack.c.l.b16 %v3207
  %v6813 = vunpack.c.h.b16 %v3207
  %v6814 = vunpack.c.l.b16 %v3208
  %v6815 = vunpack.c.h.b16 %v3208
  %v6816 = vunpack.c.l.b16 %v3209
  %v6817 = vunpack.c.h.b16 %v3209
  %v6818 = vunpack.c.l.b16 %v3210
  %v6819 = vunpack.c.h.b16 %v3210
  %v6820 = vunpack.c.l.b16 %v3211
  %v6821 = vunpack.c.h.b16 %v3211
  %v6822 = vunpack.c.l.b16 %v3212
  %v6823 = vunpack.c.h.b16 %v3212
  %v6824 = vunpack.c.l.b16 %v3213
  %v6825 = vunpack.c.h.b16 %v3213
  %v6826 = vunpack.c.l.b16 %v3214
  %v6827 = vunpack.c.h.b16 %v3214
  %v6828 = vunpack.c.l.b16 %v3215
  %v6829 = vunpack.c.h.b16 %v3215
  %v6830 = vunpack.c.l.b16 %v3216
  %v6831 = vunpack.c.h.b16 %v3216
  %v6832 = vunpack.c.l.b16 %v3217
  %v6833 = vunpack.c.h.b16 %v3217
  %v6834 = vunpack.c.l.b16 %v3218
  %v6835 = vunpack.c.h.b16 %v3218
  %v6836 = vunpack.c.l.b16 %v3219
  %v6837 = vunpack.c.h.b16 %v3219
  %v6838 = vunpack.c.l.b16 %v3220
  %v6839 = vunpack.c.h.b16 %v3220
  %v6840 = vunpack.c.l.b16 %v3221
  %v6841 = vunpack.c.h.b16 %v3221
  %v6842 = vunpack.c.l.b16 %v3222
  %v6843 = vunpack.c.h.b16 %v3222
  %v6844 = vunpack.c.l.b16 %v3223
  %v6845 = vunpack.c.h.b16 %v3223
  %v6846 = vunpack.c.l.b16 %v3224
  %v6847 = vunpack.c.h.b16 %v3224
  %v6848 = vunpack.c.l.b16 %v3225
  %v6849 = vunpack.c.h.b16 %v3225
  %v6850 = vunpack.c.l.b16 %v3226
  %v6851 = vunpack.c.h.b16 %v3226
  %v6852 = vunpack.c.l.b16 %v3227
  %v6853 = vunpack.c.h.b16 %v3227
  %v6854 = vunpack.c.l.b16 %v3228
  %v6855 = vunpack.c.h.b16 %v3228
  %v6856 = vunpack.c.l.b16 %v3229
  %v6857 = vunpack.c.h.b16 %v3229
  %v6858 = vunpack.c.l.b16 %v3230
  %v6859 = vunpack.c.h.b16 %v3230
  %v6860 = vunpack.c.l.b16 %v3231
  %v6861 = vunpack.c.h.b16 %v3231
  %v6862 = vunpack.c.l.b16 %v3232
  %v6863 = vunpack.c.h.b16 %v3232
  %v6864 = vunpack.c.l.b16 %v3233
  %v6865 = vunpack.c.h.b16 %v3233
  %v6866 = vunpack.c.l.b16 %v3234
  %v6867 = vunpack.c.h.b16 %v3234
  %v6868 = vunpack.c.l.b16 %v3235
  %v6869 = vunpack.c.h.b16 %v3235
  %v6870 = vunpack.c.l.b16 %v3236
  %v6871 = vunpack.c.h.b16 %v3236
  %v6872 = vunpack.c.l.b16 %v3237
  %v6873 = vunpack.c.h.b16 %v3237
  %v6874 = vunpack.c.l.b16 %v3238
  %v6875 = vunpack.c.h.b16 %v3238
  %v6876 = vunpack.c.l.b16 %v3239
  %v6877 = vunpack.c.h.b16 %v3239
  %v6878 = vunpack.c.l.b16 %v3240
  %v6879 = vunpack.c.h.b16 %v3240
  %v6880 = vunpack.c.l.b16 %v3241
  %v6881 = vunpack.c.h.b16 %v3241
  %v6882 = vunpack.c.l.b16 %v3242
  %v6883 = vunpack.c.h.b16 %v3242
  %v6884 = vunpack.c.l.b16 %v3243
  %v6885 = vunpack.c.h.b16 %v3243
  %v6886 = vunpack.c.l.b16 %v3244
  %v6887 = vunpack.c.h.b16 %v3244
  %v6888 = vunpack.c.l.b16 %v3245
  %v6889 = vunpack.c.h.b16 %v3245
  %v6890 = vunpack.c.l.b16 %v3246
  %v6891 = vunpack.c.h.b16 %v3246
  %v6892 = vunpack.c.l.b16 %v3247
  %v6893 = vunpack.c.h.b16 %v3247
  %v6894 = vunpack.c.l.b16 %v3248
  %v6895 = vunpack.c.h.b16 %v3248
  %v6896 = vunpack.c.l.b16 %v3249
  %v6897 = vunpack.c.h.b16 %v3249
  %v6898 = vunpack.c.l.b16 %v3250
  %v6899 = vunpack.c.h.b16 %v3250
  %v6900 = vunpack.c.l.b16 %v3251
  %v6901 = vunpack.c.h.b16 %v3251
  %v6902 = vunpack.c.l.b16 %v3252
  %v6903 = vunpack.c.h.b16 %v3252
  %v6904 = vunpack.c.l.b16 %v3253
  %v6905 = vunpack.c.h.b16 %v3253
  %v6906 = vunpack.c.l.b16 %v3254
  %v6907 = vunpack.c.h.b16 %v3254
  %v6908 = vunpack.c.l.b16 %v3255
  %v6909 = vunpack.c.h.b16 %v3255
  %v6910 = vunpack.c.l.b16 %v3256
  %v6911 = vunpack.c.h.b16 %v3256
  %v6912 = vunpack.c.l.b16 %v3257
  %v6913 = vunpack.c.h.b16 %v3257
  %v6914 = vunpack.c.l.b16 %v3258
  %v6915 = vunpack.c.h.b16 %v3258
  %v6916 = vunpack.c.l.b16 %v3259
  %v6917 = vunpack.c.h.b16 %v3259
  %v6918 = vunpack.c.l.b16 %v3260
  %v6919 = vunpack.c.h.b16 %v3260
  %v6920 = vunpack.c.l.b16 %v3261
  %v6921 = vunpack.c.h.b16 %v3261
  %v6922 = vunpack.c.l.b16 %v3262
  %v6923 = vunpack.c.h.b16 %v3262
  %v6924 = vunpack.c.l.b16 %v3263
  %v6925 = vunpack.c.h.b16 %v3263
  %v6926 = vunpack.c.l.b16 %v3264
  %v6927 = vunpack.c.h.b16 %v3264
  %v6928 = vunpack.c.l.b16 %v3265
  %v6929 = vunpack.c.h.b16 %v3265
  %v6930 = vunpack.c.l.b16 %v3266
  %v6931 = vunpack.c.h.b16 %v3266
  %v6932 = vunpack.c.l.b16 %v3267
  %v6933 = vunpack.c.h.b16 %v3267
  %v6934 = vunpack.c.l.b16 %v3268
  %v6935 = vunpack.c.h.b16 %v3268
  %v6936 = vunpack.c.l.b16 %v3269
  %v6937 = vunpack.c.h.b16 %v3269
  %v6938 = vunpack.c.l.b16 %v3270
  %v6939 = vunpack.c.h.b16 %v3270
  %v6940 = vunpack.c.l.b16 %v3271
  %v6941 = vunpack.c.h.b16 %v3271
  %v6942 = vunpack.c.l.b16 %v3272
  %v6943 = vunpack.c.h.b16 %v3272
  %v6944 = vunpack.c.l.b16 %v3273
  %v6945 = vunpack.c.h.b16 %v3273
  %v6946 = vunpack.c.l.b16 %v3274
  %v6947 = vunpack.c.h.b16 %v3274
  %v6948 = vunpack.c.l.b16 %v3275
  %v6949 = vunpack.c.h.b16 %v3275
  %v6950 = vunpack.c.l.b16 %v3276
  %v6951 = vunpack.c.h.b16 %v3276
  %v6952 = vunpack.c.l.b16 %v3277
  %v6953 = vunpack.c.h.b16 %v3277
  %v6954 = vunpack.c.l.b16 %v3278
  %v6955 = vunpack.c.h.b16 %v3278
  %v6956 = vunpack.c.l.b16 %v3279
  %v6957 = vunpack.c.h.b16 %v3279
  %v6958 = vunpack.c.l.b16 %v3280
  %v6959 = vunpack.c.h.b16 %v3280
  %v6960 = vunpack.c.l.b16 %v3281
  %v6961 = vunpack.c.h.b16 %v3281
  %v6962 = vunpack.c.l.b16 %v3282
  %v6963 = vunpack.c.h.b16 %v3282
  %v6964 = vunpack.c.l.b16 %v3283
  %v6965 = vunpack.c.h.b16 %v3283
  %v6966 = vunpack.c.l.b16 %v3284
  %v6967 = vunpack.c.h.b16 %v3284
  %v6968 = vunpack.c.l.b16 %v3285
  %v6969 = vunpack.c.h.b16 %v3285
  %v6970 = vunpack.c.l.b16 %v3286
  %v6971 = vunpack.c.h.b16 %v3286
  %v6972 = vunpack.c.l.b16 %v3287
  %v6973 = vunpack.c.h.b16 %v3287
  %v6974 = vunpack.c.l.b16 %v3288
  %v6975 = vunpack.c.h.b16 %v3288
  %v6976 = vunpack.c.l.b16 %v3289
  %v6977 = vunpack.c.h.b16 %v3289
  %v6978 = vunpack.c.l.b16 %v3290
  %v6979 = vunpack.c.h.b16 %v3290
  %v6980 = vunpack.c.l.b16 %v3291
  %v6981 = vunpack.c.h.b16 %v3291
  %v6982 = vunpack.c.l.b16 %v3292
  %v6983 = vunpack.c.h.b16 %v3292
  %v6984 = vunpack.c.l.b16 %v3293
  %v6985 = vunpack.c.h.b16 %v3293
  %v6986 = vunpack.c.l.b16 %v3294
  %v6987 = vunpack.c.h.b16 %v3294
  %v6988 = vunpack.c.l.b16 %v3295
  %v6989 = vunpack.c.h.b16 %v3295
  %v6990 = vunpack.c.l.b16 %v3296
  %v6991 = vunpack.c.h.b16 %v3296
  %v6992 = vunpack.c.l.b16 %v3297
  %v6993 = vunpack.c.h.b16 %v3297
  %v6994 = vunpack.c.l.b16 %v3298
  %v6995 = vunpack.c.h.b16 %v3298
  %v6996 = vunpack.c.l.b16 %v3299
  %v6997 = vunpack.c.h.b16 %v3299
  %v6998 = vunpack.c.l.b16 %v3300
  %v6999 = vunpack.c.h.b16 %v3300
  %v7000 = vunpack.c.l.b16 %v3301
  %v7001 = vunpack.c.h.b16 %v3301
  %v7002 = vunpack.c.l.b16 %v3302
  %v7003 = vunpack.c.h.b16 %v3302
  %v7004 = vunpack.c.l.b16 %v3303
  %v7005 = vunpack.c.h.b16 %v3303
  %v7006 = vunpack.c.l.b16 %v3304
  %v7007 = vunpack.c.h.b16 %v3304
  %v7008 = vunpack.c.l.b16 %v3305
  %v7009 = vunpack.c.h.b16 %v3305
  %v7010 = vunpack.c.l.b16 %v3306
  %v7011 = vunpack.c.h.b16 %v3306
  %v7012 = vunpack.c.l.b16 %v3307
  %v7013 = vunpack.c.h.b16 %v3307
  %v7014 = vunpack.c.l.b16 %v3308
  %v7015 = vunpack.c.h.b16 %v3308
  %v7016 = vunpack.c.l.b16 %v3309
  %v7017 = vunpack.c.h.b16 %v3309
  %v7018 = vunpack.c.l.b16 %v3310
  %v7019 = vunpack.c.h.b16 %v3310
  %v7020 = vunpack.c.l.b16 %v3311
  %v7021 = vunpack.c.h.b16 %v3311
  %v7022 = vunpack.c.l.b16 %v3312
  %v7023 = vunpack.c.h.b16 %v3312
  %v7024 = vunpack.c.l.b16 %v3313
  %v7025 = vunpack.c.h.b16 %v3313
  %v7026 = vunpack.c.l.b16 %v3314
  %v7027 = vunpack.c.h.b16 %v3314
  %v7028 = vunpack.c.l.b16 %v3315
  %v7029 = vunpack.c.h.b16 %v3315
  %v7030 = vunpack.c.l.b16 %v3316
  %v7031 = vunpack.c.h.b16 %v3316
  %v7032 = vunpack.c.l.b16 %v3317
  %v7033 = vunpack.c.h.b16 %v3317
  %v7034 = vunpack.c.l.b16 %v3318
  %v7035 = vunpack.c.h.b16 %v3318
  %v7036 = vunpack.c.l.b16 %v3319
  %v7037 = vunpack.c.h.b16 %v3319
  %v7038 = vunpack.c.l.b16 %v3320
  %v7039 = vunpack.c.h.b16 %v3320
  %v7040 = vunpack.c.l.b16 %v3321
  %v7041 = vunpack.c.h.b16 %v3321
  %v7042 = vunpack.c.l.b16 %v3322
  %v7043 = vunpack.c.h.b16 %v3322
  %v7044 = vunpack.c.l.b16 %v3323
  %v7045 = vunpack.c.h.b16 %v3323
  %v7046 = vunpack.c.l.b16 %v3324
  %v7047 = vunpack.c.h.b16 %v3324
  %v7048 = vunpack.c.l.b16 %v3325
  %v7049 = vunpack.c.h.b16 %v3325
  %v7050 = vunpack.c.l.b16 %v3326
  %v7051 = vunpack.c.h.b16 %v3326
  %v7052 = vunpack.c.l.b16 %v3327
  %v7053 = vunpack.c.h.b16 %v3327
  %v7054 = vunpack.c.l.b16 %v3328
  %v7055 = vunpack.c.h.b16 %v3328
  %v7056 = vunpack.c.l.b16 %v3329
  %v7057 = vunpack.c.h.b16 %v3329
  %v7058 = vunpack.c.l.b16 %v3330
  %v7059 = vunpack.c.h.b16 %v3330
  %v7060 = vunpack.c.l.b16 %v3331
  %v7061 = vunpack.c.h.b16 %v3331
  %v7062 = vunpack.c.l.b16 %v3332
  %v7063 = vunpack.c.h.b16 %v3332
  %v7064 = vunpack.c.l.b16 %v3333
  %v7065 = vunpack.c.h.b16 %v3333
  %v7066 = vunpack.c.l.b16 %v3334
  %v7067 = vunpack.c.h.b16 %v3334
  %v7068 = vunpack.c.l.b16 %v3335
  %v7069 = vunpack.c.h.b16 %v3335
  %v7070 = vunpack.c.l.b16 %v3336
  %v7071 = vunpack.c.h.b16 %v3336
  %v7072 = vunpack.c.l.b16 %v3337
  %v7073 = vunpack.c.h.b16 %v3337
  %v7074 = vunpack.c.l.b16 %v3338
  %v7075 = vunpack.c.h.b16 %v3338
  %v7076 = vunpack.c.l.b16 %v3339
  %v7077 = vunpack.c.h.b16 %v3339
  %v7078 = vunpack.c.l.b16 %v3340
  %v7079 = vunpack.c.h.b16 %v3340
  %v7080 = vunpack.c.l.b16 %v3341
  %v7081 = vunpack.c.h.b16 %v3341
  %v7082 = vunpack.c.l.b16 %v3342
  %v7083 = vunpack.c.h.b16 %v3342
  %v7084 = vunpack.c.l.b16 %v3343
  %v7085 = vunpack.c.h.b16 %v3343
  %v7086 = vunpack.c.l.b16 %v3344
  %v7087 = vunpack.c.h.b16 %v3344
  %v7088 = vunpack.c.l.b16 %v3345
  %v7089 = vunpack.c.h.b16 %v3345
  %v7090 = vunpack.c.l.b16 %v3346
  %v7091 = vunpack.c.h.b16 %v3346
  %v7092 = vunpack.c.l.b16 %v3347
  %v7093 = vunpack.c.h.b16 %v3347
  %v7094 = vunpack.c.l.b16 %v3348
  %v7095 = vunpack.c.h.b16 %v3348
  %v7096 = vunpack.c.l.b16 %v3349
  %v7097 = vunpack.c.h.b16 %v3349
  %v7098 = vunpack.c.l.b16 %v3350
  %v7099 = vunpack.c.h.b16 %v3350
  %v7100 = vunpack.c.l.b16 %v3351
  %v7101 = vunpack.c.h.b16 %v3351
  %v7102 = vunpack.c.l.b16 %v3352
  %v7103 = vunpack.c.h.b16 %v3352
  %v7104 = vunpack.c.l.b16 %v3353
  %v7105 = vunpack.c.h.b16 %v3353
  %v7106 = vunpack.c.l.b16 %v3354
  %v7107 = vunpack.c.h.b16 %v3354
  %v7108 = vunpack.c.l.b16 %v3355
  %v7109 = vunpack.c.h.b16 %v3355
  %v7110 = vunpack.c.l.b16 %v3356
  %v7111 = vunpack.c.h.b16 %v3356
  %v7112 = vunpack.c.l.b16 %v3357
  %v7113 = vunpack.c.h.b16 %v3357
  %v7114 = vunpack.c.l.b16 %v3358
  %v7115 = vunpack.c.h.b16 %v3358
  %v7116 = vunpack.c.l.b16 %v3359
  %v7117 = vunpack.c.h.b16 %v3359
  %v7118 = vunpack.c.l.b16 %v3360
  %v7119 = vunpack.c.h.b16 %v3360
  %v7120 = vunpack.c.l.b16 %v3361
  %v7121 = vunpack.c.h.b16 %v3361
  %v7122 = vunpack.c.l.b16 %v3362
  %v7123 = vunpack.c.h.b16 %v3362
  %v7124 = vunpack.c.l.b16 %v3363
  %v7125 = vunpack.c.h.b16 %v3363
  %v7126 = vunpack.c.l.b16 %v3364
  %v7127 = vunpack.c.h.b16 %v3364
  %v7128 = vunpack.c.l.b16 %v3365
  %v7129 = vunpack.c.h.b16 %v3365
  %v7130 = vunpack.c.l.b16 %v3366
  %v7131 = vunpack.c.h.b16 %v3366
  %v7132 = vunpack.c.l.b16 %v3367
  %v7133 = vunpack.c.h.b16 %v3367
  %v7134 = vunpack.c.l.b16 %v3368
  %v7135 = vunpack.c.h.b16 %v3368
  %v7136 = vunpack.c.l.b16 %v3369
  %v7137 = vunpack.c.h.b16 %v3369
  %v7138 = vunpack.c.l.b16 %v3370
  %v7139 = vunpack.c.h.b16 %v3370
  %v7140 = vunpack.c.l.b16 %v3371
  %v7141 = vunpack.c.h.b16 %v3371
  %v7142 = vunpack.c.l.b16 %v3372
  %v7143 = vunpack.c.h.b16 %v3372
  %v7144 = vunpack.c.l.b16 %v3373
  %v7145 = vunpack.c.h.b16 %v3373
  %v7146 = vunpack.c.l.b16 %v3374
  %v7147 = vunpack.c.h.b16 %v3374
  %v7148 = vunpack.c.l.b16 %v3375
  %v7149 = vunpack.c.h.b16 %v3375
  %v7150 = vunpack.c.l.b16 %v3376
  %v7151 = vunpack.c.h.b16 %v3376
  %v7152 = vunpack.c.l.b16 %v3377
  %v7153 = vunpack.c.h.b16 %v3377
  %v7154 = vunpack.c.l.b16 %v3378
  %v7155 = vunpack.c.h.b16 %v3378
  %v7156 = vunpack.c.l.b16 %v3379
  %v7157 = vunpack.c.h.b16 %v3379
  %v7158 = vunpack.c.l.b16 %v3380
  %v7159 = vunpack.c.h.b16 %v3380
  %v7160 = vunpack.c.l.b16 %v3381
  %v7161 = vunpack.c.h.b16 %v3381
  %v7162 = vunpack.c.l.b16 %v3382
  %v7163 = vunpack.c.h.b16 %v3382
  %v7164 = vunpack.c.l.b16 %v3383
  %v7165 = vunpack.c.h.b16 %v3383
  %v7166 = vunpack.c.l.b16 %v3384
  %v7167 = vunpack.c.h.b16 %v3384
  %v7168 = vunpack.c.l.b16 %v3385
  %v7169 = vunpack.c.h.b16 %v3385
  %v7170 = vunpack.c.l.b16 %v3386
  %v7171 = vunpack.c.h.b16 %v3386
  %v7172 = vunpack.c.l.b16 %v3387
  %v7173 = vunpack.c.h.b16 %v3387
  %v7174 = vunpack.c.l.b16 %v3388
  %v7175 = vunpack.c.h.b16 %v3388
  %v7176 = vunpack.c.l.b16 %v3389
  %v7177 = vunpack.c.h.b16 %v3389
  %v7178 = vunpack.c.l.b16 %v3390
  %v7179 = vunpack.c.h.b16 %v3390
  %v7180 = vunpack.c.l.b16 %v3391
  %v7181 = vunpack.c.h.b16 %v3391
  %v7182 = vunpack.c.l.b16 %v3392
  %v7183 = vunpack.c.h.b16 %v3392
  %v7184 = vunpack.c.l.b16 %v3393
  %v7185 = vunpack.c.h.b16 %v3393
  %v7186 = vunpack.c.l.b16 %v3394
  %v7187 = vunpack.c.h.b16 %v3394
  %v7188 = vunpack.c.l.b16 %v3395
  %v7189 = vunpack.c.h.b16 %v3395
  %v7190 = vunpack.c.l.b16 %v3396
  %v7191 = vunpack.c.h.b16 %v3396
  %v7192 = vunpack.c.l.b16 %v3397
  %v7193 = vunpack.c.h.b16 %v3397
  %v7194 = vunpack.c.l.b16 %v3398
  %v7195 = vunpack.c.h.b16 %v3398
  %v7196 = vunpack.c.l.b16 %v3399
  %v7197 = vunpack.c.h.b16 %v3399
  %v7198 = vunpack.c.l.b16 %v3400
  %v7199 = vunpack.c.h.b16 %v3400
  %v7200 = vunpack.c.l.b16 %v3401
  %v7201 = vunpack.c.h.b16 %v3401
  %v7202 = vunpack.c.l.b16 %v3402
  %v7203 = vunpack.c.h.b16 %v3402
  %v7204 = vunpack.c.l.b16 %v3403
  %v7205 = vunpack.c.h.b16 %v3403
  %v7206 = vunpack.c.l.b16 %v3404
  %v7207 = vunpack.c.h.b16 %v3404
  %v7208 = vunpack.c.l.b16 %v3405
  %v7209 = vunpack.c.h.b16 %v3405
  %v7210 = vunpack.c.l.b16 %v3406
  %v7211 = vunpack.c.h.b16 %v3406
  %v7212 = vunpack.c.l.b16 %v3407
  %v7213 = vunpack.c.h.b16 %v3407
  %v7214 = vunpack.c.l.b16 %v3408
  %v7215 = vunpack.c.h.b16 %v3408
  %v7216 = vunpack.c.l.b16 %v3409
  %v7217 = vunpack.c.h.b16 %v3409
  %v7218 = vunpack.c.l.b16 %v3410
  %v7219 = vunpack.c.h.b16 %v3410
  %v7220 = vunpack.c.l.b16 %v3411
  %v7221 = vunpack.c.h.b16 %v3411
  %v7222 = vunpack.c.l.b16 %v3412
  %v7223 = vunpack.c.h.b16 %v3412
  %v7224 = vunpack.c.l.b16 %v3413
  %v7225 = vunpack.c.h.b16 %v3413
  %v7226 = vunpack.c.l.b16 %v3414
  %v7227 = vunpack.c.h.b16 %v3414
  %v7228 = vunpack.c.l.b16 %v3415
  %v7229 = vunpack.c.h.b16 %v3415
  %v7230 = vunpack.c.l.b16 %v3416
  %v7231 = vunpack.c.h.b16 %v3416
  %v7232 = vunpack.c.l.b16 %v3417
  %v7233 = vunpack.c.h.b16 %v3417
  %v7234 = vunpack.c.l.b16 %v3418
  %v7235 = vunpack.c.h.b16 %v3418
  %v7236 = vunpack.c.l.b16 %v3419
  %v7237 = vunpack.c.h.b16 %v3419
  %v7238 = vunpack.c.l.b16 %v3420
  %v7239 = vunpack.c.h.b16 %v3420
  %v7240 = vunpack.c.l.b16 %v3421
  %v7241 = vunpack.c.h.b16 %v3421
  %v7242 = vunpack.c.l.b16 %v3422
  %v7243 = vunpack.c.h.b16 %v3422
  %v7244 = vunpack.c.l.b16 %v3423
  %v7245 = vunpack.c.h.b16 %v3423
  %v7246 = vunpack.c.l.b16 %v3424
  %v7247 = vunpack.c.h.b16 %v3424
  %v7248 = vunpack.c.l.b16 %v3425
  %v7249 = vunpack.c.h.b16 %v3425
  %v7250 = vunpack.c.l.b16 %v3426
  %v7251 = vunpack.c.h.b16 %v3426
  %v7252 = vunpack.c.l.b16 %v3427
  %v7253 = vunpack.c.h.b16 %v3427
  %v7254 = vunpack.c.l.b16 %v3428
  %v7255 = vunpack.c.h.b16 %v3428
  %v7256 = vunpack.c.l.b16 %v3429
  %v7257 = vunpack.c.h.b16 %v3429
  %v7258 = vunpack.c.l.b16 %v3430
  %v7259 = vunpack.c.h.b16 %v3430
  %v7260 = vunpack.c.l.b16 %v3431
  %v7261 = vunpack.c.h.b16 %v3431
  %v7262 = vunpack.c.l.b16 %v3432
  %v7263 = vunpack.c.h.b16 %v3432
  %v7264 = vunpack.c.l.b16 %v3433
  %v7265 = vunpack.c.h.b16 %v3433
  %v7266 = vunpack.c.l.b16 %v3434
  %v7267 = vunpack.c.h.b16 %v3434
  %v7268 = vunpack.c.l.b16 %v3435
  %v7269 = vunpack.c.h.b16 %v3435
  %v7270 = vunpack.c.l.b16 %v3436
  %v7271 = vunpack.c.h.b16 %v3436
  %v7272 = vunpack.c.l.b16 %v3437
  %v7273 = vunpack.c.h.b16 %v3437
  %v7274 = vunpack.c.l.b16 %v3438
  %v7275 = vunpack.c.h.b16 %v3438
  %v7276 = vunpack.c.l.b16 %v3439
  %v7277 = vunpack.c.h.b16 %v3439
  %v7278 = vunpack.c.l.b16 %v3440
  %v7279 = vunpack.c.h.b16 %v3440
  %v7280 = vunpack.c.l.b16 %v3441
  %v7281 = vunpack.c.h.b16 %v3441
  %v7282 = vunpack.c.l.b16 %v3442
  %v7283 = vunpack.c.h.b16 %v3442
  %v7284 = vunpack.c.l.b16 %v3443
  %v7285 = vunpack.c.h.b16 %v3443
  %v7286 = vunpack.c.l.b16 %v3444
  %v7287 = vunpack.c.h.b16 %v3444
  %v7288 = vunpack.c.l.b16 %v3445
  %v7289 = vunpack.c.h.b16 %v3445
  %v7290 = vunpack.c.l.b16 %v3446
  %v7291 = vunpack.c.h.b16 %v3446
  %v7292 = vunpack.c.l.b16 %v3447
  %v7293 = vunpack.c.h.b16 %v3447
  %v7294 = vunpack.c.l.b16 %v3448
  %v7295 = vunpack.c.h.b16 %v3448
  %v7296 = vunpack.c.l.b16 %v3449
  %v7297 = vunpack.c.h.b16 %v3449
  %v7298 = vunpack.c.l.b16 %v3450
  %v7299 = vunpack.c.h.b16 %v3450
  %v7300 = vunpack.c.l.b16 %v3451
  %v7301 = vunpack.c.h.b16 %v3451
  %v7302 = vunpack.c.l.b16 %v3452
  %v7303 = vunpack.c.h.b16 %v3452
  %v7304 = vunpack.c.l.b16 %v3453
  %v7305 = vunpack.c.h.b16 %v3453
  %v7306 = vunpack.c.l.b16 %v3454
  %v7307 = vunpack.c.h.b16 %v3454
  %v7308 = vunpack.c.l.b16 %v3455
  %v7309 = vunpack.c.h.b16 %v3455
  %v7310 = vunpack.c.l.b16 %v3456
  %v7311 = vunpack.c.h.b16 %v3456
  %v7312 = vunpack.c.l.b16 %v3457
  %v7313 = vunpack.c.h.b16 %v3457
  %v7314 = vunpack.c.l.b16 %v3458
  %v7315 = vunpack.c.h.b16 %v3458
  %v7316 = vunpack.c.l.b16 %v3459
  %v7317 = vunpack.c.h.b16 %v3459
  %v7318 = vunpack.c.l.b16 %v3460
  %v7319 = vunpack.c.h.b16 %v3460
  %v7320 = vunpack.c.l.b16 %v3461
  %v7321 = vunpack.c.h.b16 %v3461
  %v7322 = vunpack.c.l.b16 %v3462
  %v7323 = vunpack.c.h.b16 %v3462
  %v7324 = vunpack.c.l.b16 %v3463
  %v7325 = vunpack.c.h.b16 %v3463
  %v7326 = vunpack.c.l.b16 %v3464
  %v7327 = vunpack.c.h.b16 %v3464
  %v7328 = vunpack.c.l.b16 %v3465
  %v7329 = vunpack.c.h.b16 %v3465
  %v7330 = vunpack.c.l.b16 %v3466
  %v7331 = vunpack.c.h.b16 %v3466
  %v7332 = vunpack.c.l.b16 %v3467
  %v7333 = vunpack.c.h.b16 %v3467
  %v7334 = vunpack.c.l.b16 %v3468
  %v7335 = vunpack.c.h.b16 %v3468
  %v7336 = vunpack.c.l.b16 %v3469
  %v7337 = vunpack.c.h.b16 %v3469
  %v7338 = vunpack.c.l.b16 %v3470
  %v7339 = vunpack.c.h.b16 %v3470
  %v7340 = vunpack.c.l.b16 %v3471
  %v7341 = vunpack.c.h.b16 %v3471
  %v7342 = vunpack.c.l.b16 %v3472
  %v7343 = vunpack.c.h.b16 %v3472
  %v7344 = vunpack.c.l.b16 %v3473
  %v7345 = vunpack.c.h.b16 %v3473
  %v7346 = vunpack.c.l.b16 %v3474
  %v7347 = vunpack.c.h.b16 %v3474
  %v7348 = vunpack.c.l.b16 %v3475
  %v7349 = vunpack.c.h.b16 %v3475
  %v7350 = vunpack.c.l.b16 %v3476
  %v7351 = vunpack.c.h.b16 %v3476
  %v7352 = vunpack.c.l.b16 %v3477
  %v7353 = vunpack.c.h.b16 %v3477
  %v7354 = vunpack.c.l.b16 %v3478
  %v7355 = vunpack.c.h.b16 %v3478
  %v7356 = vunpack.c.l.b16 %v3479
  %v7357 = vunpack.c.h.b16 %v3479
  %v7358 = vunpack.c.l.b16 %v3480
  %v7359 = vunpack.c.h.b16 %v3480
  %v7360 = vunpack.c.l.b16 %v3481
  %v7361 = vunpack.c.h.b16 %v3481
  %v7362 = vunpack.c.l.b16 %v3482
  %v7363 = vunpack.c.h.b16 %v3482
  %v7364 = vunpack.c.l.b16 %v3483
  %v7365 = vunpack.c.h.b16 %v3483
  %v7366 = vunpack.c.l.b16 %v3484
  %v7367 = vunpack.c.h.b16 %v3484
  %v7368 = vunpack.c.l.b16 %v3485
  %v7369 = vunpack.c.h.b16 %v3485
  %v7370 = vunpack.c.l.b16 %v3486
  %v7371 = vunpack.c.h.b16 %v3486
  %v7372 = vunpack.c.l.b16 %v3487
  %v7373 = vunpack.c.h.b16 %v3487
  %v7374 = vunpack.c.l.b16 %v3488
  %v7375 = vunpack.c.h.b16 %v3488
  %v7376 = vunpack.c.l.b16 %v3489
  %v7377 = vunpack.c.h.b16 %v3489
  %v7378 = vunpack.c.l.b16 %v3490
  %v7379 = vunpack.c.h.b16 %v3490
  %v7380 = vunpack.c.l.b16 %v3491
  %v7381 = vunpack.c.h.b16 %v3491
  %v7382 = vunpack.c.l.b16 %v3492
  %v7383 = vunpack.c.h.b16 %v3492
  %v7384 = vunpack.c.l.b16 %v3493
  %v7385 = vunpack.c.h.b16 %v3493
  %v7386 = vunpack.c.l.b16 %v3494
  %v7387 = vunpack.c.h.b16 %v3494
  %v7388 = vunpack.c.l.b16 %v3495
  %v7389 = vunpack.c.h.b16 %v3495
  %v7390 = vunpack.c.l.b16 %v3496
  %v7391 = vunpack.c.h.b16 %v3496
  %v7392 = vunpack.c.l.b16 %v3497
  %v7393 = vunpack.c.h.b16 %v3497
  %v7394 = vunpack.c.l.b16 %v3498
  %v7395 = vunpack.c.h.b16 %v3498
  %v7396 = vunpack.c.l.b16 %v3499
  %v7397 = vunpack.c.h.b16 %v3499
  %v7398 = vunpack.c.l.b16 %v3500
  %v7399 = vunpack.c.h.b16 %v3500
  %v7400 = vunpack.c.l.b16 %v3501
  %v7401 = vunpack.c.h.b16 %v3501
  %v7402 = vunpack.c.l.b16 %v3502
  %v7403 = vunpack.c.h.b16 %v3502
  %v7404 = vunpack.c.l.b16 %v3503
  %v7405 = vunpack.c.h.b16 %v3503
  %v7406 = vunpack.c.l.b16 %v3504
  %v7407 = vunpack.c.h.b16 %v3504
  %v7408 = vunpack.c.l.b16 %v3505
  %v7409 = vunpack.c.h.b16 %v3505
  %v7410 = vunpack.c.l.b16 %v3506
  %v7411 = vunpack.c.h.b16 %v3506
  %v7412 = vunpack.c.l.b16 %v3507
  %v7413 = vunpack.c.h.b16 %v3507
  %v7414 = vunpack.c.l.b16 %v3508
  %v7415 = vunpack.c.h.b16 %v3508
  %v7416 = vunpack.c.l.b16 %v3509
  %v7417 = vunpack.c.h.b16 %v3509
  %v7418 = vunpack.c.l.b16 %v3510
  %v7419 = vunpack.c.h.b16 %v3510
  %v7420 = vunpack.c.l.b16 %v3511
  %v7421 = vunpack.c.h.b16 %v3511
  %v7422 = vunpack.c.l.b16 %v3512
  %v7423 = vunpack.c.h.b16 %v3512
  %v7424 = vunpack.c.l.b16 %v3513
  %v7425 = vunpack.c.h.b16 %v3513
  %v7426 = vunpack.c.l.b16 %v3514
  %v7427 = vunpack.c.h.b16 %v3514
  %v7428 = vunpack.c.l.b16 %v3515
  %v7429 = vunpack.c.h.b16 %v3515
  %v7430 = vunpack.c.l.b16 %v3516
  %v7431 = vunpack.c.h.b16 %v3516
  %v7432 = vunpack.c.l.b16 %v3517
  %v7433 = vunpack.c.h.b16 %v3517
  %v7434 = vunpack.c.l.b16 %v3518
  %v7435 = vunpack.c.h.b16 %v3518
  %v7436 = vunpack.c.l.b16 %v3519
  %v7437 = vunpack.c.h.b16 %v3519
  %v7438 = vunpack.c.l.b16 %v3520
  %v7439 = vunpack.c.h.b16 %v3520
  %v7440 = vunpack.c.l.b16 %v3521
  %v7441 = vunpack.c.h.b16 %v3521
  %v7442 = vunpack.c.l.b16 %v3522
  %v7443 = vunpack.c.h.b16 %v3522
  %v7444 = vunpack.c.l.b16 %v3523
  %v7445 = vunpack.c.h.b16 %v3523
  %v7446 = vunpack.c.l.b16 %v3524
  %v7447 = vunpack.c.h.b16 %v3524
  %v7448 = vunpack.c.l.b16 %v3525
  %v7449 = vunpack.c.h.b16 %v3525
  %v7450 = vunpack.c.l.b16 %v3526
  %v7451 = vunpack.c.h.b16 %v3526
  %v7452 = vunpack.c.l.b16 %v3527
  %v7453 = vunpack.c.h.b16 %v3527
  %v7454 = vunpack.c.l.b16 %v3528
  %v7455 = vunpack.c.h.b16 %v3528
  %v7456 = vunpack.c.l.b16 %v3529
  %v7457 = vunpack.c.h.b16 %v3529
  %v7458 = vunpack.c.l.b16 %v3530
  %v7459 = vunpack.c.h.b16 %v3530
  %v7460 = vunpack.c.l.b16 %v3531
  %v7461 = vunpack.c.h.b16 %v3531
  %v7462 = vunpack.c.l.b16 %v3532
  %v7463 = vunpack.c.h.b16 %v3532
  %v7464 = vunpack.c.l.b16 %v3533
  %v7465 = vunpack.c.h.b16 %v3533
  %v7466 = vunpack.c.l.b16 %v3534
  %v7467 = vunpack.c.h.b16 %v3534
  %v7468 = vunpack.c.l.b16 %v3535
  %v7469 = vunpack.c.h.b16 %v3535
  %v7470 = vunpack.c.l.b16 %v3536
  %v7471 = vunpack.c.h.b16 %v3536
  %v7472 = vunpack.c.l.b16 %v3537
  %v7473 = vunpack.c.h.b16 %v3537
  %v7474 = vunpack.c.l.b16 %v3538
  %v7475 = vunpack.c.h.b16 %v3538
  %v7476 = vunpack.c.l.b16 %v3539
  %v7477 = vunpack.c.h.b16 %v3539
  %v7478 = vunpack.c.l.b16 %v3540
  %v7479 = vunpack.c.h.b16 %v3540
  %v7480 = vunpack.c.l.b16 %v3541
  %v7481 = vunpack.c.h.b16 %v3541
  %v7482 = vunpack.c.l.b16 %v3542
  %v7483 = vunpack.c.h.b16 %v3542
  %v7484 = vunpack.c.l.b16 %v3543
  %v7485 = vunpack.c.h.b16 %v3543
  %v7486 = vunpack.c.l.b16 %v3544
  %v7487 = vunpack.c.h.b16 %v3544
  %v7488 = vunpack.c.l.b16 %v3545
  %v7489 = vunpack.c.h.b16 %v3545
  %v7490 = vunpack.c.l.b16 %v3546
  %v7491 = vunpack.c.h.b16 %v3546
  %v7492 = vunpack.c.l.b16 %v3547
  %v7493 = vunpack.c.h.b16 %v3547
  %v7494 = vunpack.c.l.b16 %v3548
  %v7495 = vunpack.c.h.b16 %v3548
  %v7496 = vunpack.c.l.b16 %v3549
  %v7497 = vunpack.c.h.b16 %v3549
  %v7498 = vunpack.c.l.b16 %v3550
  %v7499 = vunpack.c.h.b16 %v3550
  %v7500 = vunpack.c.l.b16 %v3551
  %v7501 = vunpack.c.h.b16 %v3551
  %v7502 = vunpack.c.l.b16 %v3552
  %v7503 = vunpack.c.h.b16 %v3552
  %v7504 = vunpack.c.l.b16 %v3553
  %v7505 = vunpack.c.h.b16 %v3553
  %v7506 = vunpack.c.l.b16 %v3554
  %v7507 = vunpack.c.h.b16 %v3554
  %v7508 = vunpack.c.l.b16 %v3555
  %v7509 = vunpack.c.h.b16 %v3555
  %v7510 = vunpack.c.l.b16 %v3556
  %v7511 = vunpack.c.h.b16 %v3556
  %v7512 = vunpack.c.l.b16 %v3557
  %v7513 = vunpack.c.h.b16 %v3557
  %v7514 = vunpack.c.l.b16 %v3558
  %v7515 = vunpack.c.h.b16 %v3558
  %v7516 = vunpack.c.l.b16 %v3559
  %v7517 = vunpack.c.h.b16 %v3559
  %v7518 = vunpack.c.l.b16 %v3560
  %v7519 = vunpack.c.h.b16 %v3560
  %v7520 = vunpack.c.l.b16 %v3561
  %v7521 = vunpack.c.h.b16 %v3561
  %v7522 = vunpack.c.l.b16 %v3562
  %v7523 = vunpack.c.h.b16 %v3562
  %v7524 = vunpack.c.l.b16 %v3563
  %v7525 = vunpack.c.h.b16 %v3563
  %v7526 = vunpack.c.l.b16 %v3564
  %v7527 = vunpack.c.h.b16 %v3564
  %v7528 = vunpack.c.l.b16 %v3565
  %v7529 = vunpack.c.h.b16 %v3565
  %v7530 = vunpack.c.l.b16 %v3566
  %v7531 = vunpack.c.h.b16 %v3566
  %v7532 = vunpack.c.l.b16 %v3567
  %v7533 = vunpack.c.h.b16 %v3567
  %v7534 = vunpack.c.l.b16 %v3568
  %v7535 = vunpack.c.h.b16 %v3568
  %v7536 = vunpack.c.l.b16 %v3569
  %v7537 = vunpack.c.h.b16 %v3569
  %v7538 = vunpack.c.l.b16 %v3570
  %v7539 = vunpack.c.h.b16 %v3570
  %v7540 = vunpack.c.l.b16 %v3571
  %v7541 = vunpack.c.h.b16 %v3571
  %v7542 = vunpack.c.l.b16 %v3572
  %v7543 = vunpack.c.h.b16 %v3572
  %v7544 = vunpack.c.l.b16 %v3573
  %v7545 = vunpack.c.h.b16 %v3573
  %v7546 = vunpack.c.l.b16 %v3574
  %v7547 = vunpack.c.h.b16 %v3574
  %v7548 = vunpack.c.l.b16 %v3575
  %v7549 = vunpack.c.h.b16 %v3575
  %v7550 = vunpack.c.l.b16 %v3576
  %v7551 = vunpack.c.h.b16 %v3576
  %v7552 = vunpack.c.l.b16 %v3577
  %v7553 = vunpack.c.h.b16 %v3577
  %v7554 = vunpack.c.l.b16 %v3578
  %v7555 = vunpack.c.h.b16 %v3578
  %v7556 = vunpack.c.l.b16 %v3579
  %v7557 = vunpack.c.h.b16 %v3579
  %v7558 = vunpack.c.l.b16 %v3580
  %v7559 = vunpack.c.h.b16 %v3580
  %v7560 = vunpack.c.l.b16 %v3581
  %v7561 = vunpack.c.h.b16 %v3581
  %v7562 = vunpack.c.l.b16 %v3582
  %v7563 = vunpack.c.h.b16 %v3582
  %v7564 = vunpack.c.l.b16 %v3583
  %v7565 = vunpack.c.h.b16 %v3583
  %v7566 = vunpack.c.l.b16 %v3584
  %v7567 = vunpack.c.h.b16 %v3584
  %v7568 = vunpack.c.l.b16 %v3585
  %v7569 = vunpack.c.h.b16 %v3585
  %v7570 = vunpack.c.l.b16 %v3586
  %v7571 = vunpack.c.h.b16 %v3586
  %v7572 = vunpack.c.l.b16 %v3587
  %v7573 = vunpack.c.h.b16 %v3587
  %v7574 = vunpack.c.l.b16 %v3588
  %v7575 = vunpack.c.h.b16 %v3588
  %v7576 = vunpack.c.l.b16 %v3589
  %v7577 = vunpack.c.h.b16 %v3589
  %v7578 = vunpack.c.l.b16 %v3590
  %v7579 = vunpack.c.h.b16 %v3590
  %v7580 = vunpack.c.l.b16 %v3591
  %v7581 = vunpack.c.h.b16 %v3591
  %v7582 = vunpack.c.l.b16 %v3592
  %v7583 = vunpack.c.h.b16 %v3592
  %v7584 = vunpack.c.l.b16 %v3593
  %v7585 = vunpack.c.h.b16 %v3593
  %v7586 = vunpack.c.l.b16 %v3594
  %v7587 = vunpack.c.h.b16 %v3594
  %v7588 = vunpack.c.l.b16 %v3595
  %v7589 = vunpack.c.h.b16 %v3595
  %v7590 = vunpack.c.l.b16 %v3596
  %v7591 = vunpack.c.h.b16 %v3596
  %v7592 = vunpack.c.l.b16 %v3597
  %v7593 = vunpack.c.h.b16 %v3597
  %v7594 = vunpack.c.l.b16 %v3598
  %v7595 = vunpack.c.h.b16 %v3598
  %v7596 = vunpack.c.l.b16 %v3599
  %v7597 = vunpack.c.h.b16 %v3599
  %v7598 = vunpack.c.l.b16 %v3600
  %v7599 = vunpack.c.h.b16 %v3600
  %v7600 = vunpack.c.l.b16 %v3601
  %v7601 = vunpack.c.h.b16 %v3601
  %v7602 = vunpack.c.l.b16 %v3602
  %v7603 = vunpack.c.h.b16 %v3602
  %v7604 = vunpack.c.l.b16 %v3603
  %v7605 = vunpack.c.h.b16 %v3603
  %v7606 = vunpack.c.l.b16 %v3604
  %v7607 = vunpack.c.h.b16 %v3604
  %v7608 = vunpack.c.l.b16 %v3605
  %v7609 = vunpack.c.h.b16 %v3605
  %v7610 = vunpack.c.l.b16 %v3606
  %v7611 = vunpack.c.h.b16 %v3606
  %v7612 = vunpack.c.l.b16 %v3607
  %v7613 = vunpack.c.h.b16 %v3607
  %v7614 = vunpack.c.l.b16 %v3608
  %v7615 = vunpack.c.h.b16 %v3608
  %v7616 = vunpack.c.l.b16 %v3609
  %v7617 = vunpack.c.h.b16 %v3609
  %v7618 = vunpack.c.l.b16 %v3610
  %v7619 = vunpack.c.h.b16 %v3610
  %v7620 = vunpack.c.l.b16 %v3611
  %v7621 = vunpack.c.h.b16 %v3611
  %v7622 = vunpack.c.l.b16 %v3612
  %v7623 = vunpack.c.h.b16 %v3612
  %v7624 = vunpack.c.l.b16 %v3613
  %v7625 = vunpack.c.h.b16 %v3613
  %v7626 = vunpack.c.l.b16 %v3614
  %v7627 = vunpack.c.h.b16 %v3614
  %v7628 = vunpack.c.l.b16 %v3615
  %v7629 = vunpack.c.h.b16 %v3615
  %v7630 = vunpack.c.l.b16 %v3616
  %v7631 = vunpack.c.h.b16 %v3616
  %v7632 = vunpack.c.l.b16 %v3617
  %v7633 = vunpack.c.h.b16 %v3617
  %v7634 = vunpack.c.l.b16 %v3618
  %v7635 = vunpack.c.h.b16 %v3618
  %v7636 = vunpack.c.l.b16 %v3619
  %v7637 = vunpack.c.h.b16 %v3619
  %v7638 = vunpack.c.l.b16 %v3620
  %v7639 = vunpack.c.h.b16 %v3620
  %v7640 = vunpack.c.l.b16 %v3621
  %v7641 = vunpack.c.h.b16 %v3621
  %v7642 = vunpack.c.l.b16 %v3622
  %v7643 = vunpack.c.h.b16 %v3622
  %v7644 = vunpack.c.l.b16 %v3623
  %v7645 = vunpack.c.h.b16 %v3623
  %v7646 = vunpack.c.l.b16 %v3624
  %v7647 = vunpack.c.h.b16 %v3624
  %v7648 = vunpack.c.l.b16 %v3625
  %v7649 = vunpack.c.h.b16 %v3625
  %v7650 = vunpack.c.l.b16 %v3626
  %v7651 = vunpack.c.h.b16 %v3626
  %v7652 = vunpack.c.l.b16 %v3627
  %v7653 = vunpack.c.h.b16 %v3627
  %v7654 = vunpack.c.l.b16 %v3628
  %v7655 = vunpack.c.h.b16 %v3628
  %v7656 = vunpack.c.l.b16 %v3629
  %v7657 = vunpack.c.h.b16 %v3629
  %v7658 = vunpack.c.l.b16 %v3630
  %v7659 = vunpack.c.h.b16 %v3630
  %v7660 = vunpack.c.l.b16 %v3631
  %v7661 = vunpack.c.h.b16 %v3631
  %v7662 = vunpack.c.l.b16 %v3632
  %v7663 = vunpack.c.h.b16 %v3632
  %v7664 = vunpack.c.l.b16 %v3633
  %v7665 = vunpack.c.h.b16 %v3633
  %v7666 = vunpack.c.l.b16 %v3634
  %v7667 = vunpack.c.h.b16 %v3634
  %v7668 = vunpack.c.l.b16 %v3635
  %v7669 = vunpack.c.h.b16 %v3635
  %v7670 = vunpack.c.l.b16 %v3636
  %v7671 = vunpack.c.h.b16 %v3636
  %v7672 = vunpack.c.l.b16 %v3637
  %v7673 = vunpack.c.h.b16 %v3637
  %v7674 = vunpack.c.l.b16 %v3638
  %v7675 = vunpack.c.h.b16 %v3638
  %v7676 = vunpack.c.l.b16 %v3639
  %v7677 = vunpack.c.h.b16 %v3639
  %v7678 = vunpack.c.l.b16 %v3640
  %v7679 = vunpack.c.h.b16 %v3640
  %v7680 = vunpack.c.l.b16 %v3641
  %v7681 = vunpack.c.h.b16 %v3641
  %v7682 = vunpack.c.l.b16 %v3642
  %v7683 = vunpack.c.h.b16 %v3642
  %v7684 = vunpack.c.l.b16 %v3643
  %v7685 = vunpack.c.h.b16 %v3643
  %v7686 = vunpack.c.l.b16 %v3644
  %v7687 = vunpack.c.h.b16 %v3644
  %v7688 = vunpack.c.l.b16 %v3645
  %v7689 = vunpack.c.h.b16 %v3645
  %v7690 = vunpack.c.l.b16 %v3646
  %v7691 = vunpack.c.h.b16 %v3646
  %v7692 = vunpack.c.l.b16 %v3647
  %v7693 = vunpack.c.h.b16 %v3647
  %v7694 = vunpack.c.l.b16 %v3648
  %v7695 = vunpack.c.h.b16 %v3648
  %v7696 = vunpack.c.l.b16 %v3649
  %v7697 = vunpack.c.h.b16 %v3649
  %v7698 = vunpack.c.l.b16 %v3650
  %v7699 = vunpack.c.h.b16 %v3650
  %v7700 = vunpack.c.l.b16 %v3651
  %v7701 = vunpack.c.h.b16 %v3651
  %v7702 = vunpack.c.l.b16 %v3652
  %v7703 = vunpack.c.h.b16 %v3652
  %v7704 = vunpack.c.l.b16 %v3653
  %v7705 = vunpack.c.h.b16 %v3653
  %v7706 = vunpack.c.l.b16 %v3654
  %v7707 = vunpack.c.h.b16 %v3654
  %v7708 = vunpack.c.l.b16 %v3655
  %v7709 = vunpack.c.h.b16 %v3655
  %v7710 = vunpack.c.l.b16 %v3656
  %v7711 = vunpack.c.h.b16 %v3656
  %v7712 = vunpack.c.l.b16 %v3657
  %v7713 = vunpack.c.h.b16 %v3657
  %v7714 = vunpack.c.l.b16 %v3658
  %v7715 = vunpack.c.h.b16 %v3658
  %v7716 = vunpack.c.l.b16 %v3659
  %v7717 = vunpack.c.h.b16 %v3659
  %v7718 = vunpack.c.l.b16 %v3660
  %v7719 = vunpack.c.h.b16 %v3660
  %v7720 = vunpack.c.l.b16 %v3661
  %v7721 = vunpack.c.h.b16 %v3661
  %v7722 = vunpack.c.l.b16 %v3662
  %v7723 = vunpack.c.h.b16 %v3662
  %v7724 = vunpack.c.l.b16 %v3663
  %v7725 = vunpack.c.h.b16 %v3663
  %v7726 = vunpack.c.l.b16 %v3664
  %v7727 = vunpack.c.h.b16 %v3664
  %v7728 = vunpack.c.l.b16 %v3665
  %v7729 = vunpack.c.h.b16 %v3665
  %v7730 = vunpack.c.l.b16 %v3666
  %v7731 = vunpack.c.h.b16 %v3666
  %v7732 = vunpack.c.l.b16 %v3667
  %v7733 = vunpack.c.h.b16 %v3667
  %v7734 = vunpack.c.l.b16 %v3668
  %v7735 = vunpack.c.h.b16 %v3668
  %v7736 = vunpack.c.l.b16 %v3669
  %v7737 = vunpack.c.h.b16 %v3669
  %v7738 = vunpack.c.l.b16 %v3670
  %v7739 = vunpack.c.h.b16 %v3670
  %v7740 = vunpack.c.l.b16 %v3671
  %v7741 = vunpack.c.h.b16 %v3671
  %v7742 = vunpack.c.l.b16 %v3672
  %v7743 = vunpack.c.h.b16 %v3672
  %v7744 = vunpack.c.l.b16 %v3673
  %v7745 = vunpack.c.h.b16 %v3673
  %v7746 = vunpack.c.l.b16 %v3674
  %v7747 = vunpack.c.h.b16 %v3674
  %v7748 = vunpack.c.l.b16 %v3675
  %v7749 = vunpack.c.h.b16 %v3675
  %v7750 = vunpack.c.l.b16 %v3676
  %v7751 = vunpack.c.h.b16 %v3676
  %v7752 = vunpack.c.l.b16 %v3677
  %v7753 = vunpack.c.h.b16 %v3677
  %v7754 = vunpack.c.l.b16 %v3678
  %v7755 = vunpack.c.h.b16 %v3678
  %v7756 = vunpack.c.l.b16 %v3679
  %v7757 = vunpack.c.h.b16 %v3679
  %v7758 = vunpack.c.l.b16 %v3680
  %v7759 = vunpack.c.h.b16 %v3680
  %v7760 = vunpack.c.l.b16 %v3681
  %v7761 = vunpack.c.h.b16 %v3681
  %v7762 = vunpack.c.l.b16 %v3682
  %v7763 = vunpack.c.h.b16 %v3682
  %v7764 = vunpack.c.l.b16 %v3683
  %v7765 = vunpack.c.h.b16 %v3683
  %v7766 = vunpack.c.l.b16 %v3684
  %v7767 = vunpack.c.h.b16 %v3684
  %v7768 = vunpack.c.l.b16 %v3685
  %v7769 = vunpack.c.h.b16 %v3685
  %v7770 = vunpack.c.l.b16 %v3686
  %v7771 = vunpack.c.h.b16 %v3686
  %v7772 = vunpack.c.l.b16 %v3687
  %v7773 = vunpack.c.h.b16 %v3687
  %v7774 = vunpack.c.l.b16 %v3688
  %v7775 = vunpack.c.h.b16 %v3688
  %v7776 = vunpack.c.l.b16 %v3689
  %v7777 = vunpack.c.h.b16 %v3689
  %v7778 = vunpack.c.l.b16 %v3690
  %v7779 = vunpack.c.h.b16 %v3690
  %v7780 = vunpack.c.l.b16 %v3691
  %v7781 = vunpack.c.h.b16 %v3691
  %v7782 = vunpack.c.l.b16 %v3692
  %v7783 = vunpack.c.h.b16 %v3692
  %v7784 = vunpack.c.l.b16 %v3693
  %v7785 = vunpack.c.h.b16 %v3693
  %v7786 = vunpack.c.l.b16 %v3694
  %v7787 = vunpack.c.h.b16 %v3694
  %v7788 = vunpack.c.l.b16 %v3695
  %v7789 = vunpack.c.h.b16 %v3695
  %v7790 = vunpack.c.l.b16 %v3696
  %v7791 = vunpack.c.h.b16 %v3696
  %v7792 = vunpack.c.l.b16 %v3697
  %v7793 = vunpack.c.h.b16 %v3697
  %v7794 = vunpack.c.l.b16 %v3698
  %v7795 = vunpack.c.h.b16 %v3698
  %v7796 = vunpack.c.l.b16 %v3699
  %v7797 = vunpack.c.h.b16 %v3699
  %v7798 = vunpack.c.l.b16 %v3700
  %v7799 = vunpack.c.h.b16 %v3700
  %v7800 = vunpack.c.l.b16 %v3701
  %v7801 = vunpack.c.h.b16 %v3701
  %v7802 = vunpack.c.l.b16 %v3702
  %v7803 = vunpack.c.h.b16 %v3702
  %v7804 = vunpack.c.l.b16 %v3703
  %v7805 = vunpack.c.h.b16 %v3703
  %v7806 = vunpack.c.l.b16 %v3704
  %v7807 = vunpack.c.h.b16 %v3704
  %v7808 = vunpack.c.l.b16 %v3705
  %v7809 = vunpack.c.h.b16 %v3705
  %v7810 = vunpack.c.l.b16 %v3706
  %v7811 = vunpack.c.h.b16 %v3706
  %v7812 = vunpack.c.l.b16 %v3707
  %v7813 = vunpack.c.h.b16 %v3707
  %v7814 = vunpack.c.l.b16 %v3708
  %v7815 = vunpack.c.h.b16 %v3708
  %v7816 = vunpack.c.l.b16 %v3709
  %v7817 = vunpack.c.h.b16 %v3709
  %v7818 = vunpack.c.l.b16 %v3710
  %v7819 = vunpack.c.h.b16 %v3710
  %v7820 = vunpack.c.l.b16 %v3711
  %v7821 = vunpack.c.h.b16 %v3711
  %v7822 = vunpack.c.l.b16 %v3712
  %v7823 = vunpack.c.h.b16 %v3712
  %v7824 = vunpack.c.l.b16 %v3713
  %v7825 = vunpack.c.h.b16 %v3713
  %v7826 = vunpack.c.l.b16 %v3714
  %v7827 = vunpack.c.h.b16 %v3714
  %v7828 = vunpack.c.l.b16 %v3715
  %v7829 = vunpack.c.h.b16 %v3715
  %v7830 = vunpack.c.l.b16 %v3716
  %v7831 = vunpack.c.h.b16 %v3716
  %v7832 = vunpack.c.l.b16 %v3717
  %v7833 = vunpack.c.h.b16 %v3717
  %v7834 = vunpack.c.l.b16 %v3718
  %v7835 = vunpack.c.h.b16 %v3718
  %v7836 = vunpack.c.l.b16 %v3719
  %v7837 = vunpack.c.h.b16 %v3719
  %v7838 = vunpack.c.l.b16 %v3720
  %v7839 = vunpack.c.h.b16 %v3720
  %v7840 = vunpack.c.l.b16 %v3721
  %v7841 = vunpack.c.h.b16 %v3721
  %v7842 = vunpack.c.l.b16 %v3722
  %v7843 = vunpack.c.h.b16 %v3722
  %v7844 = vunpack.c.l.b16 %v3723
  %v7845 = vunpack.c.h.b16 %v3723
  %v7846 = vunpack.c.l.b16 %v3724
  %v7847 = vunpack.c.h.b16 %v3724
  %v7848 = vunpack.c.l.b16 %v3725
  %v7849 = vunpack.c.h.b16 %v3725
  %v7850 = vunpack.c.l.b16 %v3726
  %v7851 = vunpack.c.h.b16 %v3726
  %v7852 = vunpack.c.l.b16 %v3727
  %v7853 = vunpack.c.h.b16 %v3727
  %v7854 = vunpack.c.l.b16 %v3728
  %v7855 = vunpack.c.h.b16 %v3728
  %v7856 = vunpack.c.l.b16 %v3729
  %v7857 = vunpack.c.h.b16 %v3729
  %v7858 = vunpack.c.l.b16 %v3730
  %v7859 = vunpack.c.h.b16 %v3730
  %v7860 = vunpack.c.l.b16 %v3731
  %v7861 = vunpack.c.h.b16 %v3731
  %v7862 = vunpack.c.l.b16 %v3732
  %v7863 = vunpack.c.h.b16 %v3732
  %v7864 = vunpack.c.l.b16 %v3733
  %v7865 = vunpack.c.h.b16 %v3733
  %v7866 = vunpack.c.l.b16 %v3734
  %v7867 = vunpack.c.h.b16 %v3734
  %v7868 = vunpack.c.l.b16 %v3735
  %v7869 = vunpack.c.h.b16 %v3735
  %v7870 = vunpack.c.l.b16 %v3736
  %v7871 = vunpack.c.h.b16 %v3736
  %v7872 = vunpack.c.l.b16 %v3737
  %v7873 = vunpack.c.h.b16 %v3737
  %v7874 = vunpack.c.l.b16 %v3738
  %v7875 = vunpack.c.h.b16 %v3738
  %v7876 = vunpack.c.l.b16 %v3739
  %v7877 = vunpack.c.h.b16 %v3739
  %v7878 = vunpack.c.l.b16 %v3740
  %v7879 = vunpack.c.h.b16 %v3740
  %v7880 = vunpack.c.l.b16 %v3741
  %v7881 = vunpack.c.h.b16 %v3741
  %v7882 = vunpack.c.l.b16 %v3742
  %v7883 = vunpack.c.h.b16 %v3742
  %v7884 = vunpack.c.l.b16 %v3743
  %v7885 = vunpack.c.h.b16 %v3743
  %v7886 = vunpack.c.l.b16 %v3744
  %v7887 = vunpack.c.h.b16 %v3744
  %v7888 = vunpack.c.l.b16 %v3745
  %v7889 = vunpack.c.h.b16 %v3745
  %v7890 = vunpack.c.l.b16 %v3746
  %v7891 = vunpack.c.h.b16 %v3746
  %v7892 = vunpack.c.l.b16 %v3747
  %v7893 = vunpack.c.h.b16 %v3747
  %v7894 = vunpack.c.l.b16 %v3748
  %v7895 = vunpack.c.h.b16 %v3748
  %v7896 = vunpack.c.l.b16 %v3749
  %v7897 = vunpack.c.h.b16 %v3749
  %v7898 = vunpack.c.l.b16 %v3750
  %v7899 = vunpack.c.h.b16 %v3750
  %v7900 = vunpack.c.l.b16 %v3751
  %v7901 = vunpack.c.h.b16 %v3751
  %v7902 = vunpack.c.l.b16 %v3752
  %v7903 = vunpack.c.h.b16 %v3752
  %v7904 = vunpack.c.l.b16 %v3753
  %v7905 = vunpack.c.h.b16 %v3753
  %v7906 = vunpack.c.l.b16 %v3754
  %v7907 = vunpack.c.h.b16 %v3754
  %v7908 = vunpack.c.l.b16 %v3755
  %v7909 = vunpack.c.h.b16 %v3755
  %v7910 = vunpack.c.l.b16 %v3756
  %v7911 = vunpack.c.h.b16 %v3756
  %v7912 = vunpack.c.l.b16 %v3757
  %v7913 = vunpack.c.h.b16 %v3757
  %v7914 = vunpack.c.l.b16 %v3758
  %v7915 = vunpack.c.h.b16 %v3758
  %v7916 = vunpack.c.l.b16 %v3759
  %v7917 = vunpack.c.h.b16 %v3759
  %v7918 = vunpack.c.l.b16 %v3760
  %v7919 = vunpack.c.h.b16 %v3760
  %v7920 = vunpack.c.l.b16 %v3761
  %v7921 = vunpack.c.h.b16 %v3761
  %v7922 = vunpack.c.l.b16 %v3762
  %v7923 = vunpack.c.h.b16 %v3762
  %v7924 = vunpack.c.l.b16 %v3763
  %v7925 = vunpack.c.h.b16 %v3763
  %v7926 = vunpack.c.l.b16 %v3764
  %v7927 = vunpack.c.h.b16 %v3764
  %v7928 = vunpack.c.l.b16 %v3765
  %v7929 = vunpack.c.h.b16 %v3765
  %v7930 = vunpack.c.l.b16 %v3766
  %v7931 = vunpack.c.h.b16 %v3766
  %v7932 = vunpack.c.l.b16 %v3767
  %v7933 = vunpack.c.h.b16 %v3767
  %v7934 = vunpack.c.l.b16 %v3768
  %v7935 = vunpack.c.h.b16 %v3768
  %v7936 = vunpack.c.l.b16 %v3769
  %v7937 = vunpack.c.h.b16 %v3769
  %v7938 = vunpack.c.l.b16 %v3770
  %v7939 = vunpack.c.h.b16 %v3770
  %v7940 = vunpack.c.l.b16 %v3771
  %v7941 = vunpack.c.h.b16 %v3771
  %v7942 = vunpack.c.l.b16 %v3772
  %v7943 = vunpack.c.h.b16 %v3772
  %v7944 = vunpack.c.l.b16 %v3773
  %v7945 = vunpack.c.h.b16 %v3773
  %v7946 = vunpack.c.l.b16 %v3774
  %v7947 = vunpack.c.h.b16 %v3774
  %v7948 = vunpack.c.l.b16 %v3775
  %v7949 = vunpack.c.h.b16 %v3775
  %v7950 = vunpack.c.l.b16 %v3776
  %v7951 = vunpack.c.h.b16 %v3776
  %v7952 = vunpack.c.l.b16 %v3777
  %v7953 = vunpack.c.h.b16 %v3777
  %v7954 = vunpack.c.l.b16 %v3778
  %v7955 = vunpack.c.h.b16 %v3778
  %v7956 = vunpack.c.l.b16 %v3779
  %v7957 = vunpack.c.h.b16 %v3779
  %v7958 = vunpack.c.l.b16 %v3780
  %v7959 = vunpack.c.h.b16 %v3780
  %v7960 = vunpack.c.l.b16 %v3781
  %v7961 = vunpack.c.h.b16 %v3781
  %v7962 = vunpack.c.l.b16 %v3782
  %v7963 = vunpack.c.h.b16 %v3782
  %v7964 = vunpack.c.l.b16 %v3783
  %v7965 = vunpack.c.h.b16 %v3783
  %v7966 = vunpack.c.l.b16 %v3784
  %v7967 = vunpack.c.h.b16 %v3784
  %v7968 = vunpack.c.l.b16 %v3785
  %v7969 = vunpack.c.h.b16 %v3785
  %v7970 = vunpack.c.l.b16 %v3786
  %v7971 = vunpack.c.h.b16 %v3786
  %v7972 = vunpack.c.l.b16 %v3787
  %v7973 = vunpack.c.h.b16 %v3787
  %v7974 = vunpack.c.l.b16 %v3788
  %v7975 = vunpack.c.h.b16 %v3788
  %v7976 = vunpack.c.l.b16 %v3789
  %v7977 = vunpack.c.h.b16 %v3789
  %v7978 = vunpack.c.l.b16 %v3790
  %v7979 = vunpack.c.h.b16 %v3790
  %v7980 = vunpack.c.l.b16 %v3791
  %v7981 = vunpack.c.h.b16 %v3791
  %v7982 = vunpack.c.l.b16 %v3792
  %v7983 = vunpack.c.h.b16 %v3792
  %v7984 = vunpack.c.l.b16 %v3793
  %v7985 = vunpack.c.h.b16 %v3793
  %v7986 = vunpack.c.l.b16 %v3794
  %v7987 = vunpack.c.h.b16 %v3794
  %v7988 = vunpack.c.l.b16 %v3795
  %v7989 = vunpack.c.h.b16 %v3795
  %v7990 = vunpack.c.l.b16 %v3796
  %v7991 = vunpack.c.h.b16 %v3796
  %v7992 = vunpack.c.l.b16 %v3797
  %v7993 = vunpack.c.h.b16 %v3797
  %v7994 = vunpack.c.l.b16 %v3798
  %v7995 = vunpack.c.h.b16 %v3798
  %v7996 = vunpack.c.l.b16 %v3799
  %v7997 = vunpack.c.h.b16 %v3799
  %v7998 = vunpack.c.l.b16 %v3800
  %v7999 = vunpack.c.h.b16 %v3800
  %v8000 = vunpack.c.l.b16 %v3801
  %v8001 = vunpack.c.h.b16 %v3801
  %v8002 = vunpack.c.l.b16 %v3802
  %v8003 = vunpack.c.h.b16 %v3802
  %v8004 = vunpack.c.l.b16 %v3803
  %v8005 = vunpack.c.h.b16 %v3803
  %v8006 = vunpack.c.l.b16 %v3804
  %v8007 = vunpack.c.h.b16 %v3804
  %v8008 = vunpack.c.l.b16 %v3805
  %v8009 = vunpack.c.h.b16 %v3805
  %v8010 = vunpack.c.l.b16 %v3806
  %v8011 = vunpack.c.h.b16 %v3806
  %v8012 = vunpack.c.l.b16 %v3807
  %v8013 = vunpack.c.h.b16 %v3807
  %v8014 = vunpack.c.l.b16 %v3808
  %v8015 = vunpack.c.h.b16 %v3808
  %v8016 = vunpack.c.l.b16 %v3809
  %v8017 = vunpack.c.h.b16 %v3809
  %v8018 = vunpack.c.l.b16 %v3810
  %v8019 = vunpack.c.h.b16 %v3810
  %v8020 = vunpack.c.l.b16 %v3811
  %v8021 = vunpack.c.h.b16 %v3811
  %v8022 = vunpack.c.l.b16 %v3812
  %v8023 = vunpack.c.h.b16 %v3812
  %v8024 = vunpack.c.l.b16 %v3813
  %v8025 = vunpack.c.h.b16 %v3813
  %v8026 = vunpack.c.l.b16 %v3814
  %v8027 = vunpack.c.h.b16 %v3814
  %v8028 = vunpack.c.l.b16 %v3815
  %v8029 = vunpack.c.h.b16 %v3815
  %v8030 = vunpack.c.l.b16 %v3816
  %v8031 = vunpack.c.h.b16 %v3816
  %v8032 = vunpack.c.l.b16 %v3817
  %v8033 = vunpack.c.h.b16 %v3817
  %v8034 = vunpack.c.l.b16 %v3818
  %v8035 = vunpack.c.h.b16 %v3818
  %v8036 = vunpack.c.l.b16 %v3819
  %v8037 = vunpack.c.h.b16 %v3819
  %v8038 = vunpack.c.l.b16 %v3820
  %v8039 = vunpack.c.h.b16 %v3820
  %v8040 = vunpack.c.l.b16 %v3821
  %v8041 = vunpack.c.h.b16 %v3821
  %v8042 = vunpack.c.l.b16 %v3822
  %v8043 = vunpack.c.h.b16 %v3822
  %v8044 = vunpack.c.l.b16 %v3823
  %v8045 = vunpack.c.h.b16 %v3823
  %v8046 = vunpack.c.l.b16 %v3824
  %v8047 = vunpack.c.h.b16 %v3824
  %v8048 = vunpack.c.l.b16 %v3825
  %v8049 = vunpack.c.h.b16 %v3825
  %v8050 = vunpack.c.l.b16 %v3826
  %v8051 = vunpack.c.h.b16 %v3826
  %v8052 = vunpack.c.l.b16 %v3827
  %v8053 = vunpack.c.h.b16 %v3827
  %v8054 = vunpack.c.l.b16 %v3828
  %v8055 = vunpack.c.h.b16 %v3828
  %v8056 = vunpack.c.l.b16 %v3829
  %v8057 = vunpack.c.h.b16 %v3829
  %v8058 = vunpack.c.l.b16 %v3830
  %v8059 = vunpack.c.h.b16 %v3830
  %v8060 = vunpack.c.l.b16 %v3831
  %v8061 = vunpack.c.h.b16 %v3831
  %v8062 = vunpack.c.l.b16 %v3832
  %v8063 = vunpack.c.h.b16 %v3832
  %v8064 = vunpack.c.l.b16 %v3833
  %v8065 = vunpack.c.h.b16 %v3833
  %v8066 = vunpack.c.l.b16 %v3834
  %v8067 = vunpack.c.h.b16 %v3834
  %v8068 = vunpack.c.l.b16 %v3835
  %v8069 = vunpack.c.h.b16 %v3835
  %v8070 = vunpack.c.l.b16 %v3836
  %v8071 = vunpack.c.h.b16 %v3836
  %v8072 = vunpack.c.l.b16 %v3837
  %v8073 = vunpack.c.h.b16 %v3837
  %v8074 = vunpack.c.l.b16 %v3838
  %v8075 = vunpack.c.h.b16 %v3838
  %v8076 = vunpack.c.l.b16 %v3839
  %v8077 = vunpack.c.h.b16 %v3839
  %v8078 = vunpack.c.l.b16 %v3840
  %v8079 = vunpack.c.h.b16 %v3840
  %v8080 = vunpack.c.l.b16 %v3841
  %v8081 = vunpack.c.h.b16 %v3841
  %v8082 = vunpack.c.l.b16 %v3842
  %v8083 = vunpack.c.h.b16 %v3842
  %v8084 = vunpack.c.l.b16 %v3843
  %v8085 = vunpack.c.h.b16 %v3843
  %v8086 = vunpack.c.l.b16 %v3844
  %v8087 = vunpack.c.h.b16 %v3844
  %v8088 = vunpack.c.l.b16 %v3845
  %v8089 = vunpack.c.h.b16 %v3845
  %v8090 = vunpack.c.l.b16 %v3846
  %v8091 = vunpack.c.h.b16 %v3846
  %v8092 = vunpack.c.l.b16 %v3847
  %v8093 = vunpack.c.h.b16 %v3847
  %v8094 = vunpack.c.l.b16 %v3848
  %v8095 = vunpack.c.h.b16 %v3848
  %v8096 = vunpack.c.l.b16 %v3849
  %v8097 = vunpack.c.h.b16 %v3849
  %v8098 = vunpack.c.l.b16 %v3850
  %v8099 = vunpack.c.h.b16 %v3850
  %v8100 = vunpack.c.l.b16 %v3851
  %v8101 = vunpack.c.h.b16 %v3851
  %v8102 = vunpack.c.l.b16 %v3852
  %v8103 = vunpack.c.h.b16 %v3852
  %v8104 = vunpack.c.l.b16 %v3853
  %v8105 = vunpack.c.h.b16 %v3853
  %v8106 = vunpack.c.l.b16 %v3854
  %v8107 = vunpack.c.h.b16 %v3854
  %v8108 = vunpack.c.l.b16 %v3855
  %v8109 = vunpack.c.h.b16 %v3855
  %v8110 = vunpack.c.l.b16 %v3856
  %v8111 = vunpack.c.h.b16 %v3856
  %v8112 = vunpack.c.l.b16 %v3857
  %v8113 = vunpack.c.h.b16 %v3857
  %v8114 = vunpack.c.l.b16 %v3858
  %v8115 = vunpack.c.h.b16 %v3858
  %v8116 = vunpack.c.l.b16 %v3859
  %v8117 = vunpack.c.h.b16 %v3859
  %v8118 = vunpack.c.l.b16 %v3860
  %v8119 = vunpack.c.h.b16 %v3860
  %v8120 = vunpack.c.l.b16 %v3861
  %v8121 = vunpack.c.h.b16 %v3861
  %v8122 = vunpack.c.l.b16 %v3862
  %v8123 = vunpack.c.h.b16 %v3862
  %v8124 = vunpack.c.l.b16 %v3863
  %v8125 = vunpack.c.h.b16 %v3863
  %v8126 = vunpack.c.l.b16 %v3864
  %v8127 = vunpack.c.h.b16 %v3864
  %v8128 = vunpack.c.l.b16 %v3865
  %v8129 = vunpack.c.h.b16 %v3865
  %v8130 = vunpack.c.l.b16 %v3866
  %v8131 = vunpack.c.h.b16 %v3866
  %v8132 = vunpack.c.l.b16 %v3867
  %v8133 = vunpack.c.h.b16 %v3867
  %v8134 = vunpack.c.l.b16 %v3868
  %v8135 = vunpack.c.h.b16 %v3868
  %v8136 = vunpack.c.l.b16 %v3869
  %v8137 = vunpack.c.h.b16 %v3869
  %v8138 = vunpack.c.l.b16 %v3870
  %v8139 = vunpack.c.h.b16 %v3870
  %v8140 = vunpack.c.l.b16 %v3871
  %v8141 = vunpack.c.h.b16 %v3871
  %v8142 = vunpack.c.l.b16 %v3872
  %v8143 = vunpack.c.h.b16 %v3872
  %v8144 = vunpack.c.l.b16 %v3873
  %v8145 = vunpack.c.h.b16 %v3873
  %v8146 = vunpack.c.l.b16 %v3874
  %v8147 = vunpack.c.h.b16 %v3874
  %v8148 = vunpack.c.l.b16 %v3875
  %v8149 = vunpack.c.h.b16 %v3875
  %v8150 = vunpack.c.l.b16 %v3876
  %v8151 = vunpack.c.h.b16 %v3876
  %v8152 = vunpack.c.l.b16 %v3877
  %v8153 = vunpack.c.h.b16 %v3877
  %v8154 = vunpack.c.l.b16 %v3878
  %v8155 = vunpack.c.h.b16 %v3878
  %v8156 = vunpack.c.l.b16 %v3879
  %v8157 = vunpack.c.h.b16 %v3879
  %v8158 = vunpack.c.l.b16 %v3880
  %v8159 = vunpack.c.h.b16 %v3880
  %v8160 = vunpack.c.l.b16 %v3881
  %v8161 = vunpack.c.h.b16 %v3881
  %v8162 = vunpack.c.l.b16 %v3882
  %v8163 = vunpack.c.h.b16 %v3882
  %v8164 = vunpack.c.l.b16 %v3883
  %v8165 = vunpack.c.h.b16 %v3883
  %v8166 = vunpack.c.l.b16 %v3884
  %v8167 = vunpack.c.h.b16 %v3884
  %v8168 = vunpack.c.l.b16 %v3885
  %v8169 = vunpack.c.h.b16 %v3885
  %v8170 = vunpack.c.l.b16 %v3886
  %v8171 = vunpack.c.h.b16 %v3886
  %v8172 = vunpack.c.l.b16 %v3887
  %v8173 = vunpack.c.h.b16 %v3887
  %v8174 = vunpack.c.l.b16 %v3888
  %v8175 = vunpack.c.h.b16 %v3888
  %v8176 = vunpack.c.l.b16 %v3889
  %v8177 = vunpack.c.h.b16 %v3889
  %v8178 = vunpack.c.l.b16 %v3890
  %v8179 = vunpack.c.h.b16 %v3890
  %v8180 = vunpack.c.l.b16 %v3891
  %v8181 = vunpack.c.h.b16 %v3891
  %v8182 = vunpack.c.l.b16 %v3892
  %v8183 = vunpack.c.h.b16 %v3892
  %v8184 = vunpack.c.l.b16 %v3893
  %v8185 = vunpack.c.h.b16 %v3893
  %v8186 = vunpack.c.l.b16 %v3894
  %v8187 = vunpack.c.h.b16 %v3894
  %v8188 = vunpack.c.l.b16 %v3895
  %v8189 = vunpack.c.h.b16 %v3895
  %v8190 = vunpack.c.l.b16 %v3896
  %v8191 = vunpack.c.h.b16 %v3896
  %v8192 = vunpack.c.l.b16 %v3897
  %v8193 = vunpack.c.h.b16 %v3897
  %v8194 = vunpack.c.l.b16 %v3898
  %v8195 = vunpack.c.h.b16 %v3898
  %v8196 = vunpack.c.l.b16 %v3899
  %v8197 = vunpack.c.h.b16 %v3899
  %v8198 = vunpack.c.l.b16 %v3900
  %v8199 = vunpack.c.h.b16 %v3900
  %v8200 = vunpack.c.l.b16 %v3901
  %v8201 = vunpack.c.h.b16 %v3901
  %v8202 = vunpack.c.l.b16 %v3902
  %v8203 = vunpack.c.h.b16 %v3902
  %v8204 = vunpack.c.l.b16 %v3903
  %v8205 = vunpack.c.h.b16 %v3903
  %v8206 = vunpack.c.l.b16 %v3904
  %v8207 = vunpack.c.h.b16 %v3904
  %v8208 = vunpack.c.l.b16 %v3905
  %v8209 = vunpack.c.h.b16 %v3905
  %v8210 = vunpack.c.l.b16 %v3906
  %v8211 = vunpack.c.h.b16 %v3906
  %v8212 = vunpack.c.l.b16 %v3907
  %v8213 = vunpack.c.h.b16 %v3907
  %v8214 = vunpack.c.l.b16 %v3908
  %v8215 = vunpack.c.h.b16 %v3908
  %v8216 = vunpack.c.l.b16 %v3909
  %v8217 = vunpack.c.h.b16 %v3909
  %v8218 = vunpack.c.l.b16 %v3910
  %v8219 = vunpack.c.h.b16 %v3910
  %v8220 = vunpack.c.l.b16 %v3911
  %v8221 = vunpack.c.h.b16 %v3911
  %v8222 = vunpack.c.l.b16 %v3912
  %v8223 = vunpack.c.h.b16 %v3912
  %v8224 = vunpack.c.l.b16 %v3913
  %v8225 = vunpack.c.h.b16 %v3913
  %v8226 = vunpack.c.l.b16 %v3914
  %v8227 = vunpack.c.h.b16 %v3914
  %v8228 = vunpack.c.l.b16 %v3915
  %v8229 = vunpack.c.h.b16 %v3915
  %v8230 = vunpack.c.l.b16 %v3916
  %v8231 = vunpack.c.h.b16 %v3916
  %v8232 = vunpack.c.l.b16 %v3917
  %v8233 = vunpack.c.h.b16 %v3917
  %v8234 = vunpack.c.l.b16 %v3918
  %v8235 = vunpack.c.h.b16 %v3918
  %v8236 = vunpack.c.l.b16 %v3919
  %v8237 = vunpack.c.h.b16 %v3919
  %v8238 = vunpack.c.l.b16 %v3920
  %v8239 = vunpack.c.h.b16 %v3920
  %v8240 = vunpack.c.l.b16 %v3921
  %v8241 = vunpack.c.h.b16 %v3921
  %v8242 = vunpack.c.l.b16 %v3922
  %v8243 = vunpack.c.h.b16 %v3922
  %v8244 = vunpack.c.l.b16 %v3923
  %v8245 = vunpack.c.h.b16 %v3923
  %v8246 = vunpack.c.l.b16 %v3924
  %v8247 = vunpack.c.h.b16 %v3924
  %v8248 = vunpack.c.l.b16 %v3925
  %v8249 = vunpack.c.h.b16 %v3925
  %v8250 = vunpack.c.l.b16 %v3926
  %v8251 = vunpack.c.h.b16 %v3926
  %v8252 = vunpack.c.l.b16 %v3927
  %v8253 = vunpack.c.h.b16 %v3927
  %v8254 = vunpack.c.l.b16 %v3928
  %v8255 = vunpack.c.h.b16 %v3928
  %v8256 = vunpack.c.l.b16 %v3929
  %v8257 = vunpack.c.h.b16 %v3929
  %v8258 = vunpack.c.l.b16 %v3930
  %v8259 = vunpack.c.h.b16 %v3930
  %v8260 = vunpack.c.l.b16 %v3931
  %v8261 = vunpack.c.h.b16 %v3931
  %v8262 = vunpack.c.l.b16 %v3932
  %v8263 = vunpack.c.h.b16 %v3932
  %v8264 = vunpack.c.l.b16 %v3933
  %v8265 = vunpack.c.h.b16 %v3933
  %v8266 = vunpack.c.l.b16 %v3934
  %v8267 = vunpack.c.h.b16 %v3934
  %v8268 = vunpack.c.l.b16 %v3935
  %v8269 = vunpack.c.h.b16 %v3935
  %v8270 = vunpack.c.l.b16 %v3936
  %v8271 = vunpack.c.h.b16 %v3936
  %v8272 = vunpack.c.l.b16 %v3937
  %v8273 = vunpack.c.h.b16 %v3937
  %v8274 = vunpack.c.l.b16 %v3938
  %v8275 = vunpack.c.h.b16 %v3938
  %v8276 = vunpack.c.l.b16 %v3939
  %v8277 = vunpack.c.h.b16 %v3939
  %v8278 = vunpack.c.l.b16 %v3940
  %v8279 = vunpack.c.h.b16 %v3940
  %v8280 = vunpack.c.l.b16 %v3941
  %v8281 = vunpack.c.h.b16 %v3941
  %v8282 = vunpack.c.l.b16 %v3942
  %v8283 = vunpack.c.h.b16 %v3942
  %v8284 = vunpack.c.l.b16 %v3943
  %v8285 = vunpack.c.h.b16 %v3943
  %v8286 = vunpack.c.l.b16 %v3944
  %v8287 = vunpack.c.h.b16 %v3944
  %v8288 = vunpack.c.l.b16 %v3945
  %v8289 = vunpack.c.h.b16 %v3945
  %v8290 = vunpack.c.l.b16 %v3946
  %v8291 = vunpack.c.h.b16 %v3946
  %v8292 = vunpack.c.l.b16 %v3947
  %v8293 = vunpack.c.h.b16 %v3947
  %v8294 = vunpack.c.l.b16 %v3948
  %v8295 = vunpack.c.h.b16 %v3948
  %v8296 = vunpack.c.l.b16 %v3949
  %v8297 = vunpack.c.h.b16 %v3949
  %v8298 = vunpack.c.l.b16 %v3950
  %v8299 = vunpack.c.h.b16 %v3950
  %v8300 = vunpack.c.l.b16 %v3951
  %v8301 = vunpack.c.h.b16 %v3951
  %v8302 = vunpack.c.l.b16 %v3952
  %v8303 = vunpack.c.h.b16 %v3952
  %v8304 = vunpack.c.l.b16 %v3953
  %v8305 = vunpack.c.h.b16 %v3953
  %v8306 = vunpack.c.l.b16 %v3954
  %v8307 = vunpack.c.h.b16 %v3954
  %v8308 = vunpack.c.l.b16 %v3955
  %v8309 = vunpack.c.h.b16 %v3955
  %v8310 = vunpack.c.l.b16 %v3956
  %v8311 = vunpack.c.h.b16 %v3956
  %v8312 = vunpack.c.l.b16 %v3957
  %v8313 = vunpack.c.h.b16 %v3957
  %v8314 = vunpack.c.l.b16 %v3958
  %v8315 = vunpack.c.h.b16 %v3958
  %v8316 = vunpack.c.l.b16 %v3959
  %v8317 = vunpack.c.h.b16 %v3959
  %v8318 = vunpack.c.l.b16 %v3960
  %v8319 = vunpack.c.h.b16 %v3960
  %v8320 = vunpack.c.l.b16 %v3961
  %v8321 = vunpack.c.h.b16 %v3961
  %v8322 = vunpack.c.l.b16 %v3962
  %v8323 = vunpack.c.h.b16 %v3962
  %v8324 = vunpack.c.l.b16 %v3963
  %v8325 = vunpack.c.h.b16 %v3963
  %v8326 = vunpack.c.l.b16 %v3964
  %v8327 = vunpack.c.h.b16 %v3964
  %v8328 = vunpack.c.l.b16 %v3965
  %v8329 = vunpack.c.h.b16 %v3965
  %v8330 = vunpack.c.l.b16 %v3966
  %v8331 = vunpack.c.h.b16 %v3966
  %v8332 = vunpack.c.l.b16 %v3967
  %v8333 = vunpack.c.h.b16 %v3967
  %v8334 = vunpack.c.l.b16 %v3968
  %v8335 = vunpack.c.h.b16 %v3968
  %v8336 = vunpack.c.l.b16 %v3969
  %v8337 = vunpack.c.h.b16 %v3969
  %v8338 = vunpack.c.l.b16 %v3970
  %v8339 = vunpack.c.h.b16 %v3970
  %v8340 = vunpack.c.l.b16 %v3971
  %v8341 = vunpack.c.h.b16 %v3971
  %v8342 = vunpack.c.l.b16 %v3972
  %v8343 = vunpack.c.h.b16 %v3972
  %v8344 = vunpack.c.l.b16 %v3973
  %v8345 = vunpack.c.h.b16 %v3973
  %v8346 = vunpack.c.l.b16 %v3974
  %v8347 = vunpack.c.h.b16 %v3974
  %v8348 = vunpack.c.l.b16 %v3975
  %v8349 = vunpack.c.h.b16 %v3975
  %v8350 = vunpack.c.l.b16 %v3976
  %v8351 = vunpack.c.h.b16 %v3976
  %v8352 = vunpack.c.l.b16 %v3977
  %v8353 = vunpack.c.h.b16 %v3977
  %v8354 = vunpack.c.l.b16 %v3978
  %v8355 = vunpack.c.h.b16 %v3978
  %v8356 = vunpack.c.l.b16 %v3979
  %v8357 = vunpack.c.h.b16 %v3979
  %v8358 = vunpack.c.l.b16 %v3980
  %v8359 = vunpack.c.h.b16 %v3980
  %v8360 = vunpack.c.l.b16 %v3981
  %v8361 = vunpack.c.h.b16 %v3981
  %v8362 = vunpack.c.l.b16 %v3982
  %v8363 = vunpack.c.h.b16 %v3982
  %v8364 = vunpack.c.l.b16 %v3983
  %v8365 = vunpack.c.h.b16 %v3983
  %v8366 = vunpack.c.l.b16 %v3984
  %v8367 = vunpack.c.h.b16 %v3984
  %v8368 = vunpack.c.l.b16 %v3985
  %v8369 = vunpack.c.h.b16 %v3985
  %v8370 = vunpack.c.l.b16 %v3986
  %v8371 = vunpack.c.h.b16 %v3986
  %v8372 = vunpack.c.l.b16 %v3987
  %v8373 = vunpack.c.h.b16 %v3987
  %v8374 = vunpack.c.l.b16 %v3988
  %v8375 = vunpack.c.h.b16 %v3988
  %v8376 = vunpack.c.l.b16 %v3989
  %v8377 = vunpack.c.h.b16 %v3989
  %v8378 = vunpack.c.l.b16 %v3990
  %v8379 = vunpack.c.h.b16 %v3990
  %v8380 = vunpack.c.l.b16 %v3991
  %v8381 = vunpack.c.h.b16 %v3991
  %v8382 = vunpack.c.l.b16 %v3992
  %v8383 = vunpack.c.h.b16 %v3992
  %v8384 = vunpack.c.l.b16 %v3993
  %v8385 = vunpack.c.h.b16 %v3993
  %v8386 = vunpack.c.l.b16 %v3994
  %v8387 = vunpack.c.h.b16 %v3994
  %v8388 = vunpack.c.l.b16 %v3995
  %v8389 = vunpack.c.h.b16 %v3995
  %v8390 = vunpack.c.l.b16 %v3996
  %v8391 = vunpack.c.h.b16 %v3996
  %v8392 = vunpack.c.l.b16 %v3997
  %v8393 = vunpack.c.h.b16 %v3997
  %v8394 = vunpack.c.l.b16 %v3998
  %v8395 = vunpack.c.h.b16 %v3998
  %v8396 = vunpack.c.l.b16 %v3999
  %v8397 = vunpack.c.h.b16 %v3999
  %v8398 = vunpack.c.l.b16 %v4000
  %v8399 = vunpack.c.h.b16 %v4000
  %v8400 = vunpack.c.l.b16 %v4001
  %v8401 = vunpack.c.h.b16 %v4001
  %v8402 = vunpack.c.l.b16 %v4002
  %v8403 = vunpack.c.h.b16 %v4002
  %v8404 = vunpack.c.l.b16 %v4003
  %v8405 = vunpack.c.h.b16 %v4003
  %v8406 = vunpack.c.l.b16 %v4004
  %v8407 = vunpack.c.h.b16 %v4004
  %v8408 = vunpack.c.l.b16 %v4005
  %v8409 = vunpack.c.h.b16 %v4005
  %v8410 = vunpack.c.l.b16 %v4006
  %v8411 = vunpack.c.h.b16 %v4006
  %v8412 = vunpack.c.l.b16 %v4007
  %v8413 = vunpack.c.h.b16 %v4007
  %v8414 = vunpack.c.l.b16 %v4008
  %v8415 = vunpack.c.h.b16 %v4008
  %v8416 = vunpack.c.l.b16 %v4009
  %v8417 = vunpack.c.h.b16 %v4009
  %v8418 = vunpack.c.l.b16 %v4010
  %v8419 = vunpack.c.h.b16 %v4010
  %v8420 = vunpack.c.l.b16 %v4011
  %v8421 = vunpack.c.h.b16 %v4011
  %v8422 = vunpack.c.l.b16 %v4012
  %v8423 = vunpack.c.h.b16 %v4012
  %v8424 = vunpack.c.l.b16 %v4013
  %v8425 = vunpack.c.h.b16 %v4013
  %v8426 = vunpack.c.l.b16 %v4014
  %v8427 = vunpack.c.h.b16 %v4014
  %v8428 = vunpack.c.l.b16 %v4015
  %v8429 = vunpack.c.h.b16 %v4015
  %v8430 = vunpack.c.l.b16 %v4016
  %v8431 = vunpack.c.h.b16 %v4016
  %v8432 = vunpack.c.l.b16 %v4017
  %v8433 = vunpack.c.h.b16 %v4017
  %v8434 = vunpack.c.l.b16 %v4018
  %v8435 = vunpack.c.h.b16 %v4018
  %v8436 = vunpack.c.l.b16 %v4019
  %v8437 = vunpack.c.h.b16 %v4019
  %v8438 = vunpack.c.l.b16 %v4020
  %v8439 = vunpack.c.h.b16 %v4020
  %v8440 = vunpack.c.l.b16 %v4021
  %v8441 = vunpack.c.h.b16 %v4021
  %v8442 = vunpack.c.l.b16 %v4022
  %v8443 = vunpack.c.h.b16 %v4022
  %v8444 = vunpack.c.l.b16 %v4023
  %v8445 = vunpack.c.h.b16 %v4023
  %v8446 = vunpack.c.l.b16 %v4024
  %v8447 = vunpack.c.h.b16 %v4024
  %v8448 = vunpack.c.l.b16 %v4025
  %v8449 = vunpack.c.h.b16 %v4025
  %v8450 = vunpack.c.l.b16 %v4026
  %v8451 = vunpack.c.h.b16 %v4026
  %v8452 = vunpack.c.l.b16 %v4027
  %v8453 = vunpack.c.h.b16 %v4027
  %v8454 = vunpack.c.l.b16 %v4028
  %v8455 = vunpack.c.h.b16 %v4028
  %v8456 = vunpack.c.l.b16 %v4029
  %v8457 = vunpack.c.h.b16 %v4029
  %v8458 = vunpack.c.l.b16 %v4030
  %v8459 = vunpack.c.h.b16 %v4030
  %v8460 = vunpack.c.l.b16 %v4031
  %v8461 = vunpack.c.h.b16 %v4031
  %v8462 = vunpack.c.l.b16 %v4032
  %v8463 = vunpack.c.h.b16 %v4032
  %v8464 = vunpack.c.l.b16 %v4033
  %v8465 = vunpack.c.h.b16 %v4033
  %v8466 = vunpack.c.l.b16 %v4034
  %v8467 = vunpack.c.h.b16 %v4034
  %v8468 = vunpack.c.l.b16 %v4035
  %v8469 = vunpack.c.h.b16 %v4035
  %v8470 = vunpack.c.l.b16 %v4036
  %v8471 = vunpack.c.h.b16 %v4036
  %v8472 = vunpack.c.l.b16 %v4037
  %v8473 = vunpack.c.h.b16 %v4037
  %v8474 = vunpack.c.l.b16 %v4038
  %v8475 = vunpack.c.h.b16 %v4038
  %v8476 = vunpack.c.l.b16 %v4039
  %v8477 = vunpack.c.h.b16 %v4039
  %v8478 = vunpack.c.l.b16 %v4040
  %v8479 = vunpack.c.h.b16 %v4040
  %v8480 = vunpack.c.l.b16 %v4041
  %v8481 = vunpack.c.h.b16 %v4041
  %v8482 = vunpack.c.l.b16 %v4042
  %v8483 = vunpack.c.h.b16 %v4042
  %v8484 = vunpack.c.l.b16 %v4043
  %v8485 = vunpack.c.h.b16 %v4043
  %v8486 = vunpack.c.l.b16 %v4044
  %v8487 = vunpack.c.h.b16 %v4044
  %v8488 = vunpack.c.l.b16 %v4045
  %v8489 = vunpack.c.h.b16 %v4045
  %v8490 = vunpack.c.l.b16 %v4046
  %v8491 = vunpack.c.h.b16 %v4046
  %v8492 = vunpack.c.l.b16 %v4047
  %v8493 = vunpack.c.h.b16 %v4047
  %v8494 = vunpack.c.l.b16 %v4048
  %v8495 = vunpack.c.h.b16 %v4048
  %v8496 = vunpack.c.l.b16 %v4049
  %v8497 = vunpack.c.h.b16 %v4049
  %v8498 = vunpack.c.l.b16 %v4050
  %v8499 = vunpack.c.h.b16 %v4050
  %v8500 = vunpack.c.l.b16 %v4051
  %v8501 = vunpack.c.h.b16 %v4051
  %v8502 = vunpack.c.l.b16 %v4052
  %v8503 = vunpack.c.h.b16 %v4052
  %v8504 = vunpack.c.l.b16 %v4053
  %v8505 = vunpack.c.h.b16 %v4053
  %v8506 = vunpack.c.l.b16 %v4054
  %v8507 = vunpack.c.h.b16 %v4054
  %v8508 = vunpack.c.l.b16 %v4055
  %v8509 = vunpack.c.h.b16 %v4055
  %v8510 = vunpack.c.l.b16 %v4056
  %v8511 = vunpack.c.h.b16 %v4056
  %v8512 = vunpack.c.l.b16 %v4057
  %v8513 = vunpack.c.h.b16 %v4057
  %v8514 = vunpack.c.l.b16 %v4058
  %v8515 = vunpack.c.h.b16 %v4058
  %v8516 = vunpack.c.l.b16 %v4059
  %v8517 = vunpack.c.h.b16 %v4059
  %v8518 = vunpack.c.l.b16 %v4060
  %v8519 = vunpack.c.h.b16 %v4060
  %v8520 = vunpack.c.l.b16 %v4061
  %v8521 = vunpack.c.h.b16 %v4061
  %v8522 = vunpack.c.l.b16 %v4062
  %v8523 = vunpack.c.h.b16 %v4062
  %v8524 = vunpack.c.l.b16 %v4063
  %v8525 = vunpack.c.h.b16 %v4063
  %v8526 = vunpack.c.l.b16 %v4064
  %v8527 = vunpack.c.h.b16 %v4064
  %v8528 = vunpack.c.l.b16 %v4065
  %v8529 = vunpack.c.h.b16 %v4065
  %v8530 = vunpack.c.l.b16 %v4066
  %v8531 = vunpack.c.h.b16 %v4066
  %v8532 = vunpack.c.l.b16 %v4067
  %v8533 = vunpack.c.h.b16 %v4067
  %v8534 = vunpack.c.l.b16 %v4068
  %v8535 = vunpack.c.h.b16 %v4068
  %v8536 = vunpack.c.l.b16 %v4069
  %v8537 = vunpack.c.h.b16 %v4069
  %v8538 = vunpack.c.l.b16 %v4070
  %v8539 = vunpack.c.h.b16 %v4070
  %v8540 = vunpack.c.l.b16 %v4071
  %v8541 = vunpack.c.h.b16 %v4071
  %v8542 = vunpack.c.l.b16 %v4072
  %v8543 = vunpack.c.h.b16 %v4072
  %v8544 = vunpack.c.l.b16 %v4073
  %v8545 = vunpack.c.h.b16 %v4073
  %v8546 = vunpack.c.l.b16 %v4074
  %v8547 = vunpack.c.h.b16 %v4074
  %v8548 = vunpack.c.l.b16 %v4075
  %v8549 = vunpack.c.h.b16 %v4075
  %v8550 = vunpack.c.l.b16 %v4076
  %v8551 = vunpack.c.h.b16 %v4076
  %v8552 = vunpack.c.l.b16 %v4077
  %v8553 = vunpack.c.h.b16 %v4077
  %v8554 = vunpack.c.l.b16 %v4078
  %v8555 = vunpack.c.h.b16 %v4078
  %v8556 = vunpack.c.l.b16 %v4079
  %v8557 = vunpack.c.h.b16 %v4079
  %v8558 = vunpack.c.l.b16 %v4080
  %v8559 = vunpack.c.h.b16 %v4080
  %v8560 = vunpack.c.l.b16 %v4081
  %v8561 = vunpack.c.h.b16 %v4081
  %v8562 = vunpack.c.l.b16 %v4082
  %v8563 = vunpack.c.h.b16 %v4082
  %v8564 = vunpack.c.l.b16 %v4083
  %v8565 = vunpack.c.h.b16 %v4083
  %v8566 = vunpack.c.l.b16 %v4084
  %v8567 = vunpack.c.h.b16 %v4084
  %v8568 = vunpack.c.l.b16 %v4085
  %v8569 = vunpack.c.h.b16 %v4085
  %v8570 = vunpack.c.l.b16 %v4086
  %v8571 = vunpack.c.h.b16 %v4086
  %v8572 = vunpack.c.l.b16 %v4087
  %v8573 = vunpack.c.h.b16 %v4087
  %v8574 = vunpack.c.l.b16 %v4088
  %v8575 = vunpack.c.h.b16 %v4088
  %v8576 = vunpack.c.l.b16 %v4089
  %v8577 = vunpack.c.h.b16 %v4089
  %v8578 = vunpack.c.l.b16 %v4090
  %v8579 = vunpack.c.h.b16 %v4090
  %v8580 = vunpack.c.l.b16 %v4091
  %v8581 = vunpack.c.h.b16 %v4091
  %v8582 = vunpack.c.l.b16 %v4092
  %v8583 = vunpack.c.h.b16 %v4092
  %v8584 = vunpack.c.l.b16 %v4093
  %v8585 = vunpack.c.h.b16 %v4093
  %v8586 = vunpack.c.l.b16 %v4094
  %v8587 = vunpack.c.h.b16 %v4094
  %v8588 = vunpack.c.l.b16 %v4095
  %v8589 = vunpack.c.h.b16 %v4095
  %v8590 = vunpack.c.l.b16 %v4096
  %v8591 = vunpack.c.h.b16 %v4096
  %v8592 = vunpack.c.l.b16 %v4097
  %v8593 = vunpack.c.h.b16 %v4097
  %v8594 = vunpack.c.l.b16 %v4098
  %v8595 = vunpack.c.h.b16 %v4098
  %v8596 = vunpack.c.l.b16 %v4099
  %v8597 = vunpack.c.h.b16 %v4099
  %v8598 = vunpack.c.l.b16 %v4100
  %v8599 = vunpack.c.h.b16 %v4100
  %v8600 = vunpack.c.l.b16 %v4101
  %v8601 = vunpack.c.h.b16 %v4101
  %v8602 = vunpack.c.l.b16 %v4102
  %v8603 = vunpack.c.h.b16 %v4102
  %v8604 = vunpack.c.l.b16 %v4103
  %v8605 = vunpack.c.h.b16 %v4103
  %v8606 = vunpack.c.l.b16 %v4104
  %v8607 = vunpack.c.h.b16 %v4104
  %v8608 = vunpack.c.l.b16 %v4105
  %v8609 = vunpack.c.h.b16 %v4105
  %v8610 = vunpack.c.l.b16 %v4106
  %v8611 = vunpack.c.h.b16 %v4106
  %v8612 = vunpack.c.l.b16 %v4107
  %v8613 = vunpack.c.h.b16 %v4107
  %v8614 = vunpack.c.l.b16 %v4108
  %v8615 = vunpack.c.h.b16 %v4108
  %v8616 = vunpack.c.l.b16 %v4109
  %v8617 = vunpack.c.h.b16 %v4109
  %v8618 = vunpack.c.l.b16 %v4110
  %v8619 = vunpack.c.h.b16 %v4110
  %v8620 = vunpack.c.l.b16 %v4111
  %v8621 = vunpack.c.h.b16 %v4111
  %v8622 = vunpack.c.l.b16 %v4112
  %v8623 = vunpack.c.h.b16 %v4112
  %v8624 = vunpack.c.l.b16 %v4113
  %v8625 = vunpack.c.h.b16 %v4113
  %v8626 = vunpack.c.l.b16 %v4114
  %v8627 = vunpack.c.h.b16 %v4114
  %v8628 = vunpack.c.l.b16 %v4115
  %v8629 = vunpack.c.h.b16 %v4115
  %v8630 = vunpack.c.l.b16 %v4116
  %v8631 = vunpack.c.h.b16 %v4116
  %v8632 = vunpack.c.l.b16 %v4117
  %v8633 = vunpack.c.h.b16 %v4117
  %v8634 = vunpack.c.l.b16 %v4118
  %v8635 = vunpack.c.h.b16 %v4118
  %v8636 = vunpack.c.l.b16 %v4119
  %v8637 = vunpack.c.h.b16 %v4119
  %v8638 = vunpack.c.l.b16 %v4120
  %v8639 = vunpack.c.h.b16 %v4120
  %v8640 = vunpack.c.l.b16 %v4121
  %v8641 = vunpack.c.h.b16 %v4121
  %v8642 = vunpack.c.l.b16 %v4122
  %v8643 = vunpack.c.h.b16 %v4122
  %v8644 = vunpack.c.l.b16 %v4123
  %v8645 = vunpack.c.h.b16 %v4123
  %v8646 = vunpack.c.l.b16 %v4124
  %v8647 = vunpack.c.h.b16 %v4124
  %v8648 = vunpack.c.l.b16 %v4125
  %v8649 = vunpack.c.h.b16 %v4125
  %v8650 = vunpack.c.l.b16 %v4126
  %v8651 = vunpack.c.h.b16 %v4126
  %v8652 = vunpack.c.l.b16 %v4127
  %v8653 = vunpack.c.h.b16 %v4127
  %v8654 = vunpack.c.l.b16 %v4128
  %v8655 = vunpack.c.h.b16 %v4128
  %v8656 = vunpack.c.l.b16 %v4129
  %v8657 = vunpack.c.h.b16 %v4129
  %v8658 = vunpack.c.l.b16 %v4130
  %v8659 = vunpack.c.h.b16 %v4130
  %v8660 = vunpack.c.l.b16 %v4131
  %v8661 = vunpack.c.h.b16 %v4131
  %v8662 = vunpack.c.l.b16 %v4132
  %v8663 = vunpack.c.h.b16 %v4132
  %v8664 = vunpack.c.l.b16 %v4133
  %v8665 = vunpack.c.h.b16 %v4133
  %v8666 = vunpack.c.l.b16 %v4134
  %v8667 = vunpack.c.h.b16 %v4134
  %v8668 = vunpack.c.l.b16 %v4135
  %v8669 = vunpack.c.h.b16 %v4135
  %v8670 = vunpack.c.l.b16 %v4136
  %v8671 = vunpack.c.h.b16 %v4136
  %v8672 = vunpack.c.l.b16 %v4137
  %v8673 = vunpack.c.h.b16 %v4137
  %v8674 = vunpack.c.l.b16 %v4138
  %v8675 = vunpack.c.h.b16 %v4138
  %v8676 = vunpack.c.l.b16 %v4139
  %v8677 = vunpack.c.h.b16 %v4139
  %v8678 = vunpack.c.l.b16 %v4140
  %v8679 = vunpack.c.h.b16 %v4140
  %v8680 = vunpack.c.l.b16 %v4141
  %v8681 = vunpack.c.h.b16 %v4141
  %v8682 = vunpack.c.l.b16 %v4142
  %v8683 = vunpack.c.h.b16 %v4142
  %v8684 = vunpack.c.l.b16 %v4143
  %v8685 = vunpack.c.h.b16 %v4143
  %v8686 = vunpack.c.l.b16 %v4144
  %v8687 = vunpack.c.h.b16 %v4144
  %v8688 = vunpack.c.l.b16 %v4145
  %v8689 = vunpack.c.h.b16 %v4145
  %v8690 = vunpack.c.l.b16 %v4146
  %v8691 = vunpack.c.h.b16 %v4146
  %v8692 = vunpack.c.l.b16 %v4147
  %v8693 = vunpack.c.h.b16 %v4147
  %v8694 = vunpack.c.l.b16 %v4148
  %v8695 = vunpack.c.h.b16 %v4148
  %v8696 = vunpack.c.l.b16 %v4149
  %v8697 = vunpack.c.h.b16 %v4149
  %v8698 = vunpack.c.l.b16 %v4150
  %v8699 = vunpack.c.h.b16 %v4150
  %v8700 = vunpack.c.l.b16 %v4151
  %v8701 = vunpack.c.h.b16 %v4151
  %v8702 = vunpack.c.l.b16 %v4152
  %v8703 = vunpack.c.h.b16 %v4152
  %v8704 = vunpack.c.l.b16 %v4153
  %v8705 = vunpack.c.h.b16 %v4153
  %v8706 = vunpack.c.l.b16 %v4154
  %v8707 = vunpack.c.h.b16 %v4154
  %v8708 = vunpack.c.l.b16 %v4155
  %v8709 = vunpack.c.h.b16 %v4155
  %v8710 = vunpack.c.l.b16 %v4156
  %v8711 = vunpack.c.h.b16 %v4156
  %v8712 = vunpack.c.l.b16 %v4157
  %v8713 = vunpack.c.h.b16 %v4157
  %v8714 = vunpack.c.l.b16 %v4158
  %v8715 = vunpack.c.h.b16 %v4158
  %v8716 = vunpack.c.l.b16 %v4159
  %v8717 = vunpack.c.h.b16 %v4159
  %v8718 = vunpack.c.l.b16 %v4160
  %v8719 = vunpack.c.h.b16 %v4160
  %v8720 = vunpack.c.l.b16 %v4161
  %v8721 = vunpack.c.h.b16 %v4161
  %v8722 = vunpack.c.l.b16 %v4162
  %v8723 = vunpack.c.h.b16 %v4162
  %v8724 = vunpack.c.l.b16 %v4163
  %v8725 = vunpack.c.h.b16 %v4163
  %v8726 = vunpack.c.l.b16 %v4164
  %v8727 = vunpack.c.h.b16 %v4164
  %v8728 = vunpack.c.l.b16 %v4165
  %v8729 = vunpack.c.h.b16 %v4165
  %v8730 = vunpack.c.l.b16 %v4166
  %v8731 = vunpack.c.h.b16 %v4166
  %v8732 = vunpack.c.l.b16 %v4167
  %v8733 = vunpack.c.h.b16 %v4167
  %v8734 = vunpack.c.l.b16 %v4168
  %v8735 = vunpack.c.h.b16 %v4168
  %v8736 = vunpack.c.l.b16 %v4169
  %v8737 = vunpack.c.h.b16 %v4169
  %v8738 = vunpack.c.l.b16 %v4170
  %v8739 = vunpack.c.h.b16 %v4170
  %v8740 = vunpack.c.l.b16 %v4171
  %v8741 = vunpack.c.h.b16 %v4171
  %v8742 = vunpack.c.l.b16 %v4172
  %v8743 = vunpack.c.h.b16 %v4172
  %v8744 = vunpack.c.l.b16 %v4173
  %v8745 = vunpack.c.h.b16 %v4173
  %v8746 = vunpack.c.l.b16 %v4174
  %v8747 = vunpack.c.h.b16 %v4174
  %v8748 = vunpack.c.l.b16 %v4175
  %v8749 = vunpack.c.h.b16 %v4175
  %v8750 = vunpack.c.l.b16 %v4176
  %v8751 = vunpack.c.h.b16 %v4176
  %v8752 = vunpack.c.l.b16 %v4177
  %v8753 = vunpack.c.h.b16 %v4177
  %v8754 = vunpack.c.l.b16 %v4178
  %v8755 = vunpack.c.h.b16 %v4178
  %v8756 = vunpack.c.l.b16 %v4179
  %v8757 = vunpack.c.h.b16 %v4179
  %v8758 = vunpack.c.l.b16 %v4180
  %v8759 = vunpack.c.h.b16 %v4180
  %v8760 = vunpack.c.l.b16 %v4181
  %v8761 = vunpack.c.h.b16 %v4181
  %v8762 = vunpack.c.l.b16 %v4182
  %v8763 = vunpack.c.h.b16 %v4182
  %v8764 = vunpack.c.l.b16 %v4183
  %v8765 = vunpack.c.h.b16 %v4183
  %v8766 = vunpack.c.l.b16 %v4184
  %v8767 = vunpack.c.h.b16 %v4184
  %v8768 = vunpack.c.l.b16 %v4185
  %v8769 = vunpack.c.h.b16 %v4185
  %v8770 = vunpack.c.l.b16 %v4186
  %v8771 = vunpack.c.h.b16 %v4186
  %v8772 = vunpack.c.l.b16 %v4187
  %v8773 = vunpack.c.h.b16 %v4187
  %v8774 = vunpack.c.l.b16 %v4188
  %v8775 = vunpack.c.h.b16 %v4188
  %v8776 = vunpack.c.l.b16 %v4189
  %v8777 = vunpack.c.h.b16 %v4189
  %v8778 = vunpack.c.l.b16 %v4190
  %v8779 = vunpack.c.h.b16 %v4190
  %v8780 = vunpack.c.l.b16 %v4191
  %v8781 = vunpack.c.h.b16 %v4191
  %v8782 = vunpack.c.l.b16 %v4192
  %v8783 = vunpack.c.h.b16 %v4192
  %v8784 = vunpack.c.l.b16 %v4193
  %v8785 = vunpack.c.h.b16 %v4193
  %v8786 = vunpack.c.l.b16 %v4194
  %v8787 = vunpack.c.h.b16 %v4194
  %v8788 = vunpack.c.l.b16 %v4195
  %v8789 = vunpack.c.h.b16 %v4195
  %v8790 = vunpack.c.l.b16 %v4196
  %v8791 = vunpack.c.h.b16 %v4196
  %v8792 = vunpack.c.l.b16 %v4197
  %v8793 = vunpack.c.h.b16 %v4197
  %v8794 = vunpack.c.l.b16 %v4198
  %v8795 = vunpack.c.h.b16 %v4198
  %v8796 = vunpack.c.l.b16 %v4199
  %v8797 = vunpack.c.h.b16 %v4199
  %v8798 = vunpack.c.l.b16 %v4200
  %v8799 = vunpack.c.h.b16 %v4200
  %v8800 = vunpack.c.l.b16 %v4201
  %v8801 = vunpack.c.h.b16 %v4201
  %v8802 = vunpack.c.l.b16 %v4202
  %v8803 = vunpack.c.h.b16 %v4202
  %v8804 = vunpack.c.l.b16 %v4203
  %v8805 = vunpack.c.h.b16 %v4203
  %v8806 = vunpack.c.l.b16 %v4204
  %v8807 = vunpack.c.h.b16 %v4204
  %v8808 = vunpack.c.l.b16 %v4205
  %v8809 = vunpack.c.h.b16 %v4205
  %v8810 = vunpack.c.l.b16 %v4206
  %v8811 = vunpack.c.h.b16 %v4206
  %v8812 = vunpack.c.l.b16 %v4207
  %v8813 = vunpack.c.h.b16 %v4207
  %v8814 = vunpack.c.l.b16 %v4208
  %v8815 = vunpack.c.h.b16 %v4208
  %v8816 = vunpack.c.l.b16 %v4209
  %v8817 = vunpack.c.h.b16 %v4209
  %v8818 = vunpack.c.l.b16 %v4210
  %v8819 = vunpack.c.h.b16 %v4210
  %v8820 = vunpack.c.l.b16 %v4211
  %v8821 = vunpack.c.h.b16 %v4211
  %v8822 = vunpack.c.l.b16 %v4212
  %v8823 = vunpack.c.h.b16 %v4212
  %v8824 = vunpack.c.l.b16 %v4213
  %v8825 = vunpack.c.h.b16 %v4213
  %v8826 = vunpack.c.l.b16 %v4214
  %v8827 = vunpack.c.h.b16 %v4214
  %v8828 = vunpack.c.l.b16 %v4215
  %v8829 = vunpack.c.h.b16 %v4215
  %v8830 = vunpack.c.l.b16 %v4216
  %v8831 = vunpack.c.h.b16 %v4216
  %v8832 = vunpack.c.l.b16 %v4217
  %v8833 = vunpack.c.h.b16 %v4217
  %v8834 = vunpack.c.l.b16 %v4218
  %v8835 = vunpack.c.h.b16 %v4218
  %v8836 = vunpack.c.l.b16 %v4219
  %v8837 = vunpack.c.h.b16 %v4219
  %v8838 = vunpack.c.l.b16 %v4220
  %v8839 = vunpack.c.h.b16 %v4220
  %v8840 = vunpack.c.l.b16 %v4221
  %v8841 = vunpack.c.h.b16 %v4221
  %v8842 = vunpack.c.l.b16 %v4222
  %v8843 = vunpack.c.h.b16 %v4222
  %v8844 = vunpack.c.l.b16 %v4223
  %v8845 = vunpack.c.h.b16 %v4223
  %v8846 = vunpack.c.l.b16 %v4224
  %v8847 = vunpack.c.h.b16 %v4224
  %v8848 = vunpack.c.l.b16 %v4225
  %v8849 = vunpack.c.h.b16 %v4225
  %v8850 = vunpack.c.l.b16 %v4226
  %v8851 = vunpack.c.h.b16 %v4226
  %v8852 = vunpack.c.l.b16 %v4227
  %v8853 = vunpack.c.h.b16 %v4227
  %v8854 = vunpack.c.l.b16 %v4228
  %v8855 = vunpack.c.h.b16 %v4228
  %v8856 = vunpack.c.l.b16 %v4229
  %v8857 = vunpack.c.h.b16 %v4229
  %v8858 = vunpack.c.l.b16 %v4230
  %v8859 = vunpack.c.h.b16 %v4230
  %v8860 = vunpack.c.l.b16 %v4231
  %v8861 = vunpack.c.h.b16 %v4231
  %v8862 = vunpack.c.l.b16 %v4232
  %v8863 = vunpack.c.h.b16 %v4232
  %v8864 = vunpack.c.l.b16 %v4233
  %v8865 = vunpack.c.h.b16 %v4233
  %v8866 = vunpack.c.l.b16 %v4234
  %v8867 = vunpack.c.h.b16 %v4234
  %v8868 = vunpack.c.l.b16 %v4235
  %v8869 = vunpack.c.h.b16 %v4235
  %v8870 = vunpack.c.l.b16 %v4236
  %v8871 = vunpack.c.h.b16 %v4236
  %v8872 = vunpack.c.l.b16 %v4237
  %v8873 = vunpack.c.h.b16 %v4237
  %v8874 = vunpack.c.l.b16 %v4238
  %v8875 = vunpack.c.h.b16 %v4238
  %v8876 = vunpack.c.l.b16 %v4239
  %v8877 = vunpack.c.h.b16 %v4239
  %v8878 = vunpack.c.l.b16 %v4240
  %v8879 = vunpack.c.h.b16 %v4240
  %v8880 = vunpack.c.l.b16 %v4241
  %v8881 = vunpack.c.h.b16 %v4241
  %v8882 = vunpack.c.l.b16 %v4242
  %v8883 = vunpack.c.h.b16 %v4242
  %v8884 = vunpack.c.l.b16 %v4243
  %v8885 = vunpack.c.h.b16 %v4243
  %v8886 = vunpack.c.l.b16 %v4244
  %v8887 = vunpack.c.h.b16 %v4244
  %v8888 = vunpack.c.l.b16 %v4245
  %v8889 = vunpack.c.h.b16 %v4245
  %v8890 = vunpack.c.l.b16 %v4246
  %v8891 = vunpack.c.h.b16 %v4246
  %v8892 = vunpack.c.l.b16 %v4247
  %v8893 = vunpack.c.h.b16 %v4247
  %v8894 = vunpack.c.l.b16 %v4248
  %v8895 = vunpack.c.h.b16 %v4248
  %v8896 = vunpack.c.l.b16 %v4249
  %v8897 = vunpack.c.h.b16 %v4249
  %v8898 = vunpack.c.l.b16 %v4250
  %v8899 = vunpack.c.h.b16 %v4250
  %v8900 = vunpack.c.l.b16 %v4251
  %v8901 = vunpack.c.h.b16 %v4251
  %v8902 = vunpack.c.l.b16 %v4252
  %v8903 = vunpack.c.h.b16 %v4252
  %v8904 = vunpack.c.l.b16 %v4253
  %v8905 = vunpack.c.h.b16 %v4253
  %v8906 = vunpack.c.l.b16 %v4254
  %v8907 = vunpack.c.h.b16 %v4254
  %v8908 = vunpack.c.l.b16 %v4255
  %v8909 = vunpack.c.h.b16 %v4255
  %v8910 = vunpack.c.l.b16 %v4256
  %v8911 = vunpack.c.h.b16 %v4256
  %v8912 = vunpack.c.l.b16 %v4257
  %v8913 = vunpack.c.h.b16 %v4257
  %v8914 = vunpack.c.l.b16 %v4258
  %v8915 = vunpack.c.h.b16 %v4258
  %v8916 = vunpack.c.l.b16 %v4259
  %v8917 = vunpack.c.h.b16 %v4259
  %v8918 = vunpack.c.l.b16 %v4260
  %v8919 = vunpack.c.h.b16 %v4260
  %v8920 = vunpack.c.l.b16 %v4261
  %v8921 = vunpack.c.h.b16 %v4261
  %v8922 = vunpack.c.l.b16 %v4262
  %v8923 = vunpack.c.h.b16 %v4262
  %v8924 = vunpack.c.l.b16 %v4263
  %v8925 = vunpack.c.h.b16 %v4263
  %v8926 = vunpack.c.l.b16 %v4264
  %v8927 = vunpack.c.h.b16 %v4264
  %v8928 = vunpack.c.l.b16 %v4265
  %v8929 = vunpack.c.h.b16 %v4265
  %v8930 = vunpack.c.l.b16 %v4266
  %v8931 = vunpack.c.h.b16 %v4266
  %v8932 = vunpack.c.l.b16 %v4267
  %v8933 = vunpack.c.h.b16 %v4267
  %v8934 = vunpack.c.l.b16 %v4268
  %v8935 = vunpack.c.h.b16 %v4268
  %v8936 = vunpack.c.l.b16 %v4269
  %v8937 = vunpack.c.h.b16 %v4269
  %v8938 = vunpack.c.l.b16 %v4270
  %v8939 = vunpack.c.h.b16 %v4270
  %v8940 = vunpack.c.l.b16 %v4271
  %v8941 = vunpack.c.h.b16 %v4271
  %v8942 = vunpack.c.l.b16 %v4272
  %v8943 = vunpack.c.h.b16 %v4272
  %v8944 = vunpack.c.l.b16 %v4273
  %v8945 = vunpack.c.h.b16 %v4273
  %v8946 = vunpack.c.l.b16 %v4274
  %v8947 = vunpack.c.h.b16 %v4274
  %v8948 = vunpack.c.l.b16 %v4275
  %v8949 = vunpack.c.h.b16 %v4275
  %v8950 = vunpack.c.l.b16 %v4276
  %v8951 = vunpack.c.h.b16 %v4276
  %v8952 = vunpack.c.l.b16 %v4277
  %v8953 = vunpack.c.h.b16 %v4277
  %v8954 = vunpack.c.l.b16 %v4278
  %v8955 = vunpack.c.h.b16 %v4278
  %v8956 = vunpack.c.l.b16 %v4279
  %v8957 = vunpack.c.h.b16 %v4279
  %v8958 = vunpack.c.l.b16 %v4280
  %v8959 = vunpack.c.h.b16 %v4280
  %v8960 = vunpack.c.l.b16 %v4281
  %v8961 = vunpack.c.h.b16 %v4281
  %v8962 = vunpack.c.l.b16 %v4282
  %v8963 = vunpack.c.h.b16 %v4282
  %v8964 = vunpack.c.l.b16 %v4283
  %v8965 = vunpack.c.h.b16 %v4283
  %v8966 = vunpack.c.l.b16 %v4284
  %v8967 = vunpack.c.h.b16 %v4284
  %v8968 = vunpack.c.l.b16 %v4285
  %v8969 = vunpack.c.h.b16 %v4285
  %v8970 = vunpack.c.l.b16 %v4286
  %v8971 = vunpack.c.h.b16 %v4286
  %v8972 = vunpack.c.l.b16 %v4287
  %v8973 = vunpack.c.h.b16 %v4287
  %v8974 = vunpack.c.l.b16 %v4288
  %v8975 = vunpack.c.h.b16 %v4288
  %v8976 = vunpack.c.l.b16 %v4289
  %v8977 = vunpack.c.h.b16 %v4289
  %v8978 = vunpack.c.l.b16 %v4290
  %v8979 = vunpack.c.h.b16 %v4290
  %v8980 = vunpack.c.l.b16 %v4291
  %v8981 = vunpack.c.h.b16 %v4291
  %v8982 = vunpack.c.l.b16 %v4292
  %v8983 = vunpack.c.h.b16 %v4292
  %v8984 = vunpack.c.l.b16 %v4293
  %v8985 = vunpack.c.h.b16 %v4293
  %v8986 = vunpack.c.l.b16 %v4294
  %v8987 = vunpack.c.h.b16 %v4294
  %v8988 = vunpack.c.l.b16 %v4295
  %v8989 = vunpack.c.h.b16 %v4295
  %v8990 = vunpack.c.l.b16 %v4296
  %v8991 = vunpack.c.h.b16 %v4296
  %v8992 = vunpack.c.l.b16 %v4297
  %v8993 = vunpack.c.h.b16 %v4297
  %v8994 = vunpack.c.l.b16 %v4298
  %v8995 = vunpack.c.h.b16 %v4298
  %v8996 = vunpack.c.l.b16 %v4299
  %v8997 = vunpack.c.h.b16 %v4299
  %v8998 = vunpack.c.l.b16 %v4300
  %v8999 = vunpack.c.h.b16 %v4300
  %v9000 = vunpack.c.l.b16 %v4301
  %v9001 = vunpack.c.h.b16 %v4301
  %v9002 = vunpack.c.l.b16 %v4302
  %v9003 = vunpack.c.h.b16 %v4302
  %v9004 = vunpack.c.l.b16 %v4303
  %v9005 = vunpack.c.h.b16 %v4303
  %v9006 = vunpack.c.l.b16 %v4304
  %v9007 = vunpack.c.h.b16 %v4304
  %v9008 = vunpack.c.l.b16 %v4305
  %v9009 = vunpack.c.h.b16 %v4305
  %v9010 = vunpack.c.l.b16 %v4306
  %v9011 = vunpack.c.h.b16 %v4306
  %v9012 = vunpack.c.l.b16 %v4307
  %v9013 = vunpack.c.h.b16 %v4307
  %v9014 = vunpack.c.l.b16 %v4308
  %v9015 = vunpack.c.h.b16 %v4308
  %v9016 = vunpack.c.l.b16 %v4309
  %v9017 = vunpack.c.h.b16 %v4309
  %v9018 = vunpack.c.l.b16 %v4310
  %v9019 = vunpack.c.h.b16 %v4310
  %v9020 = vunpack.c.l.b16 %v4311
  %v9021 = vunpack.c.h.b16 %v4311
  %v9022 = vunpack.c.l.b16 %v4312
  %v9023 = vunpack.c.h.b16 %v4312
  %v9024 = vunpack.c.l.b16 %v4313
  %v9025 = vunpack.c.h.b16 %v4313
  %v9026 = vunpack.c.l.b16 %v4314
  %v9027 = vunpack.c.h.b16 %v4314
  %v9028 = vunpack.c.l.b16 %v4315
  %v9029 = vunpack.c.h.b16 %v4315
  %v9030 = vunpack.c.l.b16 %v4316
  %v9031 = vunpack.c.h.b16 %v4316
  %v9032 = vunpack.c.l.b16 %v4317
  %v9033 = vunpack.c.h.b16 %v4317
  %v9034 = vunpack.c.l.b16 %v4318
  %v9035 = vunpack.c.h.b16 %v4318
  %v9036 = vunpack.c.l.b16 %v4319
  %v9037 = vunpack.c.h.b16 %v4319
  %v9038 = vunpack.c.l.b16 %v4320
  %v9039 = vunpack.c.h.b16 %v4320
  %v9040 = vunpack.c.l.b16 %v4321
  %v9041 = vunpack.c.h.b16 %v4321
  %v9042 = vunpack.c.l.b16 %v4322
  %v9043 = vunpack.c.h.b16 %v4322
  %v9044 = vunpack.c.l.b16 %v4323
  %v9045 = vunpack.c.h.b16 %v4323
  %v9046 = vunpack.c.l.b16 %v4324
  %v9047 = vunpack.c.h.b16 %v4324
  %v9048 = vunpack.c.l.b16 %v4325
  %v9049 = vunpack.c.h.b16 %v4325
  %v9050 = vunpack.c.l.b16 %v4326
  %v9051 = vunpack.c.h.b16 %v4326
  %v9052 = vunpack.c.l.b16 %v4327
  %v9053 = vunpack.c.h.b16 %v4327
  %v9054 = vunpack.c.l.b16 %v4328
  %v9055 = vunpack.c.h.b16 %v4328
  %v9056 = vunpack.c.l.b16 %v4329
  %v9057 = vunpack.c.h.b16 %v4329
  %v9058 = vunpack.c.l.b16 %v4330
  %v9059 = vunpack.c.h.b16 %v4330
  %v9060 = vunpack.c.l.b16 %v4331
  %v9061 = vunpack.c.h.b16 %v4331
  %v9062 = vunpack.c.l.b16 %v4332
  %v9063 = vunpack.c.h.b16 %v4332
  %v9064 = vunpack.c.l.b16 %v4333
  %v9065 = vunpack.c.h.b16 %v4333
  %v9066 = vunpack.c.l.b16 %v4334
  %v9067 = vunpack.c.h.b16 %v4334
  %v9068 = vunpack.c.l.b16 %v4335
  %v9069 = vunpack.c.h.b16 %v4335
  %v9070 = vpack.c.b16 %v6022, %v5998
  %v9071 = vpack.c.b16 %v6023, %v5999
  %v9072 = vpack.c.b16 %v6024, %v6000
  %v9073 = vpack.c.b16 %v6025, %v6001
  %v9074 = vpack.c.b16 %v6026, %v6002
  %v9075 = vpack.c.b16 %v6027, %v6003
  %v9076 = vpack.c.b16 %v6028, %v6004
  %v9077 = vpack.c.b16 %v6029, %v6005
  %v9078 = vpack.c.b16 %v6030, %v6006
  %v9079 = vpack.c.b16 %v6031, %v6007
  %v9080 = vpack.c.b16 %v6032, %v6008
  %v9081 = vpack.c.b16 %v6033, %v6009
  %v9082 = vpack.c.b16 %v6034, %v6010
  %v9083 = vpack.c.b16 %v6035, %v6011
  %v9084 = vpack.c.b16 %v6036, %v6012
  %v9085 = vpack.c.b16 %v6037, %v6013
  %v9086 = vpack.c.b16 %v6038, %v6014
  %v9087 = vpack.c.b16 %v6039, %v6015
  %v9088 = vpack.c.b16 %v6040, %v6016
  %v9089 = vpack.c.b16 %v6041, %v6017
  %v9090 = vpack.c.b16 %v6042, %v6018
  %v9091 = vpack.c.b16 %v6043, %v6019
  %v9092 = vpack.c.b16 %v6044, %v6020
  %v9093 = vpack.c.b16 %v6045, %v6021
  %v9094 = vpack.c.b16 %v6070, %v6046
  %v9095 = vpack.c.b16 %v6071, %v6047
  %v9096 = vpack.c.b16 %v6072, %v6048
  %v9097 = vpack.c.b16 %v6073, %v6049
  %v9098 = vpack.c.b16 %v6074, %v6050
  %v9099 = vpack.c.b16 %v6075, %v6051
  %v9100 = vpack.c.b16 %v6076, %v6052
  %v9101 = vpack.c.b16 %v6077, %v6053
  %v9102 = vpack.c.b16 %v6078, %v6054
  %v9103 = vpack.c.b16 %v6079, %v6055
  %v9104 = vpack.c.b16 %v6080, %v6056
  %v9105 = vpack.c.b16 %v6081, %v6057
  %v9106 = vpack.c.b16 %v6082, %v6058
  %v9107 = vpack.c.b16 %v6083, %v6059
  %v9108 = vpack.c.b16 %v6084, %v6060
  %v9109 = vpack.c.b16 %v6085, %v6061
  %v9110 = vpack.c.b16 %v6086, %v6062
  %v9111 = vpack.c.b16 %v6087, %v6063
  %v9112 = vpack.c.b16 %v6088, %v6064
  %v9113 = vpack.c.b16 %v6089, %v6065
  %v9114 = vpack.c.b16 %v6090, %v6066
  %v9115 = vpack.c.b16 %v6091, %v6067
  %v9116 = vpack.c.b16 %v6092, %v6068
  %v9117 = vpack.c.b16 %v6093, %v6069
  %v9118 = vpack.c.b16 %v6118, %v6094
  %v9119 = vpack.c.b16 %v6119, %v6095
  %v9120 = vpack.c.b16 %v6120, %v6096
  %v9121 = vpack.c.b16 %v6121, %v6097
  %v9122 = vpack.c.b16 %v6122, %v6098
  %v9123 = vpack.c.b16 %v6123, %v6099
  %v9124 = vpack.c.b16 %v6124, %v6100
  %v9125 = vpack.c.b16 %v6125, %v6101
  %v9126 = vpack.c.b16 %v6126, %v6102
  %v9127 = vpack.c.b16 %v6127, %v6103
  %v9128 = vpack.c.b16 %v6128, %v6104
  %v9129 = vpack.c.b16 %v6129, %v6105
  %v9130 = vpack.c.b16 %v6130, %v6106
  %v9131 = vpack.c.b16 %v6131, %v6107
  %v9132 = vpack.c.b16 %v6132, %v6108
  %v9133 = vpack.c.b16 %v6133, %v6109
  %v9134 = vpack.c.b16 %v6134, %v6110
  %v9135 = vpack.c.b16 %v6135, %v6111
  %v9136 = vpack.c.b16 %v6136, %v6112
  %v9137 = vpack.c.b16 %v6137, %v6113
  %v9138 = vpack.c.b16 %v6138, %v6114
  %v9139 = vpack.c.b16 %v6139, %v6115
  %v9140 = vpack.c.b16 %v6140, %v6116
  %v9141 = vpack.c.b16 %v6141, %v6117
  %v9142 = vpack.c.b16 %v6166, %v6142
  %v9143 = vpack.c.b16 %v6167, %v6143
  %v9144 = vpack.c.b16 %v6168, %v6144
  %v9145 = vpack.c.b16 %v6169, %v6145
  %v9146 = vpack.c.b16 %v6170, %v6146
  %v9147 = vpack.c.b16 %v6171, %v6147
  %v9148 = vpack.c.b16 %v6172, %v6148
  %v9149 = vpack.c.b16 %v6173, %v6149
  %v9150 = vpack.c.b16 %v6174, %v6150
  %v9151 = vpack.c.b16 %v6175, %v6151
  %v9152 = vpack.c.b16 %v6176, %v6152
  %v9153 = vpack.c.b16 %v6177, %v6153
  %v9154 = vpack.c.b16 %v6178, %v6154
  %v9155 = vpack.c.b16 %v6179, %v6155
  %v9156 = vpack.c.b16 %v6180, %v6156
  %v9157 = vpack.c.b16 %v6181, %v6157
  %v9158 = vpack.c.b16 %v6182, %v6158
  %v9159 = vpack.c.b16 %v6183, %v6159
  %v9160 = vpack.c.b16 %v6184, %v6160
  %v9161 = vpack.c.b16 %v6185, %v6161
  %v9162 = vpack.c.b16 %v6186, %v6162
  %v9163 = vpack.c.b16 %v6187, %v6163
  %v9164 = vpack.c.b16 %v6188, %v6164
  %v9165 = vpack.c.b16 %v6189, %v6165
  %v9166 = vpack.c.b16 %v6214, %v6190
  %v9167 = vpack.c.b16 %v6215, %v6191
  %v9168 = vpack.c.b16 %v6216, %v6192
  %v9169 = vpack.c.b16 %v6217, %v6193
  %v9170 = vpack.c.b16 %v6218, %v6194
  %v9171 = vpack.c.b16 %v6219, %v6195
  %v9172 = vpack.c.b16 %v6220, %v6196
  %v9173 = vpack.c.b16 %v6221, %v6197
  %v9174 = vpack.c.b16 %v6222, %v6198
  %v9175 = vpack.c.b16 %v6223, %v6199
  %v9176 = vpack.c.b16 %v6224, %v6200
  %v9177 = vpack.c.b16 %v6225, %v6201
  %v9178 = vpack.c.b16 %v6226, %v6202
  %v9179 = vpack.c.b16 %v6227, %v6203
  %v9180 = vpack.c.b16 %v6228, %v6204
  %v9181 = vpack.c.b16 %v6229, %v6205
  %v9182 = vpack.c.b16 %v6230, %v6206
  %v9183 = vpack.c.b16 %v6231, %v6207
  %v9184 = vpack.c.b16 %v6232, %v6208
  %v9185 = vpack.c.b16 %v6233, %v6209
  %v9186 = vpack.c.b16 %v6234, %v6210
  %v9187 = vpack.c.b16 %v6235, %v6211
  %v9188 = vpack.c.b16 %v6236, %v6212
  %v9189 = vpack.c.b16 %v6237, %v6213
  %v9190 = vpack.c.b16 %v6262, %v6238
  %v9191 = vpack.c.b16 %v6263, %v6239
  %v9192 = vpack.c.b16 %v6264, %v6240
  %v9193 = vpack.c.b16 %v6265, %v6241
  %v9194 = vpack.c.b16 %v6266, %v6242
  %v9195 = vpack.c.b16 %v6267, %v6243
  %v9196 = vpack.c.b16 %v6268, %v6244
  %v9197 = vpack.c.b16 %v6269, %v6245
  %v9198 = vpack.c.b16 %v6270, %v6246
  %v9199 = vpack.c.b16 %v6271, %v6247
  %v9200 = vpack.c.b16 %v6272, %v6248
  %v9201 = vpack.c.b16 %v6273, %v6249
  %v9202 = vpack.c.b16 %v6274, %v6250
  %v9203 = vpack.c.b16 %v6275, %v6251
  %v9204 = vpack.c.b16 %v6276, %v6252
  %v9205 = vpack.c.b16 %v6277, %v6253
  %v9206 = vpack.c.b16 %v6278, %v6254
  %v9207 = vpack.c.b16 %v6279, %v6255
  %v9208 = vpack.c.b16 %v6280, %v6256
  %v9209 = vpack.c.b16 %v6281, %v6257
  %v9210 = vpack.c.b16 %v6282, %v6258
  %v9211 = vpack.c.b16 %v6283, %v6259
  %v9212 = vpack.c.b16 %v6284, %v6260
  %v9213 = vpack.c.b16 %v6285, %v6261
  %v9214 = vpack.c.b16 %v6310, %v6286
  %v9215 = vpack.c.b16 %v6311, %v6287
  %v9216 = vpack.c.b16 %v6312, %v6288
  %v9217 = vpack.c.b16 %v6313, %v6289
  %v9218 = vpack.c.b16 %v6314, %v6290
  %v9219 = vpack.c.b16 %v6315, %v6291
  %v9220 = vpack.c.b16 %v6316, %v6292
  %v9221 = vpack.c.b16 %v6317, %v6293
  %v9222 = vpack.c.b16 %v6318, %v6294
  %v9223 = vpack.c.b16 %v6319, %v6295
  %v9224 = vpack.c.b16 %v6320, %v6296
  %v9225 = vpack.c.b16 %v6321, %v6297
  %v9226 = vpack.c.b16 %v6322, %v6298
  %v9227 = vpack.c.b16 %v6323, %v6299
  %v9228 = vpack.c.b16 %v6324, %v6300
  %v9229 = vpack.c.b16 %v6325, %v6301
  %v9230 = vpack.c.b16 %v6326, %v6302
  %v9231 = vpack.c.b16 %v6327, %v6303
  %v9232 = vpack.c.b16 %v6328, %v6304
  %v9233 = vpack.c.b16 %v6329, %v6305
  %v9234 = vpack.c.b16 %v6330, %v6306
  %v9235 = vpack.c.b16 %v6331, %v6307
  %v9236 = vpack.c.b16 %v6332, %v6308
  %v9237 = vpack.c.b16 %v6333, %v6309
  %v9238 = vpack.c.b16 %v6358, %v6334
  %v9239 = vpack.c.b16 %v6359, %v6335
  %v9240 = vpack.c.b16 %v6360, %v6336
  %v9241 = vpack.c.b16 %v6361, %v6337
  %v9242 = vpack.c.b16 %v6362, %v6338
  %v9243 = vpack.c.b16 %v6363, %v6339
  %v9244 = vpack.c.b16 %v6364, %v6340
  %v9245 = vpack.c.b16 %v6365, %v6341
  %v9246 = vpack.c.b16 %v6366, %v6342
  %v9247 = vpack.c.b16 %v6367, %v6343
  %v9248 = vpack.c.b16 %v6368, %v6344
  %v9249 = vpack.c.b16 %v6369, %v6345
  %v9250 = vpack.c.b16 %v6370, %v6346
  %v9251 = vpack.c.b16 %v6371, %v6347
  %v9252 = vpack.c.b16 %v6372, %v6348
  %v9253 = vpack.c.b16 %v6373, %v6349
  %v9254 = vpack.c.b16 %v6374, %v6350
  %v9255 = vpack.c.b16 %v6375, %v6351
  %v9256 = vpack.c.b16 %v6376, %v6352
  %v9257 = vpack.c.b16 %v6377, %v6353
  %v9258 = vpack.c.b16 %v6378, %v6354
  %v9259 = vpack.c.b16 %v6379, %v6355
  %v9260 = vpack.c.b16 %v6380, %v6356
  %v9261 = vpack.c.b16 %v6381, %v6357
  %v9262 = vpack.c.b16 %v6406, %v6382
  %v9263 = vpack.c.b16 %v6407, %v6383
  %v9264 = vpack.c.b16 %v6408, %v6384
  %v9265 = vpack.c.b16 %v6409, %v6385
  %v9266 = vpack.c.b16 %v6410, %v6386
  %v9267 = vpack.c.b16 %v6411, %v6387
  %v9268 = vpack.c.b16 %v6412, %v6388
  %v9269 = vpack.c.b16 %v6413, %v6389
  %v9270 = vpack.c.b16 %v6414, %v6390
  %v9271 = vpack.c.b16 %v6415, %v6391
  %v9272 = vpack.c.b16 %v6416, %v6392
  %v9273 = vpack.c.b16 %v6417, %v6393
  %v9274 = vpack.c.b16 %v6418, %v6394
  %v9275 = vpack.c.b16 %v6419, %v6395
  %v9276 = vpack.c.b16 %v6420, %v6396
  %v9277 = vpack.c.b16 %v6421, %v6397
  %v9278 = vpack.c.b16 %v6422, %v6398
  %v9279 = vpack.c.b16 %v6423, %v6399
  %v9280 = vpack.c.b16 %v6424, %v6400
  %v9281 = vpack.c.b16 %v6425, %v6401
  %v9282 = vpack.c.b16 %v6426, %v6402
  %v9283 = vpack.c.b16 %v6427, %v6403
  %v9284 = vpack.c.b16 %v6428, %v6404
  %v9285 = vpack.c.b16 %v6429, %v6405
  %v9286 = vpack.c.b16 %v6454, %v6430
  %v9287 = vpack.c.b16 %v6455, %v6431
  %v9288 = vpack.c.b16 %v6456, %v6432
  %v9289 = vpack.c.b16 %v6457, %v6433
  %v9290 = vpack.c.b16 %v6458, %v6434
  %v9291 = vpack.c.b16 %v6459, %v6435
  %v9292 = vpack.c.b16 %v6460, %v6436
  %v9293 = vpack.c.b16 %v6461, %v6437
  %v9294 = vpack.c.b16 %v6462, %v6438
  %v9295 = vpack.c.b16 %v6463, %v6439
  %v9296 = vpack.c.b16 %v6464, %v6440
  %v9297 = vpack.c.b16 %v6465, %v6441
  %v9298 = vpack.c.b16 %v6466, %v6442
  %v9299 = vpack.c.b16 %v6467, %v6443
  %v9300 = vpack.c.b16 %v6468, %v6444
  %v9301 = vpack.c.b16 %v6469, %v6445
  %v9302 = vpack.c.b16 %v6470, %v6446
  %v9303 = vpack.c.b16 %v6471, %v6447
  %v9304 = vpack.c.b16 %v6472, %v6448
  %v9305 = vpack.c.b16 %v6473, %v6449
  %v9306 = vpack.c.b16 %v6474, %v6450
  %v9307 = vpack.c.b16 %v6475, %v6451
  %v9308 = vpack.c.b16 %v6476, %v6452
  %v9309 = vpack.c.b16 %v6477, %v6453
  %v9310 = vpack.c.b16 %v6502, %v6478
  %v9311 = vpack.c.b16 %v6503, %v6479
  %v9312 = vpack.c.b16 %v6504, %v6480
  %v9313 = vpack.c.b16 %v6505, %v6481
  %v9314 = vpack.c.b16 %v6506, %v6482
  %v9315 = vpack.c.b16 %v6507, %v6483
  %v9316 = vpack.c.b16 %v6508, %v6484
  %v9317 = vpack.c.b16 %v6509, %v6485
  %v9318 = vpack.c.b16 %v6510, %v6486
  %v9319 = vpack.c.b16 %v6511, %v6487
  %v9320 = vpack.c.b16 %v6512, %v6488
  %v9321 = vpack.c.b16 %v6513, %v6489
  %v9322 = vpack.c.b16 %v6514, %v6490
  %v9323 = vpack.c.b16 %v6515, %v6491
  %v9324 = vpack.c.b16 %v6516, %v6492
  %v9325 = vpack.c.b16 %v6517, %v6493
  %v9326 = vpack.c.b16 %v6518, %v6494
  %v9327 = vpack.c.b16 %v6519, %v6495
  %v9328 = vpack.c.b16 %v6520, %v6496
  %v9329 = vpack.c.b16 %v6521, %v6497
  %v9330 = vpack.c.b16 %v6522, %v6498
  %v9331 = vpack.c.b16 %v6523, %v6499
  %v9332 = vpack.c.b16 %v6524, %v6500
  %v9333 = vpack.c.b16 %v6525, %v6501
  %v9334 = vpack.c.b16 %v6550, %v6526
  %v9335 = vpack.c.b16 %v6551, %v6527
  %v9336 = vpack.c.b16 %v6552, %v6528
  %v9337 = vpack.c.b16 %v6553, %v6529
  %v9338 = vpack.c.b16 %v6554, %v6530
  %v9339 = vpack.c.b16 %v6555, %v6531
  %v9340 = vpack.c.b16 %v6556, %v6532
  %v9341 = vpack.c.b16 %v6557, %v6533
  %v9342 = vpack.c.b16 %v6558, %v6534
  %v9343 = vpack.c.b16 %v6559, %v6535
  %v9344 = vpack.c.b16 %v6560, %v6536
  %v9345 = vpack.c.b16 %v6561, %v6537
  %v9346 = vpack.c.b16 %v6562, %v6538
  %v9347 = vpack.c.b16 %v6563, %v6539
  %v9348 = vpack.c.b16 %v6564, %v6540
  %v9349 = vpack.c.b16 %v6565, %v6541
  %v9350 = vpack.c.b16 %v6566, %v6542
  %v9351 = vpack.c.b16 %v6567, %v6543
  %v9352 = vpack.c.b16 %v6568, %v6544
  %v9353 = vpack.c.b16 %v6569, %v6545
  %v9354 = vpack.c.b16 %v6570, %v6546
  %v9355 = vpack.c.b16 %v6571, %v6547
  %v9356 = vpack.c.b16 %v6572, %v6548
  %v9357 = vpack.c.b16 %v6573, %v6549
  %v9358 = vpack.c.b16 %v6598, %v6574
  %v9359 = vpack.c.b16 %v6599, %v6575
  %v9360 = vpack.c.b16 %v6600, %v6576
  %v9361 = vpack.c.b16 %v6601, %v6577
  %v9362 = vpack.c.b16 %v6602, %v6578
  %v9363 = vpack.c.b16 %v6603, %v6579
  %v9364 = vpack.c.b16 %v6604, %v6580
  %v9365 = vpack.c.b16 %v6605, %v6581
  %v9366 = vpack.c.b16 %v6606, %v6582
  %v9367 = vpack.c.b16 %v6607, %v6583
  %v9368 = vpack.c.b16 %v6608, %v6584
  %v9369 = vpack.c.b16 %v6609, %v6585
  %v9370 = vpack.c.b16 %v6610, %v6586
  %v9371 = vpack.c.b16 %v6611, %v6587
  %v9372 = vpack.c.b16 %v6612, %v6588
  %v9373 = vpack.c.b16 %v6613, %v6589
  %v9374 = vpack.c.b16 %v6614, %v6590
  %v9375 = vpack.c.b16 %v6615, %v6591
  %v9376 = vpack.c.b16 %v6616, %v6592
  %v9377 = vpack.c.b16 %v6617, %v6593
  %v9378 = vpack.c.b16 %v6618, %v6594
  %v9379 = vpack.c.b16 %v6619, %v6595
  %v9380 = vpack.c.b16 %v6620, %v6596
  %v9381 = vpack.c.b16 %v6621, %v6597
  %v9382 = vpack.c.b16 %v6646, %v6622
  %v9383 = vpack.c.b16 %v6647, %v6623
  %v9384 = vpack.c.b16 %v6648, %v6624
  %v9385 = vpack.c.b16 %v6649, %v6625
  %v9386 = vpack.c.b16 %v6650, %v6626
  %v9387 = vpack.c.b16 %v6651, %v6627
  %v9388 = vpack.c.b16 %v6652, %v6628
  %v9389 = vpack.c.b16 %v6653, %v6629
  %v9390 = vpack.c.b16 %v6654, %v6630
  %v9391 = vpack.c.b16 %v6655, %v6631
  %v9392 = vpack.c.b16 %v6656, %v6632
  %v9393 = vpack.c.b16 %v6657, %v6633
  %v9394 = vpack.c.b16 %v6658, %v6634
  %v9395 = vpack.c.b16 %v6659, %v6635
  %v9396 = vpack.c.b16 %v6660, %v6636
  %v9397 = vpack.c.b16 %v6661, %v6637
  %v9398 = vpack.c.b16 %v6662, %v6638
  %v9399 = vpack.c.b16 %v6663, %v6639
  %v9400 = vpack.c.b16 %v6664, %v6640
  %v9401 = vpack.c.b16 %v6665, %v6641
  %v9402 = vpack.c.b16 %v6666, %v6642
  %v9403 = vpack.c.b16 %v6667, %v6643
  %v9404 = vpack.c.b16 %v6668, %v6644
  %v9405 = vpack.c.b16 %v6669, %v6645
  %v9406 = vpack.c.b16 %v6694, %v6670
  %v9407 = vpack.c.b16 %v6695, %v6671
  %v9408 = vpack.c.b16 %v6696, %v6672
  %v9409 = vpack.c.b16 %v6697, %v6673
  %v9410 = vpack.c.b16 %v6698, %v6674
  %v9411 = vpack.c.b16 %v6699, %v6675
  %v9412 = vpack.c.b16 %v6700, %v6676
  %v9413 = vpack.c.b16 %v6701, %v6677
  %v9414 = vpack.c.b16 %v6702, %v6678
  %v9415 = vpack.c.b16 %v6703, %v6679
  %v9416 = vpack.c.b16 %v6704, %v6680
  %v9417 = vpack.c.b16 %v6705, %v6681
  %v9418 = vpack.c.b16 %v6706, %v6682
  %v9419 = vpack.c.b16 %v6707, %v6683
  %v9420 = vpack.c.b16 %v6708, %v6684
  %v9421 = vpack.c.b16 %v6709, %v6685
  %v9422 = vpack.c.b16 %v6710, %v6686
  %v9423 = vpack.c.b16 %v6711, %v6687
  %v9424 = vpack.c.b16 %v6712, %v6688
  %v9425 = vpack.c.b16 %v6713, %v6689
  %v9426 = vpack.c.b16 %v6714, %v6690
  %v9427 = vpack.c.b16 %v6715, %v6691
  %v9428 = vpack.c.b16 %v6716, %v6692
  %v9429 = vpack.c.b16 %v6717, %v6693
  %v9430 = vpack.c.b16 %v6742, %v6718
  %v9431 = vpack.c.b16 %v6743, %v6719
  %v9432 = vpack.c.b16 %v6744, %v6720
  %v9433 = vpack.c.b16 %v6745, %v6721
  %v9434 = vpack.c.b16 %v6746, %v6722
  %v9435 = vpack.c.b16 %v6747, %v6723
  %v9436 = vpack.c.b16 %v6748, %v6724
  %v9437 = vpack.c.b16 %v6749, %v6725
  %v9438 = vpack.c.b16 %v6750, %v6726
  %v9439 = vpack.c.b16 %v6751, %v6727
  %v9440 = vpack.c.b16 %v6752, %v6728
  %v9441 = vpack.c.b16 %v6753, %v6729
  %v9442 = vpack.c.b16 %v6754, %v6730
  %v9443 = vpack.c.b16 %v6755, %v6731
  %v9444 = vpack.c.b16 %v6756, %v6732
  %v9445 = vpack.c.b16 %v6757, %v6733
  %v9446 = vpack.c.b16 %v6758, %v6734
  %v9447 = vpack.c.b16 %v6759, %v6735
  %v9448 = vpack.c.b16 %v6760, %v6736
  %v9449 = vpack.c.b16 %v6761, %v6737
  %v9450 = vpack.c.b16 %v6762, %v6738
  %v9451 = vpack.c.b16 %v6763, %v6739
  %v9452 = vpack.c.b16 %v6764, %v6740
  %v9453 = vpack.c.b16 %v6765, %v6741
  %v9454 = vpack.c.b16 %v6790, %v6766
  %v9455 = vpack.c.b16 %v6791, %v6767
  %v9456 = vpack.c.b16 %v6792, %v6768
  %v9457 = vpack.c.b16 %v6793, %v6769
  %v9458 = vpack.c.b16 %v6794, %v6770
  %v9459 = vpack.c.b16 %v6795, %v6771
  %v9460 = vpack.c.b16 %v6796, %v6772
  %v9461 = vpack.c.b16 %v6797, %v6773
  %v9462 = vpack.c.b16 %v6798, %v6774
  %v9463 = vpack.c.b16 %v6799, %v6775
  %v9464 = vpack.c.b16 %v6800, %v6776
  %v9465 = vpack.c.b16 %v6801, %v6777
  %v9466 = vpack.c.b16 %v6802, %v6778
  %v9467 = vpack.c.b16 %v6803, %v6779
  %v9468 = vpack.c.b16 %v6804, %v6780
  %v9469 = vpack.c.b16 %v6805, %v6781
  %v9470 = vpack.c.b16 %v6806, %v6782
  %v9471 = vpack.c.b16 %v6807, %v6783
  %v9472 = vpack.c.b16 %v6808, %v6784
  %v9473 = vpack.c.b16 %v6809, %v6785
  %v9474 = vpack.c.b16 %v6810, %v6786
  %v9475 = vpack.c.b16 %v6811, %v6787
  %v9476 = vpack.c.b16 %v6812, %v6788
  %v9477 = vpack.c.b16 %v6813, %v6789
  %v9478 = vpack.c.b16 %v6838, %v6814
  %v9479 = vpack.c.b16 %v6839, %v6815
  %v9480 = vpack.c.b16 %v6840, %v6816
  %v9481 = vpack.c.b16 %v6841, %v6817
  %v9482 = vpack.c.b16 %v6842, %v6818
  %v9483 = vpack.c.b16 %v6843, %v6819
  %v9484 = vpack.c.b16 %v6844, %v6820
  %v9485 = vpack.c.b16 %v6845, %v6821
  %v9486 = vpack.c.b16 %v6846, %v6822
  %v9487 = vpack.c.b16 %v6847, %v6823
  %v9488 = vpack.c.b16 %v6848, %v6824
  %v9489 = vpack.c.b16 %v6849, %v6825
  %v9490 = vpack.c.b16 %v6850, %v6826
  %v9491 = vpack.c.b16 %v6851, %v6827
  %v9492 = vpack.c.b16 %v6852, %v6828
  %v9493 = vpack.c.b16 %v6853, %v6829
  %v9494 = vpack.c.b16 %v6854, %v6830
  %v9495 = vpack.c.b16 %v6855, %v6831
  %v9496 = vpack.c.b16 %v6856, %v6832
  %v9497 = vpack.c.b16 %v6857, %v6833
  %v9498 = vpack.c.b16 %v6858, %v6834
  %v9499 = vpack.c.b16 %v6859, %v6835
  %v9500 = vpack.c.b16 %v6860, %v6836
  %v9501 = vpack.c.b16 %v6861, %v6837
  %v9502 = vpack.c.b16 %v6886, %v6862
  %v9503 = vpack.c.b16 %v6887, %v6863
  %v9504 = vpack.c.b16 %v6888, %v6864
  %v9505 = vpack.c.b16 %v6889, %v6865
  %v9506 = vpack.c.b16 %v6890, %v6866
  %v9507 = vpack.c.b16 %v6891, %v6867
  %v9508 = vpack.c.b16 %v6892, %v6868
  %v9509 = vpack.c.b16 %v6893, %v6869
  %v9510 = vpack.c.b16 %v6894, %v6870
  %v9511 = vpack.c.b16 %v6895, %v6871
  %v9512 = vpack.c.b16 %v6896, %v6872
  %v9513 = vpack.c.b16 %v6897, %v6873
  %v9514 = vpack.c.b16 %v6898, %v6874
  %v9515 = vpack.c.b16 %v6899, %v6875
  %v9516 = vpack.c.b16 %v6900, %v6876
  %v9517 = vpack.c.b16 %v6901, %v6877
  %v9518 = vpack.c.b16 %v6902, %v6878
  %v9519 = vpack.c.b16 %v6903, %v6879
  %v9520 = vpack.c.b16 %v6904, %v6880
  %v9521 = vpack.c.b16 %v6905, %v6881
  %v9522 = vpack.c.b16 %v6906, %v6882
  %v9523 = vpack.c.b16 %v6907, %v6883
  %v9524 = vpack.c.b16 %v6908, %v6884
  %v9525 = vpack.c.b16 %v6909, %v6885
  %v9526 = vpack.c.b16 %v6934, %v6910
  %v9527 = vpack.c.b16 %v6935, %v6911
  %v9528 = vpack.c.b16 %v6936, %v6912
  %v9529 = vpack.c.b16 %v6937, %v6913
  %v9530 = vpack.c.b16 %v6938, %v6914
  %v9531 = vpack.c.b16 %v6939, %v6915
  %v9532 = vpack.c.b16 %v6940, %v6916
  %v9533 = vpack.c.b16 %v6941, %v6917
  %v9534 = vpack.c.b16 %v6942, %v6918
  %v9535 = vpack.c.b16 %v6943, %v6919
  %v9536 = vpack.c.b16 %v6944, %v6920
  %v9537 = vpack.c.b16 %v6945, %v6921
  %v9538 = vpack.c.b16 %v6946, %v6922
  %v9539 = vpack.c.b16 %v6947, %v6923
  %v9540 = vpack.c.b16 %v6948, %v6924
  %v9541 = vpack.c.b16 %v6949, %v6925
  %v9542 = vpack.c.b16 %v6950, %v6926
  %v9543 = vpack.c.b16 %v6951, %v6927
  %v9544 = vpack.c.b16 %v6952, %v6928
  %v9545 = vpack.c.b16 %v6953, %v6929
  %v9546 = vpack.c.b16 %v6954, %v6930
  %v9547 = vpack.c.b16 %v6955, %v6931
  %v9548 = vpack.c.b16 %v6956, %v6932
  %v9549 = vpack.c.b16 %v6957, %v6933
  %v9550 = vpack.c.b16 %v6982, %v6958
  %v9551 = vpack.c.b16 %v6983, %v6959
  %v9552 = vpack.c.b16 %v6984, %v6960
  %v9553 = vpack.c.b16 %v6985, %v6961
  %v9554 = vpack.c.b16 %v6986, %v6962
  %v9555 = vpack.c.b16 %v6987, %v6963
  %v9556 = vpack.c.b16 %v6988, %v6964
  %v9557 = vpack.c.b16 %v6989, %v6965
  %v9558 = vpack.c.b16 %v6990, %v6966
  %v9559 = vpack.c.b16 %v6991, %v6967
  %v9560 = vpack.c.b16 %v6992, %v6968
  %v9561 = vpack.c.b16 %v6993, %v6969
  %v9562 = vpack.c.b16 %v6994, %v6970
  %v9563 = vpack.c.b16 %v6995, %v6971
  %v9564 = vpack.c.b16 %v6996, %v6972
  %v9565 = vpack.c.b16 %v6997, %v6973
  %v9566 = vpack.c.b16 %v6998, %v6974
  %v9567 = vpack.c.b16 %v6999, %v6975
  %v9568 = vpack.c.b16 %v7000, %v6976
  %v9569 = vpack.c.b16 %v7001, %v6977
  %v9570 = vpack.c.b16 %v7002, %v6978
  %v9571 = vpack.c.b16 %v7003, %v6979
  %v9572 = vpack.c.b16 %v7004, %v6980
  %v9573 = vpack.c.b16 %v7005, %v6981
  %v9574 = vpack.c.b16 %v7030, %v7006
  %v9575 = vpack.c.b16 %v7031, %v7007
  %v9576 = vpack.c.b16 %v7032, %v7008
  %v9577 = vpack.c.b16 %v7033, %v7009
  %v9578 = vpack.c.b16 %v7034, %v7010
  %v9579 = vpack.c.b16 %v7035, %v7011
  %v9580 = vpack.c.b16 %v7036, %v7012
  %v9581 = vpack.c.b16 %v7037, %v7013
  %v9582 = vpack.c.b16 %v7038, %v7014
  %v9583 = vpack.c.b16 %v7039, %v7015
  %v9584 = vpack.c.b16 %v7040, %v7016
  %v9585 = vpack.c.b16 %v7041, %v7017
  %v9586 = vpack.c.b16 %v7042, %v7018
  %v9587 = vpack.c.b16 %v7043, %v7019
  %v9588 = vpack.c.b16 %v7044, %v7020
  %v9589 = vpack.c.b16 %v7045, %v7021
  %v9590 = vpack.c.b16 %v7046, %v7022
  %v9591 = vpack.c.b16 %v7047, %v7023
  %v9592 = vpack.c.b16 %v7048, %v7024
  %v9593 = vpack.c.b16 %v7049, %v7025
  %v9594 = vpack.c.b16 %v7050, %v7026
  %v9595 = vpack.c.b16 %v7051, %v7027
  %v9596 = vpack.c.b16 %v7052, %v7028
  %v9597 = vpack.c.b16 %v7053, %v7029
  %v9598 = vpack.c.b16 %v7078, %v7054
  %v9599 = vpack.c.b16 %v7079, %v7055
  %v9600 = vpack.c.b16 %v7080, %v7056
  %v9601 = vpack.c.b16 %v7081, %v7057
  %v9602 = vpack.c.b16 %v7082, %v7058
  %v9603 = vpack.c.b16 %v7083, %v7059
  %v9604 = vpack.c.b16 %v7084, %v7060
  %v9605 = vpack.c.b16 %v7085, %v7061
  %v9606 = vpack.c.b16 %v7086, %v7062
  %v9607 = vpack.c.b16 %v7087, %v7063
  %v9608 = vpack.c.b16 %v7088, %v7064
  %v9609 = vpack.c.b16 %v7089, %v7065
  %v9610 = vpack.c.b16 %v7090, %v7066
  %v9611 = vpack.c.b16 %v7091, %v7067
  %v9612 = vpack.c.b16 %v7092, %v7068
  %v9613 = vpack.c.b16 %v7093, %v7069
  %v9614 = vpack.c.b16 %v7094, %v7070
  %v9615 = vpack.c.b16 %v7095, %v7071
  %v9616 = vpack.c.b16 %v7096, %v7072
  %v9617 = vpack.c.b16 %v7097, %v7073
  %v9618 = vpack.c.b16 %v7098, %v7074
  %v9619 = vpack.c.b16 %v7099, %v7075
  %v9620 = vpack.c.b16 %v7100, %v7076
  %v9621 = vpack.c.b16 %v7101, %v7077
  %v9622 = vpack.c.b16 %v7126, %v7102
  %v9623 = vpack.c.b16 %v7127, %v7103
  %v9624 = vpack.c.b16 %v7128, %v7104
  %v9625 = vpack.c.b16 %v7129, %v7105
  %v9626 = vpack.c.b16 %v7130, %v7106
  %v9627 = vpack.c.b16 %v7131, %v7107
  %v9628 = vpack.c.b16 %v7132, %v7108
  %v9629 = vpack.c.b16 %v7133, %v7109
  %v9630 = vpack.c.b16 %v7134, %v7110
  %v9631 = vpack.c.b16 %v7135, %v7111
  %v9632 = vpack.c.b16 %v7136, %v7112
  %v9633 = vpack.c.b16 %v7137, %v7113
  %v9634 = vpack.c.b16 %v7138, %v7114
  %v9635 = vpack.c.b16 %v7139, %v7115
  %v9636 = vpack.c.b16 %v7140, %v7116
  %v9637 = vpack.c.b16 %v7141, %v7117
  %v9638 = vpack.c.b16 %v7142, %v7118
  %v9639 = vpack.c.b16 %v7143, %v7119
  %v9640 = vpack.c.b16 %v7144, %v7120
  %v9641 = vpack.c.b16 %v7145, %v7121
  %v9642 = vpack.c.b16 %v7146, %v7122
  %v9643 = vpack.c.b16 %v7147, %v7123
  %v9644 = vpack.c.b16 %v7148, %v7124
  %v9645 = vpack.c.b16 %v7149, %v7125
  %v9646 = vpack.c.b16 %v7174, %v7150
  %v9647 = vpack.c.b16 %v7175, %v7151
  %v9648 = vpack.c.b16 %v7176, %v7152
  %v9649 = vpack.c.b16 %v7177, %v7153
  %v9650 = vpack.c.b16 %v7178, %v7154
  %v9651 = vpack.c.b16 %v7179, %v7155
  %v9652 = vpack.c.b16 %v7180, %v7156
  %v9653 = vpack.c.b16 %v7181, %v7157
  %v9654 = vpack.c.b16 %v7182, %v7158
  %v9655 = vpack.c.b16 %v7183, %v7159
  %v9656 = vpack.c.b16 %v7184, %v7160
  %v9657 = vpack.c.b16 %v7185, %v7161
  %v9658 = vpack.c.b16 %v7186, %v7162
  %v9659 = vpack.c.b16 %v7187, %v7163
  %v9660 = vpack.c.b16 %v7188, %v7164
  %v9661 = vpack.c.b16 %v7189, %v7165
  %v9662 = vpack.c.b16 %v7190, %v7166
  %v9663 = vpack.c.b16 %v7191, %v7167
  %v9664 = vpack.c.b16 %v7192, %v7168
  %v9665 = vpack.c.b16 %v7193, %v7169
  %v9666 = vpack.c.b16 %v7194, %v7170
  %v9667 = vpack.c.b16 %v7195, %v7171
  %v9668 = vpack.c.b16 %v7196, %v7172
  %v9669 = vpack.c.b16 %v7197, %v7173
  %v9670 = vpack.c.b16 %v7222, %v7198
  %v9671 = vpack.c.b16 %v7223, %v7199
  %v9672 = vpack.c.b16 %v7224, %v7200
  %v9673 = vpack.c.b16 %v7225, %v7201
  %v9674 = vpack.c.b16 %v7226, %v7202
  %v9675 = vpack.c.b16 %v7227, %v7203
  %v9676 = vpack.c.b16 %v7228, %v7204
  %v9677 = vpack.c.b16 %v7229, %v7205
  %v9678 = vpack.c.b16 %v7230, %v7206
  %v9679 = vpack.c.b16 %v7231, %v7207
  %v9680 = vpack.c.b16 %v7232, %v7208
  %v9681 = vpack.c.b16 %v7233, %v7209
  %v9682 = vpack.c.b16 %v7234, %v7210
  %v9683 = vpack.c.b16 %v7235, %v7211
  %v9684 = vpack.c.b16 %v7236, %v7212
  %v9685 = vpack.c.b16 %v7237, %v7213
  %v9686 = vpack.c.b16 %v7238, %v7214
  %v9687 = vpack.c.b16 %v7239, %v7215
  %v9688 = vpack.c.b16 %v7240, %v7216
  %v9689 = vpack.c.b16 %v7241, %v7217
  %v9690 = vpack.c.b16 %v7242, %v7218
  %v9691 = vpack.c.b16 %v7243, %v7219
  %v9692 = vpack.c.b16 %v7244, %v7220
  %v9693 = vpack.c.b16 %v7245, %v7221
  %v9694 = vpack.c.b16 %v7270, %v7246
  %v9695 = vpack.c.b16 %v7271, %v7247
  %v9696 = vpack.c.b16 %v7272, %v7248
  %v9697 = vpack.c.b16 %v7273, %v7249
  %v9698 = vpack.c.b16 %v7274, %v7250
  %v9699 = vpack.c.b16 %v7275, %v7251
  %v9700 = vpack.c.b16 %v7276, %v7252
  %v9701 = vpack.c.b16 %v7277, %v7253
  %v9702 = vpack.c.b16 %v7278, %v7254
  %v9703 = vpack.c.b16 %v7279, %v7255
  %v9704 = vpack.c.b16 %v7280, %v7256
  %v9705 = vpack.c.b16 %v7281, %v7257
  %v9706 = vpack.c.b16 %v7282, %v7258
  %v9707 = vpack.c.b16 %v7283, %v7259
  %v9708 = vpack.c.b16 %v7284, %v7260
  %v9709 = vpack.c.b16 %v7285, %v7261
  %v9710 = vpack.c.b16 %v7286, %v7262
  %v9711 = vpack.c.b16 %v7287, %v7263
  %v9712 = vpack.c.b16 %v7288, %v7264
  %v9713 = vpack.c.b16 %v7289, %v7265
  %v9714 = vpack.c.b16 %v7290, %v7266
  %v9715 = vpack.c.b16 %v7291, %v7267
  %v9716 = vpack.c.b16 %v7292, %v7268
  %v9717 = vpack.c.b16 %v7293, %v7269
  %v9718 = vpack.c.b16 %v7318, %v7294
  %v9719 = vpack.c.b16 %v7319, %v7295
  %v9720 = vpack.c.b16 %v7320, %v7296
  %v9721 = vpack.c.b16 %v7321, %v7297
  %v9722 = vpack.c.b16 %v7322, %v7298
  %v9723 = vpack.c.b16 %v7323, %v7299
  %v9724 = vpack.c.b16 %v7324, %v7300
  %v9725 = vpack.c.b16 %v7325, %v7301
  %v9726 = vpack.c.b16 %v7326, %v7302
  %v9727 = vpack.c.b16 %v7327, %v7303
  %v9728 = vpack.c.b16 %v7328, %v7304
  %v9729 = vpack.c.b16 %v7329, %v7305
  %v9730 = vpack.c.b16 %v7330, %v7306
  %v9731 = vpack.c.b16 %v7331, %v7307
  %v9732 = vpack.c.b16 %v7332, %v7308
  %v9733 = vpack.c.b16 %v7333, %v7309
  %v9734 = vpack.c.b16 %v7334, %v7310
  %v9735 = vpack.c.b16 %v7335, %v7311
  %v9736 = vpack.c.b16 %v7336, %v7312
  %v9737 = vpack.c.b16 %v7337, %v7313
  %v9738 = vpack.c.b16 %v7338, %v7314
  %v9739 = vpack.c.b16 %v7339, %v7315
  %v9740 = vpack.c.b16 %v7340, %v7316
  %v9741 = vpack.c.b16 %v7341, %v7317
  %v9742 = vpack.c.b16 %v7366, %v7342
  %v9743 = vpack.c.b16 %v7367, %v7343
  %v9744 = vpack.c.b16 %v7368, %v7344
  %v9745 = vpack.c.b16 %v7369, %v7345
  %v9746 = vpack.c.b16 %v7370, %v7346
  %v9747 = vpack.c.b16 %v7371, %v7347
  %v9748 = vpack.c.b16 %v7372, %v7348
  %v9749 = vpack.c.b16 %v7373, %v7349
  %v9750 = vpack.c.b16 %v7374, %v7350
  %v9751 = vpack.c.b16 %v7375, %v7351
  %v9752 = vpack.c.b16 %v7376, %v7352
  %v9753 = vpack.c.b16 %v7377, %v7353
  %v9754 = vpack.c.b16 %v7378, %v7354
  %v9755 = vpack.c.b16 %v7379, %v7355
  %v9756 = vpack.c.b16 %v7380, %v7356
  %v9757 = vpack.c.b16 %v7381, %v7357
  %v9758 = vpack.c.b16 %v7382, %v7358
  %v9759 = vpack.c.b16 %v7383, %v7359
  %v9760 = vpack.c.b16 %v7384, %v7360
  %v9761 = vpack.c.b16 %v7385, %v7361
  %v9762 = vpack.c.b16 %v7386, %v7362
  %v9763 = vpack.c.b16 %v7387, %v7363
  %v9764 = vpack.c.b16 %v7388, %v7364
  %v9765 = vpack.c.b16 %v7389, %v7365
  %v9766 = vpack.c.b16 %v7414, %v7390
  %v9767 = vpack.c.b16 %v7415, %v7391
  %v9768 = vpack.c.b16 %v7416, %v7392
  %v9769 = vpack.c.b16 %v7417, %v7393
  %v9770 = vpack.c.b16 %v7418, %v7394
  %v9771 = vpack.c.b16 %v7419, %v7395
  %v9772 = vpack.c.b16 %v7420, %v7396
  %v9773 = vpack.c.b16 %v7421, %v7397
  %v9774 = vpack.c.b16 %v7422, %v7398
  %v9775 = vpack.c.b16 %v7423, %v7399
  %v9776 = vpack.c.b16 %v7424, %v7400
  %v9777 = vpack.c.b16 %v7425, %v7401
  %v9778 = vpack.c.b16 %v7426, %v7402
  %v9779 = vpack.c.b16 %v7427, %v7403
  %v9780 = vpack.c.b16 %v7428, %v7404
  %v9781 = vpack.c.b16 %v7429, %v7405
  %v9782 = vpack.c.b16 %v7430, %v7406
  %v9783 = vpack.c.b16 %v7431, %v7407
  %v9784 = vpack.c.b16 %v7432, %v7408
  %v9785 = vpack.c.b16 %v7433, %v7409
  %v9786 = vpack.c.b16 %v7434, %v7410
  %v9787 = vpack.c.b16 %v7435, %v7411
  %v9788 = vpack.c.b16 %v7436, %v7412
  %v9789 = vpack.c.b16 %v7437, %v7413
  %v9790 = vpack.c.b16 %v7462, %v7438
  %v9791 = vpack.c.b16 %v7463, %v7439
  %v9792 = vpack.c.b16 %v7464, %v7440
  %v9793 = vpack.c.b16 %v7465, %v7441
  %v9794 = vpack.c.b16 %v7466, %v7442
  %v9795 = vpack.c.b16 %v7467, %v7443
  %v9796 = vpack.c.b16 %v7468, %v7444
  %v9797 = vpack.c.b16 %v7469, %v7445
  %v9798 = vpack.c.b16 %v7470, %v7446
  %v9799 = vpack.c.b16 %v7471, %v7447
  %v9800 = vpack.c.b16 %v7472, %v7448
  %v9801 = vpack.c.b16 %v7473, %v7449
  %v9802 = vpack.c.b16 %v7474, %v7450
  %v9803 = vpack.c.b16 %v7475, %v7451
  %v9804 = vpack.c.b16 %v7476, %v7452
  %v9805 = vpack.c.b16 %v7477, %v7453
  %v9806 = vpack.c.b16 %v7478, %v7454
  %v9807 = vpack.c.b16 %v7479, %v7455
  %v9808 = vpack.c.b16 %v7480, %v7456
  %v9809 = vpack.c.b16 %v7481, %v7457
  %v9810 = vpack.c.b16 %v7482, %v7458
  %v9811 = vpack.c.b16 %v7483, %v7459
  %v9812 = vpack.c.b16 %v7484, %v7460
  %v9813 = vpack.c.b16 %v7485, %v7461
  %v9814 = vpack.c.b16 %v7510, %v7486
  %v9815 = vpack.c.b16 %v7511, %v7487
  %v9816 = vpack.c.b16 %v7512, %v7488
  %v9817 = vpack.c.b16 %v7513, %v7489
  %v9818 = vpack.c.b16 %v7514, %v7490
  %v9819 = vpack.c.b16 %v7515, %v7491
  %v9820 = vpack.c.b16 %v7516, %v7492
  %v9821 = vpack.c.b16 %v7517, %v7493
  %v9822 = vpack.c.b16 %v7518, %v7494
  %v9823 = vpack.c.b16 %v7519, %v7495
  %v9824 = vpack.c.b16 %v7520, %v7496
  %v9825 = vpack.c.b16 %v7521, %v7497
  %v9826 = vpack.c.b16 %v7522, %v7498
  %v9827 = vpack.c.b16 %v7523, %v7499
  %v9828 = vpack.c.b16 %v7524, %v7500
  %v9829 = vpack.c.b16 %v7525, %v7501
  %v9830 = vpack.c.b16 %v7526, %v7502
  %v9831 = vpack.c.b16 %v7527, %v7503
  %v9832 = vpack.c.b16 %v7528, %v7504
  %v9833 = vpack.c.b16 %v7529, %v7505
  %v9834 = vpack.c.b16 %v7530, %v7506
  %v9835 = vpack.c.b16 %v7531, %v7507
  %v9836 = vpack.c.b16 %v7532, %v7508
  %v9837 = vpack.c.b16 %v7533, %v7509
  %v9838 = vpack.c.b16 %v7558, %v7534
  %v9839 = vpack.c.b16 %v7559, %v7535
  %v9840 = vpack.c.b16 %v7560, %v7536
  %v9841 = vpack.c.b16 %v7561, %v7537
  %v9842 = vpack.c.b16 %v7562, %v7538
  %v9843 = vpack.c.b16 %v7563, %v7539
  %v9844 = vpack.c.b16 %v7564, %v7540
  %v9845 = vpack.c.b16 %v7565, %v7541
  %v9846 = vpack.c.b16 %v7566, %v7542
  %v9847 = vpack.c.b16 %v7567, %v7543
  %v9848 = vpack.c.b16 %v7568, %v7544
  %v9849 = vpack.c.b16 %v7569, %v7545
  %v9850 = vpack.c.b16 %v7570, %v7546
  %v9851 = vpack.c.b16 %v7571, %v7547
  %v9852 = vpack.c.b16 %v7572, %v7548
  %v9853 = vpack.c.b16 %v7573, %v7549
  %v9854 = vpack.c.b16 %v7574, %v7550
  %v9855 = vpack.c.b16 %v7575, %v7551
  %v9856 = vpack.c.b16 %v7576, %v7552
  %v9857 = vpack.c.b16 %v7577, %v7553
  %v9858 = vpack.c.b16 %v7578, %v7554
  %v9859 = vpack.c.b16 %v7579, %v7555
  %v9860 = vpack.c.b16 %v7580, %v7556
  %v9861 = vpack.c.b16 %v7581, %v7557
  %v9862 = vpack.c.b16 %v7606, %v7582
  %v9863 = vpack.c.b16 %v7607, %v7583
  %v9864 = vpack.c.b16 %v7608, %v7584
  %v9865 = vpack.c.b16 %v7609, %v7585
  %v9866 = vpack.c.b16 %v7610, %v7586
  %v9867 = vpack.c.b16 %v7611, %v7587
  %v9868 = vpack.c.b16 %v7612, %v7588
  %v9869 = vpack.c.b16 %v7613, %v7589
  %v9870 = vpack.c.b16 %v7614, %v7590
  %v9871 = vpack.c.b16 %v7615, %v7591
  %v9872 = vpack.c.b16 %v7616, %v7592
  %v9873 = vpack.c.b16 %v7617, %v7593
  %v9874 = vpack.c.b16 %v7618, %v7594
  %v9875 = vpack.c.b16 %v7619, %v7595
  %v9876 = vpack.c.b16 %v7620, %v7596
  %v9877 = vpack.c.b16 %v7621, %v7597
  %v9878 = vpack.c.b16 %v7622, %v7598
  %v9879 = vpack.c.b16 %v7623, %v7599
  %v9880 = vpack.c.b16 %v7624, %v7600
  %v9881 = vpack.c.b16 %v7625, %v7601
  %v9882 = vpack.c.b16 %v7626, %v7602
  %v9883 = vpack.c.b16 %v7627, %v7603
  %v9884 = vpack.c.b16 %v7628, %v7604
  %v9885 = vpack.c.b16 %v7629, %v7605
  %v9886 = vpack.c.b16 %v7654, %v7630
  %v9887 = vpack.c.b16 %v7655, %v7631
  %v9888 = vpack.c.b16 %v7656, %v7632
  %v9889 = vpack.c.b16 %v7657, %v7633
  %v9890 = vpack.c.b16 %v7658, %v7634
  %v9891 = vpack.c.b16 %v7659, %v7635
  %v9892 = vpack.c.b16 %v7660, %v7636
  %v9893 = vpack.c.b16 %v7661, %v7637
  %v9894 = vpack.c.b16 %v7662, %v7638
  %v9895 = vpack.c.b16 %v7663, %v7639
  %v9896 = vpack.c.b16 %v7664, %v7640
  %v9897 = vpack.c.b16 %v7665, %v7641
  %v9898 = vpack.c.b16 %v7666, %v7642
  %v9899 = vpack.c.b16 %v7667, %v7643
  %v9900 = vpack.c.b16 %v7668, %v7644
  %v9901 = vpack.c.b16 %v7669, %v7645
  %v9902 = vpack.c.b16 %v7670, %v7646
  %v9903 = vpack.c.b16 %v7671, %v7647
  %v9904 = vpack.c.b16 %v7672, %v7648
  %v9905 = vpack.c.b16 %v7673, %v7649
  %v9906 = vpack.c.b16 %v7674, %v7650
  %v9907 = vpack.c.b16 %v7675, %v7651
  %v9908 = vpack.c.b16 %v7676, %v7652
  %v9909 = vpack.c.b16 %v7677, %v7653
  %v9910 = vpack.c.b16 %v7702, %v7678
  %v9911 = vpack.c.b16 %v7703, %v7679
  %v9912 = vpack.c.b16 %v7704, %v7680
  %v9913 = vpack.c.b16 %v7705, %v7681
  %v9914 = vpack.c.b16 %v7706, %v7682
  %v9915 = vpack.c.b16 %v7707, %v7683
  %v9916 = vpack.c.b16 %v7708, %v7684
  %v9917 = vpack.c.b16 %v7709, %v7685
  %v9918 = vpack.c.b16 %v7710, %v7686
  %v9919 = vpack.c.b16 %v7711, %v7687
  %v9920 = vpack.c.b16 %v7712, %v7688
  %v9921 = vpack.c.b16 %v7713, %v7689
  %v9922 = vpack.c.b16 %v7714, %v7690
  %v9923 = vpack.c.b16 %v7715, %v7691
  %v9924 = vpack.c.b16 %v7716, %v7692
  %v9925 = vpack.c.b16 %v7717, %v7693
  %v9926 = vpack.c.b16 %v7718, %v7694
  %v9927 = vpack.c.b16 %v7719, %v7695
  %v9928 = vpack.c.b16 %v7720, %v7696
  %v9929 = vpack.c.b16 %v7721, %v7697
  %v9930 = vpack.c.b16 %v7722, %v7698
  %v9931 = vpack.c.b16 %v7723, %v7699
  %v9932 = vpack.c.b16 %v7724, %v7700
  %v9933 = vpack.c.b16 %v7725, %v7701
  %v9934 = vpack.c.b16 %v7750, %v7726
  %v9935 = vpack.c.b16 %v7751, %v7727
  %v9936 = vpack.c.b16 %v7752, %v7728
  %v9937 = vpack.c.b16 %v7753, %v7729
  %v9938 = vpack.c.b16 %v7754, %v7730
  %v9939 = vpack.c.b16 %v7755, %v7731
  %v9940 = vpack.c.b16 %v7756, %v7732
  %v9941 = vpack.c.b16 %v7757, %v7733
  %v9942 = vpack.c.b16 %v7758, %v7734
  %v9943 = vpack.c.b16 %v7759, %v7735
  %v9944 = vpack.c.b16 %v7760, %v7736
  %v9945 = vpack.c.b16 %v7761, %v7737
  %v9946 = vpack.c.b16 %v7762, %v7738
  %v9947 = vpack.c.b16 %v7763, %v7739
  %v9948 = vpack.c.b16 %v7764, %v7740
  %v9949 = vpack.c.b16 %v7765, %v7741
  %v9950 = vpack.c.b16 %v7766, %v7742
  %v9951 = vpack.c.b16 %v7767, %v7743
  %v9952 = vpack.c.b16 %v7768, %v7744
  %v9953 = vpack.c.b16 %v7769, %v7745
  %v9954 = vpack.c.b16 %v7770, %v7746
  %v9955 = vpack.c.b16 %v7771, %v7747
  %v9956 = vpack.c.b16 %v7772, %v7748
  %v9957 = vpack.c.b16 %v7773, %v7749
  %v9958 = vpack.c.b16 %v7798, %v7774
  %v9959 = vpack.c.b16 %v7799, %v7775
  %v9960 = vpack.c.b16 %v7800, %v7776
  %v9961 = vpack.c.b16 %v7801, %v7777
  %v9962 = vpack.c.b16 %v7802, %v7778
  %v9963 = vpack.c.b16 %v7803, %v7779
  %v9964 = vpack.c.b16 %v7804, %v7780
  %v9965 = vpack.c.b16 %v7805, %v7781
  %v9966 = vpack.c.b16 %v7806, %v7782
  %v9967 = vpack.c.b16 %v7807, %v7783
  %v9968 = vpack.c.b16 %v7808, %v7784
  %v9969 = vpack.c.b16 %v7809, %v7785
  %v9970 = vpack.c.b16 %v7810, %v7786
  %v9971 = vpack.c.b16 %v7811, %v7787
  %v9972 = vpack.c.b16 %v7812, %v7788
  %v9973 = vpack.c.b16 %v7813, %v7789
  %v9974 = vpack.c.b16 %v7814, %v7790
  %v9975 = vpack.c.b16 %v7815, %v7791
  %v9976 = vpack.c.b16 %v7816, %v7792
  %v9977 = vpack.c.b16 %v7817, %v7793
  %v9978 = vpack.c.b16 %v7818, %v7794
  %v9979 = vpack.c.b16 %v7819, %v7795
  %v9980 = vpack.c.b16 %v7820, %v7796
  %v9981 = vpack.c.b16 %v7821, %v7797
  %v9982 = vpack.c.b16 %v7846, %v7822
  %v9983 = vpack.c.b16 %v7847, %v7823
  %v9984 = vpack.c.b16 %v7848, %v7824
  %v9985 = vpack.c.b16 %v7849, %v7825
  %v9986 = vpack.c.b16 %v7850, %v7826
  %v9987 = vpack.c.b16 %v7851, %v7827
  %v9988 = vpack.c.b16 %v7852, %v7828
  %v9989 = vpack.c.b16 %v7853, %v7829
  %v9990 = vpack.c.b16 %v7854, %v7830
  %v9991 = vpack.c.b16 %v7855, %v7831
  %v9992 = vpack.c.b16 %v7856, %v7832
  %v9993 = vpack.c.b16 %v7857, %v7833
  %v9994 = vpack.c.b16 %v7858, %v7834
  %v9995 = vpack.c.b16 %v7859, %v7835
  %v9996 = vpack.c.b16 %v7860, %v7836
  %v9997 = vpack.c.b16 %v7861, %v7837
  %v9998 = vpack.c.b16 %v7862, %v7838
  %v9999 = vpack.c.b16 %v7863, %v7839
  %v10000 = vpack.c.b16 %v7864, %v7840
  %v10001 = vpack.c.b16 %v7865, %v7841
  %v10002 = vpack.c.b16 %v7866, %v7842
  %v10003 = vpack.c.b16 %v7867, %v7843
  %v10004 = vpack.c.b16 %v7868, %v7844
  %v10005 = vpack.c.b16 %v7869, %v7845
  %v10006 = vpack.c.b16 %v7894, %v7870
  %v10007 = vpack.c.b16 %v7895, %v7871
  %v10008 = vpack.c.b16 %v7896, %v7872
  %v10009 = vpack.c.b16 %v7897, %v7873
  %v10010 = vpack.c.b16 %v7898, %v7874
  %v10011 = vpack.c.b16 %v7899, %v7875
  %v10012 = vpack.c.b16 %v7900, %v7876
  %v10013 = vpack.c.b16 %v7901, %v7877
  %v10014 = vpack.c.b16 %v7902, %v7878
  %v10015 = vpack.c.b16 %v7903, %v7879
  %v10016 = vpack.c.b16 %v7904, %v7880
  %v10017 = vpack.c.b16 %v7905, %v7881
  %v10018 = vpack.c.b16 %v7906, %v7882
  %v10019 = vpack.c.b16 %v7907, %v7883
  %v10020 = vpack.c.b16 %v7908, %v7884
  %v10021 = vpack.c.b16 %v7909, %v7885
  %v10022 = vpack.c.b16 %v7910, %v7886
  %v10023 = vpack.c.b16 %v7911, %v7887
  %v10024 = vpack.c.b16 %v7912, %v7888
  %v10025 = vpack.c.b16 %v7913, %v7889
  %v10026 = vpack.c.b16 %v7914, %v7890
  %v10027 = vpack.c.b16 %v7915, %v7891
  %v10028 = vpack.c.b16 %v7916, %v7892
  %v10029 = vpack.c.b16 %v7917, %v7893
  %v10030 = vpack.c.b16 %v7942, %v7918
  %v10031 = vpack.c.b16 %v7943, %v7919
  %v10032 = vpack.c.b16 %v7944, %v7920
  %v10033 = vpack.c.b16 %v7945, %v7921
  %v10034 = vpack.c.b16 %v7946, %v7922
  %v10035 = vpack.c.b16 %v7947, %v7923
  %v10036 = vpack.c.b16 %v7948, %v7924
  %v10037 = vpack.c.b16 %v7949, %v7925
  %v10038 = vpack.c.b16 %v7950, %v7926
  %v10039 = vpack.c.b16 %v7951, %v7927
  %v10040 = vpack.c.b16 %v7952, %v7928
  %v10041 = vpack.c.b16 %v7953, %v7929
  %v10042 = vpack.c.b16 %v7954, %v7930
  %v10043 = vpack.c.b16 %v7955, %v7931
  %v10044 = vpack.c.b16 %v7956, %v7932
  %v10045 = vpack.c.b16 %v7957, %v7933
  %v10046 = vpack.c.b16 %v7958, %v7934
  %v10047 = vpack.c.b16 %v7959, %v7935
  %v10048 = vpack.c.b16 %v7960, %v7936
  %v10049 = vpack.c.b16 %v7961, %v7937
  %v10050 = vpack.c.b16 %v7962, %v7938
  %v10051 = vpack.c.b16 %v7963, %v7939
  %v10052 = vpack.c.b16 %v7964, %v7940
  %v10053 = vpack.c.b16 %v7965, %v7941
  %v10054 = vpack.c.b16 %v7990, %v7966
  %v10055 = vpack.c.b16 %v7991, %v7967
  %v10056 = vpack.c.b16 %v7992, %v7968
  %v10057 = vpack.c.b16 %v7993, %v7969
  %v10058 = vpack.c.b16 %v7994, %v7970
  %v10059 = vpack.c.b16 %v7995, %v7971
  %v10060 = vpack.c.b16 %v7996, %v7972
  %v10061 = vpack.c.b16 %v7997, %v7973
  %v10062 = vpack.c.b16 %v7998, %v7974
  %v10063 = vpack.c.b16 %v7999, %v7975
  %v10064 = vpack.c.b16 %v8000, %v7976
  %v10065 = vpack.c.b16 %v8001, %v7977
  %v10066 = vpack.c.b16 %v8002, %v7978
  %v10067 = vpack.c.b16 %v8003, %v7979
  %v10068 = vpack.c.b16 %v8004, %v7980
  %v10069 = vpack.c.b16 %v8005, %v7981
  %v10070 = vpack.c.b16 %v8006, %v7982
  %v10071 = vpack.c.b16 %v8007, %v7983
  %v10072 = vpack.c.b16 %v8008, %v7984
  %v10073 = vpack.c.b16 %v8009, %v7985
  %v10074 = vpack.c.b16 %v8010, %v7986
  %v10075 = vpack.c.b16 %v8011, %v7987
  %v10076 = vpack.c.b16 %v8012, %v7988
  %v10077 = vpack.c.b16 %v8013, %v7989
  %v10078 = vpack.c.b16 %v8038, %v8014
  %v10079 = vpack.c.b16 %v8039, %v8015
  %v10080 = vpack.c.b16 %v8040, %v8016
  %v10081 = vpack.c.b16 %v8041, %v8017
  %v10082 = vpack.c.b16 %v8042, %v8018
  %v10083 = vpack.c.b16 %v8043, %v8019
  %v10084 = vpack.c.b16 %v8044, %v8020
  %v10085 = vpack.c.b16 %v8045, %v8021
  %v10086 = vpack.c.b16 %v8046, %v8022
  %v10087 = vpack.c.b16 %v8047, %v8023
  %v10088 = vpack.c.b16 %v8048, %v8024
  %v10089 = vpack.c.b16 %v8049, %v8025
  %v10090 = vpack.c.b16 %v8050, %v8026
  %v10091 = vpack.c.b16 %v8051, %v8027
  %v10092 = vpack.c.b16 %v8052, %v8028
  %v10093 = vpack.c.b16 %v8053, %v8029
  %v10094 = vpack.c.b16 %v8054, %v8030
  %v10095 = vpack.c.b16 %v8055, %v8031
  %v10096 = vpack.c.b16 %v8056, %v8032
  %v10097 = vpack.c.b16 %v8057, %v8033
  %v10098 = vpack.c.b16 %v8058, %v8034
  %v10099 = vpack.c.b16 %v8059, %v8035
  %v10100 = vpack.c.b16 %v8060, %v8036
  %v10101 = vpack.c.b16 %v8061, %v8037
  %v10102 = vpack.c.b16 %v8086, %v8062
  %v10103 = vpack.c.b16 %v8087, %v8063
  %v10104 = vpack.c.b16 %v8088, %v8064
  %v10105 = vpack.c.b16 %v8089, %v8065
  %v10106 = vpack.c.b16 %v8090, %v8066
  %v10107 = vpack.c.b16 %v8091, %v8067
  %v10108 = vpack.c.b16 %v8092, %v8068
  %v10109 = vpack.c.b16 %v8093, %v8069
  %v10110 = vpack.c.b16 %v8094, %v8070
  %v10111 = vpack.c.b16 %v8095, %v8071
  %v10112 = vpack.c.b16 %v8096, %v8072
  %v10113 = vpack.c.b16 %v8097, %v8073
  %v10114 = vpack.c.b16 %v8098, %v8074
  %v10115 = vpack.c.b16 %v8099, %v8075
  %v10116 = vpack.c.b16 %v8100, %v8076
  %v10117 = vpack.c.b16 %v8101, %v8077
  %v10118 = vpack.c.b16 %v8102, %v8078
  %v10119 = vpack.c.b16 %v8103, %v8079
  %v10120 = vpack.c.b16 %v8104, %v8080
  %v10121 = vpack.c.b16 %v8105, %v8081
  %v10122 = vpack.c.b16 %v8106, %v8082
  %v10123 = vpack.c.b16 %v8107, %v8083
  %v10124 = vpack.c.b16 %v8108, %v8084
  %v10125 = vpack.c.b16 %v8109, %v8085
  %v10126 = vpack.c.b16 %v8134, %v8110
  %v10127 = vpack.c.b16 %v8135, %v8111
  %v10128 = vpack.c.b16 %v8136, %v8112
  %v10129 = vpack.c.b16 %v8137, %v8113
  %v10130 = vpack.c.b16 %v8138, %v8114
  %v10131 = vpack.c.b16 %v8139, %v8115
  %v10132 = vpack.c.b16 %v8140, %v8116
  %v10133 = vpack.c.b16 %v8141, %v8117
  %v10134 = vpack.c.b16 %v8142, %v8118
  %v10135 = vpack.c.b16 %v8143, %v8119
  %v10136 = vpack.c.b16 %v8144, %v8120
  %v10137 = vpack.c.b16 %v8145, %v8121
  %v10138 = vpack.c.b16 %v8146, %v8122
  %v10139 = vpack.c.b16 %v8147, %v8123
  %v10140 = vpack.c.b16 %v8148, %v8124
  %v10141 = vpack.c.b16 %v8149, %v8125
  %v10142 = vpack.c.b16 %v8150, %v8126
  %v10143 = vpack.c.b16 %v8151, %v8127
  %v10144 = vpack.c.b16 %v8152, %v8128
  %v10145 = vpack.c.b16 %v8153, %v8129
  %v10146 = vpack.c.b16 %v8154, %v8130
  %v10147 = vpack.c.b16 %v8155, %v8131
  %v10148 = vpack.c.b16 %v8156, %v8132
  %v10149 = vpack.c.b16 %v8157, %v8133
  %v10150 = vpack.c.b16 %v8182, %v8158
  %v10151 = vpack.c.b16 %v8183, %v8159
  %v10152 = vpack.c.b16 %v8184, %v8160
  %v10153 = vpack.c.b16 %v8185, %v8161
  %v10154 = vpack.c.b16 %v8186, %v8162
  %v10155 = vpack.c.b16 %v8187, %v8163
  %v10156 = vpack.c.b16 %v8188, %v8164
  %v10157 = vpack.c.b16 %v8189, %v8165
  %v10158 = vpack.c.b16 %v8190, %v8166
  %v10159 = vpack.c.b16 %v8191, %v8167
  %v10160 = vpack.c.b16 %v8192, %v8168
  %v10161 = vpack.c.b16 %v8193, %v8169
  %v10162 = vpack.c.b16 %v8194, %v8170
  %v10163 = vpack.c.b16 %v8195, %v8171
  %v10164 = vpack.c.b16 %v8196, %v8172
  %v10165 = vpack.c.b16 %v8197, %v8173
  %v10166 = vpack.c.b16 %v8198, %v8174
  %v10167 = vpack.c.b16 %v8199, %v8175
  %v10168 = vpack.c.b16 %v8200, %v8176
  %v10169 = vpack.c.b16 %v8201, %v8177
  %v10170 = vpack.c.b16 %v8202, %v8178
  %v10171 = vpack.c.b16 %v8203, %v8179
  %v10172 = vpack.c.b16 %v8204, %v8180
  %v10173 = vpack.c.b16 %v8205, %v8181
  %v10174 = vpack.c.b16 %v8230, %v8206
  %v10175 = vpack.c.b16 %v8231, %v8207
  %v10176 = vpack.c.b16 %v8232, %v8208
  %v10177 = vpack.c.b16 %v8233, %v8209
  %v10178 = vpack.c.b16 %v8234, %v8210
  %v10179 = vpack.c.b16 %v8235, %v8211
  %v10180 = vpack.c.b16 %v8236, %v8212
  %v10181 = vpack.c.b16 %v8237, %v8213
  %v10182 = vpack.c.b16 %v8238, %v8214
  %v10183 = vpack.c.b16 %v8239, %v8215
  %v10184 = vpack.c.b16 %v8240, %v8216
  %v10185 = vpack.c.b16 %v8241, %v8217
  %v10186 = vpack.c.b16 %v8242, %v8218
  %v10187 = vpack.c.b16 %v8243, %v8219
  %v10188 = vpack.c.b16 %v8244, %v8220
  %v10189 = vpack.c.b16 %v8245, %v8221
  %v10190 = vpack.c.b16 %v8246, %v8222
  %v10191 = vpack.c.b16 %v8247, %v8223
  %v10192 = vpack.c.b16 %v8248, %v8224
  %v10193 = vpack.c.b16 %v8249, %v8225
  %v10194 = vpack.c.b16 %v8250, %v8226
  %v10195 = vpack.c.b16 %v8251, %v8227
  %v10196 = vpack.c.b16 %v8252, %v8228
  %v10197 = vpack.c.b16 %v8253, %v8229
  %v10198 = vpack.c.b16 %v8278, %v8254
  %v10199 = vpack.c.b16 %v8279, %v8255
  %v10200 = vpack.c.b16 %v8280, %v8256
  %v10201 = vpack.c.b16 %v8281, %v8257
  %v10202 = vpack.c.b16 %v8282, %v8258
  %v10203 = vpack.c.b16 %v8283, %v8259
  %v10204 = vpack.c.b16 %v8284, %v8260
  %v10205 = vpack.c.b16 %v8285, %v8261
  %v10206 = vpack.c.b16 %v8286, %v8262
  %v10207 = vpack.c.b16 %v8287, %v8263
  %v10208 = vpack.c.b16 %v8288, %v8264
  %v10209 = vpack.c.b16 %v8289, %v8265
  %v10210 = vpack.c.b16 %v8290, %v8266
  %v10211 = vpack.c.b16 %v8291, %v8267
  %v10212 = vpack.c.b16 %v8292, %v8268
  %v10213 = vpack.c.b16 %v8293, %v8269
  %v10214 = vpack.c.b16 %v8294, %v8270
  %v10215 = vpack.c.b16 %v8295, %v8271
  %v10216 = vpack.c.b16 %v8296, %v8272
  %v10217 = vpack.c.b16 %v8297, %v8273
  %v10218 = vpack.c.b16 %v8298, %v8274
  %v10219 = vpack.c.b16 %v8299, %v8275
  %v10220 = vpack.c.b16 %v8300, %v8276
  %v10221 = vpack.c.b16 %v8301, %v8277
  %v10222 = vpack.c.b16 %v8326, %v8302
  %v10223 = vpack.c.b16 %v8327, %v8303
  %v10224 = vpack.c.b16 %v8328, %v8304
  %v10225 = vpack.c.b16 %v8329, %v8305
  %v10226 = vpack.c.b16 %v8330, %v8306
  %v10227 = vpack.c.b16 %v8331, %v8307
  %v10228 = vpack.c.b16 %v8332, %v8308
  %v10229 = vpack.c.b16 %v8333, %v8309
  %v10230 = vpack.c.b16 %v8334, %v8310
  %v10231 = vpack.c.b16 %v8335, %v8311
  %v10232 = vpack.c.b16 %v8336, %v8312
  %v10233 = vpack.c.b16 %v8337, %v8313
  %v10234 = vpack.c.b16 %v8338, %v8314
  %v10235 = vpack.c.b16 %v8339, %v8315
  %v10236 = vpack.c.b16 %v8340, %v8316
  %v10237 = vpack.c.b16 %v8341, %v8317
  %v10238 = vpack.c.b16 %v8342, %v8318
  %v10239 = vpack.c.b16 %v8343, %v8319
  %v10240 = vpack.c.b16 %v8344, %v8320
  %v10241 = vpack.c.b16 %v8345, %v8321
  %v10242 = vpack.c.b16 %v8346, %v8322
  %v10243 = vpack.c.b16 %v8347, %v8323
  %v10244 = vpack.c.b16 %v8348, %v8324
  %v10245 = vpack.c.b16 %v8349, %v8325
  %v10246 = vpack.c.b16 %v8374, %v8350
  %v10247 = vpack.c.b16 %v8375, %v8351
  %v10248 = vpack.c.b16 %v8376, %v8352
  %v10249 = vpack.c.b16 %v8377, %v8353
  %v10250 = vpack.c.b16 %v8378, %v8354
  %v10251 = vpack.c.b16 %v8379, %v8355
  %v10252 = vpack.c.b16 %v8380, %v8356
  %v10253 = vpack.c.b16 %v8381, %v8357
  %v10254 = vpack.c.b16 %v8382, %v8358
  %v10255 = vpack.c.b16 %v8383, %v8359
  %v10256 = vpack.c.b16 %v8384, %v8360
  %v10257 = vpack.c.b16 %v8385, %v8361
  %v10258 = vpack.c.b16 %v8386, %v8362
  %v10259 = vpack.c.b16 %v8387, %v8363
  %v10260 = vpack.c.b16 %v8388, %v8364
  %v10261 = vpack.c.b16 %v8389, %v8365
  %v10262 = vpack.c.b16 %v8390, %v8366
  %v10263 = vpack.c.b16 %v8391, %v8367
  %v10264 = vpack.c.b16 %v8392, %v8368
  %v10265 = vpack.c.b16 %v8393, %v8369
  %v10266 = vpack.c.b16 %v8394, %v8370
  %v10267 = vpack.c.b16 %v8395, %v8371
  %v10268 = vpack.c.b16 %v8396, %v8372
  %v10269 = vpack.c.b16 %v8397, %v8373
  %v10270 = vpack.c.b16 %v8422, %v8398
  %v10271 = vpack.c.b16 %v8423, %v8399
  %v10272 = vpack.c.b16 %v8424, %v8400
  %v10273 = vpack.c.b16 %v8425, %v8401
  %v10274 = vpack.c.b16 %v8426, %v8402
  %v10275 = vpack.c.b16 %v8427, %v8403
  %v10276 = vpack.c.b16 %v8428, %v8404
  %v10277 = vpack.c.b16 %v8429, %v8405
  %v10278 = vpack.c.b16 %v8430, %v8406
  %v10279 = vpack.c.b16 %v8431, %v8407
  %v10280 = vpack.c.b16 %v8432, %v8408
  %v10281 = vpack.c.b16 %v8433, %v8409
  %v10282 = vpack.c.b16 %v8434, %v8410
  %v10283 = vpack.c.b16 %v8435, %v8411
  %v10284 = vpack.c.b16 %v8436, %v8412
  %v10285 = vpack.c.b16 %v8437, %v8413
  %v10286 = vpack.c.b16 %v8438, %v8414
  %v10287 = vpack.c.b16 %v8439, %v8415
  %v10288 = vpack.c.b16 %v8440, %v8416
  %v10289 = vpack.c.b16 %v8441, %v8417
  %v10290 = vpack.c.b16 %v8442, %v8418
  %v10291 = vpack.c.b16 %v8443, %v8419
  %v10292 = vpack.c.b16 %v8444, %v8420
  %v10293 = vpack.c.b16 %v8445, %v8421
  %v10294 = vpack.c.b16 %v8470, %v8446
  %v10295 = vpack.c.b16 %v8471, %v8447
  %v10296 = vpack.c.b16 %v8472, %v8448
  %v10297 = vpack.c.b16 %v8473, %v8449
  %v10298 = vpack.c.b16 %v8474, %v8450
  %v10299 = vpack.c.b16 %v8475, %v8451
  %v10300 = vpack.c.b16 %v8476, %v8452
  %v10301 = vpack.c.b16 %v8477, %v8453
  %v10302 = vpack.c.b16 %v8478, %v8454
  %v10303 = vpack.c.b16 %v8479, %v8455
  %v10304 = vpack.c.b16 %v8480, %v8456
  %v10305 = vpack.c.b16 %v8481, %v8457
  %v10306 = vpack.c.b16 %v8482, %v8458
  %v10307 = vpack.c.b16 %v8483, %v8459
  %v10308 = vpack.c.b16 %v8484, %v8460
  %v10309 = vpack.c.b16 %v8485, %v8461
  %v10310 = vpack.c.b16 %v8486, %v8462
  %v10311 = vpack.c.b16 %v8487, %v8463
  %v10312 = vpack.c.b16 %v8488, %v8464
  %v10313 = vpack.c.b16 %v8489, %v8465
  %v10314 = vpack.c.b16 %v8490, %v8466
  %v10315 = vpack.c.b16 %v8491, %v8467
  %v10316 = vpack.c.b16 %v8492, %v8468
  %v10317 = vpack.c.b16 %v8493, %v8469
  %v10318 = vpack.c.b16 %v8518, %v8494
  %v10319 = vpack.c.b16 %v8519, %v8495
  %v10320 = vpack.c.b16 %v8520, %v8496
  %v10321 = vpack.c.b16 %v8521, %v8497
  %v10322 = vpack.c.b16 %v8522, %v8498
  %v10323 = vpack.c.b16 %v8523, %v8499
  %v10324 = vpack.c.b16 %v8524, %v8500
  %v10325 = vpack.c.b16 %v8525, %v8501
  %v10326 = vpack.c.b16 %v8526, %v8502
  %v10327 = vpack.c.b16 %v8527, %v8503
  %v10328 = vpack.c.b16 %v8528, %v8504
  %v10329 = vpack.c.b16 %v8529, %v8505
  %v10330 = vpack.c.b16 %v8530, %v8506
  %v10331 = vpack.c.b16 %v8531, %v8507
  %v10332 = vpack.c.b16 %v8532, %v8508
  %v10333 = vpack.c.b16 %v8533, %v8509
  %v10334 = vpack.c.b16 %v8534, %v8510
  %v10335 = vpack.c.b16 %v8535, %v8511
  %v10336 = vpack.c.b16 %v8536, %v8512
  %v10337 = vpack.c.b16 %v8537, %v8513
  %v10338 = vpack.c.b16 %v8538, %v8514
  %v10339 = vpack.c.b16 %v8539, %v8515
  %v10340 = vpack.c.b16 %v8540, %v8516
  %v10341 = vpack.c.b16 %v8541, %v8517
  %v10342 = vpack.c.b16 %v8566, %v8542
  %v10343 = vpack.c.b16 %v8567, %v8543
  %v10344 = vpack.c.b16 %v8568, %v8544
  %v10345 = vpack.c.b16 %v8569, %v8545
  %v10346 = vpack.c.b16 %v8570, %v8546
  %v10347 = vpack.c.b16 %v8571, %v8547
  %v10348 = vpack.c.b16 %v8572, %v8548
  %v10349 = vpack.c.b16 %v8573, %v8549
  %v10350 = vpack.c.b16 %v8574, %v8550
  %v10351 = vpack.c.b16 %v8575, %v8551
  %v10352 = vpack.c.b16 %v8576, %v8552
  %v10353 = vpack.c.b16 %v8577, %v8553
  %v10354 = vpack.c.b16 %v8578, %v8554
  %v10355 = vpack.c.b16 %v8579, %v8555
  %v10356 = vpack.c.b16 %v8580, %v8556
  %v10357 = vpack.c.b16 %v8581, %v8557
  %v10358 = vpack.c.b16 %v8582, %v8558
  %v10359 = vpack.c.b16 %v8583, %v8559
  %v10360 = vpack.c.b16 %v8584, %v8560
  %v10361 = vpack.c.b16 %v8585, %v8561
  %v10362 = vpack.c.b16 %v8586, %v8562
  %v10363 = vpack.c.b16 %v8587, %v8563
  %v10364 = vpack.c.b16 %v8588, %v8564
  %v10365 = vpack.c.b16 %v8589, %v8565
  %v10366 = vpack.c.b16 %v8614, %v8590
  %v10367 = vpack.c.b16 %v8615, %v8591
  %v10368 = vpack.c.b16 %v8616, %v8592
  %v10369 = vpack.c.b16 %v8617, %v8593
  %v10370 = vpack.c.b16 %v8618, %v8594
  %v10371 = vpack.c.b16 %v8619, %v8595
  %v10372 = vpack.c.b16 %v8620, %v8596
  %v10373 = vpack.c.b16 %v8621, %v8597
  %v10374 = vpack.c.b16 %v8622, %v8598
  %v10375 = vpack.c.b16 %v8623, %v8599
  %v10376 = vpack.c.b16 %v8624, %v8600
  %v10377 = vpack.c.b16 %v8625, %v8601
  %v10378 = vpack.c.b16 %v8626, %v8602
  %v10379 = vpack.c.b16 %v8627, %v8603
  %v10380 = vpack.c.b16 %v8628, %v8604
  %v10381 = vpack.c.b16 %v8629, %v8605
  %v10382 = vpack.c.b16 %v8630, %v8606
  %v10383 = vpack.c.b16 %v8631, %v8607
  %v10384 = vpack.c.b16 %v8632, %v8608
  %v10385 = vpack.c.b16 %v8633, %v8609
  %v10386 = vpack.c.b16 %v8634, %v8610
  %v10387 = vpack.c.b16 %v8635, %v8611
  %v10388 = vpack.c.b16 %v8636, %v8612
  %v10389 = vpack.c.b16 %v8637, %v8613
  %v10390 = vpack.c.b16 %v8662, %v8638
  %v10391 = vpack.c.b16 %v8663, %v8639
  %v10392 = vpack.c.b16 %v8664, %v8640
  %v10393 = vpack.c.b16 %v8665, %v8641
  %v10394 = vpack.c.b16 %v8666, %v8642
  %v10395 = vpack.c.b16 %v8667, %v8643
  %v10396 = vpack.c.b16 %v8668, %v8644
  %v10397 = vpack.c.b16 %v8669, %v8645
  %v10398 = vpack.c.b16 %v8670, %v8646
  %v10399 = vpack.c.b16 %v8671, %v8647
  %v10400 = vpack.c.b16 %v8672, %v8648
  %v10401 = vpack.c.b16 %v8673, %v8649
  %v10402 = vpack.c.b16 %v8674, %v8650
  %v10403 = vpack.c.b16 %v8675, %v8651
  %v10404 = vpack.c.b16 %v8676, %v8652
  %v10405 = vpack.c.b16 %v8677, %v8653
  %v10406 = vpack.c.b16 %v8678, %v8654
  %v10407 = vpack.c.b16 %v8679, %v8655
  %v10408 = vpack.c.b16 %v8680, %v8656
  %v10409 = vpack.c.b16 %v8681, %v8657
  %v10410 = vpack.c.b16 %v8682, %v8658
  %v10411 = vpack.c.b16 %v8683, %v8659
  %v10412 = vpack.c.b16 %v8684, %v8660
  %v10413 = vpack.c.b16 %v8685, %v8661
  %v10414 = vpack.c.b16 %v8710, %v8686
  %v10415 = vpack.c.b16 %v8711, %v8687
  %v10416 = vpack.c.b16 %v8712, %v8688
  %v10417 = vpack.c.b16 %v8713, %v8689
  %v10418 = vpack.c.b16 %v8714, %v8690
  %v10419 = vpack.c.b16 %v8715, %v8691
  %v10420 = vpack.c.b16 %v8716, %v8692
  %v10421 = vpack.c.b16 %v8717, %v8693
  %v10422 = vpack.c.b16 %v8718, %v8694
  %v10423 = vpack.c.b16 %v8719, %v8695
  %v10424 = vpack.c.b16 %v8720, %v8696
  %v10425 = vpack.c.b16 %v8721, %v8697
  %v10426 = vpack.c.b16 %v8722, %v8698
  %v10427 = vpack.c.b16 %v8723, %v8699
  %v10428 = vpack.c.b16 %v8724, %v8700
  %v10429 = vpack.c.b16 %v8725, %v8701
  %v10430 = vpack.c.b16 %v8726, %v8702
  %v10431 = vpack.c.b16 %v8727, %v8703
  %v10432 = vpack.c.b16 %v8728, %v8704
  %v10433 = vpack.c.b16 %v8729, %v8705
  %v10434 = vpack.c.b16 %v8730, %v8706
  %v10435 = vpack.c.b16 %v8731, %v8707
  %v10436 = vpack.c.b16 %v8732, %v8708
  %v10437 = vpack.c.b16 %v8733, %v8709
  %v10438 = vpack.c.b16 %v8758, %v8734
  %v10439 = vpack.c.b16 %v8759, %v8735
  %v10440 = vpack.c.b16 %v8760, %v8736
  %v10441 = vpack.c.b16 %v8761, %v8737
  %v10442 = vpack.c.b16 %v8762, %v8738
  %v10443 = vpack.c.b16 %v8763, %v8739
  %v10444 = vpack.c.b16 %v8764, %v8740
  %v10445 = vpack.c.b16 %v8765, %v8741
  %v10446 = vpack.c.b16 %v8766, %v8742
  %v10447 = vpack.c.b16 %v8767, %v8743
  %v10448 = vpack.c.b16 %v8768, %v8744
  %v10449 = vpack.c.b16 %v8769, %v8745
  %v10450 = vpack.c.b16 %v8770, %v8746
  %v10451 = vpack.c.b16 %v8771, %v8747
  %v10452 = vpack.c.b16 %v8772, %v8748
  %v10453 = vpack.c.b16 %v8773, %v8749
  %v10454 = vpack.c.b16 %v8774, %v8750
  %v10455 = vpack.c.b16 %v8775, %v8751
  %v10456 = vpack.c.b16 %v8776, %v8752
  %v10457 = vpack.c.b16 %v8777, %v8753
  %v10458 = vpack.c.b16 %v8778, %v8754
  %v10459 = vpack.c.b16 %v8779, %v8755
  %v10460 = vpack.c.b16 %v8780, %v8756
  %v10461 = vpack.c.b16 %v8781, %v8757
  %v10462 = vpack.c.b16 %v8806, %v8782
  %v10463 = vpack.c.b16 %v8807, %v8783
  %v10464 = vpack.c.b16 %v8808, %v8784
  %v10465 = vpack.c.b16 %v8809, %v8785
  %v10466 = vpack.c.b16 %v8810, %v8786
  %v10467 = vpack.c.b16 %v8811, %v8787
  %v10468 = vpack.c.b16 %v8812, %v8788
  %v10469 = vpack.c.b16 %v8813, %v8789
  %v10470 = vpack.c.b16 %v8814, %v8790
  %v10471 = vpack.c.b16 %v8815, %v8791
  %v10472 = vpack.c.b16 %v8816, %v8792
  %v10473 = vpack.c.b16 %v8817, %v8793
  %v10474 = vpack.c.b16 %v8818, %v8794
  %v10475 = vpack.c.b16 %v8819, %v8795
  %v10476 = vpack.c.b16 %v8820, %v8796
  %v10477 = vpack.c.b16 %v8821, %v8797
  %v10478 = vpack.c.b16 %v8822, %v8798
  %v10479 = vpack.c.b16 %v8823, %v8799
  %v10480 = vpack.c.b16 %v8824, %v8800
  %v10481 = vpack.c.b16 %v8825, %v8801
  %v10482 = vpack.c.b16 %v8826, %v8802
  %v10483 = vpack.c.b16 %v8827, %v8803
  %v10484 = vpack.c.b16 %v8828, %v8804
  %v10485 = vpack.c.b16 %v8829, %v8805
  %v10486 = vpack.c.b16 %v8854, %v8830
  %v10487 = vpack.c.b16 %v8855, %v8831
  %v10488 = vpack.c.b16 %v8856, %v8832
  %v10489 = vpack.c.b16 %v8857, %v8833
  %v10490 = vpack.c.b16 %v8858, %v8834
  %v10491 = vpack.c.b16 %v8859, %v8835
  %v10492 = vpack.c.b16 %v8860, %v8836
  %v10493 = vpack.c.b16 %v8861, %v8837
  %v10494 = vpack.c.b16 %v8862, %v8838
  %v10495 = vpack.c.b16 %v8863, %v8839
  %v10496 = vpack.c.b16 %v8864, %v8840
  %v10497 = vpack.c.b16 %v8865, %v8841
  %v10498 = vpack.c.b16 %v8866, %v8842
  %v10499 = vpack.c.b16 %v8867, %v8843
  %v10500 = vpack.c.b16 %v8868, %v8844
  %v10501 = vpack.c.b16 %v8869, %v8845
  %v10502 = vpack.c.b16 %v8870, %v8846
  %v10503 = vpack.c.b16 %v8871, %v8847
  %v10504 = vpack.c.b16 %v8872, %v8848
  %v10505 = vpack.c.b16 %v8873, %v8849
  %v10506 = vpack.c.b16 %v8874, %v8850
  %v10507 = vpack.c.b16 %v8875, %v8851
  %v10508 = vpack.c.b16 %v8876, %v8852
  %v10509 = vpack.c.b16 %v8877, %v8853
  %v10510 = vpack.c.b16 %v8902, %v8878
  %v10511 = vpack.c.b16 %v8903, %v8879
  %v10512 = vpack.c.b16 %v8904, %v8880
  %v10513 = vpack.c.b16 %v8905, %v8881
  %v10514 = vpack.c.b16 %v8906, %v8882
  %v10515 = vpack.c.b16 %v8907, %v8883
  %v10516 = vpack.c.b16 %v8908, %v8884
  %v10517 = vpack.c.b16 %v8909, %v8885
  %v10518 = vpack.c.b16 %v8910, %v8886
  %v10519 = vpack.c.b16 %v8911, %v8887
  %v10520 = vpack.c.b16 %v8912, %v8888
  %v10521 = vpack.c.b16 %v8913, %v8889
  %v10522 = vpack.c.b16 %v8914, %v8890
  %v10523 = vpack.c.b16 %v8915, %v8891
  %v10524 = vpack.c.b16 %v8916, %v8892
  %v10525 = vpack.c.b16 %v8917, %v8893
  %v10526 = vpack.c.b16 %v8918, %v8894
  %v10527 = vpack.c.b16 %v8919, %v8895
  %v10528 = vpack.c.b16 %v8920, %v8896
  %v10529 = vpack.c.b16 %v8921, %v8897
  %v10530 = vpack.c.b16 %v8922, %v8898
  %v10531 = vpack.c.b16 %v8923, %v8899
  %v10532 = vpack.c.b16 %v8924, %v8900
  %v10533 = vpack.c.b16 %v8925, %v8901
  %v10534 = vpack.c.b16 %v8950, %v8926
  %v10535 = vpack.c.b16 %v8951, %v8927
  %v10536 = vpack.c.b16 %v8952, %v8928
  %v10537 = vpack.c.b16 %v8953, %v8929
  %v10538 = vpack.c.b16 %v8954, %v8930
  %v10539 = vpack.c.b16 %v8955, %v8931
  %v10540 = vpack.c.b16 %v8956, %v8932
  %v10541 = vpack.c.b16 %v8957, %v8933
  %v10542 = vpack.c.b16 %v8958, %v8934
  %v10543 = vpack.c.b16 %v8959, %v8935
  %v10544 = vpack.c.b16 %v8960, %v8936
  %v10545 = vpack.c.b16 %v8961, %v8937
  %v10546 = vpack.c.b16 %v8962, %v8938
  %v10547 = vpack.c.b16 %v8963, %v8939
  %v10548 = vpack.c.b16 %v8964, %v8940
  %v10549 = vpack.c.b16 %v8965, %v8941
  %v10550 = vpack.c.b16 %v8966, %v8942
  %v10551 = vpack.c.b16 %v8967, %v8943
  %v10552 = vpack.c.b16 %v8968, %v8944
  %v10553 = vpack.c.b16 %v8969, %v8945
  %v10554 = vpack.c.b16 %v8970, %v8946
  %v10555 = vpack.c.b16 %v8971, %v8947
  %v10556 = vpack.c.b16 %v8972, %v8948
  %v10557 = vpack.c.b16 %v8973, %v8949
  %v10558 = vpack.c.b16 %v8998, %v8974
  %v10559 = vpack.c.b16 %v8999, %v8975
  %v10560 = vpack.c.b16 %v9000, %v8976
  %v10561 = vpack.c.b16 %v9001, %v8977
  %v10562 = vpack.c.b16 %v9002, %v8978
  %v10563 = vpack.c.b16 %v9003, %v8979
  %v10564 = vpack.c.b16 %v9004, %v8980
  %v10565 = vpack.c.b16 %v9005, %v8981
  %v10566 = vpack.c.b16 %v9006, %v8982
  %v10567 = vpack.c.b16 %v9007, %v8983
  %v10568 = vpack.c.b16 %v9008, %v8984
  %v10569 = vpack.c.b16 %v9009, %v8985
  %v10570 = vpack.c.b16 %v9010, %v8986
  %v10571 = vpack.c.b16 %v9011, %v8987
  %v10572 = vpack.c.b16 %v9012, %v8988
  %v10573 = vpack.c.b16 %v9013, %v8989
  %v10574 = vpack.c.b16 %v9014, %v8990
  %v10575 = vpack.c.b16 %v9015, %v8991
  %v10576 = vpack.c.b16 %v9016, %v8992
  %v10577 = vpack.c.b16 %v9017, %v8993
  %v10578 = vpack.c.b16 %v9018, %v8994
  %v10579 = vpack.c.b16 %v9019, %v8995
  %v10580 = vpack.c.b16 %v9020, %v8996
  %v10581 = vpack.c.b16 %v9021, %v8997
  %v10582 = vpack.c.b16 %v9046, %v9022
  %v10583 = vpack.c.b16 %v9047, %v9023
  %v10584 = vpack.c.b16 %v9048, %v9024
  %v10585 = vpack.c.b16 %v9049, %v9025
  %v10586 = vpack.c.b16 %v9050, %v9026
  %v10587 = vpack.c.b16 %v9051, %v9027
  %v10588 = vpack.c.b16 %v9052, %v9028
  %v10589 = vpack.c.b16 %v9053, %v9029
  %v10590 = vpack.c.b16 %v9054, %v9030
  %v10591 = vpack.c.b16 %v9055, %v9031
  %v10592 = vpack.c.b16 %v9056, %v9032
  %v10593 = vpack.c.b16 %v9057, %v9033
  %v10594 = vpack.c.b16 %v9058, %v9034
  %v10595 = vpack.c.b16 %v9059, %v9035
  %v10596 = vpack.c.b16 %v9060, %v9036
  %v10597 = vpack.c.b16 %v9061, %v9037
  %v10598 = vpack.c.b16 %v9062, %v9038
  %v10599 = vpack.c.b16 %v9063, %v9039
  %v10600 = vpack.c.b16 %v9064, %v9040
  %v10601 = vpack.c.b16 %v9065, %v9041
  %v10602 = vpack.c.b16 %v9066, %v9042
  %v10603 = vpack.c.b16 %v9067, %v9043
  %v10604 = vpack.c.b16 %v9068, %v9044
  %v10605 = vpack.c.b16 %v9069, %v9045
  %12142 = vmatprep.subr.bf16.mxu0 %v9071
  %12143 = vmatpush1.bf16.msra.mxu0 %v9070
  %12144 = vmatprep.subr.bf16.mxu0 %v9095
  %12145 = vmatpush1.bf16.msra.mxu0 %v9094
  %12146 = vmatprep.subr.bf16.mxu0 %v9119
  %12147 = vmatpush1.bf16.msra.mxu0 %v9118
  %12148 = vmatprep.subr.bf16.mxu0 %v9143
  %12149 = vmatpush1.bf16.msra.mxu0 %v9142
  %12150 = vmatprep.subr.bf16.mxu0 %v9167
  %12151 = vmatpush1.bf16.msra.mxu0 %v9166
  %12152 = vmatprep.subr.bf16.mxu0 %v9191
  %12153 = vmatpush1.bf16.msra.mxu0 %v9190
  %12154 = vmatprep.subr.bf16.mxu0 %v9215
  %12155 = vmatpush1.bf16.msra.mxu0 %v9214
  %12156 = vmatprep.subr.bf16.mxu0 %v9239
  %12157 = vmatpush1.bf16.msra.mxu0 %v9238
  %12158 = vmatprep.subr.bf16.mxu0 %v9263
  %12159 = vmatpush1.bf16.msra.mxu0 %v9262
  %12160 = vmatprep.subr.bf16.mxu0 %v9287
  %12161 = vmatpush1.bf16.msra.mxu0 %v9286
  %12162 = vmatprep.subr.bf16.mxu0 %v9311
  %12163 = vmatpush1.bf16.msra.mxu0 %v9310
  %12164 = vmatprep.subr.bf16.mxu0 %v9335
  %12165 = vmatpush1.bf16.msra.mxu0 %v9334
  %12166 = vmatprep.subr.bf16.mxu0 %v9359
  %12167 = vmatpush1.bf16.msra.mxu0 %v9358
  %12168 = vmatprep.subr.bf16.mxu0 %v9383
  %12169 = vmatpush1.bf16.msra.mxu0 %v9382
  %12170 = vmatprep.subr.bf16.mxu0 %v9407
  %12171 = vmatpush1.bf16.msra.mxu0 %v9406
  %12172 = vmatprep.subr.bf16.mxu0 %v9431
  %12173 = vmatpush1.bf16.msra.mxu0 %v9430
  %12174 = vmatprep.mubr.bf16.mxu0 %v2793
  %12175 = vmatmul.mubr.bf16.gmra.mrb[0].mxu0 %v2792
  %v12176 = vpop.f32.mrb[0].mxu0
  %v12177 = vadd.f32 %v4345, %v12176
  %v12178 = vpop.f32.mrb[0].mxu0
  %v12179 = vadd.f32 %v4349, %v12178
  %v12180 = vpop.f32.mrb[0].mxu0
  %v12181 = vadd.f32 %v4345, %v12180
  %v12182 = vpop.f32.mrb[0].mxu0
  %v12183 = vadd.f32 %v4349, %v12182
  %12184 = vdwg.mxu0
  %12185 = vmatprep.subr.bf16.mxu0 %v9455
  %12186 = vmatpush1.bf16.msra.mxu0 %v9454
  %12187 = vmatprep.subr.bf16.mxu0 %v9479
  %12188 = vmatpush1.bf16.msra.mxu0 %v9478
  %12189 = vmatprep.subr.bf16.mxu0 %v9503
  %12190 = vmatpush1.bf16.msra.mxu0 %v9502
  %12191 = vmatprep.subr.bf16.mxu0 %v9527
  %12192 = vmatpush1.bf16.msra.mxu0 %v9526
  %12193 = vmatprep.subr.bf16.mxu0 %v9551
  %12194 = vmatpush1.bf16.msra.mxu0 %v9550
  %12195 = vmatprep.subr.bf16.mxu0 %v9575
  %12196 = vmatpush1.bf16.msra.mxu0 %v9574
  %12197 = vmatprep.subr.bf16.mxu0 %v9599
  %12198 = vmatpush1.bf16.msra.mxu0 %v9598
  %12199 = vmatprep.subr.bf16.mxu0 %v9623
  %12200 = vmatpush1.bf16.msra.mxu0 %v9622
  %12201 = vmatprep.subr.bf16.mxu0 %v9647
  %12202 = vmatpush1.bf16.msra.mxu0 %v9646
  %12203 = vmatprep.subr.bf16.mxu0 %v9671
  %12204 = vmatpush1.bf16.msra.mxu0 %v9670
  %12205 = vmatprep.subr.bf16.mxu0 %v9695
  %12206 = vmatpush1.bf16.msra.mxu0 %v9694
  %12207 = vmatprep.subr.bf16.mxu0 %v9719
  %12208 = vmatpush1.bf16.msra.mxu0 %v9718
  %12209 = vmatprep.subr.bf16.mxu0 %v9743
  %12210 = vmatpush1.bf16.msra.mxu0 %v9742
  %12211 = vmatprep.subr.bf16.mxu0 %v9767
  %12212 = vmatpush1.bf16.msra.mxu0 %v9766
  %12213 = vmatprep.subr.bf16.mxu0 %v9791
  %12214 = vmatpush1.bf16.msra.mxu0 %v9790
  %12215 = vmatprep.subr.bf16.mxu0 %v9815
  %12216 = vmatpush1.bf16.msra.mxu0 %v9814
  %12217 = vmatprep.mubr.bf16.mxu0 %v2795
  %12218 = vmatmul.mubr.bf16.gmra.mrb[0].mxu0 %v2794
  %v12219 = vpop.f32.mrb[0].mxu0
  %v12220 = vadd.f32 %v12177, %v12219
  %v12221 = vpop.f32.mrb[0].mxu0
  %v12222 = vadd.f32 %v12179, %v12221
  %v12223 = vpop.f32.mrb[0].mxu0
  %v12224 = vadd.f32 %v12181, %v12223
  %v12225 = vpop.f32.mrb[0].mxu0
  %v12226 = vadd.f32 %v12183, %v12225
  %12227 = vdwg.mxu0
  %12228 = vmatprep.subr.bf16.mxu0 %v9839
  %12229 = vmatpush1.bf16.msra.mxu0 %v9838
  %12230 = vmatprep.subr.bf16.mxu0 %v9863
  %12231 = vmatpush1.bf16.msra.mxu0 %v9862
  %12232 = vmatprep.subr.bf16.mxu0 %v9887
  %12233 = vmatpush1.bf16.msra.mxu0 %v9886
  %12234 = vmatprep.subr.bf16.mxu0 %v9911
  %12235 = vmatpush1.bf16.msra.mxu0 %v9910
  %12236 = vmatprep.subr.bf16.mxu0 %v9935
  %12237 = vmatpush1.bf16.msra.mxu0 %v9934
  %12238 = vmatprep.subr.bf16.mxu0 %v9959
  %12239 = vmatpush1.bf16.msra.mxu0 %v9958
  %12240 = vmatprep.subr.bf16.mxu0 %v9983
  %12241 = vmatpush1.bf16.msra.mxu0 %v9982
  %12242 = vmatprep.subr.bf16.mxu0 %v10007
  %12243 = vmatpush1.bf16.msra.mxu0 %v10006
  %12244 = vmatprep.subr.bf16.mxu0 %v10031
  %12245 = vmatpush1.bf16.msra.mxu0 %v10030
  %12246 = vmatprep.subr.bf16.mxu0 %v10055
  %12247 = vmatpush1.bf16.msra.mxu0 %v10054
  %12248 = vmatprep.subr.bf16.mxu0 %v10079
  %12249 = vmatpush1.bf16.msra.mxu0 %v10078
  %12250 = vmatprep.subr.bf16.mxu0 %v10103
  %12251 = vmatpush1.bf16.msra.mxu0 %v10102
  %12252 = vmatprep.subr.bf16.mxu0 %v10127
  %12253 = vmatpush1.bf16.msra.mxu0 %v10126
  %12254 = vmatprep.subr.bf16.mxu0 %v10151
  %12255 = vmatpush1.bf16.msra.mxu0 %v10150
  %12256 = vmatprep.subr.bf16.mxu0 %v10175
  %12257 = vmatpush1.bf16.msra.mxu0 %v10174
  %12258 = vmatprep.subr.bf16.mxu0 %v10199
  %12259 = vmatpush1.bf16.msra.mxu0 %v10198
  %12260 = vmatprep.mubr.bf16.mxu0 %v2797
  %12261 = vmatmul.mubr.bf16.gmra.mrb[0].mxu0 %v2796
  %v12262 = vpop.f32.mrb[0].mxu0
  %v12263 = vadd.f32 %v12220, %v12262
  %v12264 = vpop.f32.mrb[0].mxu0
  %v12265 = vadd.f32 %v12222, %v12264
  %v12266 = vpop.f32.mrb[0].mxu0
  %v12267 = vadd.f32 %v12224, %v12266
  %v12268 = vpop.f32.mrb[0].mxu0
  %v12269 = vadd.f32 %v12226, %v12268
  %12270 = vdwg.mxu0
  %12271 = vmatprep.subr.bf16.mxu0 %v10223
  %12272 = vmatpush1.bf16.msra.mxu0 %v10222
  %12273 = vmatprep.subr.bf16.mxu0 %v10247
  %12274 = vmatpush1.bf16.msra.mxu0 %v10246
  %12275 = vmatprep.subr.bf16.mxu0 %v10271
  %12276 = vmatpush1.bf16.msra.mxu0 %v10270
  %12277 = vmatprep.subr.bf16.mxu0 %v10295
  %12278 = vmatpush1.bf16.msra.mxu0 %v10294
  %12279 = vmatprep.subr.bf16.mxu0 %v10319
  %12280 = vmatpush1.bf16.msra.mxu0 %v10318
  %12281 = vmatprep.subr.bf16.mxu0 %v10343
  %12282 = vmatpush1.bf16.msra.mxu0 %v10342
  %12283 = vmatprep.subr.bf16.mxu0 %v10367
  %12284 = vmatpush1.bf16.msra.mxu0 %v10366
  %12285 = vmatprep.subr.bf16.mxu0 %v10391
  %12286 = vmatpush1.bf16.msra.mxu0 %v10390
  %12287 = vmatprep.subr.bf16.mxu0 %v10415
  %12288 = vmatpush1.bf16.msra.mxu0 %v10414
  %12289 = vmatprep.subr.bf16.mxu0 %v10439
  %12290 = vmatpush1.bf16.msra.mxu0 %v10438
  %12291 = vmatprep.subr.bf16.mxu0 %v10463
  %12292 = vmatpush1.bf16.msra.mxu0 %v10462
  %12293 = vmatprep.subr.bf16.mxu0 %v10487
  %12294 = vmatpush1.bf16.msra.mxu0 %v10486
  %12295 = vmatprep.subr.bf16.mxu0 %v10511
  %12296 = vmatpush1.bf16.msra.mxu0 %v10510
  %12297 = vmatprep.subr.bf16.mxu0 %v10535
  %12298 = vmatpush1.bf16.msra.mxu0 %v10534
  %12299 = vmatprep.subr.bf16.mxu0 %v10559
  %12300 = vmatpush1.bf16.msra.mxu0 %v10558
  %12301 = vmatprep.subr.bf16.mxu0 %v10583
  %12302 = vmatpush1.bf16.msra.mxu0 %v10582
  %12303 = vmatprep.mubr.bf16.mxu0 %v2799
  %12304 = vmatmul.mubr.bf16.gmra.mrb[0].mxu0 %v2798
  %v12305 = vpop.f32.mrb[0].mxu0
  %v12306 = vadd.f32 %v12263, %v12305
  %v12307 = vpop.f32.mrb[0].mxu0
  %v12308 = vadd.f32 %v12265, %v12307
  %v12309 = vpop.f32.mrb[0].mxu0
  %v12310 = vadd.f32 %v12267, %v12309
  %v12311 = vpop.f32.mrb[0].mxu0
  %v12312 = vadd.f32 %v12269, %v12311
  %12313 = vdwg.mxu0
  %12314 = vmatprep.subr.bf16.mxu0 %v9073
  %12315 = vmatpush1.bf16.msra.mxu0 %v9072
  %12316 = vmatprep.subr.bf16.mxu0 %v9097
  %12317 = vmatpush1.bf16.msra.mxu0 %v9096
  %12318 = vmatprep.subr.bf16.mxu0 %v9121
  %12319 = vmatpush1.bf16.msra.mxu0 %v9120
  %12320 = vmatprep.subr.bf16.mxu0 %v9145
  %12321 = vmatpush1.bf16.msra.mxu0 %v9144
  %12322 = vmatprep.subr.bf16.mxu0 %v9169
  %12323 = vmatpush1.bf16.msra.mxu0 %v9168
  %12324 = vmatprep.subr.bf16.mxu0 %v9193
  %12325 = vmatpush1.bf16.msra.mxu0 %v9192
  %12326 = vmatprep.subr.bf16.mxu0 %v9217
  %12327 = vmatpush1.bf16.msra.mxu0 %v9216
  %12328 = vmatprep.subr.bf16.mxu0 %v9241
  %12329 = vmatpush1.bf16.msra.mxu0 %v9240
  %12330 = vmatprep.subr.bf16.mxu0 %v9265
  %12331 = vmatpush1.bf16.msra.mxu0 %v9264
  %12332 = vmatprep.subr.bf16.mxu0 %v9289
  %12333 = vmatpush1.bf16.msra.mxu0 %v9288
  %12334 = vmatprep.subr.bf16.mxu0 %v9313
  %12335 = vmatpush1.bf16.msra.mxu0 %v9312
  %12336 = vmatprep.subr.bf16.mxu0 %v9337
  %12337 = vmatpush1.bf16.msra.mxu0 %v9336
  %12338 = vmatprep.subr.bf16.mxu0 %v9361
  %12339 = vmatpush1.bf16.msra.mxu0 %v9360
  %12340 = vmatprep.subr.bf16.mxu0 %v9385
  %12341 = vmatpush1.bf16.msra.mxu0 %v9384
  %12342 = vmatprep.subr.bf16.mxu0 %v9409
  %12343 = vmatpush1.bf16.msra.mxu0 %v9408
  %12344 = vmatprep.subr.bf16.mxu0 %v9433
  %12345 = vmatpush1.bf16.msra.mxu0 %v9432
  %12346 = vmatprep.mubr.bf16.mxu0 %v2793
  %12347 = vmatmul.mubr.bf16.gmra.mrb[0].mxu0 %v2792
  %v12348 = vpop.f32.mrb[0].mxu0
  %v12349 = vadd.f32 %v4353, %v12348
  %v12350 = vpop.f32.mrb[0].mxu0
  %v12351 = vadd.f32 %v4357, %v12350
  %v12352 = vpop.f32.mrb[0].mxu0
  %v12353 = vadd.f32 %v4353, %v12352
  %v12354 = vpop.f32.mrb[0].mxu0
  %v12355 = vadd.f32 %v4357, %v12354
  %12356 = vdwg.mxu0
  %12357 = vmatprep.subr.bf16.mxu0 %v9457
  %12358 = vmatpush1.bf16.msra.mxu0 %v9456
  %12359 = vmatprep.subr.bf16.mxu0 %v9481
  %12360 = vmatpush1.bf16.msra.mxu0 %v9480
  %12361 = vmatprep.subr.bf16.mxu0 %v9505
  %12362 = vmatpush1.bf16.msra.mxu0 %v9504
  %12363 = vmatprep.subr.bf16.mxu0 %v9529
  %12364 = vmatpush1.bf16.msra.mxu0 %v9528
  %12365 = vmatprep.subr.bf16.mxu0 %v9553
  %12366 = vmatpush1.bf16.msra.mxu0 %v9552
  %12367 = vmatprep.subr.bf16.mxu0 %v9577
  %12368 = vmatpush1.bf16.msra.mxu0 %v9576
  %12369 = vmatprep.subr.bf16.mxu0 %v9601
  %12370 = vmatpush1.bf16.msra.mxu0 %v9600
  %12371 = vmatprep.subr.bf16.mxu0 %v9625
  %12372 = vmatpush1.bf16.msra.mxu0 %v9624
  %12373 = vmatprep.subr.bf16.mxu0 %v9649
  %12374 = vmatpush1.bf16.msra.mxu0 %v9648
  %12375 = vmatprep.subr.bf16.mxu0 %v9673
  %12376 = vmatpush1.bf16.msra.mxu0 %v9672
  %12377 = vmatprep.subr.bf16.mxu0 %v9697
  %12378 = vmatpush1.bf16.msra.mxu0 %v9696
  %12379 = vmatprep.subr.bf16.mxu0 %v9721
  %12380 = vmatpush1.bf16.msra.mxu0 %v9720
  %12381 = vmatprep.subr.bf16.mxu0 %v9745
  %12382 = vmatpush1.bf16.msra.mxu0 %v9744
  %12383 = vmatprep.subr.bf16.mxu0 %v9769
  %12384 = vmatpush1.bf16.msra.mxu0 %v9768
  %12385 = vmatprep.subr.bf16.mxu0 %v9793
  %12386 = vmatpush1.bf16.msra.mxu0 %v9792
  %12387 = vmatprep.subr.bf16.mxu0 %v9817
  %12388 = vmatpush1.bf16.msra.mxu0 %v9816
  %12389 = vmatprep.mubr.bf16.mxu0 %v2795
  %12390 = vmatmul.mubr.bf16.gmra.mrb[0].mxu0 %v2794
  %v12391 = vpop.f32.mrb[0].mxu0
  %v12392 = vadd.f32 %v12349, %v12391
  %v12393 = vpop.f32.mrb[0].mxu0
  %v12394 = vadd.f32 %v12351, %v12393
  %v12395 = vpop.f32.mrb[0].mxu0
  %v12396 = vadd.f32 %v12353, %v12395
  %v12397 = vpop.f32.mrb[0].mxu0
  %v12398 = vadd.f32 %v12355, %v12397
  %12399 = vdwg.mxu0
  %12400 = vmatprep.subr.bf16.mxu0 %v9841
  %12401 = vmatpush1.bf16.msra.mxu0 %v9840
  %12402 = vmatprep.subr.bf16.mxu0 %v9865
  %12403 = vmatpush1.bf16.msra.mxu0 %v9864
  %12404 = vmatprep.subr.bf16.mxu0 %v9889
  %12405 = vmatpush1.bf16.msra.mxu0 %v9888
  %12406 = vmatprep.subr.bf16.mxu0 %v9913
  %12407 = vmatpush1.bf16.msra.mxu0 %v9912
  %12408 = vmatprep.subr.bf16.mxu0 %v9937
  %12409 = vmatpush1.bf16.msra.mxu0 %v9936
  %12410 = vmatprep.subr.bf16.mxu0 %v9961
  %12411 = vmatpush1.bf16.msra.mxu0 %v9960
  %12412 = vmatprep.subr.bf16.mxu0 %v9985
  %12413 = vmatpush1.bf16.msra.mxu0 %v9984
  %12414 = vmatprep.subr.bf16.mxu0 %v10009
  %12415 = vmatpush1.bf16.msra.mxu0 %v10008
  %12416 = vmatprep.subr.bf16.mxu0 %v10033
  %12417 = vmatpush1.bf16.msra.mxu0 %v10032
  %12418 = vmatprep.subr.bf16.mxu0 %v10057
  %12419 = vmatpush1.bf16.msra.mxu0 %v10056
  %12420 = vmatprep.subr.bf16.mxu0 %v10081
  %12421 = vmatpush1.bf16.msra.mxu0 %v10080
  %12422 = vmatprep.subr.bf16.mxu0 %v10105
  %12423 = vmatpush1.bf16.msra.mxu0 %v10104
  %12424 = vmatprep.subr.bf16.mxu0 %v10129
  %12425 = vmatpush1.bf16.msra.mxu0 %v10128
  %12426 = vmatprep.subr.bf16.mxu0 %v10153
  %12427 = vmatpush1.bf16.msra.mxu0 %v10152
  %12428 = vmatprep.subr.bf16.mxu0 %v10177
  %12429 = vmatpush1.bf16.msra.mxu0 %v10176
  %12430 = vmatprep.subr.bf16.mxu0 %v10201
  %12431 = vmatpush1.bf16.msra.mxu0 %v10200
  %12432 = vmatprep.mubr.bf16.mxu0 %v2797
  %12433 = vmatmul.mubr.bf16.gmra.mrb[0].mxu0 %v2796
  %v12434 = vpop.f32.mrb[0].mxu0
  %v12435 = vadd.f32 %v12392, %v12434
  %v12436 = vpop.f32.mrb[0].mxu0
  %v12437 = vadd.f32 %v12394, %v12436
  %v12438 = vpop.f32.mrb[0].mxu0
  %v12439 = vadd.f32 %v12396, %v12438
  %v12440 = vpop.f32.mrb[0].mxu0
  %v12441 = vadd.f32 %v12398, %v12440
  %12442 = vdwg.mxu0
  %12443 = vmatprep.subr.bf16.mxu0 %v10225
  %12444 = vmatpush1.bf16.msra.mxu0 %v10224
  %12445 = vmatprep.subr.bf16.mxu0 %v10249
  %12446 = vmatpush1.bf16.msra.mxu0 %v10248
  %12447 = vmatprep.subr.bf16.mxu0 %v10273
  %12448 = vmatpush1.bf16.msra.mxu0 %v10272
  %12449 = vmatprep.subr.bf16.mxu0 %v10297
  %12450 = vmatpush1.bf16.msra.mxu0 %v10296
  %12451 = vmatprep.subr.bf16.mxu0 %v10321
  %12452 = vmatpush1.bf16.msra.mxu0 %v10320
  %12453 = vmatprep.subr.bf16.mxu0 %v10345
  %12454 = vmatpush1.bf16.msra.mxu0 %v10344
  %12455 = vmatprep.subr.bf16.mxu0 %v10369
  %12456 = vmatpush1.bf16.msra.mxu0 %v10368
  %12457 = vmatprep.subr.bf16.mxu0 %v10393
  %12458 = vmatpush1.bf16.msra.mxu0 %v10392
  %12459 = vmatprep.subr.bf16.mxu0 %v10417
  %12460 = vmatpush1.bf16.msra.mxu0 %v10416
  %12461 = vmatprep.subr.bf16.mxu0 %v10441
  %12462 = vmatpush1.bf16.msra.mxu0 %v10440
  %12463 = vmatprep.subr.bf16.mxu0 %v10465
  %12464 = vmatpush1.bf16.msra.mxu0 %v10464
  %12465 = vmatprep.subr.bf16.mxu0 %v10489
  %12466 = vmatpush1.bf16.msra.mxu0 %v10488
  %12467 = vmatprep.subr.bf16.mxu0 %v10513
  %12468 = vmatpush1.bf16.msra.mxu0 %v10512
  %12469 = vmatprep.subr.bf16.mxu0 %v10537
  %12470 = vmatpush1.bf16.msra.mxu0 %v10536
  %12471 = vmatprep.subr.bf16.mxu0 %v10561
  %12472 = vmatpush1.bf16.msra.mxu0 %v10560
  %12473 = vmatprep.subr.bf16.mxu0 %v10585
  %12474 = vmatpush1.bf16.msra.mxu0 %v10584
  %12475 = vmatprep.mubr.bf16.mxu0 %v2799
  %12476 = vmatmul.mubr.bf16.gmra.mrb[0].mxu0 %v2798
  %v12477 = vpop.f32.mrb[0].mxu0
  %v12478 = vadd.f32 %v12435, %v12477
  %v12479 = vpop.f32.mrb[0].mxu0
  %v12480 = vadd.f32 %v12437, %v12479
  %v12481 = vpop.f32.mrb[0].mxu0
  %v12482 = vadd.f32 %v12439, %v12481
  %v12483 = vpop.f32.mrb[0].mxu0
  %v12484 = vadd.f32 %v12441, %v12483
  %12485 = vdwg.mxu0
  %12486 = vmatprep.subr.bf16.mxu0 %v9075
  %12487 = vmatpush1.bf16.msra.mxu0 %v9074
  %12488 = vmatprep.subr.bf16.mxu0 %v9099
  %12489 = vmatpush1.bf16.msra.mxu0 %v9098
  %12490 = vmatprep.subr.bf16.mxu0 %v9123
  %12491 = vmatpush1.bf16.msra.mxu0 %v9122
  %12492 = vmatprep.subr.bf16.mxu0 %v9147
  %12493 = vmatpush1.bf16.msra.mxu0 %v9146
  %12494 = vmatprep.subr.bf16.mxu0 %v9171
  %12495 = vmatpush1.bf16.msra.mxu0 %v9170
  %12496 = vmatprep.subr.bf16.mxu0 %v9195
  %12497 = vmatpush1.bf16.msra.mxu0 %v9194
  %12498 = vmatprep.subr.bf16.mxu0 %v9219
  %12499 = vmatpush1.bf16.msra.mxu0 %v9218
  %12500 = vmatprep.subr.bf16.mxu0 %v9243
  %12501 = vmatpush1.bf16.msra.mxu0 %v9242
  %12502 = vmatprep.subr.bf16.mxu0 %v9267
  %12503 = vmatpush1.bf16.msra.mxu0 %v9266
  %12504 = vmatprep.subr.bf16.mxu0 %v9291
  %12505 = vmatpush1.bf16.msra.mxu0 %v9290
  %12506 = vmatprep.subr.bf16.mxu0 %v9315
  %12507 = vmatpush1.bf16.msra.mxu0 %v9314
  %12508 = vmatprep.subr.bf16.mxu0 %v9339
  %12509 = vmatpush1.bf16.msra.mxu0 %v9338
  %12510 = vmatprep.subr.bf16.mxu0 %v9363
  %12511 = vmatpush1.bf16.msra.mxu0 %v9362
  %12512 = vmatprep.subr.bf16.mxu0 %v9387
  %12513 = vmatpush1.bf16.msra.mxu0 %v9386
  %12514 = vmatprep.subr.bf16.mxu0 %v9411
  %12515 = vmatpush1.bf16.msra.mxu0 %v9410
  %12516 = vmatprep.subr.bf16.mxu0 %v9435
  %12517 = vmatpush1.bf16.msra.mxu0 %v9434
  %12518 = vmatprep.mubr.bf16.mxu0 %v2793
  %12519 = vmatmul.mubr.bf16.gmra.mrb[0].mxu0 %v2792
  %v12520 = vpop.f32.mrb[0].mxu0
  %v12521 = vadd.f32 %v4361, %v12520
  %v12522 = vpop.f32.mrb[0].mxu0
  %v12523 = vadd.f32 %v4365, %v12522
  %v12524 = vpop.f32.mrb[0].mxu0
  %v12525 = vadd.f32 %v4361, %v12524
  %v12526 = vpop.f32.mrb[0].mxu0
  %v12527 = vadd.f32 %v4365, %v12526
  %12528 = vdwg.mxu0
  %12529 = vmatprep.subr.bf16.mxu0 %v9459
  %12530 = vmatpush1.bf16.msra.mxu0 %v9458
  %12531 = vmatprep.subr.bf16.mxu0 %v9483
  %12532 = vmatpush1.bf16.msra.mxu0 %v9482
  %12533 = vmatprep.subr.bf16.mxu0 %v9507
  %12534 = vmatpush1.bf16.msra.mxu0 %v9506
  %12535 = vmatprep.subr.bf16.mxu0 %v9531
  %12536 = vmatpush1.bf16.msra.mxu0 %v9530
  %12537 = vmatprep.subr.bf16.mxu0 %v9555
  %12538 = vmatpush1.bf16.msra.mxu0 %v9554
  %12539 = vmatprep.subr.bf16.mxu0 %v9579
  %12540 = vmatpush1.bf16.msra.mxu0 %v9578
  %12541 = vmatprep.subr.bf16.mxu0 %v9603
  %12542 = vmatpush1.bf16.msra.mxu0 %v9602
  %12543 = vmatprep.subr.bf16.mxu0 %v9627
  %12544 = vmatpush1.bf16.msra.mxu0 %v9626
  %12545 = vmatprep.subr.bf16.mxu0 %v9651
  %12546 = vmatpush1.bf16.msra.mxu0 %v9650
  %12547 = vmatprep.subr.bf16.mxu0 %v9675
  %12548 = vmatpush1.bf16.msra.mxu0 %v9674
  %12549 = vmatprep.subr.bf16.mxu0 %v9699
  %12550 = vmatpush1.bf16.msra.mxu0 %v9698
  %12551 = vmatprep.subr.bf16.mxu0 %v9723
  %12552 = vmatpush1.bf16.msra.mxu0 %v9722
  %12553 = vmatprep.subr.bf16.mxu0 %v9747
  %12554 = vmatpush1.bf16.msra.mxu0 %v9746
  %12555 = vmatprep.subr.bf16.mxu0 %v9771
  %12556 = vmatpush1.bf16.msra.mxu0 %v9770
  %12557 = vmatprep.subr.bf16.mxu0 %v9795
  %12558 = vmatpush1.bf16.msra.mxu0 %v9794
  %12559 = vmatprep.subr.bf16.mxu0 %v9819
  %12560 = vmatpush1.bf16.msra.mxu0 %v9818
  %12561 = vmatprep.mubr.bf16.mxu0 %v2795
  %12562 = vmatmul.mubr.bf16.gmra.mrb[0].mxu0 %v2794
  %v12563 = vpop.f32.mrb[0].mxu0
  %v12564 = vadd.f32 %v12521, %v12563
  %v12565 = vpop.f32.mrb[0].mxu0
  %v12566 = vadd.f32 %v12523, %v12565
  %v12567 = vpop.f32.mrb[0].mxu0
  %v12568 = vadd.f32 %v12525, %v12567
  %v12569 = vpop.f32.mrb[0].mxu0
  %v12570 = vadd.f32 %v12527, %v12569
  %12571 = vdwg.mxu0
  %12572 = vmatprep.subr.bf16.mxu0 %v9843
  %12573 = vmatpush1.bf16.msra.mxu0 %v9842
  %12574 = vmatprep.subr.bf16.mxu0 %v9867
  %12575 = vmatpush1.bf16.msra.mxu0 %v9866
  %12576 = vmatprep.subr.bf16.mxu0 %v9891
  %12577 = vmatpush1.bf16.msra.mxu0 %v9890
  %12578 = vmatprep.subr.bf16.mxu0 %v9915
  %12579 = vmatpush1.bf16.msra.mxu0 %v9914
  %12580 = vmatprep.subr.bf16.mxu0 %v9939
  %12581 = vmatpush1.bf16.msra.mxu0 %v9938
  %12582 = vmatprep.subr.bf16.mxu0 %v9963
  %12583 = vmatpush1.bf16.msra.mxu0 %v9962
  %12584 = vmatprep.subr.bf16.mxu0 %v9987
  %12585 = vmatpush1.bf16.msra.mxu0 %v9986
  %12586 = vmatprep.subr.bf16.mxu0 %v10011
  %12587 = vmatpush1.bf16.msra.mxu0 %v10010
  %12588 = vmatprep.subr.bf16.mxu0 %v10035
  %12589 = vmatpush1.bf16.msra.mxu0 %v10034
  %12590 = vmatprep.subr.bf16.mxu0 %v10059
  %12591 = vmatpush1.bf16.msra.mxu0 %v10058
  %12592 = vmatprep.subr.bf16.mxu0 %v10083
  %12593 = vmatpush1.bf16.msra.mxu0 %v10082
  %12594 = vmatprep.subr.bf16.mxu0 %v10107
  %12595 = vmatpush1.bf16.msra.mxu0 %v10106
  %12596 = vmatprep.subr.bf16.mxu0 %v10131
  %12597 = vmatpush1.bf16.msra.mxu0 %v10130
  %12598 = vmatprep.subr.bf16.mxu0 %v10155
  %12599 = vmatpush1.bf16.msra.mxu0 %v10154
  %12600 = vmatprep.subr.bf16.mxu0 %v10179
  %12601 = vmatpush1.bf16.msra.mxu0 %v10178
  %12602 = vmatprep.subr.bf16.mxu0 %v10203
  %12603 = vmatpush1.bf16.msra.mxu0 %v10202
  %12604 = vmatprep.mubr.bf16.mxu0 %v2797
  %12605 = vmatmul.mubr.bf16.gmra.mrb[0].mxu0 %v2796
  %v12606 = vpop.f32.mrb[0].mxu0
  %v12607 = vadd.f32 %v12564, %v12606
  %v12608 = vpop.f32.mrb[0].mxu0
  %v12609 = vadd.f32 %v12566, %v12608
  %v12610 = vpop.f32.mrb[0].mxu0
  %v12611 = vadd.f32 %v12568, %v12610
  %v12612 = vpop.f32.mrb[0].mxu0
  %v12613 = vadd.f32 %v12570, %v12612
  %12614 = vdwg.mxu0
  %12615 = vmatprep.subr.bf16.mxu0 %v10227
  %12616 = vmatpush1.bf16.msra.mxu0 %v10226
  %12617 = vmatprep.subr.bf16.mxu0 %v10251
  %12618 = vmatpush1.bf16.msra.mxu0 %v10250
  %12619 = vmatprep.subr.bf16.mxu0 %v10275
  %12620 = vmatpush1.bf16.msra.mxu0 %v10274
  %12621 = vmatprep.subr.bf16.mxu0 %v10299
  %12622 = vmatpush1.bf16.msra.mxu0 %v10298
  %12623 = vmatprep.subr.bf16.mxu0 %v10323
  %12624 = vmatpush1.bf16.msra.mxu0 %v10322
  %12625 = vmatprep.subr.bf16.mxu0 %v10347
  %12626 = vmatpush1.bf16.msra.mxu0 %v10346
  %12627 = vmatprep.subr.bf16.mxu0 %v10371
  %12628 = vmatpush1.bf16.msra.mxu0 %v10370
  %12629 = vmatprep.subr.bf16.mxu0 %v10395
  %12630 = vmatpush1.bf16.msra.mxu0 %v10394
  %12631 = vmatprep.subr.bf16.mxu0 %v10419
  %12632 = vmatpush1.bf16.msra.mxu0 %v10418
  %12633 = vmatprep.subr.bf16.mxu0 %v10443
  %12634 = vmatpush1.bf16.msra.mxu0 %v10442
  %12635 = vmatprep.subr.bf16.mxu0 %v10467
  %12636 = vmatpush1.bf16.msra.mxu0 %v10466
  %12637 = vmatprep.subr.bf16.mxu0 %v10491
  %12638 = vmatpush1.bf16.msra.mxu0 %v10490
  %12639 = vmatprep.subr.bf16.mxu0 %v10515
  %12640 = vmatpush1.bf16.msra.mxu0 %v10514
  %12641 = vmatprep.subr.bf16.mxu0 %v10539
  %12642 = vmatpush1.bf16.msra.mxu0 %v10538
  %12643 = vmatprep.subr.bf16.mxu0 %v10563
  %12644 = vmatpush1.bf16.msra.mxu0 %v10562
  %12645 = vmatprep.subr.bf16.mxu0 %v10587
  %12646 = vmatpush1.bf16.msra.mxu0 %v10586
  %12647 = vmatprep.mubr.bf16.mxu0 %v2799
  %12648 = vmatmul.mubr.bf16.gmra.mrb[0].mxu0 %v2798
  %v12649 = vpop.f32.mrb[0].mxu0
  %v12650 = vadd.f32 %v12607, %v12649
  %v12651 = vpop.f32.mrb[0].mxu0
  %v12652 = vadd.f32 %v12609, %v12651
  %v12653 = vpop.f32.mrb[0].mxu0
  %v12654 = vadd.f32 %v12611, %v12653
  %v12655 = vpop.f32.mrb[0].mxu0
  %v12656 = vadd.f32 %v12613, %v12655
  %12657 = vdwg.mxu0
  %12658 = vmatprep.subr.bf16.mxu0 %v9077
  %12659 = vmatpush1.bf16.msra.mxu0 %v9076
  %12660 = vmatprep.subr.bf16.mxu0 %v9101
  %12661 = vmatpush1.bf16.msra.mxu0 %v9100
  %12662 = vmatprep.subr.bf16.mxu0 %v9125
  %12663 = vmatpush1.bf16.msra.mxu0 %v9124
  %12664 = vmatprep.subr.bf16.mxu0 %v9149
  %12665 = vmatpush1.bf16.msra.mxu0 %v9148
  %12666 = vmatprep.subr.bf16.mxu0 %v9173
  %12667 = vmatpush1.bf16.msra.mxu0 %v9172
  %12668 = vmatprep.subr.bf16.mxu0 %v9197
  %12669 = vmatpush1.bf16.msra.mxu0 %v9196
  %12670 = vmatprep.subr.bf16.mxu0 %v9221
  %12671 = vmatpush1.bf16.msra.mxu0 %v9220
  %12672 = vmatprep.subr.bf16.mxu0 %v9245
  %12673 = vmatpush1.bf16.msra.mxu0 %v9244
  %12674 = vmatprep.subr.bf16.mxu0 %v9269
  %12675 = vmatpush1.bf16.msra.mxu0 %v9268
  %12676 = vmatprep.subr.bf16.mxu0 %v9293
  %12677 = vmatpush1.bf16.msra.mxu0 %v9292
  %12678 = vmatprep.subr.bf16.mxu0 %v9317
  %12679 = vmatpush1.bf16.msra.mxu0 %v9316
  %12680 = vmatprep.subr.bf16.mxu0 %v9341
  %12681 = vmatpush1.bf16.msra.mxu0 %v9340
  %12682 = vmatprep.subr.bf16.mxu0 %v9365
  %12683 = vmatpush1.bf16.msra.mxu0 %v9364
  %12684 = vmatprep.subr.bf16.mxu0 %v9389
  %12685 = vmatpush1.bf16.msra.mxu0 %v9388
  %12686 = vmatprep.subr.bf16.mxu0 %v9413
  %12687 = vmatpush1.bf16.msra.mxu0 %v9412
  %12688 = vmatprep.subr.bf16.mxu0 %v9437
  %12689 = vmatpush1.bf16.msra.mxu0 %v9436
  %12690 = vmatprep.mubr.bf16.mxu0 %v2793
  %12691 = vmatmul.mubr.bf16.gmra.mrb[0].mxu0 %v2792
  %v12692 = vpop.f32.mrb[0].mxu0
  %v12693 = vadd.f32 %v4369, %v12692
  %v12694 = vpop.f32.mrb[0].mxu0
  %v12695 = vadd.f32 %v4373, %v12694
  %v12696 = vpop.f32.mrb[0].mxu0
  %v12697 = vadd.f32 %v4369, %v12696
  %v12698 = vpop.f32.mrb[0].mxu0
  %v12699 = vadd.f32 %v4373, %v12698
  %12700 = vdwg.mxu0
  %12701 = vmatprep.subr.bf16.mxu0 %v9461
  %12702 = vmatpush1.bf16.msra.mxu0 %v9460
  %12703 = vmatprep.subr.bf16.mxu0 %v9485
  %12704 = vmatpush1.bf16.msra.mxu0 %v9484
  %12705 = vmatprep.subr.bf16.mxu0 %v9509
  %12706 = vmatpush1.bf16.msra.mxu0 %v9508
  %12707 = vmatprep.subr.bf16.mxu0 %v9533
  %12708 = vmatpush1.bf16.msra.mxu0 %v9532
  %12709 = vmatprep.subr.bf16.mxu0 %v9557
  %12710 = vmatpush1.bf16.msra.mxu0 %v9556
  %12711 = vmatprep.subr.bf16.mxu0 %v9581
  %12712 = vmatpush1.bf16.msra.mxu0 %v9580
  %12713 = vmatprep.subr.bf16.mxu0 %v9605
  %12714 = vmatpush1.bf16.msra.mxu0 %v9604
  %12715 = vmatprep.subr.bf16.mxu0 %v9629
  %12716 = vmatpush1.bf16.msra.mxu0 %v9628
  %12717 = vmatprep.subr.bf16.mxu0 %v9653
  %12718 = vmatpush1.bf16.msra.mxu0 %v9652
  %12719 = vmatprep.subr.bf16.mxu0 %v9677
  %12720 = vmatpush1.bf16.msra.mxu0 %v9676
  %12721 = vmatprep.subr.bf16.mxu0 %v9701
  %12722 = vmatpush1.bf16.msra.mxu0 %v9700
  %12723 = vmatprep.subr.bf16.mxu0 %v9725
  %12724 = vmatpush1.bf16.msra.mxu0 %v9724
  %12725 = vmatprep.subr.bf16.mxu0 %v9749
  %12726 = vmatpush1.bf16.msra.mxu0 %v9748
  %12727 = vmatprep.subr.bf16.mxu0 %v9773
  %12728 = vmatpush1.bf16.msra.mxu0 %v9772
  %12729 = vmatprep.subr.bf16.mxu0 %v9797
  %12730 = vmatpush1.bf16.msra.mxu0 %v9796
  %12731 = vmatprep.subr.bf16.mxu0 %v9821
  %12732 = vmatpush1.bf16.msra.mxu0 %v9820
  %12733 = vmatprep.mubr.bf16.mxu0 %v2795
  %12734 = vmatmul.mubr.bf16.gmra.mrb[0].mxu0 %v2794
  %v12735 = vpop.f32.mrb[0].mxu0
  %v12736 = vadd.f32 %v12693, %v12735
  %v12737 = vpop.f32.mrb[0].mxu0
  %v12738 = vadd.f32 %v12695, %v12737
  %v12739 = vpop.f32.mrb[0].mxu0
  %v12740 = vadd.f32 %v12697, %v12739
  %v12741 = vpop.f32.mrb[0].mxu0
  %v12742 = vadd.f32 %v12699, %v12741
  %12743 = vdwg.mxu0
  %12744 = vmatprep.subr.bf16.mxu0 %v9845
  %12745 = vmatpush1.bf16.msra.mxu0 %v9844
  %12746 = vmatprep.subr.bf16.mxu0 %v9869
  %12747 = vmatpush1.bf16.msra.mxu0 %v9868
  %12748 = vmatprep.subr.bf16.mxu0 %v9893
  %12749 = vmatpush1.bf16.msra.mxu0 %v9892
  %12750 = vmatprep.subr.bf16.mxu0 %v9917
  %12751 = vmatpush1.bf16.msra.mxu0 %v9916
  %12752 = vmatprep.subr.bf16.mxu0 %v9941
  %12753 = vmatpush1.bf16.msra.mxu0 %v9940
  %12754 = vmatprep.subr.bf16.mxu0 %v9965
  %12755 = vmatpush1.bf16.msra.mxu0 %v9964
  %12756 = vmatprep.subr.bf16.mxu0 %v9989
  %12757 = vmatpush1.bf16.msra.mxu0 %v9988
  %12758 = vmatprep.subr.bf16.mxu0 %v10013
  %12759 = vmatpush1.bf16.msra.mxu0 %v10012
  %12760 = vmatprep.subr.bf16.mxu0 %v10037
  %12761 = vmatpush1.bf16.msra.mxu0 %v10036
  %12762 = vmatprep.subr.bf16.mxu0 %v10061
  %12763 = vmatpush1.bf16.msra.mxu0 %v10060
  %12764 = vmatprep.subr.bf16.mxu0 %v10085
  %12765 = vmatpush1.bf16.msra.mxu0 %v10084
  %12766 = vmatprep.subr.bf16.mxu0 %v10109
  %12767 = vmatpush1.bf16.msra.mxu0 %v10108
  %12768 = vmatprep.subr.bf16.mxu0 %v10133
  %12769 = vmatpush1.bf16.msra.mxu0 %v10132
  %12770 = vmatprep.subr.bf16.mxu0 %v10157
  %12771 = vmatpush1.bf16.msra.mxu0 %v10156
  %12772 = vmatprep.subr.bf16.mxu0 %v10181
  %12773 = vmatpush1.bf16.msra.mxu0 %v10180
  %12774 = vmatprep.subr.bf16.mxu0 %v10205
  %12775 = vmatpush1.bf16.msra.mxu0 %v10204
  %12776 = vmatprep.mubr.bf16.mxu0 %v2797
  %12777 = vmatmul.mubr.bf16.gmra.mrb[0].mxu0 %v2796
  %v12778 = vpop.f32.mrb[0].mxu0
  %v12779 = vadd.f32 %v12736, %v12778
  %v12780 = vpop.f32.mrb[0].mxu0
  %v12781 = vadd.f32 %v12738, %v12780
  %v12782 = vpop.f32.mrb[0].mxu0
  %v12783 = vadd.f32 %v12740, %v12782
  %v12784 = vpop.f32.mrb[0].mxu0
  %v12785 = vadd.f32 %v12742, %v12784
  %12786 = vdwg.mxu0
  %12787 = vmatprep.subr.bf16.mxu0 %v10229
  %12788 = vmatpush1.bf16.msra.mxu0 %v10228
  %12789 = vmatprep.subr.bf16.mxu0 %v10253
  %12790 = vmatpush1.bf16.msra.mxu0 %v10252
  %12791 = vmatprep.subr.bf16.mxu0 %v10277
  %12792 = vmatpush1.bf16.msra.mxu0 %v10276
  %12793 = vmatprep.subr.bf16.mxu0 %v10301
  %12794 = vmatpush1.bf16.msra.mxu0 %v10300
  %12795 = vmatprep.subr.bf16.mxu0 %v10325
  %12796 = vmatpush1.bf16.msra.mxu0 %v10324
  %12797 = vmatprep.subr.bf16.mxu0 %v10349
  %12798 = vmatpush1.bf16.msra.mxu0 %v10348
  %12799 = vmatprep.subr.bf16.mxu0 %v10373
  %12800 = vmatpush1.bf16.msra.mxu0 %v10372
  %12801 = vmatprep.subr.bf16.mxu0 %v10397
  %12802 = vmatpush1.bf16.msra.mxu0 %v10396
  %12803 = vmatprep.subr.bf16.mxu0 %v10421
  %12804 = vmatpush1.bf16.msra.mxu0 %v10420
  %12805 = vmatprep.subr.bf16.mxu0 %v10445
  %12806 = vmatpush1.bf16.msra.mxu0 %v10444
  %12807 = vmatprep.subr.bf16.mxu0 %v10469
  %12808 = vmatpush1.bf16.msra.mxu0 %v10468
  %12809 = vmatprep.subr.bf16.mxu0 %v10493
  %12810 = vmatpush1.bf16.msra.mxu0 %v10492
  %12811 = vmatprep.subr.bf16.mxu0 %v10517
  %12812 = vmatpush1.bf16.msra.mxu0 %v10516
  %12813 = vmatprep.subr.bf16.mxu0 %v10541
  %12814 = vmatpush1.bf16.msra.mxu0 %v10540
  %12815 = vmatprep.subr.bf16.mxu0 %v10565
  %12816 = vmatpush1.bf16.msra.mxu0 %v10564
  %12817 = vmatprep.subr.bf16.mxu0 %v10589
  %12818 = vmatpush1.bf16.msra.mxu0 %v10588
  %12819 = vmatprep.mubr.bf16.mxu0 %v2799
  %12820 = vmatmul.mubr.bf16.gmra.mrb[0].mxu0 %v2798
  %v12821 = vpop.f32.mrb[0].mxu0
  %v12822 = vadd.f32 %v12779, %v12821
  %v12823 = vpop.f32.mrb[0].mxu0
  %v12824 = vadd.f32 %v12781, %v12823
  %v12825 = vpop.f32.mrb[0].mxu0
  %v12826 = vadd.f32 %v12783, %v12825
  %v12827 = vpop.f32.mrb[0].mxu0
  %v12828 = vadd.f32 %v12785, %v12827
  %12829 = vdwg.mxu0
  %12830 = vmatprep.subr.bf16.mxu0 %v9079
  %12831 = vmatpush1.bf16.msra.mxu0 %v9078
  %12832 = vmatprep.subr.bf16.mxu0 %v9103
  %12833 = vmatpush1.bf16.msra.mxu0 %v9102
  %12834 = vmatprep.subr.bf16.mxu0 %v9127
  %12835 = vmatpush1.bf16.msra.mxu0 %v9126
  %12836 = vmatprep.subr.bf16.mxu0 %v9151
  %12837 = vmatpush1.bf16.msra.mxu0 %v9150
  %12838 = vmatprep.subr.bf16.mxu0 %v9175
  %12839 = vmatpush1.bf16.msra.mxu0 %v9174
  %12840 = vmatprep.subr.bf16.mxu0 %v9199
  %12841 = vmatpush1.bf16.msra.mxu0 %v9198
  %12842 = vmatprep.subr.bf16.mxu0 %v9223
  %12843 = vmatpush1.bf16.msra.mxu0 %v9222
  %12844 = vmatprep.subr.bf16.mxu0 %v9247
  %12845 = vmatpush1.bf16.msra.mxu0 %v9246
  %12846 = vmatprep.subr.bf16.mxu0 %v9271
  %12847 = vmatpush1.bf16.msra.mxu0 %v9270
  %12848 = vmatprep.subr.bf16.mxu0 %v9295
  %12849 = vmatpush1.bf16.msra.mxu0 %v9294
  %12850 = vmatprep.subr.bf16.mxu0 %v9319
  %12851 = vmatpush1.bf16.msra.mxu0 %v9318
  %12852 = vmatprep.subr.bf16.mxu0 %v9343
  %12853 = vmatpush1.bf16.msra.mxu0 %v9342
  %12854 = vmatprep.subr.bf16.mxu0 %v9367
  %12855 = vmatpush1.bf16.msra.mxu0 %v9366
  %12856 = vmatprep.subr.bf16.mxu0 %v9391
  %12857 = vmatpush1.bf16.msra.mxu0 %v9390
  %12858 = vmatprep.subr.bf16.mxu0 %v9415
  %12859 = vmatpush1.bf16.msra.mxu0 %v9414
  %12860 = vmatprep.subr.bf16.mxu0 %v9439
  %12861 = vmatpush1.bf16.msra.mxu0 %v9438
  %12862 = vmatprep.mubr.bf16.mxu0 %v2793
  %12863 = vmatmul.mubr.bf16.gmra.mrb[0].mxu0 %v2792
  %v12864 = vpop.f32.mrb[0].mxu0
  %v12865 = vadd.f32 %v4377, %v12864
  %v12866 = vpop.f32.mrb[0].mxu0
  %v12867 = vadd.f32 %v4381, %v12866
  %v12868 = vpop.f32.mrb[0].mxu0
  %v12869 = vadd.f32 %v4377, %v12868
  %v12870 = vpop.f32.mrb[0].mxu0
  %v12871 = vadd.f32 %v4381, %v12870
  %12872 = vdwg.mxu0
  %12873 = vmatprep.subr.bf16.mxu0 %v9463
  %12874 = vmatpush1.bf16.msra.mxu0 %v9462
  %12875 = vmatprep.subr.bf16.mxu0 %v9487
  %12876 = vmatpush1.bf16.msra.mxu0 %v9486
  %12877 = vmatprep.subr.bf16.mxu0 %v9511
  %12878 = vmatpush1.bf16.msra.mxu0 %v9510
  %12879 = vmatprep.subr.bf16.mxu0 %v9535
  %12880 = vmatpush1.bf16.msra.mxu0 %v9534
  %12881 = vmatprep.subr.bf16.mxu0 %v9559
  %12882 = vmatpush1.bf16.msra.mxu0 %v9558
  %12883 = vmatprep.subr.bf16.mxu0 %v9583
  %12884 = vmatpush1.bf16.msra.mxu0 %v9582
  %12885 = vmatprep.subr.bf16.mxu0 %v9607
  %12886 = vmatpush1.bf16.msra.mxu0 %v9606
  %12887 = vmatprep.subr.bf16.mxu0 %v9631
  %12888 = vmatpush1.bf16.msra.mxu0 %v9630
  %12889 = vmatprep.subr.bf16.mxu0 %v9655
  %12890 = vmatpush1.bf16.msra.mxu0 %v9654
  %12891 = vmatprep.subr.bf16.mxu0 %v9679
  %12892 = vmatpush1.bf16.msra.mxu0 %v9678
  %12893 = vmatprep.subr.bf16.mxu0 %v9703
  %12894 = vmatpush1.bf16.msra.mxu0 %v9702
  %12895 = vmatprep.subr.bf16.mxu0 %v9727
  %12896 = vmatpush1.bf16.msra.mxu0 %v9726
  %12897 = vmatprep.subr.bf16.mxu0 %v9751
  %12898 = vmatpush1.bf16.msra.mxu0 %v9750
  %12899 = vmatprep.subr.bf16.mxu0 %v9775
  %12900 = vmatpush1.bf16.msra.mxu0 %v9774
  %12901 = vmatprep.subr.bf16.mxu0 %v9799
  %12902 = vmatpush1.bf16.msra.mxu0 %v9798
  %12903 = vmatprep.subr.bf16.mxu0 %v9823
  %12904 = vmatpush1.bf16.msra.mxu0 %v9822
  %12905 = vmatprep.mubr.bf16.mxu0 %v2795
  %12906 = vmatmul.mubr.bf16.gmra.mrb[0].mxu0 %v2794
  %v12907 = vpop.f32.mrb[0].mxu0
  %v12908 = vadd.f32 %v12865, %v12907
  %v12909 = vpop.f32.mrb[0].mxu0
  %v12910 = vadd.f32 %v12867, %v12909
  %v12911 = vpop.f32.mrb[0].mxu0
  %v12912 = vadd.f32 %v12869, %v12911
  %v12913 = vpop.f32.mrb[0].mxu0
  %v12914 = vadd.f32 %v12871, %v12913
  %12915 = vdwg.mxu0
  %12916 = vmatprep.subr.bf16.mxu0 %v9847
  %12917 = vmatpush1.bf16.msra.mxu0 %v9846
  %12918 = vmatprep.subr.bf16.mxu0 %v9871
  %12919 = vmatpush1.bf16.msra.mxu0 %v9870
  %12920 = vmatprep.subr.bf16.mxu0 %v9895
  %12921 = vmatpush1.bf16.msra.mxu0 %v9894
  %12922 = vmatprep.subr.bf16.mxu0 %v9919
  %12923 = vmatpush1.bf16.msra.mxu0 %v9918
  %12924 = vmatprep.subr.bf16.mxu0 %v9943
  %12925 = vmatpush1.bf16.msra.mxu0 %v9942
  %12926 = vmatprep.subr.bf16.mxu0 %v9967
  %12927 = vmatpush1.bf16.msra.mxu0 %v9966
  %12928 = vmatprep.subr.bf16.mxu0 %v9991
  %12929 = vmatpush1.bf16.msra.mxu0 %v9990
  %12930 = vmatprep.subr.bf16.mxu0 %v10015
  %12931 = vmatpush1.bf16.msra.mxu0 %v10014
  %12932 = vmatprep.subr.bf16.mxu0 %v10039
  %12933 = vmatpush1.bf16.msra.mxu0 %v10038
  %12934 = vmatprep.subr.bf16.mxu0 %v10063
  %12935 = vmatpush1.bf16.msra.mxu0 %v10062
  %12936 = vmatprep.subr.bf16.mxu0 %v10087
  %12937 = vmatpush1.bf16.msra.mxu0 %v10086
  %12938 = vmatprep.subr.bf16.mxu0 %v10111
  %12939 = vmatpush1.bf16.msra.mxu0 %v10110
  %12940 = vmatprep.subr.bf16.mxu0 %v10135
  %12941 = vmatpush1.bf16.msra.mxu0 %v10134
  %12942 = vmatprep.subr.bf16.mxu0 %v10159
  %12943 = vmatpush1.bf16.msra.mxu0 %v10158
  %12944 = vmatprep.subr.bf16.mxu0 %v10183
  %12945 = vmatpush1.bf16.msra.mxu0 %v10182
  %12946 = vmatprep.subr.bf16.mxu0 %v10207
  %12947 = vmatpush1.bf16.msra.mxu0 %v10206
  %12948 = vmatprep.mubr.bf16.mxu0 %v2797
  %12949 = vmatmul.mubr.bf16.gmra.mrb[0].mxu0 %v2796
  %v12950 = vpop.f32.mrb[0].mxu0
  %v12951 = vadd.f32 %v12908, %v12950
  %v12952 = vpop.f32.mrb[0].mxu0
  %v12953 = vadd.f32 %v12910, %v12952
  %v12954 = vpop.f32.mrb[0].mxu0
  %v12955 = vadd.f32 %v12912, %v12954
  %v12956 = vpop.f32.mrb[0].mxu0
  %v12957 = vadd.f32 %v12914, %v12956
  %12958 = vdwg.mxu0
  %12959 = vmatprep.subr.bf16.mxu0 %v10231
  %12960 = vmatpush1.bf16.msra.mxu0 %v10230
  %12961 = vmatprep.subr.bf16.mxu0 %v10255
  %12962 = vmatpush1.bf16.msra.mxu0 %v10254
  %12963 = vmatprep.subr.bf16.mxu0 %v10279
  %12964 = vmatpush1.bf16.msra.mxu0 %v10278
  %12965 = vmatprep.subr.bf16.mxu0 %v10303
  %12966 = vmatpush1.bf16.msra.mxu0 %v10302
  %12967 = vmatprep.subr.bf16.mxu0 %v10327
  %12968 = vmatpush1.bf16.msra.mxu0 %v10326
  %12969 = vmatprep.subr.bf16.mxu0 %v10351
  %12970 = vmatpush1.bf16.msra.mxu0 %v10350
  %12971 = vmatprep.subr.bf16.mxu0 %v10375
  %12972 = vmatpush1.bf16.msra.mxu0 %v10374
  %12973 = vmatprep.subr.bf16.mxu0 %v10399
  %12974 = vmatpush1.bf16.msra.mxu0 %v10398
  %12975 = vmatprep.subr.bf16.mxu0 %v10423
  %12976 = vmatpush1.bf16.msra.mxu0 %v10422
  %12977 = vmatprep.subr.bf16.mxu0 %v10447
  %12978 = vmatpush1.bf16.msra.mxu0 %v10446
  %12979 = vmatprep.subr.bf16.mxu0 %v10471
  %12980 = vmatpush1.bf16.msra.mxu0 %v10470
  %12981 = vmatprep.subr.bf16.mxu0 %v10495
  %12982 = vmatpush1.bf16.msra.mxu0 %v10494
  %12983 = vmatprep.subr.bf16.mxu0 %v10519
  %12984 = vmatpush1.bf16.msra.mxu0 %v10518
  %12985 = vmatprep.subr.bf16.mxu0 %v10543
  %12986 = vmatpush1.bf16.msra.mxu0 %v10542
  %12987 = vmatprep.subr.bf16.mxu0 %v10567
  %12988 = vmatpush1.bf16.msra.mxu0 %v10566
  %12989 = vmatprep.subr.bf16.mxu0 %v10591
  %12990 = vmatpush1.bf16.msra.mxu0 %v10590
  %12991 = vmatprep.mubr.bf16.mxu0 %v2799
  %12992 = vmatmul.mubr.bf16.gmra.mrb[0].mxu0 %v2798
  %v12993 = vpop.f32.mrb[0].mxu0
  %v12994 = vadd.f32 %v12951, %v12993
  %v12995 = vpop.f32.mrb[0].mxu0
  %v12996 = vadd.f32 %v12953, %v12995
  %v12997 = vpop.f32.mrb[0].mxu0
  %v12998 = vadd.f32 %v12955, %v12997
  %v12999 = vpop.f32.mrb[0].mxu0
  %v13000 = vadd.f32 %v12957, %v12999
  %13001 = vdwg.mxu0
  %13002 = vmatprep.subr.bf16.mxu0 %v9081
  %13003 = vmatpush1.bf16.msra.mxu0 %v9080
  %13004 = vmatprep.subr.bf16.mxu0 %v9105
  %13005 = vmatpush1.bf16.msra.mxu0 %v9104
  %13006 = vmatprep.subr.bf16.mxu0 %v9129
  %13007 = vmatpush1.bf16.msra.mxu0 %v9128
  %13008 = vmatprep.subr.bf16.mxu0 %v9153
  %13009 = vmatpush1.bf16.msra.mxu0 %v9152
  %13010 = vmatprep.subr.bf16.mxu0 %v9177
  %13011 = vmatpush1.bf16.msra.mxu0 %v9176
  %13012 = vmatprep.subr.bf16.mxu0 %v9201
  %13013 = vmatpush1.bf16.msra.mxu0 %v9200
  %13014 = vmatprep.subr.bf16.mxu0 %v9225
  %13015 = vmatpush1.bf16.msra.mxu0 %v9224
  %13016 = vmatprep.subr.bf16.mxu0 %v9249
  %13017 = vmatpush1.bf16.msra.mxu0 %v9248
  %13018 = vmatprep.subr.bf16.mxu0 %v9273
  %13019 = vmatpush1.bf16.msra.mxu0 %v9272
  %13020 = vmatprep.subr.bf16.mxu0 %v9297
  %13021 = vmatpush1.bf16.msra.mxu0 %v9296
  %13022 = vmatprep.subr.bf16.mxu0 %v9321
  %13023 = vmatpush1.bf16.msra.mxu0 %v9320
  %13024 = vmatprep.subr.bf16.mxu0 %v9345
  %13025 = vmatpush1.bf16.msra.mxu0 %v9344
  %13026 = vmatprep.subr.bf16.mxu0 %v9369
  %13027 = vmatpush1.bf16.msra.mxu0 %v9368
  %13028 = vmatprep.subr.bf16.mxu0 %v9393
  %13029 = vmatpush1.bf16.msra.mxu0 %v9392
  %13030 = vmatprep.subr.bf16.mxu0 %v9417
  %13031 = vmatpush1.bf16.msra.mxu0 %v9416
  %13032 = vmatprep.subr.bf16.mxu0 %v9441
  %13033 = vmatpush1.bf16.msra.mxu0 %v9440
  %13034 = vmatprep.mubr.bf16.mxu0 %v2793
  %13035 = vmatmul.mubr.bf16.gmra.mrb[0].mxu0 %v2792
  %v13036 = vpop.f32.mrb[0].mxu0
  %v13037 = vadd.f32 %v4385, %v13036
  %v13038 = vpop.f32.mrb[0].mxu0
  %v13039 = vadd.f32 %v4389, %v13038
  %v13040 = vpop.f32.mrb[0].mxu0
  %v13041 = vadd.f32 %v4385, %v13040
  %v13042 = vpop.f32.mrb[0].mxu0
  %v13043 = vadd.f32 %v4389, %v13042
  %13044 = vdwg.mxu0
  %13045 = vmatprep.subr.bf16.mxu0 %v9465
  %13046 = vmatpush1.bf16.msra.mxu0 %v9464
  %13047 = vmatprep.subr.bf16.mxu0 %v9489
  %13048 = vmatpush1.bf16.msra.mxu0 %v9488
  %13049 = vmatprep.subr.bf16.mxu0 %v9513
  %13050 = vmatpush1.bf16.msra.mxu0 %v9512
  %13051 = vmatprep.subr.bf16.mxu0 %v9537
  %13052 = vmatpush1.bf16.msra.mxu0 %v9536
  %13053 = vmatprep.subr.bf16.mxu0 %v9561
  %13054 = vmatpush1.bf16.msra.mxu0 %v9560
  %13055 = vmatprep.subr.bf16.mxu0 %v9585
  %13056 = vmatpush1.bf16.msra.mxu0 %v9584
  %13057 = vmatprep.subr.bf16.mxu0 %v9609
  %13058 = vmatpush1.bf16.msra.mxu0 %v9608
  %13059 = vmatprep.subr.bf16.mxu0 %v9633
  %13060 = vmatpush1.bf16.msra.mxu0 %v9632
  %13061 = vmatprep.subr.bf16.mxu0 %v9657
  %13062 = vmatpush1.bf16.msra.mxu0 %v9656
  %13063 = vmatprep.subr.bf16.mxu0 %v9681
  %13064 = vmatpush1.bf16.msra.mxu0 %v9680
  %13065 = vmatprep.subr.bf16.mxu0 %v9705
  %13066 = vmatpush1.bf16.msra.mxu0 %v9704
  %13067 = vmatprep.subr.bf16.mxu0 %v9729
  %13068 = vmatpush1.bf16.msra.mxu0 %v9728
  %13069 = vmatprep.subr.bf16.mxu0 %v9753
  %13070 = vmatpush1.bf16.msra.mxu0 %v9752
  %13071 = vmatprep.subr.bf16.mxu0 %v9777
  %13072 = vmatpush1.bf16.msra.mxu0 %v9776
  %13073 = vmatprep.subr.bf16.mxu0 %v9801
  %13074 = vmatpush1.bf16.msra.mxu0 %v9800
  %13075 = vmatprep.subr.bf16.mxu0 %v9825
  %13076 = vmatpush1.bf16.msra.mxu0 %v9824
  %13077 = vmatprep.mubr.bf16.mxu0 %v2795
  %13078 = vmatmul.mubr.bf16.gmra.mrb[0].mxu0 %v2794
  %v13079 = vpop.f32.mrb[0].mxu0
  %v13080 = vadd.f32 %v13037, %v13079
  %v13081 = vpop.f32.mrb[0].mxu0
  %v13082 = vadd.f32 %v13039, %v13081
  %v13083 = vpop.f32.mrb[0].mxu0
  %v13084 = vadd.f32 %v13041, %v13083
  %v13085 = vpop.f32.mrb[0].mxu0
  %v13086 = vadd.f32 %v13043, %v13085
  %13087 = vdwg.mxu0
  %13088 = vmatprep.subr.bf16.mxu0 %v9849
  %13089 = vmatpush1.bf16.msra.mxu0 %v9848
  %13090 = vmatprep.subr.bf16.mxu0 %v9873
  %13091 = vmatpush1.bf16.msra.mxu0 %v9872
  %13092 = vmatprep.subr.bf16.mxu0 %v9897
  %13093 = vmatpush1.bf16.msra.mxu0 %v9896
  %13094 = vmatprep.subr.bf16.mxu0 %v9921
  %13095 = vmatpush1.bf16.msra.mxu0 %v9920
  %13096 = vmatprep.subr.bf16.mxu0 %v9945
  %13097 = vmatpush1.bf16.msra.mxu0 %v9944
  %13098 = vmatprep.subr.bf16.mxu0 %v9969
  %13099 = vmatpush1.bf16.msra.mxu0 %v9968
  %13100 = vmatprep.subr.bf16.mxu0 %v9993
  %13101 = vmatpush1.bf16.msra.mxu0 %v9992
  %13102 = vmatprep.subr.bf16.mxu0 %v10017
  %13103 = vmatpush1.bf16.msra.mxu0 %v10016
  %13104 = vmatprep.subr.bf16.mxu0 %v10041
  %13105 = vmatpush1.bf16.msra.mxu0 %v10040
  %13106 = vmatprep.subr.bf16.mxu0 %v10065
  %13107 = vmatpush1.bf16.msra.mxu0 %v10064
  %13108 = vmatprep.subr.bf16.mxu0 %v10089
  %13109 = vmatpush1.bf16.msra.mxu0 %v10088
  %13110 = vmatprep.subr.bf16.mxu0 %v10113
  %13111 = vmatpush1.bf16.msra.mxu0 %v10112
  %13112 = vmatprep.subr.bf16.mxu0 %v10137
  %13113 = vmatpush1.bf16.msra.mxu0 %v10136
  %13114 = vmatprep.subr.bf16.mxu0 %v10161
  %13115 = vmatpush1.bf16.msra.mxu0 %v10160
  %13116 = vmatprep.subr.bf16.mxu0 %v10185
  %13117 = vmatpush1.bf16.msra.mxu0 %v10184
  %13118 = vmatprep.subr.bf16.mxu0 %v10209
  %13119 = vmatpush1.bf16.msra.mxu0 %v10208
  %13120 = vmatprep.mubr.bf16.mxu0 %v2797
  %13121 = vmatmul.mubr.bf16.gmra.mrb[0].mxu0 %v2796
  %v13122 = vpop.f32.mrb[0].mxu0
  %v13123 = vadd.f32 %v13080, %v13122
  %v13124 = vpop.f32.mrb[0].mxu0
  %v13125 = vadd.f32 %v13082, %v13124
  %v13126 = vpop.f32.mrb[0].mxu0
  %v13127 = vadd.f32 %v13084, %v13126
  %v13128 = vpop.f32.mrb[0].mxu0
  %v13129 = vadd.f32 %v13086, %v13128
  %13130 = vdwg.mxu0
  %13131 = vmatprep.subr.bf16.mxu0 %v10233
  %13132 = vmatpush1.bf16.msra.mxu0 %v10232
  %13133 = vmatprep.subr.bf16.mxu0 %v10257
  %13134 = vmatpush1.bf16.msra.mxu0 %v10256
  %13135 = vmatprep.subr.bf16.mxu0 %v10281
  %13136 = vmatpush1.bf16.msra.mxu0 %v10280
  %13137 = vmatprep.subr.bf16.mxu0 %v10305
  %13138 = vmatpush1.bf16.msra.mxu0 %v10304
  %13139 = vmatprep.subr.bf16.mxu0 %v10329
  %13140 = vmatpush1.bf16.msra.mxu0 %v10328
  %13141 = vmatprep.subr.bf16.mxu0 %v10353
  %13142 = vmatpush1.bf16.msra.mxu0 %v10352
  %13143 = vmatprep.subr.bf16.mxu0 %v10377
  %13144 = vmatpush1.bf16.msra.mxu0 %v10376
  %13145 = vmatprep.subr.bf16.mxu0 %v10401
  %13146 = vmatpush1.bf16.msra.mxu0 %v10400
  %13147 = vmatprep.subr.bf16.mxu0 %v10425
  %13148 = vmatpush1.bf16.msra.mxu0 %v10424
  %13149 = vmatprep.subr.bf16.mxu0 %v10449
  %13150 = vmatpush1.bf16.msra.mxu0 %v10448
  %13151 = vmatprep.subr.bf16.mxu0 %v10473
  %13152 = vmatpush1.bf16.msra.mxu0 %v10472
  %13153 = vmatprep.subr.bf16.mxu0 %v10497
  %13154 = vmatpush1.bf16.msra.mxu0 %v10496
  %13155 = vmatprep.subr.bf16.mxu0 %v10521
  %13156 = vmatpush1.bf16.msra.mxu0 %v10520
  %13157 = vmatprep.subr.bf16.mxu0 %v10545
  %13158 = vmatpush1.bf16.msra.mxu0 %v10544
  %13159 = vmatprep.subr.bf16.mxu0 %v10569
  %13160 = vmatpush1.bf16.msra.mxu0 %v10568
  %13161 = vmatprep.subr.bf16.mxu0 %v10593
  %13162 = vmatpush1.bf16.msra.mxu0 %v10592
  %13163 = vmatprep.mubr.bf16.mxu0 %v2799
  %13164 = vmatmul.mubr.bf16.gmra.mrb[0].mxu0 %v2798
  %v13165 = vpop.f32.mrb[0].mxu0
  %v13166 = vadd.f32 %v13123, %v13165
  %v13167 = vpop.f32.mrb[0].mxu0
  %v13168 = vadd.f32 %v13125, %v13167
  %v13169 = vpop.f32.mrb[0].mxu0
  %v13170 = vadd.f32 %v13127, %v13169
  %v13171 = vpop.f32.mrb[0].mxu0
  %v13172 = vadd.f32 %v13129, %v13171
  %13173 = vdwg.mxu0
  %13174 = vmatprep.subr.bf16.mxu0 %v9083
  %13175 = vmatpush1.bf16.msra.mxu0 %v9082
  %13176 = vmatprep.subr.bf16.mxu0 %v9107
  %13177 = vmatpush1.bf16.msra.mxu0 %v9106
  %13178 = vmatprep.subr.bf16.mxu0 %v9131
  %13179 = vmatpush1.bf16.msra.mxu0 %v9130
  %13180 = vmatprep.subr.bf16.mxu0 %v9155
  %13181 = vmatpush1.bf16.msra.mxu0 %v9154
  %13182 = vmatprep.subr.bf16.mxu0 %v9179
  %13183 = vmatpush1.bf16.msra.mxu0 %v9178
  %13184 = vmatprep.subr.bf16.mxu0 %v9203
  %13185 = vmatpush1.bf16.msra.mxu0 %v9202
  %13186 = vmatprep.subr.bf16.mxu0 %v9227
  %13187 = vmatpush1.bf16.msra.mxu0 %v9226
  %13188 = vmatprep.subr.bf16.mxu0 %v9251
  %13189 = vmatpush1.bf16.msra.mxu0 %v9250
  %13190 = vmatprep.subr.bf16.mxu0 %v9275
  %13191 = vmatpush1.bf16.msra.mxu0 %v9274
  %13192 = vmatprep.subr.bf16.mxu0 %v9299
  %13193 = vmatpush1.bf16.msra.mxu0 %v9298
  %13194 = vmatprep.subr.bf16.mxu0 %v9323
  %13195 = vmatpush1.bf16.msra.mxu0 %v9322
  %13196 = vmatprep.subr.bf16.mxu0 %v9347
  %13197 = vmatpush1.bf16.msra.mxu0 %v9346
  %13198 = vmatprep.subr.bf16.mxu0 %v9371
  %13199 = vmatpush1.bf16.msra.mxu0 %v9370
  %13200 = vmatprep.subr.bf16.mxu0 %v9395
  %13201 = vmatpush1.bf16.msra.mxu0 %v9394
  %13202 = vmatprep.subr.bf16.mxu0 %v9419
  %13203 = vmatpush1.bf16.msra.mxu0 %v9418
  %13204 = vmatprep.subr.bf16.mxu0 %v9443
  %13205 = vmatpush1.bf16.msra.mxu0 %v9442
  %13206 = vmatprep.mubr.bf16.mxu0 %v2793
  %13207 = vmatmul.mubr.bf16.gmra.mrb[0].mxu0 %v2792
  %v13208 = vpop.f32.mrb[0].mxu0
  %v13209 = vadd.f32 %v4393, %v13208
  %v13210 = vpop.f32.mrb[0].mxu0
  %v13211 = vadd.f32 %v4397, %v13210
  %v13212 = vpop.f32.mrb[0].mxu0
  %v13213 = vadd.f32 %v4393, %v13212
  %v13214 = vpop.f32.mrb[0].mxu0
  %v13215 = vadd.f32 %v4397, %v13214
  %13216 = vdwg.mxu0
  %13217 = vmatprep.subr.bf16.mxu0 %v9467
  %13218 = vmatpush1.bf16.msra.mxu0 %v9466
  %13219 = vmatprep.subr.bf16.mxu0 %v9491
  %13220 = vmatpush1.bf16.msra.mxu0 %v9490
  %13221 = vmatprep.subr.bf16.mxu0 %v9515
  %13222 = vmatpush1.bf16.msra.mxu0 %v9514
  %13223 = vmatprep.subr.bf16.mxu0 %v9539
  %13224 = vmatpush1.bf16.msra.mxu0 %v9538
  %13225 = vmatprep.subr.bf16.mxu0 %v9563
  %13226 = vmatpush1.bf16.msra.mxu0 %v9562
  %13227 = vmatprep.subr.bf16.mxu0 %v9587
  %13228 = vmatpush1.bf16.msra.mxu0 %v9586
  %13229 = vmatprep.subr.bf16.mxu0 %v9611
  %13230 = vmatpush1.bf16.msra.mxu0 %v9610
  %13231 = vmatprep.subr.bf16.mxu0 %v9635
  %13232 = vmatpush1.bf16.msra.mxu0 %v9634
  %13233 = vmatprep.subr.bf16.mxu0 %v9659
  %13234 = vmatpush1.bf16.msra.mxu0 %v9658
  %13235 = vmatprep.subr.bf16.mxu0 %v9683
  %13236 = vmatpush1.bf16.msra.mxu0 %v9682
  %13237 = vmatprep.subr.bf16.mxu0 %v9707
  %13238 = vmatpush1.bf16.msra.mxu0 %v9706
  %13239 = vmatprep.subr.bf16.mxu0 %v9731
  %13240 = vmatpush1.bf16.msra.mxu0 %v9730
  %13241 = vmatprep.subr.bf16.mxu0 %v9755
  %13242 = vmatpush1.bf16.msra.mxu0 %v9754
  %13243 = vmatprep.subr.bf16.mxu0 %v9779
  %13244 = vmatpush1.bf16.msra.mxu0 %v9778
  %13245 = vmatprep.subr.bf16.mxu0 %v9803
  %13246 = vmatpush1.bf16.msra.mxu0 %v9802
  %13247 = vmatprep.subr.bf16.mxu0 %v9827
  %13248 = vmatpush1.bf16.msra.mxu0 %v9826
  %13249 = vmatprep.mubr.bf16.mxu0 %v2795
  %13250 = vmatmul.mubr.bf16.gmra.mrb[0].mxu0 %v2794
  %v13251 = vpop.f32.mrb[0].mxu0
  %v13252 = vadd.f32 %v13209, %v13251
  %v13253 = vpop.f32.mrb[0].mxu0
  %v13254 = vadd.f32 %v13211, %v13253
  %v13255 = vpop.f32.mrb[0].mxu0
  %v13256 = vadd.f32 %v13213, %v13255
  %v13257 = vpop.f32.mrb[0].mxu0
  %v13258 = vadd.f32 %v13215, %v13257
  %13259 = vdwg.mxu0
  %13260 = vmatprep.subr.bf16.mxu0 %v9851
  %13261 = vmatpush1.bf16.msra.mxu0 %v9850
  %13262 = vmatprep.subr.bf16.mxu0 %v9875
  %13263 = vmatpush1.bf16.msra.mxu0 %v9874
  %13264 = vmatprep.subr.bf16.mxu0 %v9899
  %13265 = vmatpush1.bf16.msra.mxu0 %v9898
  %13266 = vmatprep.subr.bf16.mxu0 %v9923
  %13267 = vmatpush1.bf16.msra.mxu0 %v9922
  %13268 = vmatprep.subr.bf16.mxu0 %v9947
  %13269 = vmatpush1.bf16.msra.mxu0 %v9946
  %13270 = vmatprep.subr.bf16.mxu0 %v9971
  %13271 = vmatpush1.bf16.msra.mxu0 %v9970
  %13272 = vmatprep.subr.bf16.mxu0 %v9995
  %13273 = vmatpush1.bf16.msra.mxu0 %v9994
  %13274 = vmatprep.subr.bf16.mxu0 %v10019
  %13275 = vmatpush1.bf16.msra.mxu0 %v10018
  %13276 = vmatprep.subr.bf16.mxu0 %v10043
  %13277 = vmatpush1.bf16.msra.mxu0 %v10042
  %13278 = vmatprep.subr.bf16.mxu0 %v10067
  %13279 = vmatpush1.bf16.msra.mxu0 %v10066
  %13280 = vmatprep.subr.bf16.mxu0 %v10091
  %13281 = vmatpush1.bf16.msra.mxu0 %v10090
  %13282 = vmatprep.subr.bf16.mxu0 %v10115
  %13283 = vmatpush1.bf16.msra.mxu0 %v10114
  %13284 = vmatprep.subr.bf16.mxu0 %v10139
  %13285 = vmatpush1.bf16.msra.mxu0 %v10138
  %13286 = vmatprep.subr.bf16.mxu0 %v10163
  %13287 = vmatpush1.bf16.msra.mxu0 %v10162
  %13288 = vmatprep.subr.bf16.mxu0 %v10187
  %13289 = vmatpush1.bf16.msra.mxu0 %v10186
  %13290 = vmatprep.subr.bf16.mxu0 %v10211
  %13291 = vmatpush1.bf16.msra.mxu0 %v10210
  %13292 = vmatprep.mubr.bf16.mxu0 %v2797
  %13293 = vmatmul.mubr.bf16.gmra.mrb[0].mxu0 %v2796
  %v13294 = vpop.f32.mrb[0].mxu0
  %v13295 = vadd.f32 %v13252, %v13294
  %v13296 = vpop.f32.mrb[0].mxu0
  %v13297 = vadd.f32 %v13254, %v13296
  %v13298 = vpop.f32.mrb[0].mxu0
  %v13299 = vadd.f32 %v13256, %v13298
  %v13300 = vpop.f32.mrb[0].mxu0
  %v13301 = vadd.f32 %v13258, %v13300
  %13302 = vdwg.mxu0
  %13303 = vmatprep.subr.bf16.mxu0 %v10235
  %13304 = vmatpush1.bf16.msra.mxu0 %v10234
  %13305 = vmatprep.subr.bf16.mxu0 %v10259
  %13306 = vmatpush1.bf16.msra.mxu0 %v10258
  %13307 = vmatprep.subr.bf16.mxu0 %v10283
  %13308 = vmatpush1.bf16.msra.mxu0 %v10282
  %13309 = vmatprep.subr.bf16.mxu0 %v10307
  %13310 = vmatpush1.bf16.msra.mxu0 %v10306
  %13311 = vmatprep.subr.bf16.mxu0 %v10331
  %13312 = vmatpush1.bf16.msra.mxu0 %v10330
  %13313 = vmatprep.subr.bf16.mxu0 %v10355
  %13314 = vmatpush1.bf16.msra.mxu0 %v10354
  %13315 = vmatprep.subr.bf16.mxu0 %v10379
  %13316 = vmatpush1.bf16.msra.mxu0 %v10378
  %13317 = vmatprep.subr.bf16.mxu0 %v10403
  %13318 = vmatpush1.bf16.msra.mxu0 %v10402
  %13319 = vmatprep.subr.bf16.mxu0 %v10427
  %13320 = vmatpush1.bf16.msra.mxu0 %v10426
  %13321 = vmatprep.subr.bf16.mxu0 %v10451
  %13322 = vmatpush1.bf16.msra.mxu0 %v10450
  %13323 = vmatprep.subr.bf16.mxu0 %v10475
  %13324 = vmatpush1.bf16.msra.mxu0 %v10474
  %13325 = vmatprep.subr.bf16.mxu0 %v10499
  %13326 = vmatpush1.bf16.msra.mxu0 %v10498
  %13327 = vmatprep.subr.bf16.mxu0 %v10523
  %13328 = vmatpush1.bf16.msra.mxu0 %v10522
  %13329 = vmatprep.subr.bf16.mxu0 %v10547
  %13330 = vmatpush1.bf16.msra.mxu0 %v10546
  %13331 = vmatprep.subr.bf16.mxu0 %v10571
  %13332 = vmatpush1.bf16.msra.mxu0 %v10570
  %13333 = vmatprep.subr.bf16.mxu0 %v10595
  %13334 = vmatpush1.bf16.msra.mxu0 %v10594
  %13335 = vmatprep.mubr.bf16.mxu0 %v2799
  %13336 = vmatmul.mubr.bf16.gmra.mrb[0].mxu0 %v2798
  %v13337 = vpop.f32.mrb[0].mxu0
  %v13338 = vadd.f32 %v13295, %v13337
  %v13339 = vpop.f32.mrb[0].mxu0
  %v13340 = vadd.f32 %v13297, %v13339
  %v13341 = vpop.f32.mrb[0].mxu0
  %v13342 = vadd.f32 %v13299, %v13341
  %v13343 = vpop.f32.mrb[0].mxu0
  %v13344 = vadd.f32 %v13301, %v13343
  %13345 = vdwg.mxu0
  %13346 = vmatprep.subr.bf16.mxu0 %v9085
  %13347 = vmatpush1.bf16.msra.mxu0 %v9084
  %13348 = vmatprep.subr.bf16.mxu0 %v9109
  %13349 = vmatpush1.bf16.msra.mxu0 %v9108
  %13350 = vmatprep.subr.bf16.mxu0 %v9133
  %13351 = vmatpush1.bf16.msra.mxu0 %v9132
  %13352 = vmatprep.subr.bf16.mxu0 %v9157
  %13353 = vmatpush1.bf16.msra.mxu0 %v9156
  %13354 = vmatprep.subr.bf16.mxu0 %v9181
  %13355 = vmatpush1.bf16.msra.mxu0 %v9180
  %13356 = vmatprep.subr.bf16.mxu0 %v9205
  %13357 = vmatpush1.bf16.msra.mxu0 %v9204
  %13358 = vmatprep.subr.bf16.mxu0 %v9229
  %13359 = vmatpush1.bf16.msra.mxu0 %v9228
  %13360 = vmatprep.subr.bf16.mxu0 %v9253
  %13361 = vmatpush1.bf16.msra.mxu0 %v9252
  %13362 = vmatprep.subr.bf16.mxu0 %v9277
  %13363 = vmatpush1.bf16.msra.mxu0 %v9276
  %13364 = vmatprep.subr.bf16.mxu0 %v9301
  %13365 = vmatpush1.bf16.msra.mxu0 %v9300
  %13366 = vmatprep.subr.bf16.mxu0 %v9325
  %13367 = vmatpush1.bf16.msra.mxu0 %v9324
  %13368 = vmatprep.subr.bf16.mxu0 %v9349
  %13369 = vmatpush1.bf16.msra.mxu0 %v9348
  %13370 = vmatprep.subr.bf16.mxu0 %v9373
  %13371 = vmatpush1.bf16.msra.mxu0 %v9372
  %13372 = vmatprep.subr.bf16.mxu0 %v9397
  %13373 = vmatpush1.bf16.msra.mxu0 %v9396
  %13374 = vmatprep.subr.bf16.mxu0 %v9421
  %13375 = vmatpush1.bf16.msra.mxu0 %v9420
  %13376 = vmatprep.subr.bf16.mxu0 %v9445
  %13377 = vmatpush1.bf16.msra.mxu0 %v9444
  %13378 = vmatprep.mubr.bf16.mxu0 %v2793
  %13379 = vmatmul.mubr.bf16.gmra.mrb[0].mxu0 %v2792
  %v13380 = vpop.f32.mrb[0].mxu0
  %v13381 = vadd.f32 %v4401, %v13380
  %v13382 = vpop.f32.mrb[0].mxu0
  %v13383 = vadd.f32 %v4405, %v13382
  %v13384 = vpop.f32.mrb[0].mxu0
  %v13385 = vadd.f32 %v4401, %v13384
  %v13386 = vpop.f32.mrb[0].mxu0
  %v13387 = vadd.f32 %v4405, %v13386
  %13388 = vdwg.mxu0
  %13389 = vmatprep.subr.bf16.mxu0 %v9469
  %13390 = vmatpush1.bf16.msra.mxu0 %v9468
  %13391 = vmatprep.subr.bf16.mxu0 %v9493
  %13392 = vmatpush1.bf16.msra.mxu0 %v9492
  %13393 = vmatprep.subr.bf16.mxu0 %v9517
  %13394 = vmatpush1.bf16.msra.mxu0 %v9516
  %13395 = vmatprep.subr.bf16.mxu0 %v9541
  %13396 = vmatpush1.bf16.msra.mxu0 %v9540
  %13397 = vmatprep.subr.bf16.mxu0 %v9565
  %13398 = vmatpush1.bf16.msra.mxu0 %v9564
  %13399 = vmatprep.subr.bf16.mxu0 %v9589
  %13400 = vmatpush1.bf16.msra.mxu0 %v9588
  %13401 = vmatprep.subr.bf16.mxu0 %v9613
  %13402 = vmatpush1.bf16.msra.mxu0 %v9612
  %13403 = vmatprep.subr.bf16.mxu0 %v9637
  %13404 = vmatpush1.bf16.msra.mxu0 %v9636
  %13405 = vmatprep.subr.bf16.mxu0 %v9661
  %13406 = vmatpush1.bf16.msra.mxu0 %v9660
  %13407 = vmatprep.subr.bf16.mxu0 %v9685
  %13408 = vmatpush1.bf16.msra.mxu0 %v9684
  %13409 = vmatprep.subr.bf16.mxu0 %v9709
  %13410 = vmatpush1.bf16.msra.mxu0 %v9708
  %13411 = vmatprep.subr.bf16.mxu0 %v9733
  %13412 = vmatpush1.bf16.msra.mxu0 %v9732
  %13413 = vmatprep.subr.bf16.mxu0 %v9757
  %13414 = vmatpush1.bf16.msra.mxu0 %v9756
  %13415 = vmatprep.subr.bf16.mxu0 %v9781
  %13416 = vmatpush1.bf16.msra.mxu0 %v9780
  %13417 = vmatprep.subr.bf16.mxu0 %v9805
  %13418 = vmatpush1.bf16.msra.mxu0 %v9804
  %13419 = vmatprep.subr.bf16.mxu0 %v9829
  %13420 = vmatpush1.bf16.msra.mxu0 %v9828
  %13421 = vmatprep.mubr.bf16.mxu0 %v2795
  %13422 = vmatmul.mubr.bf16.gmra.mrb[0].mxu0 %v2794
  %v13423 = vpop.f32.mrb[0].mxu0
  %v13424 = vadd.f32 %v13381, %v13423
  %v13425 = vpop.f32.mrb[0].mxu0
  %v13426 = vadd.f32 %v13383, %v13425
  %v13427 = vpop.f32.mrb[0].mxu0
  %v13428 = vadd.f32 %v13385, %v13427
  %v13429 = vpop.f32.mrb[0].mxu0
  %v13430 = vadd.f32 %v13387, %v13429
  %13431 = vdwg.mxu0
  %13432 = vmatprep.subr.bf16.mxu0 %v9853
  %13433 = vmatpush1.bf16.msra.mxu0 %v9852
  %13434 = vmatprep.subr.bf16.mxu0 %v9877
  %13435 = vmatpush1.bf16.msra.mxu0 %v9876
  %13436 = vmatprep.subr.bf16.mxu0 %v9901
  %13437 = vmatpush1.bf16.msra.mxu0 %v9900
  %13438 = vmatprep.subr.bf16.mxu0 %v9925
  %13439 = vmatpush1.bf16.msra.mxu0 %v9924
  %13440 = vmatprep.subr.bf16.mxu0 %v9949
  %13441 = vmatpush1.bf16.msra.mxu0 %v9948
  %13442 = vmatprep.subr.bf16.mxu0 %v9973
  %13443 = vmatpush1.bf16.msra.mxu0 %v9972
  %13444 = vmatprep.subr.bf16.mxu0 %v9997
  %13445 = vmatpush1.bf16.msra.mxu0 %v9996
  %13446 = vmatprep.subr.bf16.mxu0 %v10021
  %13447 = vmatpush1.bf16.msra.mxu0 %v10020
  %13448 = vmatprep.subr.bf16.mxu0 %v10045
  %13449 = vmatpush1.bf16.msra.mxu0 %v10044
  %13450 = vmatprep.subr.bf16.mxu0 %v10069
  %13451 = vmatpush1.bf16.msra.mxu0 %v10068
  %13452 = vmatprep.subr.bf16.mxu0 %v10093
  %13453 = vmatpush1.bf16.msra.mxu0 %v10092
  %13454 = vmatprep.subr.bf16.mxu0 %v10117
  %13455 = vmatpush1.bf16.msra.mxu0 %v10116
  %13456 = vmatprep.subr.bf16.mxu0 %v10141
  %13457 = vmatpush1.bf16.msra.mxu0 %v10140
  %13458 = vmatprep.subr.bf16.mxu0 %v10165
  %13459 = vmatpush1.bf16.msra.mxu0 %v10164
  %13460 = vmatprep.subr.bf16.mxu0 %v10189
  %13461 = vmatpush1.bf16.msra.mxu0 %v10188
  %13462 = vmatprep.subr.bf16.mxu0 %v10213
  %13463 = vmatpush1.bf16.msra.mxu0 %v10212
  %13464 = vmatprep.mubr.bf16.mxu0 %v2797
  %13465 = vmatmul.mubr.bf16.gmra.mrb[0].mxu0 %v2796
  %v13466 = vpop.f32.mrb[0].mxu0
  %v13467 = vadd.f32 %v13424, %v13466
  %v13468 = vpop.f32.mrb[0].mxu0
  %v13469 = vadd.f32 %v13426, %v13468
  %v13470 = vpop.f32.mrb[0].mxu0
  %v13471 = vadd.f32 %v13428, %v13470
  %v13472 = vpop.f32.mrb[0].mxu0
  %v13473 = vadd.f32 %v13430, %v13472
  %13474 = vdwg.mxu0
  %13475 = vmatprep.subr.bf16.mxu0 %v10237
  %13476 = vmatpush1.bf16.msra.mxu0 %v10236
  %13477 = vmatprep.subr.bf16.mxu0 %v10261
  %13478 = vmatpush1.bf16.msra.mxu0 %v10260
  %13479 = vmatprep.subr.bf16.mxu0 %v10285
  %13480 = vmatpush1.bf16.msra.mxu0 %v10284
  %13481 = vmatprep.subr.bf16.mxu0 %v10309
  %13482 = vmatpush1.bf16.msra.mxu0 %v10308
  %13483 = vmatprep.subr.bf16.mxu0 %v10333
  %13484 = vmatpush1.bf16.msra.mxu0 %v10332
  %13485 = vmatprep.subr.bf16.mxu0 %v10357
  %13486 = vmatpush1.bf16.msra.mxu0 %v10356
  %13487 = vmatprep.subr.bf16.mxu0 %v10381
  %13488 = vmatpush1.bf16.msra.mxu0 %v10380
  %13489 = vmatprep.subr.bf16.mxu0 %v10405
  %13490 = vmatpush1.bf16.msra.mxu0 %v10404
  %13491 = vmatprep.subr.bf16.mxu0 %v10429
  %13492 = vmatpush1.bf16.msra.mxu0 %v10428
  %13493 = vmatprep.subr.bf16.mxu0 %v10453
  %13494 = vmatpush1.bf16.msra.mxu0 %v10452
  %13495 = vmatprep.subr.bf16.mxu0 %v10477
  %13496 = vmatpush1.bf16.msra.mxu0 %v10476
  %13497 = vmatprep.subr.bf16.mxu0 %v10501
  %13498 = vmatpush1.bf16.msra.mxu0 %v10500
  %13499 = vmatprep.subr.bf16.mxu0 %v10525
  %13500 = vmatpush1.bf16.msra.mxu0 %v10524
  %13501 = vmatprep.subr.bf16.mxu0 %v10549
  %13502 = vmatpush1.bf16.msra.mxu0 %v10548
  %13503 = vmatprep.subr.bf16.mxu0 %v10573
  %13504 = vmatpush1.bf16.msra.mxu0 %v10572
  %13505 = vmatprep.subr.bf16.mxu0 %v10597
  %13506 = vmatpush1.bf16.msra.mxu0 %v10596
  %13507 = vmatprep.mubr.bf16.mxu0 %v2799
  %13508 = vmatmul.mubr.bf16.gmra.mrb[0].mxu0 %v2798
  %v13509 = vpop.f32.mrb[0].mxu0
  %v13510 = vadd.f32 %v13467, %v13509
  %v13511 = vpop.f32.mrb[0].mxu0
  %v13512 = vadd.f32 %v13469, %v13511
  %v13513 = vpop.f32.mrb[0].mxu0
  %v13514 = vadd.f32 %v13471, %v13513
  %v13515 = vpop.f32.mrb[0].mxu0
  %v13516 = vadd.f32 %v13473, %v13515
  %13517 = vdwg.mxu0
  %13518 = vmatprep.subr.bf16.mxu0 %v9087
  %13519 = vmatpush1.bf16.msra.mxu0 %v9086
  %13520 = vmatprep.subr.bf16.mxu0 %v9111
  %13521 = vmatpush1.bf16.msra.mxu0 %v9110
  %13522 = vmatprep.subr.bf16.mxu0 %v9135
  %13523 = vmatpush1.bf16.msra.mxu0 %v9134
  %13524 = vmatprep.subr.bf16.mxu0 %v9159
  %13525 = vmatpush1.bf16.msra.mxu0 %v9158
  %13526 = vmatprep.subr.bf16.mxu0 %v9183
  %13527 = vmatpush1.bf16.msra.mxu0 %v9182
  %13528 = vmatprep.subr.bf16.mxu0 %v9207
  %13529 = vmatpush1.bf16.msra.mxu0 %v9206
  %13530 = vmatprep.subr.bf16.mxu0 %v9231
  %13531 = vmatpush1.bf16.msra.mxu0 %v9230
  %13532 = vmatprep.subr.bf16.mxu0 %v9255
  %13533 = vmatpush1.bf16.msra.mxu0 %v9254
  %13534 = vmatprep.subr.bf16.mxu0 %v9279
  %13535 = vmatpush1.bf16.msra.mxu0 %v9278
  %13536 = vmatprep.subr.bf16.mxu0 %v9303
  %13537 = vmatpush1.bf16.msra.mxu0 %v9302
  %13538 = vmatprep.subr.bf16.mxu0 %v9327
  %13539 = vmatpush1.bf16.msra.mxu0 %v9326
  %13540 = vmatprep.subr.bf16.mxu0 %v9351
  %13541 = vmatpush1.bf16.msra.mxu0 %v9350
  %13542 = vmatprep.subr.bf16.mxu0 %v9375
  %13543 = vmatpush1.bf16.msra.mxu0 %v9374
  %13544 = vmatprep.subr.bf16.mxu0 %v9399
  %13545 = vmatpush1.bf16.msra.mxu0 %v9398
  %13546 = vmatprep.subr.bf16.mxu0 %v9423
  %13547 = vmatpush1.bf16.msra.mxu0 %v9422
  %13548 = vmatprep.subr.bf16.mxu0 %v9447
  %13549 = vmatpush1.bf16.msra.mxu0 %v9446
  %13550 = vmatprep.mubr.bf16.mxu0 %v2793
  %13551 = vmatmul.mubr.bf16.gmra.mrb[0].mxu0 %v2792
  %v13552 = vpop.f32.mrb[0].mxu0
  %v13553 = vadd.f32 %v4409, %v13552
  %v13554 = vpop.f32.mrb[0].mxu0
  %v13555 = vadd.f32 %v4413, %v13554
  %v13556 = vpop.f32.mrb[0].mxu0
  %v13557 = vadd.f32 %v4409, %v13556
  %v13558 = vpop.f32.mrb[0].mxu0
  %v13559 = vadd.f32 %v4413, %v13558
  %13560 = vdwg.mxu0
  %13561 = vmatprep.subr.bf16.mxu0 %v9471
  %13562 = vmatpush1.bf16.msra.mxu0 %v9470
  %13563 = vmatprep.subr.bf16.mxu0 %v9495
  %13564 = vmatpush1.bf16.msra.mxu0 %v9494
  %13565 = vmatprep.subr.bf16.mxu0 %v9519
  %13566 = vmatpush1.bf16.msra.mxu0 %v9518
  %13567 = vmatprep.subr.bf16.mxu0 %v9543
  %13568 = vmatpush1.bf16.msra.mxu0 %v9542
  %13569 = vmatprep.subr.bf16.mxu0 %v9567
  %13570 = vmatpush1.bf16.msra.mxu0 %v9566
  %13571 = vmatprep.subr.bf16.mxu0 %v9591
  %13572 = vmatpush1.bf16.msra.mxu0 %v9590
  %13573 = vmatprep.subr.bf16.mxu0 %v9615
  %13574 = vmatpush1.bf16.msra.mxu0 %v9614
  %13575 = vmatprep.subr.bf16.mxu0 %v9639
  %13576 = vmatpush1.bf16.msra.mxu0 %v9638
  %13577 = vmatprep.subr.bf16.mxu0 %v9663
  %13578 = vmatpush1.bf16.msra.mxu0 %v9662
  %13579 = vmatprep.subr.bf16.mxu0 %v9687
  %13580 = vmatpush1.bf16.msra.mxu0 %v9686
  %13581 = vmatprep.subr.bf16.mxu0 %v9711
  %13582 = vmatpush1.bf16.msra.mxu0 %v9710
  %13583 = vmatprep.subr.bf16.mxu0 %v9735
  %13584 = vmatpush1.bf16.msra.mxu0 %v9734
  %13585 = vmatprep.subr.bf16.mxu0 %v9759
  %13586 = vmatpush1.bf16.msra.mxu0 %v9758
  %13587 = vmatprep.subr.bf16.mxu0 %v9783
  %13588 = vmatpush1.bf16.msra.mxu0 %v9782
  %13589 = vmatprep.subr.bf16.mxu0 %v9807
  %13590 = vmatpush1.bf16.msra.mxu0 %v9806
  %13591 = vmatprep.subr.bf16.mxu0 %v9831
  %13592 = vmatpush1.bf16.msra.mxu0 %v9830
  %13593 = vmatprep.mubr.bf16.mxu0 %v2795
  %13594 = vmatmul.mubr.bf16.gmra.mrb[0].mxu0 %v2794
  %v13595 = vpop.f32.mrb[0].mxu0
  %v13596 = vadd.f32 %v13553, %v13595
  %v13597 = vpop.f32.mrb[0].mxu0
  %v13598 = vadd.f32 %v13555, %v13597
  %v13599 = vpop.f32.mrb[0].mxu0
  %v13600 = vadd.f32 %v13557, %v13599
  %v13601 = vpop.f32.mrb[0].mxu0
  %v13602 = vadd.f32 %v13559, %v13601
  %13603 = vdwg.mxu0
  %13604 = vmatprep.subr.bf16.mxu0 %v9855
  %13605 = vmatpush1.bf16.msra.mxu0 %v9854
  %13606 = vmatprep.subr.bf16.mxu0 %v9879
  %13607 = vmatpush1.bf16.msra.mxu0 %v9878
  %13608 = vmatprep.subr.bf16.mxu0 %v9903
  %13609 = vmatpush1.bf16.msra.mxu0 %v9902
  %13610 = vmatprep.subr.bf16.mxu0 %v9927
  %13611 = vmatpush1.bf16.msra.mxu0 %v9926
  %13612 = vmatprep.subr.bf16.mxu0 %v9951
  %13613 = vmatpush1.bf16.msra.mxu0 %v9950
  %13614 = vmatprep.subr.bf16.mxu0 %v9975
  %13615 = vmatpush1.bf16.msra.mxu0 %v9974
  %13616 = vmatprep.subr.bf16.mxu0 %v9999
  %13617 = vmatpush1.bf16.msra.mxu0 %v9998
  %13618 = vmatprep.subr.bf16.mxu0 %v10023
  %13619 = vmatpush1.bf16.msra.mxu0 %v10022
  %13620 = vmatprep.subr.bf16.mxu0 %v10047
  %13621 = vmatpush1.bf16.msra.mxu0 %v10046
  %13622 = vmatprep.subr.bf16.mxu0 %v10071
  %13623 = vmatpush1.bf16.msra.mxu0 %v10070
  %13624 = vmatprep.subr.bf16.mxu0 %v10095
  %13625 = vmatpush1.bf16.msra.mxu0 %v10094
  %13626 = vmatprep.subr.bf16.mxu0 %v10119
  %13627 = vmatpush1.bf16.msra.mxu0 %v10118
  %13628 = vmatprep.subr.bf16.mxu0 %v10143
  %13629 = vmatpush1.bf16.msra.mxu0 %v10142
  %13630 = vmatprep.subr.bf16.mxu0 %v10167
  %13631 = vmatpush1.bf16.msra.mxu0 %v10166
  %13632 = vmatprep.subr.bf16.mxu0 %v10191
  %13633 = vmatpush1.bf16.msra.mxu0 %v10190
  %13634 = vmatprep.subr.bf16.mxu0 %v10215
  %13635 = vmatpush1.bf16.msra.mxu0 %v10214
  %13636 = vmatprep.mubr.bf16.mxu0 %v2797
  %13637 = vmatmul.mubr.bf16.gmra.mrb[0].mxu0 %v2796
  %v13638 = vpop.f32.mrb[0].mxu0
  %v13639 = vadd.f32 %v13596, %v13638
  %v13640 = vpop.f32.mrb[0].mxu0
  %v13641 = vadd.f32 %v13598, %v13640
  %v13642 = vpop.f32.mrb[0].mxu0
  %v13643 = vadd.f32 %v13600, %v13642
  %v13644 = vpop.f32.mrb[0].mxu0
  %v13645 = vadd.f32 %v13602, %v13644
  %13646 = vdwg.mxu0
  %13647 = vmatprep.subr.bf16.mxu0 %v10239
  %13648 = vmatpush1.bf16.msra.mxu0 %v10238
  %13649 = vmatprep.subr.bf16.mxu0 %v10263
  %13650 = vmatpush1.bf16.msra.mxu0 %v10262
  %13651 = vmatprep.subr.bf16.mxu0 %v10287
  %13652 = vmatpush1.bf16.msra.mxu0 %v10286
  %13653 = vmatprep.subr.bf16.mxu0 %v10311
  %13654 = vmatpush1.bf16.msra.mxu0 %v10310
  %13655 = vmatprep.subr.bf16.mxu0 %v10335
  %13656 = vmatpush1.bf16.msra.mxu0 %v10334
  %13657 = vmatprep.subr.bf16.mxu0 %v10359
  %13658 = vmatpush1.bf16.msra.mxu0 %v10358
  %13659 = vmatprep.subr.bf16.mxu0 %v10383
  %13660 = vmatpush1.bf16.msra.mxu0 %v10382
  %13661 = vmatprep.subr.bf16.mxu0 %v10407
  %13662 = vmatpush1.bf16.msra.mxu0 %v10406
  %13663 = vmatprep.subr.bf16.mxu0 %v10431
  %13664 = vmatpush1.bf16.msra.mxu0 %v10430
  %13665 = vmatprep.subr.bf16.mxu0 %v10455
  %13666 = vmatpush1.bf16.msra.mxu0 %v10454
  %13667 = vmatprep.subr.bf16.mxu0 %v10479
  %13668 = vmatpush1.bf16.msra.mxu0 %v10478
  %13669 = vmatprep.subr.bf16.mxu0 %v10503
  %13670 = vmatpush1.bf16.msra.mxu0 %v10502
  %13671 = vmatprep.subr.bf16.mxu0 %v10527
  %13672 = vmatpush1.bf16.msra.mxu0 %v10526
  %13673 = vmatprep.subr.bf16.mxu0 %v10551
  %13674 = vmatpush1.bf16.msra.mxu0 %v10550
  %13675 = vmatprep.subr.bf16.mxu0 %v10575
  %13676 = vmatpush1.bf16.msra.mxu0 %v10574
  %13677 = vmatprep.subr.bf16.mxu0 %v10599
  %13678 = vmatpush1.bf16.msra.mxu0 %v10598
  %13679 = vmatprep.mubr.bf16.mxu0 %v2799
  %13680 = vmatmul.mubr.bf16.gmra.mrb[0].mxu0 %v2798
  %v13681 = vpop.f32.mrb[0].mxu0
  %v13682 = vadd.f32 %v13639, %v13681
  %v13683 = vpop.f32.mrb[0].mxu0
  %v13684 = vadd.f32 %v13641, %v13683
  %v13685 = vpop.f32.mrb[0].mxu0
  %v13686 = vadd.f32 %v13643, %v13685
  %v13687 = vpop.f32.mrb[0].mxu0
  %v13688 = vadd.f32 %v13645, %v13687
  %13689 = vdwg.mxu0
  %13690 = vmatprep.subr.bf16.mxu0 %v9089
  %13691 = vmatpush1.bf16.msra.mxu0 %v9088
  %13692 = vmatprep.subr.bf16.mxu0 %v9113
  %13693 = vmatpush1.bf16.msra.mxu0 %v9112
  %13694 = vmatprep.subr.bf16.mxu0 %v9137
  %13695 = vmatpush1.bf16.msra.mxu0 %v9136
  %13696 = vmatprep.subr.bf16.mxu0 %v9161
  %13697 = vmatpush1.bf16.msra.mxu0 %v9160
  %13698 = vmatprep.subr.bf16.mxu0 %v9185
  %13699 = vmatpush1.bf16.msra.mxu0 %v9184
  %13700 = vmatprep.subr.bf16.mxu0 %v9209
  %13701 = vmatpush1.bf16.msra.mxu0 %v9208
  %13702 = vmatprep.subr.bf16.mxu0 %v9233
  %13703 = vmatpush1.bf16.msra.mxu0 %v9232
  %13704 = vmatprep.subr.bf16.mxu0 %v9257
  %13705 = vmatpush1.bf16.msra.mxu0 %v9256
  %13706 = vmatprep.subr.bf16.mxu0 %v9281
  %13707 = vmatpush1.bf16.msra.mxu0 %v9280
  %13708 = vmatprep.subr.bf16.mxu0 %v9305
  %13709 = vmatpush1.bf16.msra.mxu0 %v9304
  %13710 = vmatprep.subr.bf16.mxu0 %v9329
  %13711 = vmatpush1.bf16.msra.mxu0 %v9328
  %13712 = vmatprep.subr.bf16.mxu0 %v9353
  %13713 = vmatpush1.bf16.msra.mxu0 %v9352
  %13714 = vmatprep.subr.bf16.mxu0 %v9377
  %13715 = vmatpush1.bf16.msra.mxu0 %v9376
  %13716 = vmatprep.subr.bf16.mxu0 %v9401
  %13717 = vmatpush1.bf16.msra.mxu0 %v9400
  %13718 = vmatprep.subr.bf16.mxu0 %v9425
  %13719 = vmatpush1.bf16.msra.mxu0 %v9424
  %13720 = vmatprep.subr.bf16.mxu0 %v9449
  %13721 = vmatpush1.bf16.msra.mxu0 %v9448
  %13722 = vmatprep.mubr.bf16.mxu0 %v2793
  %13723 = vmatmul.mubr.bf16.gmra.mrb[0].mxu0 %v2792
  %v13724 = vpop.f32.mrb[0].mxu0
  %v13725 = vadd.f32 %v4417, %v13724
  %v13726 = vpop.f32.mrb[0].mxu0
  %v13727 = vadd.f32 %v4421, %v13726
  %v13728 = vpop.f32.mrb[0].mxu0
  %v13729 = vadd.f32 %v4417, %v13728
  %v13730 = vpop.f32.mrb[0].mxu0
  %v13731 = vadd.f32 %v4421, %v13730
  %13732 = vdwg.mxu0
  %13733 = vmatprep.subr.bf16.mxu0 %v9473
  %13734 = vmatpush1.bf16.msra.mxu0 %v9472
  %13735 = vmatprep.subr.bf16.mxu0 %v9497
  %13736 = vmatpush1.bf16.msra.mxu0 %v9496
  %13737 = vmatprep.subr.bf16.mxu0 %v9521
  %13738 = vmatpush1.bf16.msra.mxu0 %v9520
  %13739 = vmatprep.subr.bf16.mxu0 %v9545
  %13740 = vmatpush1.bf16.msra.mxu0 %v9544
  %13741 = vmatprep.subr.bf16.mxu0 %v9569
  %13742 = vmatpush1.bf16.msra.mxu0 %v9568
  %13743 = vmatprep.subr.bf16.mxu0 %v9593
  %13744 = vmatpush1.bf16.msra.mxu0 %v9592
  %13745 = vmatprep.subr.bf16.mxu0 %v9617
  %13746 = vmatpush1.bf16.msra.mxu0 %v9616
  %13747 = vmatprep.subr.bf16.mxu0 %v9641
  %13748 = vmatpush1.bf16.msra.mxu0 %v9640
  %13749 = vmatprep.subr.bf16.mxu0 %v9665
  %13750 = vmatpush1.bf16.msra.mxu0 %v9664
  %13751 = vmatprep.subr.bf16.mxu0 %v9689
  %13752 = vmatpush1.bf16.msra.mxu0 %v9688
  %13753 = vmatprep.subr.bf16.mxu0 %v9713
  %13754 = vmatpush1.bf16.msra.mxu0 %v9712
  %13755 = vmatprep.subr.bf16.mxu0 %v9737
  %13756 = vmatpush1.bf16.msra.mxu0 %v9736
  %13757 = vmatprep.subr.bf16.mxu0 %v9761
  %13758 = vmatpush1.bf16.msra.mxu0 %v9760
  %13759 = vmatprep.subr.bf16.mxu0 %v9785
  %13760 = vmatpush1.bf16.msra.mxu0 %v9784
  %13761 = vmatprep.subr.bf16.mxu0 %v9809
  %13762 = vmatpush1.bf16.msra.mxu0 %v9808
  %13763 = vmatprep.subr.bf16.mxu0 %v9833
  %13764 = vmatpush1.bf16.msra.mxu0 %v9832
  %13765 = vmatprep.mubr.bf16.mxu0 %v2795
  %13766 = vmatmul.mubr.bf16.gmra.mrb[0].mxu0 %v2794
  %v13767 = vpop.f32.mrb[0].mxu0
  %v13768 = vadd.f32 %v13725, %v13767
  %v13769 = vpop.f32.mrb[0].mxu0
  %v13770 = vadd.f32 %v13727, %v13769
  %v13771 = vpop.f32.mrb[0].mxu0
  %v13772 = vadd.f32 %v13729, %v13771
  %v13773 = vpop.f32.mrb[0].mxu0
  %v13774 = vadd.f32 %v13731, %v13773
  %13775 = vdwg.mxu0
  %13776 = vmatprep.subr.bf16.mxu0 %v9857
  %13777 = vmatpush1.bf16.msra.mxu0 %v9856
  %13778 = vmatprep.subr.bf16.mxu0 %v9881
  %13779 = vmatpush1.bf16.msra.mxu0 %v9880
  %13780 = vmatprep.subr.bf16.mxu0 %v9905
  %13781 = vmatpush1.bf16.msra.mxu0 %v9904
  %13782 = vmatprep.subr.bf16.mxu0 %v9929
  %13783 = vmatpush1.bf16.msra.mxu0 %v9928
  %13784 = vmatprep.subr.bf16.mxu0 %v9953
  %13785 = vmatpush1.bf16.msra.mxu0 %v9952
  %13786 = vmatprep.subr.bf16.mxu0 %v9977
  %13787 = vmatpush1.bf16.msra.mxu0 %v9976
  %13788 = vmatprep.subr.bf16.mxu0 %v10001
  %13789 = vmatpush1.bf16.msra.mxu0 %v10000
  %13790 = vmatprep.subr.bf16.mxu0 %v10025
  %13791 = vmatpush1.bf16.msra.mxu0 %v10024
  %13792 = vmatprep.subr.bf16.mxu0 %v10049
  %13793 = vmatpush1.bf16.msra.mxu0 %v10048
  %13794 = vmatprep.subr.bf16.mxu0 %v10073
  %13795 = vmatpush1.bf16.msra.mxu0 %v10072
  %13796 = vmatprep.subr.bf16.mxu0 %v10097
  %13797 = vmatpush1.bf16.msra.mxu0 %v10096
  %13798 = vmatprep.subr.bf16.mxu0 %v10121
  %13799 = vmatpush1.bf16.msra.mxu0 %v10120
  %13800 = vmatprep.subr.bf16.mxu0 %v10145
  %13801 = vmatpush1.bf16.msra.mxu0 %v10144
  %13802 = vmatprep.subr.bf16.mxu0 %v10169
  %13803 = vmatpush1.bf16.msra.mxu0 %v10168
  %13804 = vmatprep.subr.bf16.mxu0 %v10193
  %13805 = vmatpush1.bf16.msra.mxu0 %v10192
  %13806 = vmatprep.subr.bf16.mxu0 %v10217
  %13807 = vmatpush1.bf16.msra.mxu0 %v10216
  %13808 = vmatprep.mubr.bf16.mxu0 %v2797
  %13809 = vmatmul.mubr.bf16.gmra.mrb[0].mxu0 %v2796
  %v13810 = vpop.f32.mrb[0].mxu0
  %v13811 = vadd.f32 %v13768, %v13810
  %v13812 = vpop.f32.mrb[0].mxu0
  %v13813 = vadd.f32 %v13770, %v13812
  %v13814 = vpop.f32.mrb[0].mxu0
  %v13815 = vadd.f32 %v13772, %v13814
  %v13816 = vpop.f32.mrb[0].mxu0
  %v13817 = vadd.f32 %v13774, %v13816
  %13818 = vdwg.mxu0
  %13819 = vmatprep.subr.bf16.mxu0 %v10241
  %13820 = vmatpush1.bf16.msra.mxu0 %v10240
  %13821 = vmatprep.subr.bf16.mxu0 %v10265
  %13822 = vmatpush1.bf16.msra.mxu0 %v10264
  %13823 = vmatprep.subr.bf16.mxu0 %v10289
  %13824 = vmatpush1.bf16.msra.mxu0 %v10288
  %13825 = vmatprep.subr.bf16.mxu0 %v10313
  %13826 = vmatpush1.bf16.msra.mxu0 %v10312
  %13827 = vmatprep.subr.bf16.mxu0 %v10337
  %13828 = vmatpush1.bf16.msra.mxu0 %v10336
  %13829 = vmatprep.subr.bf16.mxu0 %v10361
  %13830 = vmatpush1.bf16.msra.mxu0 %v10360
  %13831 = vmatprep.subr.bf16.mxu0 %v10385
  %13832 = vmatpush1.bf16.msra.mxu0 %v10384
  %13833 = vmatprep.subr.bf16.mxu0 %v10409
  %13834 = vmatpush1.bf16.msra.mxu0 %v10408
  %13835 = vmatprep.subr.bf16.mxu0 %v10433
  %13836 = vmatpush1.bf16.msra.mxu0 %v10432
  %13837 = vmatprep.subr.bf16.mxu0 %v10457
  %13838 = vmatpush1.bf16.msra.mxu0 %v10456
  %13839 = vmatprep.subr.bf16.mxu0 %v10481
  %13840 = vmatpush1.bf16.msra.mxu0 %v10480
  %13841 = vmatprep.subr.bf16.mxu0 %v10505
  %13842 = vmatpush1.bf16.msra.mxu0 %v10504
  %13843 = vmatprep.subr.bf16.mxu0 %v10529
  %13844 = vmatpush1.bf16.msra.mxu0 %v10528
  %13845 = vmatprep.subr.bf16.mxu0 %v10553
  %13846 = vmatpush1.bf16.msra.mxu0 %v10552
  %13847 = vmatprep.subr.bf16.mxu0 %v10577
  %13848 = vmatpush1.bf16.msra.mxu0 %v10576
  %13849 = vmatprep.subr.bf16.mxu0 %v10601
  %13850 = vmatpush1.bf16.msra.mxu0 %v10600
  %13851 = vmatprep.mubr.bf16.mxu0 %v2799
  %13852 = vmatmul.mubr.bf16.gmra.mrb[0].mxu0 %v2798
  %v13853 = vpop.f32.mrb[0].mxu0
  %v13854 = vadd.f32 %v13811, %v13853
  %v13855 = vpop.f32.mrb[0].mxu0
  %v13856 = vadd.f32 %v13813, %v13855
  %v13857 = vpop.f32.mrb[0].mxu0
  %v13858 = vadd.f32 %v13815, %v13857
  %v13859 = vpop.f32.mrb[0].mxu0
  %v13860 = vadd.f32 %v13817, %v13859
  %13861 = vdwg.mxu0
  %13862 = vmatprep.subr.bf16.mxu0 %v9091
  %13863 = vmatpush1.bf16.msra.mxu0 %v9090
  %13864 = vmatprep.subr.bf16.mxu0 %v9115
  %13865 = vmatpush1.bf16.msra.mxu0 %v9114
  %13866 = vmatprep.subr.bf16.mxu0 %v9139
  %13867 = vmatpush1.bf16.msra.mxu0 %v9138
  %13868 = vmatprep.subr.bf16.mxu0 %v9163
  %13869 = vmatpush1.bf16.msra.mxu0 %v9162
  %13870 = vmatprep.subr.bf16.mxu0 %v9187
  %13871 = vmatpush1.bf16.msra.mxu0 %v9186
  %13872 = vmatprep.subr.bf16.mxu0 %v9211
  %13873 = vmatpush1.bf16.msra.mxu0 %v9210
  %13874 = vmatprep.subr.bf16.mxu0 %v9235
  %13875 = vmatpush1.bf16.msra.mxu0 %v9234
  %13876 = vmatprep.subr.bf16.mxu0 %v9259
  %13877 = vmatpush1.bf16.msra.mxu0 %v9258
  %13878 = vmatprep.subr.bf16.mxu0 %v9283
  %13879 = vmatpush1.bf16.msra.mxu0 %v9282
  %13880 = vmatprep.subr.bf16.mxu0 %v9307
  %13881 = vmatpush1.bf16.msra.mxu0 %v9306
  %13882 = vmatprep.subr.bf16.mxu0 %v9331
  %13883 = vmatpush1.bf16.msra.mxu0 %v9330
  %13884 = vmatprep.subr.bf16.mxu0 %v9355
  %13885 = vmatpush1.bf16.msra.mxu0 %v9354
  %13886 = vmatprep.subr.bf16.mxu0 %v9379
  %13887 = vmatpush1.bf16.msra.mxu0 %v9378
  %13888 = vmatprep.subr.bf16.mxu0 %v9403
  %13889 = vmatpush1.bf16.msra.mxu0 %v9402
  %13890 = vmatprep.subr.bf16.mxu0 %v9427
  %13891 = vmatpush1.bf16.msra.mxu0 %v9426
  %13892 = vmatprep.subr.bf16.mxu0 %v9451
  %13893 = vmatpush1.bf16.msra.mxu0 %v9450
  %13894 = vmatprep.mubr.bf16.mxu0 %v2793
  %13895 = vmatmul.mubr.bf16.gmra.mrb[0].mxu0 %v2792
  %v13896 = vpop.f32.mrb[0].mxu0
  %v13897 = vadd.f32 %v4425, %v13896
  %v13898 = vpop.f32.mrb[0].mxu0
  %v13899 = vadd.f32 %v4429, %v13898
  %v13900 = vpop.f32.mrb[0].mxu0
  %v13901 = vadd.f32 %v4425, %v13900
  %v13902 = vpop.f32.mrb[0].mxu0
  %v13903 = vadd.f32 %v4429, %v13902
  %13904 = vdwg.mxu0
  %13905 = vmatprep.subr.bf16.mxu0 %v9475
  %13906 = vmatpush1.bf16.msra.mxu0 %v9474
  %13907 = vmatprep.subr.bf16.mxu0 %v9499
  %13908 = vmatpush1.bf16.msra.mxu0 %v9498
  %13909 = vmatprep.subr.bf16.mxu0 %v9523
  %13910 = vmatpush1.bf16.msra.mxu0 %v9522
  %13911 = vmatprep.subr.bf16.mxu0 %v9547
  %13912 = vmatpush1.bf16.msra.mxu0 %v9546
  %13913 = vmatprep.subr.bf16.mxu0 %v9571
  %13914 = vmatpush1.bf16.msra.mxu0 %v9570
  %13915 = vmatprep.subr.bf16.mxu0 %v9595
  %13916 = vmatpush1.bf16.msra.mxu0 %v9594
  %13917 = vmatprep.subr.bf16.mxu0 %v9619
  %13918 = vmatpush1.bf16.msra.mxu0 %v9618
  %13919 = vmatprep.subr.bf16.mxu0 %v9643
  %13920 = vmatpush1.bf16.msra.mxu0 %v9642
  %13921 = vmatprep.subr.bf16.mxu0 %v9667
  %13922 = vmatpush1.bf16.msra.mxu0 %v9666
  %13923 = vmatprep.subr.bf16.mxu0 %v9691
  %13924 = vmatpush1.bf16.msra.mxu0 %v9690
  %13925 = vmatprep.subr.bf16.mxu0 %v9715
  %13926 = vmatpush1.bf16.msra.mxu0 %v9714
  %13927 = vmatprep.subr.bf16.mxu0 %v9739
  %13928 = vmatpush1.bf16.msra.mxu0 %v9738
  %13929 = vmatprep.subr.bf16.mxu0 %v9763
  %13930 = vmatpush1.bf16.msra.mxu0 %v9762
  %13931 = vmatprep.subr.bf16.mxu0 %v9787
  %13932 = vmatpush1.bf16.msra.mxu0 %v9786
  %13933 = vmatprep.subr.bf16.mxu0 %v9811
  %13934 = vmatpush1.bf16.msra.mxu0 %v9810
  %13935 = vmatprep.subr.bf16.mxu0 %v9835
  %13936 = vmatpush1.bf16.msra.mxu0 %v9834
  %13937 = vmatprep.mubr.bf16.mxu0 %v2795
  %13938 = vmatmul.mubr.bf16.gmra.mrb[0].mxu0 %v2794
  %v13939 = vpop.f32.mrb[0].mxu0
  %v13940 = vadd.f32 %v13897, %v13939
  %v13941 = vpop.f32.mrb[0].mxu0
  %v13942 = vadd.f32 %v13899, %v13941
  %v13943 = vpop.f32.mrb[0].mxu0
  %v13944 = vadd.f32 %v13901, %v13943
  %v13945 = vpop.f32.mrb[0].mxu0
  %v13946 = vadd.f32 %v13903, %v13945
  %13947 = vdwg.mxu0
  %13948 = vmatprep.subr.bf16.mxu0 %v9859
  %13949 = vmatpush1.bf16.msra.mxu0 %v9858
  %13950 = vmatprep.subr.bf16.mxu0 %v9883
  %13951 = vmatpush1.bf16.msra.mxu0 %v9882
  %13952 = vmatprep.subr.bf16.mxu0 %v9907
  %13953 = vmatpush1.bf16.msra.mxu0 %v9906
  %13954 = vmatprep.subr.bf16.mxu0 %v9931
  %13955 = vmatpush1.bf16.msra.mxu0 %v9930
  %13956 = vmatprep.subr.bf16.mxu0 %v9955
  %13957 = vmatpush1.bf16.msra.mxu0 %v9954
  %13958 = vmatprep.subr.bf16.mxu0 %v9979
  %13959 = vmatpush1.bf16.msra.mxu0 %v9978
  %13960 = vmatprep.subr.bf16.mxu0 %v10003
  %13961 = vmatpush1.bf16.msra.mxu0 %v10002
  %13962 = vmatprep.subr.bf16.mxu0 %v10027
  %13963 = vmatpush1.bf16.msra.mxu0 %v10026
  %13964 = vmatprep.subr.bf16.mxu0 %v10051
  %13965 = vmatpush1.bf16.msra.mxu0 %v10050
  %13966 = vmatprep.subr.bf16.mxu0 %v10075
  %13967 = vmatpush1.bf16.msra.mxu0 %v10074
  %13968 = vmatprep.subr.bf16.mxu0 %v10099
  %13969 = vmatpush1.bf16.msra.mxu0 %v10098
  %13970 = vmatprep.subr.bf16.mxu0 %v10123
  %13971 = vmatpush1.bf16.msra.mxu0 %v10122
  %13972 = vmatprep.subr.bf16.mxu0 %v10147
  %13973 = vmatpush1.bf16.msra.mxu0 %v10146
  %13974 = vmatprep.subr.bf16.mxu0 %v10171
  %13975 = vmatpush1.bf16.msra.mxu0 %v10170
  %13976 = vmatprep.subr.bf16.mxu0 %v10195
  %13977 = vmatpush1.bf16.msra.mxu0 %v10194
  %13978 = vmatprep.subr.bf16.mxu0 %v10219
  %13979 = vmatpush1.bf16.msra.mxu0 %v10218
  %13980 = vmatprep.mubr.bf16.mxu0 %v2797
  %13981 = vmatmul.mubr.bf16.gmra.mrb[0].mxu0 %v2796
  %v13982 = vpop.f32.mrb[0].mxu0
  %v13983 = vadd.f32 %v13940, %v13982
  %v13984 = vpop.f32.mrb[0].mxu0
  %v13985 = vadd.f32 %v13942, %v13984
  %v13986 = vpop.f32.mrb[0].mxu0
  %v13987 = vadd.f32 %v13944, %v13986
  %v13988 = vpop.f32.mrb[0].mxu0
  %v13989 = vadd.f32 %v13946, %v13988
  %13990 = vdwg.mxu0
  %13991 = vmatprep.subr.bf16.mxu0 %v10243
  %13992 = vmatpush1.bf16.msra.mxu0 %v10242
  %13993 = vmatprep.subr.bf16.mxu0 %v10267
  %13994 = vmatpush1.bf16.msra.mxu0 %v10266
  %13995 = vmatprep.subr.bf16.mxu0 %v10291
  %13996 = vmatpush1.bf16.msra.mxu0 %v10290
  %13997 = vmatprep.subr.bf16.mxu0 %v10315
  %13998 = vmatpush1.bf16.msra.mxu0 %v10314
  %13999 = vmatprep.subr.bf16.mxu0 %v10339
  %14000 = vmatpush1.bf16.msra.mxu0 %v10338
  %14001 = vmatprep.subr.bf16.mxu0 %v10363
  %14002 = vmatpush1.bf16.msra.mxu0 %v10362
  %14003 = vmatprep.subr.bf16.mxu0 %v10387
  %14004 = vmatpush1.bf16.msra.mxu0 %v10386
  %14005 = vmatprep.subr.bf16.mxu0 %v10411
  %14006 = vmatpush1.bf16.msra.mxu0 %v10410
  %14007 = vmatprep.subr.bf16.mxu0 %v10435
  %14008 = vmatpush1.bf16.msra.mxu0 %v10434
  %14009 = vmatprep.subr.bf16.mxu0 %v10459
  %14010 = vmatpush1.bf16.msra.mxu0 %v10458
  %14011 = vmatprep.subr.bf16.mxu0 %v10483
  %14012 = vmatpush1.bf16.msra.mxu0 %v10482
  %14013 = vmatprep.subr.bf16.mxu0 %v10507
  %14014 = vmatpush1.bf16.msra.mxu0 %v10506
  %14015 = vmatprep.subr.bf16.mxu0 %v10531
  %14016 = vmatpush1.bf16.msra.mxu0 %v10530
  %14017 = vmatprep.subr.bf16.mxu0 %v10555
  %14018 = vmatpush1.bf16.msra.mxu0 %v10554
  %14019 = vmatprep.subr.bf16.mxu0 %v10579
  %14020 = vmatpush1.bf16.msra.mxu0 %v10578
  %14021 = vmatprep.subr.bf16.mxu0 %v10603
  %14022 = vmatpush1.bf16.msra.mxu0 %v10602
  %14023 = vmatprep.mubr.bf16.mxu0 %v2799
  %14024 = vmatmul.mubr.bf16.gmra.mrb[0].mxu0 %v2798
  %v14025 = vpop.f32.mrb[0].mxu0
  %v14026 = vadd.f32 %v13983, %v14025
  %v14027 = vpop.f32.mrb[0].mxu0
  %v14028 = vadd.f32 %v13985, %v14027
  %v14029 = vpop.f32.mrb[0].mxu0
  %v14030 = vadd.f32 %v13987, %v14029
  %v14031 = vpop.f32.mrb[0].mxu0
  %v14032 = vadd.f32 %v13989, %v14031
  %14033 = vdwg.mxu0
  %14034 = vmatprep.subr.bf16.mxu0 %v9093
  %14035 = vmatpush1.bf16.msra.mxu0 %v9092
  %14036 = vmatprep.subr.bf16.mxu0 %v9117
  %14037 = vmatpush1.bf16.msra.mxu0 %v9116
  %14038 = vmatprep.subr.bf16.mxu0 %v9141
  %14039 = vmatpush1.bf16.msra.mxu0 %v9140
  %14040 = vmatprep.subr.bf16.mxu0 %v9165
  %14041 = vmatpush1.bf16.msra.mxu0 %v9164
  %14042 = vmatprep.subr.bf16.mxu0 %v9189
  %14043 = vmatpush1.bf16.msra.mxu0 %v9188
  %14044 = vmatprep.subr.bf16.mxu0 %v9213
  %14045 = vmatpush1.bf16.msra.mxu0 %v9212
  %14046 = vmatprep.subr.bf16.mxu0 %v9237
  %14047 = vmatpush1.bf16.msra.mxu0 %v9236
  %14048 = vmatprep.subr.bf16.mxu0 %v9261
  %14049 = vmatpush1.bf16.msra.mxu0 %v9260
  %14050 = vmatprep.subr.bf16.mxu0 %v9285
  %14051 = vmatpush1.bf16.msra.mxu0 %v9284
  %14052 = vmatprep.subr.bf16.mxu0 %v9309
  %14053 = vmatpush1.bf16.msra.mxu0 %v9308
  %14054 = vmatprep.subr.bf16.mxu0 %v9333
  %14055 = vmatpush1.bf16.msra.mxu0 %v9332
  %14056 = vmatprep.subr.bf16.mxu0 %v9357
  %14057 = vmatpush1.bf16.msra.mxu0 %v9356
  %14058 = vmatprep.subr.bf16.mxu0 %v9381
  %14059 = vmatpush1.bf16.msra.mxu0 %v9380
  %14060 = vmatprep.subr.bf16.mxu0 %v9405
  %14061 = vmatpush1.bf16.msra.mxu0 %v9404
  %14062 = vmatprep.subr.bf16.mxu0 %v9429
  %14063 = vmatpush1.bf16.msra.mxu0 %v9428
  %14064 = vmatprep.subr.bf16.mxu0 %v9453
  %14065 = vmatpush1.bf16.msra.mxu0 %v9452
  %14066 = vmatprep.mubr.bf16.mxu0 %v2793
  %14067 = vmatmul.mubr.bf16.gmra.mrb[0].mxu0 %v2792
  %v14068 = vpop.f32.mrb[0].mxu0
  %v14069 = vadd.f32 %v4433, %v14068
  %v14070 = vpop.f32.mrb[0].mxu0
  %v14071 = vadd.f32 %v4437, %v14070
  %v14072 = vpop.f32.mrb[0].mxu0
  %v14073 = vadd.f32 %v4433, %v14072
  %v14074 = vpop.f32.mrb[0].mxu0
  %v14075 = vadd.f32 %v4437, %v14074
  %14076 = vdwg.mxu0
  %14077 = vmatprep.subr.bf16.mxu0 %v9477
  %14078 = vmatpush1.bf16.msra.mxu0 %v9476
  %14079 = vmatprep.subr.bf16.mxu0 %v9501
  %14080 = vmatpush1.bf16.msra.mxu0 %v9500
  %14081 = vmatprep.subr.bf16.mxu0 %v9525
  %14082 = vmatpush1.bf16.msra.mxu0 %v9524
  %14083 = vmatprep.subr.bf16.mxu0 %v9549
  %14084 = vmatpush1.bf16.msra.mxu0 %v9548
  %14085 = vmatprep.subr.bf16.mxu0 %v9573
  %14086 = vmatpush1.bf16.msra.mxu0 %v9572
  %14087 = vmatprep.subr.bf16.mxu0 %v9597
  %14088 = vmatpush1.bf16.msra.mxu0 %v9596
  %14089 = vmatprep.subr.bf16.mxu0 %v9621
  %14090 = vmatpush1.bf16.msra.mxu0 %v9620
  %14091 = vmatprep.subr.bf16.mxu0 %v9645
  %14092 = vmatpush1.bf16.msra.mxu0 %v9644
  %14093 = vmatprep.subr.bf16.mxu0 %v9669
  %14094 = vmatpush1.bf16.msra.mxu0 %v9668
  %14095 = vmatprep.subr.bf16.mxu0 %v9693
  %14096 = vmatpush1.bf16.msra.mxu0 %v9692
  %14097 = vmatprep.subr.bf16.mxu0 %v9717
  %14098 = vmatpush1.bf16.msra.mxu0 %v9716
  %14099 = vmatprep.subr.bf16.mxu0 %v9741
  %14100 = vmatpush1.bf16.msra.mxu0 %v9740
  %14101 = vmatprep.subr.bf16.mxu0 %v9765
  %14102 = vmatpush1.bf16.msra.mxu0 %v9764
  %14103 = vmatprep.subr.bf16.mxu0 %v9789
  %14104 = vmatpush1.bf16.msra.mxu0 %v9788
  %14105 = vmatprep.subr.bf16.mxu0 %v9813
  %14106 = vmatpush1.bf16.msra.mxu0 %v9812
  %14107 = vmatprep.subr.bf16.mxu0 %v9837
  %14108 = vmatpush1.bf16.msra.mxu0 %v9836
  %14109 = vmatprep.mubr.bf16.mxu0 %v2795
  %14110 = vmatmul.mubr.bf16.gmra.mrb[0].mxu0 %v2794
  %v14111 = vpop.f32.mrb[0].mxu0
  %v14112 = vadd.f32 %v14069, %v14111
  %v14113 = vpop.f32.mrb[0].mxu0
  %v14114 = vadd.f32 %v14071, %v14113
  %v14115 = vpop.f32.mrb[0].mxu0
  %v14116 = vadd.f32 %v14073, %v14115
  %v14117 = vpop.f32.mrb[0].mxu0
  %v14118 = vadd.f32 %v14075, %v14117
  %14119 = vdwg.mxu0
  %14120 = vmatprep.subr.bf16.mxu0 %v9861
  %14121 = vmatpush1.bf16.msra.mxu0 %v9860
  %14122 = vmatprep.subr.bf16.mxu0 %v9885
  %14123 = vmatpush1.bf16.msra.mxu0 %v9884
  %14124 = vmatprep.subr.bf16.mxu0 %v9909
  %14125 = vmatpush1.bf16.msra.mxu0 %v9908
  %14126 = vmatprep.subr.bf16.mxu0 %v9933
  %14127 = vmatpush1.bf16.msra.mxu0 %v9932
  %14128 = vmatprep.subr.bf16.mxu0 %v9957
  %14129 = vmatpush1.bf16.msra.mxu0 %v9956
  %14130 = vmatprep.subr.bf16.mxu0 %v9981
  %14131 = vmatpush1.bf16.msra.mxu0 %v9980
  %14132 = vmatprep.subr.bf16.mxu0 %v10005
  %14133 = vmatpush1.bf16.msra.mxu0 %v10004
  %14134 = vmatprep.subr.bf16.mxu0 %v10029
  %14135 = vmatpush1.bf16.msra.mxu0 %v10028
  %14136 = vmatprep.subr.bf16.mxu0 %v10053
  %14137 = vmatpush1.bf16.msra.mxu0 %v10052
  %14138 = vmatprep.subr.bf16.mxu0 %v10077
  %14139 = vmatpush1.bf16.msra.mxu0 %v10076
  %14140 = vmatprep.subr.bf16.mxu0 %v10101
  %14141 = vmatpush1.bf16.msra.mxu0 %v10100
  %14142 = vmatprep.subr.bf16.mxu0 %v10125
  %14143 = vmatpush1.bf16.msra.mxu0 %v10124
  %14144 = vmatprep.subr.bf16.mxu0 %v10149
  %14145 = vmatpush1.bf16.msra.mxu0 %v10148
  %14146 = vmatprep.subr.bf16.mxu0 %v10173
  %14147 = vmatpush1.bf16.msra.mxu0 %v10172
  %14148 = vmatprep.subr.bf16.mxu0 %v10197
  %14149 = vmatpush1.bf16.msra.mxu0 %v10196
  %14150 = vmatprep.subr.bf16.mxu0 %v10221
  %14151 = vmatpush1.bf16.msra.mxu0 %v10220
  %14152 = vmatprep.mubr.bf16.mxu0 %v2797
  %14153 = vmatmul.mubr.bf16.gmra.mrb[0].mxu0 %v2796
  %v14154 = vpop.f32.mrb[0].mxu0
  %v14155 = vadd.f32 %v14112, %v14154
  %v14156 = vpop.f32.mrb[0].mxu0
  %v14157 = vadd.f32 %v14114, %v14156
  %v14158 = vpop.f32.mrb[0].mxu0
  %v14159 = vadd.f32 %v14116, %v14158
  %v14160 = vpop.f32.mrb[0].mxu0
  %v14161 = vadd.f32 %v14118, %v14160
  %14162 = vdwg.mxu0
  %14163 = vmatprep.subr.bf16.mxu0 %v10245
  %14164 = vmatpush1.bf16.msra.mxu0 %v10244
  %14165 = vmatprep.subr.bf16.mxu0 %v10269
  %14166 = vmatpush1.bf16.msra.mxu0 %v10268
  %14167 = vmatprep.subr.bf16.mxu0 %v10293
  %14168 = vmatpush1.bf16.msra.mxu0 %v10292
  %14169 = vmatprep.subr.bf16.mxu0 %v10317
  %14170 = vmatpush1.bf16.msra.mxu0 %v10316
  %14171 = vmatprep.subr.bf16.mxu0 %v10341
  %14172 = vmatpush1.bf16.msra.mxu0 %v10340
  %14173 = vmatprep.subr.bf16.mxu0 %v10365
  %14174 = vmatpush1.bf16.msra.mxu0 %v10364
  %14175 = vmatprep.subr.bf16.mxu0 %v10389
  %14176 = vmatpush1.bf16.msra.mxu0 %v10388
  %14177 = vmatprep.subr.bf16.mxu0 %v10413
  %14178 = vmatpush1.bf16.msra.mxu0 %v10412
  %14179 = vmatprep.subr.bf16.mxu0 %v10437
  %14180 = vmatpush1.bf16.msra.mxu0 %v10436
  %14181 = vmatprep.subr.bf16.mxu0 %v10461
  %14182 = vmatpush1.bf16.msra.mxu0 %v10460
  %14183 = vmatprep.subr.bf16.mxu0 %v10485
  %14184 = vmatpush1.bf16.msra.mxu0 %v10484
  %14185 = vmatprep.subr.bf16.mxu0 %v10509
  %14186 = vmatpush1.bf16.msra.mxu0 %v10508
  %14187 = vmatprep.subr.bf16.mxu0 %v10533
  %14188 = vmatpush1.bf16.msra.mxu0 %v10532
  %14189 = vmatprep.subr.bf16.mxu0 %v10557
  %14190 = vmatpush1.bf16.msra.mxu0 %v10556
  %14191 = vmatprep.subr.bf16.mxu0 %v10581
  %14192 = vmatpush1.bf16.msra.mxu0 %v10580
  %14193 = vmatprep.subr.bf16.mxu0 %v10605
  %14194 = vmatpush1.bf16.msra.mxu0 %v10604
  %14195 = vmatprep.mubr.bf16.mxu0 %v2799
  %14196 = vmatmul.mubr.bf16.gmra.mrb[0].mxu0 %v2798
  %v14197 = vpop.f32.mrb[0].mxu0
  %v14198 = vadd.f32 %v14155, %v14197
  %v14199 = vpop.f32.mrb[0].mxu0
  %v14200 = vadd.f32 %v14157, %v14199
  %v14201 = vpop.f32.mrb[0].mxu0
  %v14202 = vadd.f32 %v14159, %v14201
  %v14203 = vpop.f32.mrb[0].mxu0
  %v14204 = vadd.f32 %v14161, %v14203
  %14205 = vdwg.mxu0
  %v14206 = vtanh.pop %v12306
  %v14207 = vtanh.pop %v12308
  %v14208 = vtanh.pop %v12478
  %v14209 = vtanh.pop %v12480
  %v14210 = vtanh.pop %v12650
  %v14211 = vtanh.pop %v12652
  %v14212 = vtanh.pop %v12822
  %v14213 = vtanh.pop %v12824
  %v14214 = vtanh.pop %v12994
  %v14215 = vtanh.pop %v12996
  %v14216 = vtanh.pop %v13166
  %v14217 = vtanh.pop %v13168
  %v14218 = vtanh.pop %v13338
  %v14219 = vtanh.pop %v13340
  %v14220 = vtanh.pop %v13510
  %v14221 = vtanh.pop %v13512
  %v14222 = vtanh.pop %v13682
  %v14223 = vtanh.pop %v13684
  %v14224 = vtanh.pop %v13854
  %v14225 = vtanh.pop %v13856
  %v14226 = vtanh.pop %v14026
  %v14227 = vtanh.pop %v14028
  %v14228 = vtanh.pop %v14198
  %v14229 = vtanh.pop %v14200
  %v14230 = vtanh.pop %v12310
  %v14231 = vtanh.pop %v12312
  %v14232 = vtanh.pop %v12482
  %v14233 = vtanh.pop %v12484
  %v14234 = vtanh.pop %v12654
  %v14235 = vtanh.pop %v12656
  %v14236 = vtanh.pop %v12826
  %v14237 = vtanh.pop %v12828
  %v14238 = vtanh.pop %v12998
  %v14239 = vtanh.pop %v13000
  %v14240 = vtanh.pop %v13170
  %v14241 = vtanh.pop %v13172
  %v14242 = vtanh.pop %v13342
  %v14243 = vtanh.pop %v13344
  %v14244 = vtanh.pop %v13514
  %v14245 = vtanh.pop %v13516
  %v14246 = vtanh.pop %v13686
  %v14247 = vtanh.pop %v13688
  %v14248 = vtanh.pop %v13858
  %v14249 = vtanh.pop %v13860
  %v14250 = vtanh.pop %v14030
  %v14251 = vtanh.pop %v14032
  %v14252 = vtanh.pop %v14202
  %v14253 = vtanh.pop %v14204
  %v14254 = vpack.c.bf16 %v14230, %v14206
  %v14255 = vpack.c.bf16 %v14231, %v14207
  %v14256 = vpack.c.bf16 %v14232, %v14208
  %v14257 = vpack.c.bf16 %v14233, %v14209
  %v14258 = vpack.c.bf16 %v14234, %v14210
  %v14259 = vpack.c.bf16 %v14235, %v14211
  %v14260 = vpack.c.bf16 %v14236, %v14212
  %v14261 = vpack.c.bf16 %v14237, %v14213
  %v14262 = vpack.c.bf16 %v14238, %v14214
  %v14263 = vpack.c.bf16 %v14239, %v14215
  %v14264 = vpack.c.bf16 %v14240, %v14216
  %v14265 = vpack.c.bf16 %v14241, %v14217
  %v14266 = vpack.c.bf16 %v14242, %v14218
  %v14267 = vpack.c.bf16 %v14243, %v14219
  %v14268 = vpack.c.bf16 %v14244, %v14220
  %v14269 = vpack.c.bf16 %v14245, %v14221
  %v14270 = vpack.c.bf16 %v14246, %v14222
  %v14271 = vpack.c.bf16 %v14247, %v14223
  %v14272 = vpack.c.bf16 %v14248, %v14224
  %v14273 = vpack.c.bf16 %v14249, %v14225
  %v14274 = vpack.c.bf16 %v14250, %v14226
  %v14275 = vpack.c.bf16 %v14251, %v14227
  %v14276 = vpack.c.bf16 %v14252, %v14228
  %v14277 = vpack.c.bf16 %v14253, %v14229
  %v14302 = vunpack.c.l.b16 %v14254
  %v14303 = vunpack.c.l.b16 %v14255
  %v14304 = vunpack.c.l.b16 %v14256
  %v14305 = vunpack.c.l.b16 %v14257
  %v14306 = vunpack.c.l.b16 %v14258
  %v14307 = vunpack.c.l.b16 %v14259
  %v14308 = vunpack.c.l.b16 %v14260
  %v14309 = vunpack.c.l.b16 %v14261
  %v14310 = vunpack.c.l.b16 %v14262
  %v14311 = vunpack.c.l.b16 %v14263
  %v14312 = vunpack.c.l.b16 %v14264
  %v14313 = vunpack.c.l.b16 %v14265
  %v14314 = vunpack.c.l.b16 %v14266
  %v14315 = vunpack.c.l.b16 %v14267
  %v14316 = vunpack.c.l.b16 %v14268
  %v14317 = vunpack.c.l.b16 %v14269
  %v14318 = vunpack.c.l.b16 %v14270
  %v14319 = vunpack.c.l.b16 %v14271
  %v14320 = vunpack.c.l.b16 %v14272
  %v14321 = vunpack.c.l.b16 %v14273
  %v14322 = vunpack.c.l.b16 %v14274
  %v14323 = vunpack.c.l.b16 %v14275
  %v14324 = vunpack.c.l.b16 %v14276
  %v14325 = vunpack.c.l.b16 %v14277
  %v14326 = vunpack.c.h.b16 %v14254
  %v14327 = vunpack.c.h.b16 %v14255
  %v14328 = vunpack.c.h.b16 %v14256
  %v14329 = vunpack.c.h.b16 %v14257
  %v14330 = vunpack.c.h.b16 %v14258
  %v14331 = vunpack.c.h.b16 %v14259
  %v14332 = vunpack.c.h.b16 %v14260
  %v14333 = vunpack.c.h.b16 %v14261
  %v14334 = vunpack.c.h.b16 %v14262
  %v14335 = vunpack.c.h.b16 %v14263
  %v14336 = vunpack.c.h.b16 %v14264
  %v14337 = vunpack.c.h.b16 %v14265
  %v14338 = vunpack.c.h.b16 %v14266
  %v14339 = vunpack.c.h.b16 %v14267
  %v14340 = vunpack.c.h.b16 %v14268
  %v14341 = vunpack.c.h.b16 %v14269
  %v14342 = vunpack.c.h.b16 %v14270
  %v14343 = vunpack.c.h.b16 %v14271
  %v14344 = vunpack.c.h.b16 %v14272
  %v14345 = vunpack.c.h.b16 %v14273
  %v14346 = vunpack.c.h.b16 %v14274
  %v14347 = vunpack.c.h.b16 %v14275
  %v14348 = vunpack.c.h.b16 %v14276
  %v14349 = vunpack.c.h.b16 %v14277
  %v14350 = vpack.c.b16 %v14303, %v14302
  %v14351 = vpack.c.b16 %v14305, %v14304
  %v14352 = vpack.c.b16 %v14307, %v14306
  %v14353 = vpack.c.b16 %v14309, %v14308
  %v14354 = vpack.c.b16 %v14311, %v14310
  %v14355 = vpack.c.b16 %v14313, %v14312
  %v14356 = vpack.c.b16 %v14315, %v14314
  %v14357 = vpack.c.b16 %v14317, %v14316
  %v14358 = vpack.c.b16 %v14319, %v14318
  %v14359 = vpack.c.b16 %v14321, %v14320
  %v14360 = vpack.c.b16 %v14323, %v14322
  %v14361 = vpack.c.b16 %v14325, %v14324
  %v14362 = vpack.c.b16 %v14327, %v14326
  %v14363 = vpack.c.b16 %v14329, %v14328
  %v14364 = vpack.c.b16 %v14331, %v14330
  %v14365 = vpack.c.b16 %v14333, %v14332
  %v14366 = vpack.c.b16 %v14335, %v14334
  %v14367 = vpack.c.b16 %v14337, %v14336
  %v14368 = vpack.c.b16 %v14339, %v14338
  %v14369 = vpack.c.b16 %v14341, %v14340
  %v14370 = vpack.c.b16 %v14343, %v14342
  %v14371 = vpack.c.b16 %v14345, %v14344
  %v14372 = vpack.c.b16 %v14347, %v14346
  %v14373 = vpack.c.b16 %v14349, %v14348
  %14398 = vst [vmem:[%s11] sm:$0xff] %v14350
  %14399 = vst [vmem:[%s11 + $0x8] sm:$0xff] %v14351
  %14400 = vst [vmem:[%s11 + $0x10] sm:$0xff] %v14352
  %14401 = vst [vmem:[%s11 + $0x18] sm:$0xff] %v14353
  %14402 = vst [vmem:[%s11 + $0x20] sm:$0xff] %v14354
  %14403 = vst [vmem:[%s11 + $0x28] sm:$0xff] %v14355
  %14404 = vst [vmem:[%s11 + $0x30] sm:$0xff] %v14356
  %14405 = vst [vmem:[%s11 + $0x38] sm:$0xff] %v14357
  %14406 = vst [vmem:[%s11 + $0x40] sm:$0xff] %v14358
  %14407 = vst [vmem:[%s11 + $0x48] sm:$0xff] %v14359
  %14408 = vst [vmem:[%s11 + $0x50] sm:$0xff] %v14360
  %14409 = vst [vmem:[%s11 + $0x58] sm:$0xff] %v14361
  %14410 = vst [vmem:[%s11 + $0x60] sm:$0xff] %v14362
  %14411 = vst [vmem:[%s11 + $0x68] sm:$0xff] %v14363
  %14412 = vst [vmem:[%s11 + $0x70] sm:$0xff] %v14364
  %14413 = vst [vmem:[%s11 + $0x78] sm:$0xff] %v14365
  %14414 = vst [vmem:[%s11 + $0x80] sm:$0xff] %v14366
  %14415 = vst [vmem:[%s11 + $0x88] sm:$0xff] %v14367
  %14416 = vst [vmem:[%s11 + $0x90] sm:$0xff] %v14368
  %14417 = vst [vmem:[%s11 + $0x98] sm:$0xff] %v14369
  %14418 = vst [vmem:[%s11 + $0xa0] sm:$0xff] %v14370
  %14419 = vst [vmem:[%s11 + $0xa8] sm:$0xff] %v14371
  %14420 = vst [vmem:[%s11 + $0xb0] sm:$0xff] %v14372
  %14421 = vst [vmem:[%s11 + $0xb8] sm:$0xff] %v14373
  // Predicated region
  $region46: #{generator_forward.1} parent=0 // pred_check
    _
  $region47: #{generator_forward.1} parent=0 // pred_check_branch
    %14423 = sbr.rel (0) target = $region49
  $region48: #{generator_forward.1} parent=0 // pred_region
    _
  $region49: #{generator_forward.1} parent=0 // pred_fallthru
    _
  // Predicated region
  $region50: #{generator_forward.1} parent=0 // pred_check
    _
  $region51: #{generator_forward.1} parent=0 // pred_check_branch
    %14425 = sbr.rel (0) target = $region53
  $region52: #{generator_forward.1} parent=0 // pred_region
    _
  $region53: #{generator_forward.1} parent=0 // pred_fallthru
    _

</llo_original>
